<compile_context>
chip_gen: v6e
topology: v6e:2x2x1
jax: 0.10.0
libtpu: 0.0.40
codegen_flags: <defaults>
</compile_context>

<pallas_src>
import functools
import math

import jax
import jax.numpy as jnp
from jax.experimental import pallas as pl
from jax.experimental.pallas import tpu as pltpu


# ----------------------------------------------------------------------------
# Chunk size selection: largest divisor of T that keeps the (Tc*B, D) block
# sublane-legal (Tc*B % 8 == 0) and bounded, else the whole sequence.
# ----------------------------------------------------------------------------
def _pick_time_chunk(T, B, max_chunk=32):
    for tc in range(min(T, max_chunk), 0, -1):
        if T % tc == 0 and (tc == T or (tc * B) % 8 == 0):
            return tc
    return T


# ----------------------------------------------------------------------------
# Pallas kernel: one bidirectional LSTM layer over one time chunk.
#   refs layout (inputs, outputs, scratch):
#     inputs : x_fwd[0..n_streams), x_rev[0..n_streams),
#              wx_fwd[0..n_streams), wx_rev[0..n_streams),
#              whh_f, whh_r, b_f, b_r, h0_f, c0_f, h0_r, c0_r
#     outputs: out_f (T*B, H), out_r (T*B, H), mean_out (B, 2H)
#     scratch: hf, cf, hr, cr, acc_f, acc_r   (all (B, H) f32 VMEM)
# ----------------------------------------------------------------------------
def _bilstm_chunk_kernel(*refs, n_streams, hidden, tc, batch, t_total):
    H, B = hidden, batch
    k = 0
    xs_f = refs[k:k + n_streams]; k += n_streams
    xs_r = refs[k:k + n_streams]; k += n_streams
    wxs_f = refs[k:k + n_streams]; k += n_streams
    wxs_r = refs[k:k + n_streams]; k += n_streams
    (whh_f, whh_r, b_f, b_r,
     h0_f, c0_f, h0_r, c0_r) = refs[k:k + 8]; k += 8
    out_f, out_r, mean_out = refs[k:k + 3]; k += 3
    hf, cf, hr, cr, acc_f, acc_r = refs[k:k + 6]

    ci = pl.program_id(0)
    nchunks = pl.num_programs(0)

    @pl.when(ci == 0)
    def _init():
        hf[...] = h0_f[...]
        cf[...] = c0_f[...]
        hr[...] = h0_r[...]
        cr[...] = c0_r[...]
        acc_f[...] = jnp.zeros_like(acc_f)
        acc_r[...] = jnp.zeros_like(acc_r)

    # Chunk-level input projection: one (Tc*B, D) x (D, 4H) matmul per stream,
    # per direction.  Bias is added once per chunk (hoisted broadcast).
    def chunk_proj(x_refs, w_refs, bias_ref):
        proj = None
        for x_ref, w_ref in zip(x_refs, w_refs):
            p = jnp.dot(x_ref[...], w_ref[...],
                        preferred_element_type=jnp.float32)
            proj = p if proj is None else proj + p
        return proj + bias_ref[...]          # (Tc*B, 4H) + (1, 4H)

    p_f = chunk_proj(xs_f, wxs_f, b_f)
    p_r = chunk_proj(xs_r, wxs_r, b_r)

    # PyTorch gate order: i, f, g, o.  (4H == one 128-lane row for H=32; the
    # 32-lane gate extracts are lane-selects -- acceptable at these sizes.)
    def cell(gates, c_prev):
        i = jax.nn.sigmoid(gates[:, 0 * H:1 * H])
        f = jax.nn.sigmoid(gates[:, 1 * H:2 * H])
        g = jnp.tanh(gates[:, 2 * H:3 * H])
        o = jax.nn.sigmoid(gates[:, 3 * H:4 * H])
        c_new = f * c_prev + i * g
        h_new = o * jnp.tanh(c_new)
        return h_new, c_new

    # Statically unrolled loop over the Tc timesteps of this chunk; only the
    # recurrent dot(h, W_hh) remains per step.  Both directions per iteration.
    for s in range(tc):
        r0, r1 = s * B, (s + 1) * B
        gf = p_f[r0:r1, :] + jnp.dot(hf[...], whh_f[...],
                                     preferred_element_type=jnp.float32)
        h_new, c_new = cell(gf, cf[...])
        hf[...] = h_new
        cf[...] = c_new
        out_f[r0:r1, :] = h_new
        acc_f[...] += h_new

        sr = tc - 1 - s                       # reverse direction walks backwards
        q0, q1 = sr * B, (sr + 1) * B
        gr = p_r[q0:q1, :] + jnp.dot(hr[...], whh_r[...],
                                     preferred_element_type=jnp.float32)
        h_newr, c_newr = cell(gr, cr[...])
        hr[...] = h_newr
        cr[...] = c_newr
        out_r[q0:q1, :] = h_newr
        acc_r[...] += h_newr

    @pl.when(ci == nchunks - 1)
    def _finalize():
        inv_t = jnp.float32(1.0 / t_total)
        mean_out[:, 0:H] = acc_f[...] * inv_t
        mean_out[:, H:2 * H] = acc_r[...] * inv_t


def bilstm_layer_pallas(x_streams, wxs_f, wxs_r, whh_f, whh_r, b_f, b_r,
                        h0_f, c0_f, h0_r, c0_r, *, seq_len, batch, hidden):
    """One bidirectional LSTM layer.

    x_streams: list of (T*B, Ds) flattened time-major feature streams.
    Returns (out_fwd (T*B,H), out_rev (T*B,H), mean (B,2H))."""
    T, B, H = seq_len, batch, hidden
    n_streams = len(x_streams)
    tc = _pick_time_chunk(T, B)
    nchunks = T // tc

    fwd_idx = lambda ci: (ci, 0)
    rev_idx = lambda ci: (nchunks - 1 - ci, 0)
    const2 = lambda ci: (0, 0)

    in_specs = []
    for x in x_streams:                                     # forward-chunk views
        in_specs.append(pl.BlockSpec((tc * B, x.shape[-1]), fwd_idx))
    for x in x_streams:                                     # mirrored-chunk views
        in_specs.append(pl.BlockSpec((tc * B, x.shape[-1]), rev_idx))
    for w in wxs_f:
        in_specs.append(pl.BlockSpec(w.shape, const2))
    for w in wxs_r:
        in_specs.append(pl.BlockSpec(w.shape, const2))
    for a in (whh_f, whh_r, b_f, b_r, h0_f, c0_f, h0_r, c0_r):
        in_specs.append(pl.BlockSpec(a.shape, const2))

    out_shape = (
        jax.ShapeDtypeStruct((T * B, H), jnp.float32),      # fwd hidden states
        jax.ShapeDtypeStruct((T * B, H), jnp.float32),      # rev hidden states
        jax.ShapeDtypeStruct((B, 2 * H), jnp.float32),      # time-mean [fwd|rev]
    )
    out_specs = [
        pl.BlockSpec((tc * B, H), fwd_idx),
        pl.BlockSpec((tc * B, H), rev_idx),
        pl.BlockSpec((B, 2 * H), const2),
    ]

    kernel = functools.partial(_bilstm_chunk_kernel, n_streams=n_streams,
                               hidden=H, tc=tc, batch=B, t_total=T)
    args = (list(x_streams) + list(x_streams) + list(wxs_f) + list(wxs_r)
            + [whh_f, whh_r, b_f, b_r, h0_f, c0_f, h0_r, c0_r])

    return pl.pallas_call(
        kernel,
        out_shape=out_shape,
        grid_spec=pltpu.PrefetchScalarGridSpec(
            num_scalar_prefetch=0,
            grid=(nchunks,),
            in_specs=in_specs,
            out_specs=out_specs,
            scratch_shapes=[pltpu.VMEM((B, H), jnp.float32)] * 6,
        ),
        compiler_params=pltpu.CompilerParams(
            dimension_semantics=("arbitrary",)),  # time recurrence is sequential
    )(*args)


# ----------------------------------------------------------------------------
# Parameter construction (deterministic, mirrors nn.Embedding / nn.LSTM shapes)
# ----------------------------------------------------------------------------
def init_params(key, vocab_size, input_dim, hidden, num_layer, num_dirs=2):
    k_emb, key = jax.random.split(key)
    embedding = jax.random.normal(k_emb, (vocab_size, input_dim), jnp.float32)
    embedding = embedding.at[0].set(0.0)  # padding_idx=0

    bound = 1.0 / math.sqrt(hidden)
    wih, whh, bias = [], [], []
    for l in range(num_layer):
        layer_in = input_dim if l == 0 else num_dirs * hidden
        wih_l, whh_l, b_l = [], [], []
        for d in range(num_dirs):
            key, k1, k2, k3, k4 = jax.random.split(key, 5)
            # stored pre-transposed for the kernel: (D_in, 4H) and (H, 4H)
            wih_l.append(jax.random.uniform(k1, (layer_in, 4 * hidden),
                                            jnp.float32, -bound, bound))
            whh_l.append(jax.random.uniform(k2, (hidden, 4 * hidden),
                                            jnp.float32, -bound, bound))
            b_ih = jax.random.uniform(k3, (4 * hidden,), jnp.float32, -bound, bound)
            b_hh = jax.random.uniform(k4, (4 * hidden,), jnp.float32, -bound, bound)
            b_l.append((b_ih + b_hh).reshape(1, 4 * hidden))
        wih.append(wih_l)
        whh.append(whh_l)
        bias.append(b_l)
    return {"embedding": embedding, "wih": wih, "whh": whh, "b": bias}


# ----------------------------------------------------------------------------
# Forward pass (glue in JAX, hot path in Pallas)
# ----------------------------------------------------------------------------
def embed_sentence_forward(tokens, params, h0, c0, *, num_layer, hidden):
    """tokens: (B, T) int32 -> (B, 2*hidden) float32."""
    B, T = tokens.shape
    emb = jnp.take(params["embedding"], tokens, axis=0)        # (B, T, D) gather (glue)
    x = jnp.transpose(emb, (1, 0, 2)).reshape(T * B, -1)       # flattened time-major

    streams = [x]
    mean = None
    for l in range(num_layer):
        wih_f, wih_r = params["wih"][l][0], params["wih"][l][1]
        if l == 0:
            wxs_f, wxs_r = [wih_f], [wih_r]
        else:  # previous layer's fwd / rev streams get the matching weight rows
            wxs_f = [wih_f[:hidden], wih_f[hidden:]]
            wxs_r = [wih_r[:hidden], wih_r[hidden:]]
        out_f, out_r, mean = bilstm_layer_pallas(
            streams, wxs_f, wxs_r,
            params["whh"][l][0], params["whh"][l][1],
            params["b"][l][0], params["b"][l][1],
            h0[2 * l], c0[2 * l], h0[2 * l + 1], c0[2 * l + 1],
            seq_len=T, batch=B, hidden=hidden)
        streams = [out_f, out_r]
        # TODO(synk): inter-layer dropout (p=0.2) is training-only; omitted (inference no-op).

    return mean                                               # (B, 2H) of last layer


# ----------------------------------------------------------------------------
# Pure-JAX reference (structural sanity check)
# ----------------------------------------------------------------------------
def _ref_dir(x_tm, h0, c0, wih, whh, b, hidden, reverse):
    xs = x_tm[::-1] if reverse else x_tm

    def step(carry, x_t):
        h, c = carry
        gates = x_t @ wih + h @ whh + b[0]
        i = jax.nn.sigmoid(gates[:, 0 * hidden:1 * hidden])
        f = jax.nn.sigmoid(gates[:, 1 * hidden:2 * hidden])
        g = jnp.tanh(gates[:, 2 * hidden:3 * hidden])
        o = jax.nn.sigmoid(gates[:, 3 * hidden:4 * hidden])
        c_new = f * c + i * g
        h_new = o * jnp.tanh(c_new)
        return (h_new, c_new), h_new

    _, ys = jax.lax.scan(step, (h0, c0), xs)
    return ys[::-1] if reverse else ys


def reference_forward(tokens, params, h0, c0, *, num_layer, hidden):
    emb = jnp.take(params["embedding"], tokens, axis=0)
    layer_in = jnp.transpose(emb, (1, 0, 2))
    for l in range(num_layer):
        outs = [_ref_dir(layer_in, h0[l * 2 + d], c0[l * 2 + d],
                         params["wih"][l][d], params["whh"][l][d],
                         params["b"][l][d], hidden, reverse=(d == 1))
                for d in range(2)]
        layer_in = jnp.concatenate(outs, axis=-1)
    return jnp.mean(layer_in, axis=0)


# ----------------------------------------------------------------------------
if __name__ == "__main__":
    VOCAB, INPUT_DIM, HIDDEN, NUM_LAYER = 20, 16, 32, 2
    BATCH, SEQ = 2, 8

    key = jax.random.PRNGKey(0)
    k_tok, k_par, k_h, k_c = jax.random.split(key, 4)

    tokens = jax.random.randint(k_tok, (BATCH, SEQ), 0, VOCAB, dtype=jnp.int32)
    params = init_params(k_par, VOCAB, INPUT_DIM, HIDDEN, NUM_LAYER)
    # matches torch.rand((2*num_layer, batch, hidden)) init states (deterministic here)
    h0 = jax.random.uniform(k_h, (2 * NUM_LAYER, BATCH, HIDDEN), jnp.float32)
    c0 = jax.random.uniform(k_c, (2 * NUM_LAYER, BATCH, HIDDEN), jnp.float32)

    fwd = jax.jit(functools.partial(embed_sentence_forward,
                                    num_layer=NUM_LAYER, hidden=HIDDEN))
    out = fwd(tokens, params, h0, c0)
    out = jax.block_until_ready(out)

    assert out.shape == (BATCH, 2 * HIDDEN), out.shape
    assert bool(jnp.all(jnp.isfinite(out)))

    ref = reference_forward(tokens, params, h0, c0,
                            num_layer=NUM_LAYER, hidden=HIDDEN)
    assert bool(jnp.allclose(out, ref, atol=2e-2, rtol=2e-2)), \
        float(jnp.max(jnp.abs(out - ref)))

    print("KERNEL_OK")
</pallas_src>

<mosaic_0001>
module attributes {stable_mosaic.version = 11 : i64} {
  func.func @_bilstm_chunk_kernel(%arg0: i32, %arg1: memref<16x16xf32, #tpu.memory_space<vmem>>, %arg2: memref<16x16xf32, #tpu.memory_space<vmem>>, %arg3: memref<16x128xf32, #tpu.memory_space<vmem>>, %arg4: memref<16x128xf32, #tpu.memory_space<vmem>>, %arg5: memref<32x128xf32, #tpu.memory_space<vmem>>, %arg6: memref<32x128xf32, #tpu.memory_space<vmem>>, %arg7: memref<1x128xf32, #tpu.memory_space<vmem>>, %arg8: memref<1x128xf32, #tpu.memory_space<vmem>>, %arg9: memref<2x32xf32, #tpu.memory_space<vmem>>, %arg10: memref<2x32xf32, #tpu.memory_space<vmem>>, %arg11: memref<2x32xf32, #tpu.memory_space<vmem>>, %arg12: memref<2x32xf32, #tpu.memory_space<vmem>>, %arg13: memref<16x32xf32, #tpu.memory_space<vmem>>, %arg14: memref<16x32xf32, #tpu.memory_space<vmem>>, %arg15: memref<2x64xf32, #tpu.memory_space<vmem>>, %arg16: memref<2x32xf32, #tpu.memory_space<vmem>>, %arg17: memref<2x32xf32, #tpu.memory_space<vmem>>, %arg18: memref<2x32xf32, #tpu.memory_space<vmem>>, %arg19: memref<2x32xf32, #tpu.memory_space<vmem>>, %arg20: memref<2x32xf32, #tpu.memory_space<vmem>>, %arg21: memref<2x32xf32, #tpu.memory_space<vmem>>) attributes {dimension_semantics = [#tpu.dimension_semantics<arbitrary>], iteration_bounds = array<i64: 1>, scalar_prefetch = 0 : i64, scratch_operands = 6 : i64, tpu.core_type = #tpu.core_type<tc>, window_params = [{transform_indices = @transform_0, window_bounds = array<i64: 16, 16>}, {transform_indices = @transform_1, window_bounds = array<i64: 16, 16>}, {pipeline_mode = #tpu.pipeline_mode<synchronous>, transform_indices = @transform_2, window_bounds = array<i64: 16, 128>}, {pipeline_mode = #tpu.pipeline_mode<synchronous>, transform_indices = @transform_3, window_bounds = array<i64: 16, 128>}, {pipeline_mode = #tpu.pipeline_mode<synchronous>, transform_indices = @transform_4, window_bounds = array<i64: 32, 128>}, {pipeline_mode = #tpu.pipeline_mode<synchronous>, transform_indices = @transform_5, window_bounds = array<i64: 32, 128>}, {pipeline_mode = #tpu.pipeline_mode<synchronous>, transform_indices = @transform_6, window_bounds = array<i64: 1, 128>}, {pipeline_mode = #tpu.pipeline_mode<synchronous>, transform_indices = @transform_7, window_bounds = array<i64: 1, 128>}, {pipeline_mode = #tpu.pipeline_mode<synchronous>, transform_indices = @transform_8, window_bounds = array<i64: 2, 32>}, {pipeline_mode = #tpu.pipeline_mode<synchronous>, transform_indices = @transform_9, window_bounds = array<i64: 2, 32>}, {pipeline_mode = #tpu.pipeline_mode<synchronous>, transform_indices = @transform_10, window_bounds = array<i64: 2, 32>}, {pipeline_mode = #tpu.pipeline_mode<synchronous>, transform_indices = @transform_11, window_bounds = array<i64: 2, 32>}, {transform_indices = @transform_12, window_bounds = array<i64: 16, 32>}, {transform_indices = @transform_13, window_bounds = array<i64: 16, 32>}, {pipeline_mode = #tpu.pipeline_mode<synchronous>, transform_indices = @transform_14, window_bounds = array<i64: 2, 64>}]} {
    %c0_i32 = arith.constant 0 : i32
    %0 = arith.cmpi eq, %arg0, %c0_i32 : i32
    %1 = arith.extui %0 : i1 to i32
    %c0_i32_0 = arith.constant 0 : i32
    %2 = arith.cmpi ne, %1, %c0_i32_0 : i32
    scf.if %2 {
      %c0_328 = arith.constant 0 : index
      %c0_329 = arith.constant 0 : index
      %610 = vector.load %arg9[%c0_328, %c0_329] : memref<2x32xf32, #tpu.memory_space<vmem>>, vector<2x32xf32>
      %c0_330 = arith.constant 0 : index
      %c0_331 = arith.constant 0 : index
      %611 = vector.load %arg16[%c0_330, %c0_331] : memref<2x32xf32, #tpu.memory_space<vmem>>, vector<2x32xf32>
      tpu.vector_store %arg16[%c0_330, %c0_331], %610 {strides = array<i32>} : memref<2x32xf32, #tpu.memory_space<vmem>>, vector<2x32xf32>,
      %c0_332 = arith.constant 0 : index
      %c0_333 = arith.constant 0 : index
      %612 = vector.load %arg10[%c0_332, %c0_333] : memref<2x32xf32, #tpu.memory_space<vmem>>, vector<2x32xf32>
      %c0_334 = arith.constant 0 : index
      %c0_335 = arith.constant 0 : index
      %613 = vector.load %arg17[%c0_334, %c0_335] : memref<2x32xf32, #tpu.memory_space<vmem>>, vector<2x32xf32>
      tpu.vector_store %arg17[%c0_334, %c0_335], %612 {strides = array<i32>} : memref<2x32xf32, #tpu.memory_space<vmem>>, vector<2x32xf32>,
      %c0_336 = arith.constant 0 : index
      %c0_337 = arith.constant 0 : index
      %614 = vector.load %arg11[%c0_336, %c0_337] : memref<2x32xf32, #tpu.memory_space<vmem>>, vector<2x32xf32>
      %c0_338 = arith.constant 0 : index
      %c0_339 = arith.constant 0 : index
      %615 = vector.load %arg18[%c0_338, %c0_339] : memref<2x32xf32, #tpu.memory_space<vmem>>, vector<2x32xf32>
      tpu.vector_store %arg18[%c0_338, %c0_339], %614 {strides = array<i32>} : memref<2x32xf32, #tpu.memory_space<vmem>>, vector<2x32xf32>,
      %c0_340 = arith.constant 0 : index
      %c0_341 = arith.constant 0 : index
      %616 = vector.load %arg12[%c0_340, %c0_341] : memref<2x32xf32, #tpu.memory_space<vmem>>, vector<2x32xf32>
      %c0_342 = arith.constant 0 : index
      %c0_343 = arith.constant 0 : index
      %617 = vector.load %arg19[%c0_342, %c0_343] : memref<2x32xf32, #tpu.memory_space<vmem>>, vector<2x32xf32>
      tpu.vector_store %arg19[%c0_342, %c0_343], %616 {strides = array<i32>} : memref<2x32xf32, #tpu.memory_space<vmem>>, vector<2x32xf32>,
      %cst_344 = arith.constant 0.000000e+00 : f32
      %618 = vector.broadcast %cst_344 : f32 to vector<2x32xf32>
      %c0_345 = arith.constant 0 : index
      %c0_346 = arith.constant 0 : index
      %619 = vector.load %arg20[%c0_345, %c0_346] : memref<2x32xf32, #tpu.memory_space<vmem>>, vector<2x32xf32>
      tpu.vector_store %arg20[%c0_345, %c0_346], %618 {strides = array<i32>} : memref<2x32xf32, #tpu.memory_space<vmem>>, vector<2x32xf32>,
      %cst_347 = arith.constant 0.000000e+00 : f32
      %620 = vector.broadcast %cst_347 : f32 to vector<2x32xf32>
      %c0_348 = arith.constant 0 : index
      %c0_349 = arith.constant 0 : index
      %621 = vector.load %arg21[%c0_348, %c0_349] : memref<2x32xf32, #tpu.memory_space<vmem>>, vector<2x32xf32>
      tpu.vector_store %arg21[%c0_348, %c0_349], %620 {strides = array<i32>} : memref<2x32xf32, #tpu.memory_space<vmem>>, vector<2x32xf32>,
    } else {
    }
    %c0 = arith.constant 0 : index
    %c0_1 = arith.constant 0 : index
    %3 = vector.load %arg1[%c0, %c0_1] : memref<16x16xf32, #tpu.memory_space<vmem>>, vector<16x16xf32>
    %c0_2 = arith.constant 0 : index
    %c0_3 = arith.constant 0 : index
    %4 = vector.load %arg3[%c0_2, %c0_3] : memref<16x128xf32, #tpu.memory_space<vmem>>, vector<16x128xf32>
    %cst = arith.constant dense<0.000000e+00> : vector<16x128xf32>
    %5 = tpu.matmul %3, %4, %cst {dimension_numbers = #tpu.dot_dimension_numbers<[1], [0], [0], [1], [0, 0, 1, 1], [], []>} : vector<16x16xf32>, vector<16x128xf32>, vector<16x128xf32> -> vector<16x128xf32>
    %c0_4 = arith.constant 0 : index
    %c0_5 = arith.constant 0 : index
    %6 = vector.load %arg7[%c0_4, %c0_5] : memref<1x128xf32, #tpu.memory_space<vmem>>, vector<1x128xf32>
    %7 = vector.broadcast %6 : vector<1x128xf32> to vector<16x128xf32>
    %8 = arith.addf %5, %7 : vector<16x128xf32>
    %c0_6 = arith.constant 0 : index
    %c0_7 = arith.constant 0 : index
    %9 = vector.load %arg2[%c0_6, %c0_7] : memref<16x16xf32, #tpu.memory_space<vmem>>, vector<16x16xf32>
    %c0_8 = arith.constant 0 : index
    %c0_9 = arith.constant 0 : index
    %10 = vector.load %arg4[%c0_8, %c0_9] : memref<16x128xf32, #tpu.memory_space<vmem>>, vector<16x128xf32>
    %cst_10 = arith.constant dense<0.000000e+00> : vector<16x128xf32>
    %11 = tpu.matmul %9, %10, %cst_10 {dimension_numbers = #tpu.dot_dimension_numbers<[1], [0], [0], [1], [0, 0, 1, 1], [], []>} : vector<16x16xf32>, vector<16x128xf32>, vector<16x128xf32> -> vector<16x128xf32>
    %c0_11 = arith.constant 0 : index
    %c0_12 = arith.constant 0 : index
    %12 = vector.load %arg8[%c0_11, %c0_12] : memref<1x128xf32, #tpu.memory_space<vmem>>, vector<1x128xf32>
    %13 = vector.broadcast %12 : vector<1x128xf32> to vector<16x128xf32>
    %14 = arith.addf %11, %13 : vector<16x128xf32>
    %15 = vector.extract_strided_slice %8 {offsets = [0, 0], sizes = [2, 128], strides = [1, 1]} : vector<16x128xf32> to vector<2x128xf32>
    %c0_13 = arith.constant 0 : index
    %c0_14 = arith.constant 0 : index
    %16 = vector.load %arg16[%c0_13, %c0_14] : memref<2x32xf32, #tpu.memory_space<vmem>>, vector<2x32xf32>
    %c0_15 = arith.constant 0 : index
    %c0_16 = arith.constant 0 : index
    %17 = vector.load %arg5[%c0_15, %c0_16] : memref<32x128xf32, #tpu.memory_space<vmem>>, vector<32x128xf32>
    %cst_17 = arith.constant dense<0.000000e+00> : vector<2x128xf32>
    %18 = tpu.matmul %16, %17, %cst_17 {dimension_numbers = #tpu.dot_dimension_numbers<[1], [0], [0], [1], [0, 0, 1, 1], [], []>} : vector<2x32xf32>, vector<32x128xf32>, vector<2x128xf32> -> vector<2x128xf32>
    %19 = arith.addf %15, %18 : vector<2x128xf32>
    %c0_18 = arith.constant 0 : index
    %c0_19 = arith.constant 0 : index
    %20 = vector.load %arg17[%c0_18, %c0_19] : memref<2x32xf32, #tpu.memory_space<vmem>>, vector<2x32xf32>
    %21 = vector.extract_strided_slice %19 {offsets = [0, 0], sizes = [2, 32], strides = [1, 1]} : vector<2x128xf32> to vector<2x32xf32>
    %22 = arith.negf %21 : vector<2x32xf32>
    %23 = math.exp %22 : vector<2x32xf32>
    %cst_20 = arith.constant 1.000000e+00 : f32
    %24 = vector.broadcast %cst_20 : f32 to vector<2x32xf32>
    %25 = arith.addf %24, %23 : vector<2x32xf32>
    %26 = arith.divf %24, %25 : vector<2x32xf32>
    %27 = vector.extract_strided_slice %19 {offsets = [0, 32], sizes = [2, 32], strides = [1, 1]} : vector<2x128xf32> to vector<2x32xf32>
    %28 = arith.negf %27 : vector<2x32xf32>
    %29 = math.exp %28 : vector<2x32xf32>
    %cst_21 = arith.constant 1.000000e+00 : f32
    %30 = vector.broadcast %cst_21 : f32 to vector<2x32xf32>
    %31 = arith.addf %30, %29 : vector<2x32xf32>
    %32 = arith.divf %30, %31 : vector<2x32xf32>
    %33 = vector.extract_strided_slice %19 {offsets = [0, 64], sizes = [2, 32], strides = [1, 1]} : vector<2x128xf32> to vector<2x32xf32>
    %34 = math.tanh %33 : vector<2x32xf32>
    %35 = vector.extract_strided_slice %19 {offsets = [0, 96], sizes = [2, 32], strides = [1, 1]} : vector<2x128xf32> to vector<2x32xf32>
    %36 = arith.negf %35 : vector<2x32xf32>
    %37 = math.exp %36 : vector<2x32xf32>
    %cst_22 = arith.constant 1.000000e+00 : f32
    %38 = vector.broadcast %cst_22 : f32 to vector<2x32xf32>
    %39 = arith.addf %38, %37 : vector<2x32xf32>
    %40 = arith.divf %38, %39 : vector<2x32xf32>
    %41 = arith.mulf %32, %20 : vector<2x32xf32>
    %42 = arith.mulf %26, %34 : vector<2x32xf32>
    %43 = arith.addf %41, %42 : vector<2x32xf32>
    %44 = math.tanh %43 : vector<2x32xf32>
    %45 = arith.mulf %40, %44 : vector<2x32xf32>
    %c0_23 = arith.constant 0 : index
    %c0_24 = arith.constant 0 : index
    %46 = vector.load %arg16[%c0_23, %c0_24] : memref<2x32xf32, #tpu.memory_space<vmem>>, vector<2x32xf32>
    tpu.vector_store %arg16[%c0_23, %c0_24], %45 {strides = array<i32>} : memref<2x32xf32, #tpu.memory_space<vmem>>, vector<2x32xf32>,
    %c0_25 = arith.constant 0 : index
    %c0_26 = arith.constant 0 : index
    %47 = vector.load %arg17[%c0_25, %c0_26] : memref<2x32xf32, #tpu.memory_space<vmem>>, vector<2x32xf32>
    tpu.vector_store %arg17[%c0_25, %c0_26], %43 {strides = array<i32>} : memref<2x32xf32, #tpu.memory_space<vmem>>, vector<2x32xf32>,
    %c0_27 = arith.constant 0 : index
    %c0_28 = arith.constant 0 : index
    %48 = vector.load %arg13[%c0_27, %c0_28] : memref<16x32xf32, #tpu.memory_space<vmem>>, vector<2x32xf32>
    tpu.vector_store %arg13[%c0_27, %c0_28], %45 {strides = array<i32>} : memref<16x32xf32, #tpu.memory_space<vmem>>, vector<2x32xf32>,
    %c0_29 = arith.constant 0 : index
    %c0_30 = arith.constant 0 : index
    %49 = vector.load %arg20[%c0_29, %c0_30] : memref<2x32xf32, #tpu.memory_space<vmem>>, vector<2x32xf32>
    %50 = arith.addf %49, %45 : vector<2x32xf32>
    %c0_31 = arith.constant 0 : index
    %c0_32 = arith.constant 0 : index
    %51 = vector.load %arg20[%c0_31, %c0_32] : memref<2x32xf32, #tpu.memory_space<vmem>>, vector<2x32xf32>
    tpu.vector_store %arg20[%c0_31, %c0_32], %50 {strides = array<i32>} : memref<2x32xf32, #tpu.memory_space<vmem>>, vector<2x32xf32>,
    %52 = vector.extract_strided_slice %14 {offsets = [14, 0], sizes = [2, 128], strides = [1, 1]} : vector<16x128xf32> to vector<2x128xf32>
    %c0_33 = arith.constant 0 : index
    %c0_34 = arith.constant 0 : index
    %53 = vector.load %arg18[%c0_33, %c0_34] : memref<2x32xf32, #tpu.memory_space<vmem>>, vector<2x32xf32>
    %c0_35 = arith.constant 0 : index
    %c0_36 = arith.constant 0 : index
    %54 = vector.load %arg6[%c0_35, %c0_36] : memref<32x128xf32, #tpu.memory_space<vmem>>, vector<32x128xf32>
    %cst_37 = arith.constant dense<0.000000e+00> : vector<2x128xf32>
    %55 = tpu.matmul %53, %54, %cst_37 {dimension_numbers = #tpu.dot_dimension_numbers<[1], [0], [0], [1], [0, 0, 1, 1], [], []>} : vector<2x32xf32>, vector<32x128xf32>, vector<2x128xf32> -> vector<2x128xf32>
    %56 = arith.addf %52, %55 : vector<2x128xf32>
    %c0_38 = arith.constant 0 : index
    %c0_39 = arith.constant 0 : index
    %57 = vector.load %arg19[%c0_38, %c0_39] : memref<2x32xf32, #tpu.memory_space<vmem>>, vector<2x32xf32>
    %58 = vector.extract_strided_slice %56 {offsets = [0, 0], sizes = [2, 32], strides = [1, 1]} : vector<2x128xf32> to vector<2x32xf32>
    %59 = arith.negf %58 : vector<2x32xf32>
    %60 = math.exp %59 : vector<2x32xf32>
    %cst_40 = arith.constant 1.000000e+00 : f32
    %61 = vector.broadcast %cst_40 : f32 to vector<2x32xf32>
    %62 = arith.addf %61, %60 : vector<2x32xf32>
    %63 = arith.divf %61, %62 : vector<2x32xf32>
    %64 = vector.extract_strided_slice %56 {offsets = [0, 32], sizes = [2, 32], strides = [1, 1]} : vector<2x128xf32> to vector<2x32xf32>
    %65 = arith.negf %64 : vector<2x32xf32>
    %66 = math.exp %65 : vector<2x32xf32>
    %cst_41 = arith.constant 1.000000e+00 : f32
    %67 = vector.broadcast %cst_41 : f32 to vector<2x32xf32>
    %68 = arith.addf %67, %66 : vector<2x32xf32>
    %69 = arith.divf %67, %68 : vector<2x32xf32>
    %70 = vector.extract_strided_slice %56 {offsets = [0, 64], sizes = [2, 32], strides = [1, 1]} : vector<2x128xf32> to vector<2x32xf32>
    %71 = math.tanh %70 : vector<2x32xf32>
    %72 = vector.extract_strided_slice %56 {offsets = [0, 96], sizes = [2, 32], strides = [1, 1]} : vector<2x128xf32> to vector<2x32xf32>
    %73 = arith.negf %72 : vector<2x32xf32>
    %74 = math.exp %73 : vector<2x32xf32>
    %cst_42 = arith.constant 1.000000e+00 : f32
    %75 = vector.broadcast %cst_42 : f32 to vector<2x32xf32>
    %76 = arith.addf %75, %74 : vector<2x32xf32>
    %77 = arith.divf %75, %76 : vector<2x32xf32>
    %78 = arith.mulf %69, %57 : vector<2x32xf32>
    %79 = arith.mulf %63, %71 : vector<2x32xf32>
    %80 = arith.addf %78, %79 : vector<2x32xf32>
    %81 = math.tanh %80 : vector<2x32xf32>
    %82 = arith.mulf %77, %81 : vector<2x32xf32>
    %c0_43 = arith.constant 0 : index
    %c0_44 = arith.constant 0 : index
    %83 = vector.load %arg18[%c0_43, %c0_44] : memref<2x32xf32, #tpu.memory_space<vmem>>, vector<2x32xf32>
    tpu.vector_store %arg18[%c0_43, %c0_44], %82 {strides = array<i32>} : memref<2x32xf32, #tpu.memory_space<vmem>>, vector<2x32xf32>,
    %c0_45 = arith.constant 0 : index
    %c0_46 = arith.constant 0 : index
    %84 = vector.load %arg19[%c0_45, %c0_46] : memref<2x32xf32, #tpu.memory_space<vmem>>, vector<2x32xf32>
    tpu.vector_store %arg19[%c0_45, %c0_46], %80 {strides = array<i32>} : memref<2x32xf32, #tpu.memory_space<vmem>>, vector<2x32xf32>,
    %c14 = arith.constant 14 : index
    %c0_47 = arith.constant 0 : index
    %85 = vector.load %arg14[%c14, %c0_47] : memref<16x32xf32, #tpu.memory_space<vmem>>, vector<2x32xf32>
    tpu.vector_store %arg14[%c14, %c0_47], %82 {strides = array<i32>} : memref<16x32xf32, #tpu.memory_space<vmem>>, vector<2x32xf32>,
    %c0_48 = arith.constant 0 : index
    %c0_49 = arith.constant 0 : index
    %86 = vector.load %arg21[%c0_48, %c0_49] : memref<2x32xf32, #tpu.memory_space<vmem>>, vector<2x32xf32>
    %87 = arith.addf %86, %82 : vector<2x32xf32>
    %c0_50 = arith.constant 0 : index
    %c0_51 = arith.constant 0 : index
    %88 = vector.load %arg21[%c0_50, %c0_51] : memref<2x32xf32, #tpu.memory_space<vmem>>, vector<2x32xf32>
    tpu.vector_store %arg21[%c0_50, %c0_51], %87 {strides = array<i32>} : memref<2x32xf32, #tpu.memory_space<vmem>>, vector<2x32xf32>,
    %89 = vector.extract_strided_slice %8 {offsets = [2, 0], sizes = [2, 128], strides = [1, 1]} : vector<16x128xf32> to vector<2x128xf32>
    %c0_52 = arith.constant 0 : index
    %c0_53 = arith.constant 0 : index
    %90 = vector.load %arg16[%c0_52, %c0_53] : memref<2x32xf32, #tpu.memory_space<vmem>>, vector<2x32xf32>
    %c0_54 = arith.constant 0 : index
    %c0_55 = arith.constant 0 : index
    %91 = vector.load %arg5[%c0_54, %c0_55] : memref<32x128xf32, #tpu.memory_space<vmem>>, vector<32x128xf32>
    %cst_56 = arith.constant dense<0.000000e+00> : vector<2x128xf32>
    %92 = tpu.matmul %90, %91, %cst_56 {dimension_numbers = #tpu.dot_dimension_numbers<[1], [0], [0], [1], [0, 0, 1, 1], [], []>} : vector<2x32xf32>, vector<32x128xf32>, vector<2x128xf32> -> vector<2x128xf32>
    %93 = arith.addf %89, %92 : vector<2x128xf32>
    %c0_57 = arith.constant 0 : index
    %c0_58 = arith.constant 0 : index
    %94 = vector.load %arg17[%c0_57, %c0_58] : memref<2x32xf32, #tpu.memory_space<vmem>>, vector<2x32xf32>
    %95 = vector.extract_strided_slice %93 {offsets = [0, 0], sizes = [2, 32], strides = [1, 1]} : vector<2x128xf32> to vector<2x32xf32>
    %96 = arith.negf %95 : vector<2x32xf32>
    %97 = math.exp %96 : vector<2x32xf32>
    %cst_59 = arith.constant 1.000000e+00 : f32
    %98 = vector.broadcast %cst_59 : f32 to vector<2x32xf32>
    %99 = arith.addf %98, %97 : vector<2x32xf32>
    %100 = arith.divf %98, %99 : vector<2x32xf32>
    %101 = vector.extract_strided_slice %93 {offsets = [0, 32], sizes = [2, 32], strides = [1, 1]} : vector<2x128xf32> to vector<2x32xf32>
    %102 = arith.negf %101 : vector<2x32xf32>
    %103 = math.exp %102 : vector<2x32xf32>
    %cst_60 = arith.constant 1.000000e+00 : f32
    %104 = vector.broadcast %cst_60 : f32 to vector<2x32xf32>
    %105 = arith.addf %104, %103 : vector<2x32xf32>
    %106 = arith.divf %104, %105 : vector<2x32xf32>
    %107 = vector.extract_strided_slice %93 {offsets = [0, 64], sizes = [2, 32], strides = [1, 1]} : vector<2x128xf32> to vector<2x32xf32>
    %108 = math.tanh %107 : vector<2x32xf32>
    %109 = vector.extract_strided_slice %93 {offsets = [0, 96], sizes = [2, 32], strides = [1, 1]} : vector<2x128xf32> to vector<2x32xf32>
    %110 = arith.negf %109 : vector<2x32xf32>
    %111 = math.exp %110 : vector<2x32xf32>
    %cst_61 = arith.constant 1.000000e+00 : f32
    %112 = vector.broadcast %cst_61 : f32 to vector<2x32xf32>
    %113 = arith.addf %112, %111 : vector<2x32xf32>
    %114 = arith.divf %112, %113 : vector<2x32xf32>
    %115 = arith.mulf %106, %94 : vector<2x32xf32>
    %116 = arith.mulf %100, %108 : vector<2x32xf32>
    %117 = arith.addf %115, %116 : vector<2x32xf32>
    %118 = math.tanh %117 : vector<2x32xf32>
    %119 = arith.mulf %114, %118 : vector<2x32xf32>
    %c0_62 = arith.constant 0 : index
    %c0_63 = arith.constant 0 : index
    %120 = vector.load %arg16[%c0_62, %c0_63] : memref<2x32xf32, #tpu.memory_space<vmem>>, vector<2x32xf32>
    tpu.vector_store %arg16[%c0_62, %c0_63], %119 {strides = array<i32>} : memref<2x32xf32, #tpu.memory_space<vmem>>, vector<2x32xf32>,
    %c0_64 = arith.constant 0 : index
    %c0_65 = arith.constant 0 : index
    %121 = vector.load %arg17[%c0_64, %c0_65] : memref<2x32xf32, #tpu.memory_space<vmem>>, vector<2x32xf32>
    tpu.vector_store %arg17[%c0_64, %c0_65], %117 {strides = array<i32>} : memref<2x32xf32, #tpu.memory_space<vmem>>, vector<2x32xf32>,
    %c2 = arith.constant 2 : index
    %c0_66 = arith.constant 0 : index
    %122 = vector.load %arg13[%c2, %c0_66] : memref<16x32xf32, #tpu.memory_space<vmem>>, vector<2x32xf32>
    tpu.vector_store %arg13[%c2, %c0_66], %119 {strides = array<i32>} : memref<16x32xf32, #tpu.memory_space<vmem>>, vector<2x32xf32>,
    %c0_67 = arith.constant 0 : index
    %c0_68 = arith.constant 0 : index
    %123 = vector.load %arg20[%c0_67, %c0_68] : memref<2x32xf32, #tpu.memory_space<vmem>>, vector<2x32xf32>
    %124 = arith.addf %123, %119 : vector<2x32xf32>
    %c0_69 = arith.constant 0 : index
    %c0_70 = arith.constant 0 : index
    %125 = vector.load %arg20[%c0_69, %c0_70] : memref<2x32xf32, #tpu.memory_space<vmem>>, vector<2x32xf32>
    tpu.vector_store %arg20[%c0_69, %c0_70], %124 {strides = array<i32>} : memref<2x32xf32, #tpu.memory_space<vmem>>, vector<2x32xf32>,
    %126 = vector.extract_strided_slice %14 {offsets = [12, 0], sizes = [2, 128], strides = [1, 1]} : vector<16x128xf32> to vector<2x128xf32>
    %c0_71 = arith.constant 0 : index
    %c0_72 = arith.constant 0 : index
    %127 = vector.load %arg18[%c0_71, %c0_72] : memref<2x32xf32, #tpu.memory_space<vmem>>, vector<2x32xf32>
    %c0_73 = arith.constant 0 : index
    %c0_74 = arith.constant 0 : index
    %128 = vector.load %arg6[%c0_73, %c0_74] : memref<32x128xf32, #tpu.memory_space<vmem>>, vector<32x128xf32>
    %cst_75 = arith.constant dense<0.000000e+00> : vector<2x128xf32>
    %129 = tpu.matmul %127, %128, %cst_75 {dimension_numbers = #tpu.dot_dimension_numbers<[1], [0], [0], [1], [0, 0, 1, 1], [], []>} : vector<2x32xf32>, vector<32x128xf32>, vector<2x128xf32> -> vector<2x128xf32>
    %130 = arith.addf %126, %129 : vector<2x128xf32>
    %c0_76 = arith.constant 0 : index
    %c0_77 = arith.constant 0 : index
    %131 = vector.load %arg19[%c0_76, %c0_77] : memref<2x32xf32, #tpu.memory_space<vmem>>, vector<2x32xf32>
    %132 = vector.extract_strided_slice %130 {offsets = [0, 0], sizes = [2, 32], strides = [1, 1]} : vector<2x128xf32> to vector<2x32xf32>
    %133 = arith.negf %132 : vector<2x32xf32>
    %134 = math.exp %133 : vector<2x32xf32>
    %cst_78 = arith.constant 1.000000e+00 : f32
    %135 = vector.broadcast %cst_78 : f32 to vector<2x32xf32>
    %136 = arith.addf %135, %134 : vector<2x32xf32>
    %137 = arith.divf %135, %136 : vector<2x32xf32>
    %138 = vector.extract_strided_slice %130 {offsets = [0, 32], sizes = [2, 32], strides = [1, 1]} : vector<2x128xf32> to vector<2x32xf32>
    %139 = arith.negf %138 : vector<2x32xf32>
    %140 = math.exp %139 : vector<2x32xf32>
    %cst_79 = arith.constant 1.000000e+00 : f32
    %141 = vector.broadcast %cst_79 : f32 to vector<2x32xf32>
    %142 = arith.addf %141, %140 : vector<2x32xf32>
    %143 = arith.divf %141, %142 : vector<2x32xf32>
    %144 = vector.extract_strided_slice %130 {offsets = [0, 64], sizes = [2, 32], strides = [1, 1]} : vector<2x128xf32> to vector<2x32xf32>
    %145 = math.tanh %144 : vector<2x32xf32>
    %146 = vector.extract_strided_slice %130 {offsets = [0, 96], sizes = [2, 32], strides = [1, 1]} : vector<2x128xf32> to vector<2x32xf32>
    %147 = arith.negf %146 : vector<2x32xf32>
    %148 = math.exp %147 : vector<2x32xf32>
    %cst_80 = arith.constant 1.000000e+00 : f32
    %149 = vector.broadcast %cst_80 : f32 to vector<2x32xf32>
    %150 = arith.addf %149, %148 : vector<2x32xf32>
    %151 = arith.divf %149, %150 : vector<2x32xf32>
    %152 = arith.mulf %143, %131 : vector<2x32xf32>
    %153 = arith.mulf %137, %145 : vector<2x32xf32>
    %154 = arith.addf %152, %153 : vector<2x32xf32>
    %155 = math.tanh %154 : vector<2x32xf32>
    %156 = arith.mulf %151, %155 : vector<2x32xf32>
    %c0_81 = arith.constant 0 : index
    %c0_82 = arith.constant 0 : index
    %157 = vector.load %arg18[%c0_81, %c0_82] : memref<2x32xf32, #tpu.memory_space<vmem>>, vector<2x32xf32>
    tpu.vector_store %arg18[%c0_81, %c0_82], %156 {strides = array<i32>} : memref<2x32xf32, #tpu.memory_space<vmem>>, vector<2x32xf32>,
    %c0_83 = arith.constant 0 : index
    %c0_84 = arith.constant 0 : index
    %158 = vector.load %arg19[%c0_83, %c0_84] : memref<2x32xf32, #tpu.memory_space<vmem>>, vector<2x32xf32>
    tpu.vector_store %arg19[%c0_83, %c0_84], %154 {strides = array<i32>} : memref<2x32xf32, #tpu.memory_space<vmem>>, vector<2x32xf32>,
    %c12 = arith.constant 12 : index
    %c0_85 = arith.constant 0 : index
    %159 = vector.load %arg14[%c12, %c0_85] : memref<16x32xf32, #tpu.memory_space<vmem>>, vector<2x32xf32>
    tpu.vector_store %arg14[%c12, %c0_85], %156 {strides = array<i32>} : memref<16x32xf32, #tpu.memory_space<vmem>>, vector<2x32xf32>,
    %c0_86 = arith.constant 0 : index
    %c0_87 = arith.constant 0 : index
    %160 = vector.load %arg21[%c0_86, %c0_87] : memref<2x32xf32, #tpu.memory_space<vmem>>, vector<2x32xf32>
    %161 = arith.addf %160, %156 : vector<2x32xf32>
    %c0_88 = arith.constant 0 : index
    %c0_89 = arith.constant 0 : index
    %162 = vector.load %arg21[%c0_88, %c0_89] : memref<2x32xf32, #tpu.memory_space<vmem>>, vector<2x32xf32>
    tpu.vector_store %arg21[%c0_88, %c0_89], %161 {strides = array<i32>} : memref<2x32xf32, #tpu.memory_space<vmem>>, vector<2x32xf32>,
    %163 = vector.extract_strided_slice %8 {offsets = [4, 0], sizes = [2, 128], strides = [1, 1]} : vector<16x128xf32> to vector<2x128xf32>
    %c0_90 = arith.constant 0 : index
    %c0_91 = arith.constant 0 : index
    %164 = vector.load %arg16[%c0_90, %c0_91] : memref<2x32xf32, #tpu.memory_space<vmem>>, vector<2x32xf32>
    %c0_92 = arith.constant 0 : index
    %c0_93 = arith.constant 0 : index
    %165 = vector.load %arg5[%c0_92, %c0_93] : memref<32x128xf32, #tpu.memory_space<vmem>>, vector<32x128xf32>
    %cst_94 = arith.constant dense<0.000000e+00> : vector<2x128xf32>
    %166 = tpu.matmul %164, %165, %cst_94 {dimension_numbers = #tpu.dot_dimension_numbers<[1], [0], [0], [1], [0, 0, 1, 1], [], []>} : vector<2x32xf32>, vector<32x128xf32>, vector<2x128xf32> -> vector<2x128xf32>
    %167 = arith.addf %163, %166 : vector<2x128xf32>
    %c0_95 = arith.constant 0 : index
    %c0_96 = arith.constant 0 : index
    %168 = vector.load %arg17[%c0_95, %c0_96] : memref<2x32xf32, #tpu.memory_space<vmem>>, vector<2x32xf32>
    %169 = vector.extract_strided_slice %167 {offsets = [0, 0], sizes = [2, 32], strides = [1, 1]} : vector<2x128xf32> to vector<2x32xf32>
    %170 = arith.negf %169 : vector<2x32xf32>
    %171 = math.exp %170 : vector<2x32xf32>
    %cst_97 = arith.constant 1.000000e+00 : f32
    %172 = vector.broadcast %cst_97 : f32 to vector<2x32xf32>
    %173 = arith.addf %172, %171 : vector<2x32xf32>
    %174 = arith.divf %172, %173 : vector<2x32xf32>
    %175 = vector.extract_strided_slice %167 {offsets = [0, 32], sizes = [2, 32], strides = [1, 1]} : vector<2x128xf32> to vector<2x32xf32>
    %176 = arith.negf %175 : vector<2x32xf32>
    %177 = math.exp %176 : vector<2x32xf32>
    %cst_98 = arith.constant 1.000000e+00 : f32
    %178 = vector.broadcast %cst_98 : f32 to vector<2x32xf32>
    %179 = arith.addf %178, %177 : vector<2x32xf32>
    %180 = arith.divf %178, %179 : vector<2x32xf32>
    %181 = vector.extract_strided_slice %167 {offsets = [0, 64], sizes = [2, 32], strides = [1, 1]} : vector<2x128xf32> to vector<2x32xf32>
    %182 = math.tanh %181 : vector<2x32xf32>
    %183 = vector.extract_strided_slice %167 {offsets = [0, 96], sizes = [2, 32], strides = [1, 1]} : vector<2x128xf32> to vector<2x32xf32>
    %184 = arith.negf %183 : vector<2x32xf32>
    %185 = math.exp %184 : vector<2x32xf32>
    %cst_99 = arith.constant 1.000000e+00 : f32
    %186 = vector.broadcast %cst_99 : f32 to vector<2x32xf32>
    %187 = arith.addf %186, %185 : vector<2x32xf32>
    %188 = arith.divf %186, %187 : vector<2x32xf32>
    %189 = arith.mulf %180, %168 : vector<2x32xf32>
    %190 = arith.mulf %174, %182 : vector<2x32xf32>
    %191 = arith.addf %189, %190 : vector<2x32xf32>
    %192 = math.tanh %191 : vector<2x32xf32>
    %193 = arith.mulf %188, %192 : vector<2x32xf32>
    %c0_100 = arith.constant 0 : index
    %c0_101 = arith.constant 0 : index
    %194 = vector.load %arg16[%c0_100, %c0_101] : memref<2x32xf32, #tpu.memory_space<vmem>>, vector<2x32xf32>
    tpu.vector_store %arg16[%c0_100, %c0_101], %193 {strides = array<i32>} : memref<2x32xf32, #tpu.memory_space<vmem>>, vector<2x32xf32>,
    %c0_102 = arith.constant 0 : index
    %c0_103 = arith.constant 0 : index
    %195 = vector.load %arg17[%c0_102, %c0_103] : memref<2x32xf32, #tpu.memory_space<vmem>>, vector<2x32xf32>
    tpu.vector_store %arg17[%c0_102, %c0_103], %191 {strides = array<i32>} : memref<2x32xf32, #tpu.memory_space<vmem>>, vector<2x32xf32>,
    %c4 = arith.constant 4 : index
    %c0_104 = arith.constant 0 : index
    %196 = vector.load %arg13[%c4, %c0_104] : memref<16x32xf32, #tpu.memory_space<vmem>>, vector<2x32xf32>
    tpu.vector_store %arg13[%c4, %c0_104], %193 {strides = array<i32>} : memref<16x32xf32, #tpu.memory_space<vmem>>, vector<2x32xf32>,
    %c0_105 = arith.constant 0 : index
    %c0_106 = arith.constant 0 : index
    %197 = vector.load %arg20[%c0_105, %c0_106] : memref<2x32xf32, #tpu.memory_space<vmem>>, vector<2x32xf32>
    %198 = arith.addf %197, %193 : vector<2x32xf32>
    %c0_107 = arith.constant 0 : index
    %c0_108 = arith.constant 0 : index
    %199 = vector.load %arg20[%c0_107, %c0_108] : memref<2x32xf32, #tpu.memory_space<vmem>>, vector<2x32xf32>
    tpu.vector_store %arg20[%c0_107, %c0_108], %198 {strides = array<i32>} : memref<2x32xf32, #tpu.memory_space<vmem>>, vector<2x32xf32>,
    %200 = vector.extract_strided_slice %14 {offsets = [10, 0], sizes = [2, 128], strides = [1, 1]} : vector<16x128xf32> to vector<2x128xf32>
    %c0_109 = arith.constant 0 : index
    %c0_110 = arith.constant 0 : index
    %201 = vector.load %arg18[%c0_109, %c0_110] : memref<2x32xf32, #tpu.memory_space<vmem>>, vector<2x32xf32>
    %c0_111 = arith.constant 0 : index
    %c0_112 = arith.constant 0 : index
    %202 = vector.load %arg6[%c0_111, %c0_112] : memref<32x128xf32, #tpu.memory_space<vmem>>, vector<32x128xf32>
    %cst_113 = arith.constant dense<0.000000e+00> : vector<2x128xf32>
    %203 = tpu.matmul %201, %202, %cst_113 {dimension_numbers = #tpu.dot_dimension_numbers<[1], [0], [0], [1], [0, 0, 1, 1], [], []>} : vector<2x32xf32>, vector<32x128xf32>, vector<2x128xf32> -> vector<2x128xf32>
    %204 = arith.addf %200, %203 : vector<2x128xf32>
    %c0_114 = arith.constant 0 : index
    %c0_115 = arith.constant 0 : index
    %205 = vector.load %arg19[%c0_114, %c0_115] : memref<2x32xf32, #tpu.memory_space<vmem>>, vector<2x32xf32>
    %206 = vector.extract_strided_slice %204 {offsets = [0, 0], sizes = [2, 32], strides = [1, 1]} : vector<2x128xf32> to vector<2x32xf32>
    %207 = arith.negf %206 : vector<2x32xf32>
    %208 = math.exp %207 : vector<2x32xf32>
    %cst_116 = arith.constant 1.000000e+00 : f32
    %209 = vector.broadcast %cst_116 : f32 to vector<2x32xf32>
    %210 = arith.addf %209, %208 : vector<2x32xf32>
    %211 = arith.divf %209, %210 : vector<2x32xf32>
    %212 = vector.extract_strided_slice %204 {offsets = [0, 32], sizes = [2, 32], strides = [1, 1]} : vector<2x128xf32> to vector<2x32xf32>
    %213 = arith.negf %212 : vector<2x32xf32>
    %214 = math.exp %213 : vector<2x32xf32>
    %cst_117 = arith.constant 1.000000e+00 : f32
    %215 = vector.broadcast %cst_117 : f32 to vector<2x32xf32>
    %216 = arith.addf %215, %214 : vector<2x32xf32>
    %217 = arith.divf %215, %216 : vector<2x32xf32>
    %218 = vector.extract_strided_slice %204 {offsets = [0, 64], sizes = [2, 32], strides = [1, 1]} : vector<2x128xf32> to vector<2x32xf32>
    %219 = math.tanh %218 : vector<2x32xf32>
    %220 = vector.extract_strided_slice %204 {offsets = [0, 96], sizes = [2, 32], strides = [1, 1]} : vector<2x128xf32> to vector<2x32xf32>
    %221 = arith.negf %220 : vector<2x32xf32>
    %222 = math.exp %221 : vector<2x32xf32>
    %cst_118 = arith.constant 1.000000e+00 : f32
    %223 = vector.broadcast %cst_118 : f32 to vector<2x32xf32>
    %224 = arith.addf %223, %222 : vector<2x32xf32>
    %225 = arith.divf %223, %224 : vector<2x32xf32>
    %226 = arith.mulf %217, %205 : vector<2x32xf32>
    %227 = arith.mulf %211, %219 : vector<2x32xf32>
    %228 = arith.addf %226, %227 : vector<2x32xf32>
    %229 = math.tanh %228 : vector<2x32xf32>
    %230 = arith.mulf %225, %229 : vector<2x32xf32>
    %c0_119 = arith.constant 0 : index
    %c0_120 = arith.constant 0 : index
    %231 = vector.load %arg18[%c0_119, %c0_120] : memref<2x32xf32, #tpu.memory_space<vmem>>, vector<2x32xf32>
    tpu.vector_store %arg18[%c0_119, %c0_120], %230 {strides = array<i32>} : memref<2x32xf32, #tpu.memory_space<vmem>>, vector<2x32xf32>,
    %c0_121 = arith.constant 0 : index
    %c0_122 = arith.constant 0 : index
    %232 = vector.load %arg19[%c0_121, %c0_122] : memref<2x32xf32, #tpu.memory_space<vmem>>, vector<2x32xf32>
    tpu.vector_store %arg19[%c0_121, %c0_122], %228 {strides = array<i32>} : memref<2x32xf32, #tpu.memory_space<vmem>>, vector<2x32xf32>,
    %c10 = arith.constant 10 : index
    %c0_123 = arith.constant 0 : index
    %233 = vector.load %arg14[%c10, %c0_123] : memref<16x32xf32, #tpu.memory_space<vmem>>, vector<2x32xf32>
    tpu.vector_store %arg14[%c10, %c0_123], %230 {strides = array<i32>} : memref<16x32xf32, #tpu.memory_space<vmem>>, vector<2x32xf32>,
    %c0_124 = arith.constant 0 : index
    %c0_125 = arith.constant 0 : index
    %234 = vector.load %arg21[%c0_124, %c0_125] : memref<2x32xf32, #tpu.memory_space<vmem>>, vector<2x32xf32>
    %235 = arith.addf %234, %230 : vector<2x32xf32>
    %c0_126 = arith.constant 0 : index
    %c0_127 = arith.constant 0 : index
    %236 = vector.load %arg21[%c0_126, %c0_127] : memref<2x32xf32, #tpu.memory_space<vmem>>, vector<2x32xf32>
    tpu.vector_store %arg21[%c0_126, %c0_127], %235 {strides = array<i32>} : memref<2x32xf32, #tpu.memory_space<vmem>>, vector<2x32xf32>,
    %237 = vector.extract_strided_slice %8 {offsets = [6, 0], sizes = [2, 128], strides = [1, 1]} : vector<16x128xf32> to vector<2x128xf32>
    %c0_128 = arith.constant 0 : index
    %c0_129 = arith.constant 0 : index
    %238 = vector.load %arg16[%c0_128, %c0_129] : memref<2x32xf32, #tpu.memory_space<vmem>>, vector<2x32xf32>
    %c0_130 = arith.constant 0 : index
    %c0_131 = arith.constant 0 : index
    %239 = vector.load %arg5[%c0_130, %c0_131] : memref<32x128xf32, #tpu.memory_space<vmem>>, vector<32x128xf32>
    %cst_132 = arith.constant dense<0.000000e+00> : vector<2x128xf32>
    %240 = tpu.matmul %238, %239, %cst_132 {dimension_numbers = #tpu.dot_dimension_numbers<[1], [0], [0], [1], [0, 0, 1, 1], [], []>} : vector<2x32xf32>, vector<32x128xf32>, vector<2x128xf32> -> vector<2x128xf32>
    %241 = arith.addf %237, %240 : vector<2x128xf32>
    %c0_133 = arith.constant 0 : index
    %c0_134 = arith.constant 0 : index
    %242 = vector.load %arg17[%c0_133, %c0_134] : memref<2x32xf32, #tpu.memory_space<vmem>>, vector<2x32xf32>
    %243 = vector.extract_strided_slice %241 {offsets = [0, 0], sizes = [2, 32], strides = [1, 1]} : vector<2x128xf32> to vector<2x32xf32>
    %244 = arith.negf %243 : vector<2x32xf32>
    %245 = math.exp %244 : vector<2x32xf32>
    %cst_135 = arith.constant 1.000000e+00 : f32
    %246 = vector.broadcast %cst_135 : f32 to vector<2x32xf32>
    %247 = arith.addf %246, %245 : vector<2x32xf32>
    %248 = arith.divf %246, %247 : vector<2x32xf32>
    %249 = vector.extract_strided_slice %241 {offsets = [0, 32], sizes = [2, 32], strides = [1, 1]} : vector<2x128xf32> to vector<2x32xf32>
    %250 = arith.negf %249 : vector<2x32xf32>
    %251 = math.exp %250 : vector<2x32xf32>
    %cst_136 = arith.constant 1.000000e+00 : f32
    %252 = vector.broadcast %cst_136 : f32 to vector<2x32xf32>
    %253 = arith.addf %252, %251 : vector<2x32xf32>
    %254 = arith.divf %252, %253 : vector<2x32xf32>
    %255 = vector.extract_strided_slice %241 {offsets = [0, 64], sizes = [2, 32], strides = [1, 1]} : vector<2x128xf32> to vector<2x32xf32>
    %256 = math.tanh %255 : vector<2x32xf32>
    %257 = vector.extract_strided_slice %241 {offsets = [0, 96], sizes = [2, 32], strides = [1, 1]} : vector<2x128xf32> to vector<2x32xf32>
    %258 = arith.negf %257 : vector<2x32xf32>
    %259 = math.exp %258 : vector<2x32xf32>
    %cst_137 = arith.constant 1.000000e+00 : f32
    %260 = vector.broadcast %cst_137 : f32 to vector<2x32xf32>
    %261 = arith.addf %260, %259 : vector<2x32xf32>
    %262 = arith.divf %260, %261 : vector<2x32xf32>
    %263 = arith.mulf %254, %242 : vector<2x32xf32>
    %264 = arith.mulf %248, %256 : vector<2x32xf32>
    %265 = arith.addf %263, %264 : vector<2x32xf32>
    %266 = math.tanh %265 : vector<2x32xf32>
    %267 = arith.mulf %262, %266 : vector<2x32xf32>
    %c0_138 = arith.constant 0 : index
    %c0_139 = arith.constant 0 : index
    %268 = vector.load %arg16[%c0_138, %c0_139] : memref<2x32xf32, #tpu.memory_space<vmem>>, vector<2x32xf32>
    tpu.vector_store %arg16[%c0_138, %c0_139], %267 {strides = array<i32>} : memref<2x32xf32, #tpu.memory_space<vmem>>, vector<2x32xf32>,
    %c0_140 = arith.constant 0 : index
    %c0_141 = arith.constant 0 : index
    %269 = vector.load %arg17[%c0_140, %c0_141] : memref<2x32xf32, #tpu.memory_space<vmem>>, vector<2x32xf32>
    tpu.vector_store %arg17[%c0_140, %c0_141], %265 {strides = array<i32>} : memref<2x32xf32, #tpu.memory_space<vmem>>, vector<2x32xf32>,
    %c6 = arith.constant 6 : index
    %c0_142 = arith.constant 0 : index
    %270 = vector.load %arg13[%c6, %c0_142] : memref<16x32xf32, #tpu.memory_space<vmem>>, vector<2x32xf32>
    tpu.vector_store %arg13[%c6, %c0_142], %267 {strides = array<i32>} : memref<16x32xf32, #tpu.memory_space<vmem>>, vector<2x32xf32>,
    %c0_143 = arith.constant 0 : index
    %c0_144 = arith.constant 0 : index
    %271 = vector.load %arg20[%c0_143, %c0_144] : memref<2x32xf32, #tpu.memory_space<vmem>>, vector<2x32xf32>
    %272 = arith.addf %271, %267 : vector<2x32xf32>
    %c0_145 = arith.constant 0 : index
    %c0_146 = arith.constant 0 : index
    %273 = vector.load %arg20[%c0_145, %c0_146] : memref<2x32xf32, #tpu.memory_space<vmem>>, vector<2x32xf32>
    tpu.vector_store %arg20[%c0_145, %c0_146], %272 {strides = array<i32>} : memref<2x32xf32, #tpu.memory_space<vmem>>, vector<2x32xf32>,
    %274 = vector.extract_strided_slice %14 {offsets = [8, 0], sizes = [2, 128], strides = [1, 1]} : vector<16x128xf32> to vector<2x128xf32>
    %c0_147 = arith.constant 0 : index
    %c0_148 = arith.constant 0 : index
    %275 = vector.load %arg18[%c0_147, %c0_148] : memref<2x32xf32, #tpu.memory_space<vmem>>, vector<2x32xf32>
    %c0_149 = arith.constant 0 : index
    %c0_150 = arith.constant 0 : index
    %276 = vector.load %arg6[%c0_149, %c0_150] : memref<32x128xf32, #tpu.memory_space<vmem>>, vector<32x128xf32>
    %cst_151 = arith.constant dense<0.000000e+00> : vector<2x128xf32>
    %277 = tpu.matmul %275, %276, %cst_151 {dimension_numbers = #tpu.dot_dimension_numbers<[1], [0], [0], [1], [0, 0, 1, 1], [], []>} : vector<2x32xf32>, vector<32x128xf32>, vector<2x128xf32> -> vector<2x128xf32>
    %278 = arith.addf %274, %277 : vector<2x128xf32>
    %c0_152 = arith.constant 0 : index
    %c0_153 = arith.constant 0 : index
    %279 = vector.load %arg19[%c0_152, %c0_153] : memref<2x32xf32, #tpu.memory_space<vmem>>, vector<2x32xf32>
    %280 = vector.extract_strided_slice %278 {offsets = [0, 0], sizes = [2, 32], strides = [1, 1]} : vector<2x128xf32> to vector<2x32xf32>
    %281 = arith.negf %280 : vector<2x32xf32>
    %282 = math.exp %281 : vector<2x32xf32>
    %cst_154 = arith.constant 1.000000e+00 : f32
    %283 = vector.broadcast %cst_154 : f32 to vector<2x32xf32>
    %284 = arith.addf %283, %282 : vector<2x32xf32>
    %285 = arith.divf %283, %284 : vector<2x32xf32>
    %286 = vector.extract_strided_slice %278 {offsets = [0, 32], sizes = [2, 32], strides = [1, 1]} : vector<2x128xf32> to vector<2x32xf32>
    %287 = arith.negf %286 : vector<2x32xf32>
    %288 = math.exp %287 : vector<2x32xf32>
    %cst_155 = arith.constant 1.000000e+00 : f32
    %289 = vector.broadcast %cst_155 : f32 to vector<2x32xf32>
    %290 = arith.addf %289, %288 : vector<2x32xf32>
    %291 = arith.divf %289, %290 : vector<2x32xf32>
    %292 = vector.extract_strided_slice %278 {offsets = [0, 64], sizes = [2, 32], strides = [1, 1]} : vector<2x128xf32> to vector<2x32xf32>
    %293 = math.tanh %292 : vector<2x32xf32>
    %294 = vector.extract_strided_slice %278 {offsets = [0, 96], sizes = [2, 32], strides = [1, 1]} : vector<2x128xf32> to vector<2x32xf32>
    %295 = arith.negf %294 : vector<2x32xf32>
    %296 = math.exp %295 : vector<2x32xf32>
    %cst_156 = arith.constant 1.000000e+00 : f32
    %297 = vector.broadcast %cst_156 : f32 to vector<2x32xf32>
    %298 = arith.addf %297, %296 : vector<2x32xf32>
    %299 = arith.divf %297, %298 : vector<2x32xf32>
    %300 = arith.mulf %291, %279 : vector<2x32xf32>
    %301 = arith.mulf %285, %293 : vector<2x32xf32>
    %302 = arith.addf %300, %301 : vector<2x32xf32>
    %303 = math.tanh %302 : vector<2x32xf32>
    %304 = arith.mulf %299, %303 : vector<2x32xf32>
    %c0_157 = arith.constant 0 : index
    %c0_158 = arith.constant 0 : index
    %305 = vector.load %arg18[%c0_157, %c0_158] : memref<2x32xf32, #tpu.memory_space<vmem>>, vector<2x32xf32>
    tpu.vector_store %arg18[%c0_157, %c0_158], %304 {strides = array<i32>} : memref<2x32xf32, #tpu.memory_space<vmem>>, vector<2x32xf32>,
    %c0_159 = arith.constant 0 : index
    %c0_160 = arith.constant 0 : index
    %306 = vector.load %arg19[%c0_159, %c0_160] : memref<2x32xf32, #tpu.memory_space<vmem>>, vector<2x32xf32>
    tpu.vector_store %arg19[%c0_159, %c0_160], %302 {strides = array<i32>} : memref<2x32xf32, #tpu.memory_space<vmem>>, vector<2x32xf32>,
    %c8 = arith.constant 8 : index
    %c0_161 = arith.constant 0 : index
    %307 = vector.load %arg14[%c8, %c0_161] : memref<16x32xf32, #tpu.memory_space<vmem>>, vector<2x32xf32>
    tpu.vector_store %arg14[%c8, %c0_161], %304 {strides = array<i32>} : memref<16x32xf32, #tpu.memory_space<vmem>>, vector<2x32xf32>,
    %c0_162 = arith.constant 0 : index
    %c0_163 = arith.constant 0 : index
    %308 = vector.load %arg21[%c0_162, %c0_163] : memref<2x32xf32, #tpu.memory_space<vmem>>, vector<2x32xf32>
    %309 = arith.addf %308, %304 : vector<2x32xf32>
    %c0_164 = arith.constant 0 : index
    %c0_165 = arith.constant 0 : index
    %310 = vector.load %arg21[%c0_164, %c0_165] : memref<2x32xf32, #tpu.memory_space<vmem>>, vector<2x32xf32>
    tpu.vector_store %arg21[%c0_164, %c0_165], %309 {strides = array<i32>} : memref<2x32xf32, #tpu.memory_space<vmem>>, vector<2x32xf32>,
    %311 = vector.extract_strided_slice %8 {offsets = [8, 0], sizes = [2, 128], strides = [1, 1]} : vector<16x128xf32> to vector<2x128xf32>
    %c0_166 = arith.constant 0 : index
    %c0_167 = arith.constant 0 : index
    %312 = vector.load %arg16[%c0_166, %c0_167] : memref<2x32xf32, #tpu.memory_space<vmem>>, vector<2x32xf32>
    %c0_168 = arith.constant 0 : index
    %c0_169 = arith.constant 0 : index
    %313 = vector.load %arg5[%c0_168, %c0_169] : memref<32x128xf32, #tpu.memory_space<vmem>>, vector<32x128xf32>
    %cst_170 = arith.constant dense<0.000000e+00> : vector<2x128xf32>
    %314 = tpu.matmul %312, %313, %cst_170 {dimension_numbers = #tpu.dot_dimension_numbers<[1], [0], [0], [1], [0, 0, 1, 1], [], []>} : vector<2x32xf32>, vector<32x128xf32>, vector<2x128xf32> -> vector<2x128xf32>
    %315 = arith.addf %311, %314 : vector<2x128xf32>
    %c0_171 = arith.constant 0 : index
    %c0_172 = arith.constant 0 : index
    %316 = vector.load %arg17[%c0_171, %c0_172] : memref<2x32xf32, #tpu.memory_space<vmem>>, vector<2x32xf32>
    %317 = vector.extract_strided_slice %315 {offsets = [0, 0], sizes = [2, 32], strides = [1, 1]} : vector<2x128xf32> to vector<2x32xf32>
    %318 = arith.negf %317 : vector<2x32xf32>
    %319 = math.exp %318 : vector<2x32xf32>
    %cst_173 = arith.constant 1.000000e+00 : f32
    %320 = vector.broadcast %cst_173 : f32 to vector<2x32xf32>
    %321 = arith.addf %320, %319 : vector<2x32xf32>
    %322 = arith.divf %320, %321 : vector<2x32xf32>
    %323 = vector.extract_strided_slice %315 {offsets = [0, 32], sizes = [2, 32], strides = [1, 1]} : vector<2x128xf32> to vector<2x32xf32>
    %324 = arith.negf %323 : vector<2x32xf32>
    %325 = math.exp %324 : vector<2x32xf32>
    %cst_174 = arith.constant 1.000000e+00 : f32
    %326 = vector.broadcast %cst_174 : f32 to vector<2x32xf32>
    %327 = arith.addf %326, %325 : vector<2x32xf32>
    %328 = arith.divf %326, %327 : vector<2x32xf32>
    %329 = vector.extract_strided_slice %315 {offsets = [0, 64], sizes = [2, 32], strides = [1, 1]} : vector<2x128xf32> to vector<2x32xf32>
    %330 = math.tanh %329 : vector<2x32xf32>
    %331 = vector.extract_strided_slice %315 {offsets = [0, 96], sizes = [2, 32], strides = [1, 1]} : vector<2x128xf32> to vector<2x32xf32>
    %332 = arith.negf %331 : vector<2x32xf32>
    %333 = math.exp %332 : vector<2x32xf32>
    %cst_175 = arith.constant 1.000000e+00 : f32
    %334 = vector.broadcast %cst_175 : f32 to vector<2x32xf32>
    %335 = arith.addf %334, %333 : vector<2x32xf32>
    %336 = arith.divf %334, %335 : vector<2x32xf32>
    %337 = arith.mulf %328, %316 : vector<2x32xf32>
    %338 = arith.mulf %322, %330 : vector<2x32xf32>
    %339 = arith.addf %337, %338 : vector<2x32xf32>
    %340 = math.tanh %339 : vector<2x32xf32>
    %341 = arith.mulf %336, %340 : vector<2x32xf32>
    %c0_176 = arith.constant 0 : index
    %c0_177 = arith.constant 0 : index
    %342 = vector.load %arg16[%c0_176, %c0_177] : memref<2x32xf32, #tpu.memory_space<vmem>>, vector<2x32xf32>
    tpu.vector_store %arg16[%c0_176, %c0_177], %341 {strides = array<i32>} : memref<2x32xf32, #tpu.memory_space<vmem>>, vector<2x32xf32>,
    %c0_178 = arith.constant 0 : index
    %c0_179 = arith.constant 0 : index
    %343 = vector.load %arg17[%c0_178, %c0_179] : memref<2x32xf32, #tpu.memory_space<vmem>>, vector<2x32xf32>
    tpu.vector_store %arg17[%c0_178, %c0_179], %339 {strides = array<i32>} : memref<2x32xf32, #tpu.memory_space<vmem>>, vector<2x32xf32>,
    %c8_180 = arith.constant 8 : index
    %c0_181 = arith.constant 0 : index
    %344 = vector.load %arg13[%c8_180, %c0_181] : memref<16x32xf32, #tpu.memory_space<vmem>>, vector<2x32xf32>
    tpu.vector_store %arg13[%c8_180, %c0_181], %341 {strides = array<i32>} : memref<16x32xf32, #tpu.memory_space<vmem>>, vector<2x32xf32>,
    %c0_182 = arith.constant 0 : index
    %c0_183 = arith.constant 0 : index
    %345 = vector.load %arg20[%c0_182, %c0_183] : memref<2x32xf32, #tpu.memory_space<vmem>>, vector<2x32xf32>
    %346 = arith.addf %345, %341 : vector<2x32xf32>
    %c0_184 = arith.constant 0 : index
    %c0_185 = arith.constant 0 : index
    %347 = vector.load %arg20[%c0_184, %c0_185] : memref<2x32xf32, #tpu.memory_space<vmem>>, vector<2x32xf32>
    tpu.vector_store %arg20[%c0_184, %c0_185], %346 {strides = array<i32>} : memref<2x32xf32, #tpu.memory_space<vmem>>, vector<2x32xf32>,
    %348 = vector.extract_strided_slice %14 {offsets = [6, 0], sizes = [2, 128], strides = [1, 1]} : vector<16x128xf32> to vector<2x128xf32>
    %c0_186 = arith.constant 0 : index
    %c0_187 = arith.constant 0 : index
    %349 = vector.load %arg18[%c0_186, %c0_187] : memref<2x32xf32, #tpu.memory_space<vmem>>, vector<2x32xf32>
    %c0_188 = arith.constant 0 : index
    %c0_189 = arith.constant 0 : index
    %350 = vector.load %arg6[%c0_188, %c0_189] : memref<32x128xf32, #tpu.memory_space<vmem>>, vector<32x128xf32>
    %cst_190 = arith.constant dense<0.000000e+00> : vector<2x128xf32>
    %351 = tpu.matmul %349, %350, %cst_190 {dimension_numbers = #tpu.dot_dimension_numbers<[1], [0], [0], [1], [0, 0, 1, 1], [], []>} : vector<2x32xf32>, vector<32x128xf32>, vector<2x128xf32> -> vector<2x128xf32>
    %352 = arith.addf %348, %351 : vector<2x128xf32>
    %c0_191 = arith.constant 0 : index
    %c0_192 = arith.constant 0 : index
    %353 = vector.load %arg19[%c0_191, %c0_192] : memref<2x32xf32, #tpu.memory_space<vmem>>, vector<2x32xf32>
    %354 = vector.extract_strided_slice %352 {offsets = [0, 0], sizes = [2, 32], strides = [1, 1]} : vector<2x128xf32> to vector<2x32xf32>
    %355 = arith.negf %354 : vector<2x32xf32>
    %356 = math.exp %355 : vector<2x32xf32>
    %cst_193 = arith.constant 1.000000e+00 : f32
    %357 = vector.broadcast %cst_193 : f32 to vector<2x32xf32>
    %358 = arith.addf %357, %356 : vector<2x32xf32>
    %359 = arith.divf %357, %358 : vector<2x32xf32>
    %360 = vector.extract_strided_slice %352 {offsets = [0, 32], sizes = [2, 32], strides = [1, 1]} : vector<2x128xf32> to vector<2x32xf32>
    %361 = arith.negf %360 : vector<2x32xf32>
    %362 = math.exp %361 : vector<2x32xf32>
    %cst_194 = arith.constant 1.000000e+00 : f32
    %363 = vector.broadcast %cst_194 : f32 to vector<2x32xf32>
    %364 = arith.addf %363, %362 : vector<2x32xf32>
    %365 = arith.divf %363, %364 : vector<2x32xf32>
    %366 = vector.extract_strided_slice %352 {offsets = [0, 64], sizes = [2, 32], strides = [1, 1]} : vector<2x128xf32> to vector<2x32xf32>
    %367 = math.tanh %366 : vector<2x32xf32>
    %368 = vector.extract_strided_slice %352 {offsets = [0, 96], sizes = [2, 32], strides = [1, 1]} : vector<2x128xf32> to vector<2x32xf32>
    %369 = arith.negf %368 : vector<2x32xf32>
    %370 = math.exp %369 : vector<2x32xf32>
    %cst_195 = arith.constant 1.000000e+00 : f32
    %371 = vector.broadcast %cst_195 : f32 to vector<2x32xf32>
    %372 = arith.addf %371, %370 : vector<2x32xf32>
    %373 = arith.divf %371, %372 : vector<2x32xf32>
    %374 = arith.mulf %365, %353 : vector<2x32xf32>
    %375 = arith.mulf %359, %367 : vector<2x32xf32>
    %376 = arith.addf %374, %375 : vector<2x32xf32>
    %377 = math.tanh %376 : vector<2x32xf32>
    %378 = arith.mulf %373, %377 : vector<2x32xf32>
    %c0_196 = arith.constant 0 : index
    %c0_197 = arith.constant 0 : index
    %379 = vector.load %arg18[%c0_196, %c0_197] : memref<2x32xf32, #tpu.memory_space<vmem>>, vector<2x32xf32>
    tpu.vector_store %arg18[%c0_196, %c0_197], %378 {strides = array<i32>} : memref<2x32xf32, #tpu.memory_space<vmem>>, vector<2x32xf32>,
    %c0_198 = arith.constant 0 : index
    %c0_199 = arith.constant 0 : index
    %380 = vector.load %arg19[%c0_198, %c0_199] : memref<2x32xf32, #tpu.memory_space<vmem>>, vector<2x32xf32>
    tpu.vector_store %arg19[%c0_198, %c0_199], %376 {strides = array<i32>} : memref<2x32xf32, #tpu.memory_space<vmem>>, vector<2x32xf32>,
    %c6_200 = arith.constant 6 : index
    %c0_201 = arith.constant 0 : index
    %381 = vector.load %arg14[%c6_200, %c0_201] : memref<16x32xf32, #tpu.memory_space<vmem>>, vector<2x32xf32>
    tpu.vector_store %arg14[%c6_200, %c0_201], %378 {strides = array<i32>} : memref<16x32xf32, #tpu.memory_space<vmem>>, vector<2x32xf32>,
    %c0_202 = arith.constant 0 : index
    %c0_203 = arith.constant 0 : index
    %382 = vector.load %arg21[%c0_202, %c0_203] : memref<2x32xf32, #tpu.memory_space<vmem>>, vector<2x32xf32>
    %383 = arith.addf %382, %378 : vector<2x32xf32>
    %c0_204 = arith.constant 0 : index
    %c0_205 = arith.constant 0 : index
    %384 = vector.load %arg21[%c0_204, %c0_205] : memref<2x32xf32, #tpu.memory_space<vmem>>, vector<2x32xf32>
    tpu.vector_store %arg21[%c0_204, %c0_205], %383 {strides = array<i32>} : memref<2x32xf32, #tpu.memory_space<vmem>>, vector<2x32xf32>,
    %385 = vector.extract_strided_slice %8 {offsets = [10, 0], sizes = [2, 128], strides = [1, 1]} : vector<16x128xf32> to vector<2x128xf32>
    %c0_206 = arith.constant 0 : index
    %c0_207 = arith.constant 0 : index
    %386 = vector.load %arg16[%c0_206, %c0_207] : memref<2x32xf32, #tpu.memory_space<vmem>>, vector<2x32xf32>
    %c0_208 = arith.constant 0 : index
    %c0_209 = arith.constant 0 : index
    %387 = vector.load %arg5[%c0_208, %c0_209] : memref<32x128xf32, #tpu.memory_space<vmem>>, vector<32x128xf32>
    %cst_210 = arith.constant dense<0.000000e+00> : vector<2x128xf32>
    %388 = tpu.matmul %386, %387, %cst_210 {dimension_numbers = #tpu.dot_dimension_numbers<[1], [0], [0], [1], [0, 0, 1, 1], [], []>} : vector<2x32xf32>, vector<32x128xf32>, vector<2x128xf32> -> vector<2x128xf32>
    %389 = arith.addf %385, %388 : vector<2x128xf32>
    %c0_211 = arith.constant 0 : index
    %c0_212 = arith.constant 0 : index
    %390 = vector.load %arg17[%c0_211, %c0_212] : memref<2x32xf32, #tpu.memory_space<vmem>>, vector<2x32xf32>
    %391 = vector.extract_strided_slice %389 {offsets = [0, 0], sizes = [2, 32], strides = [1, 1]} : vector<2x128xf32> to vector<2x32xf32>
    %392 = arith.negf %391 : vector<2x32xf32>
    %393 = math.exp %392 : vector<2x32xf32>
    %cst_213 = arith.constant 1.000000e+00 : f32
    %394 = vector.broadcast %cst_213 : f32 to vector<2x32xf32>
    %395 = arith.addf %394, %393 : vector<2x32xf32>
    %396 = arith.divf %394, %395 : vector<2x32xf32>
    %397 = vector.extract_strided_slice %389 {offsets = [0, 32], sizes = [2, 32], strides = [1, 1]} : vector<2x128xf32> to vector<2x32xf32>
    %398 = arith.negf %397 : vector<2x32xf32>
    %399 = math.exp %398 : vector<2x32xf32>
    %cst_214 = arith.constant 1.000000e+00 : f32
    %400 = vector.broadcast %cst_214 : f32 to vector<2x32xf32>
    %401 = arith.addf %400, %399 : vector<2x32xf32>
    %402 = arith.divf %400, %401 : vector<2x32xf32>
    %403 = vector.extract_strided_slice %389 {offsets = [0, 64], sizes = [2, 32], strides = [1, 1]} : vector<2x128xf32> to vector<2x32xf32>
    %404 = math.tanh %403 : vector<2x32xf32>
    %405 = vector.extract_strided_slice %389 {offsets = [0, 96], sizes = [2, 32], strides = [1, 1]} : vector<2x128xf32> to vector<2x32xf32>
    %406 = arith.negf %405 : vector<2x32xf32>
    %407 = math.exp %406 : vector<2x32xf32>
    %cst_215 = arith.constant 1.000000e+00 : f32
    %408 = vector.broadcast %cst_215 : f32 to vector<2x32xf32>
    %409 = arith.addf %408, %407 : vector<2x32xf32>
    %410 = arith.divf %408, %409 : vector<2x32xf32>
    %411 = arith.mulf %402, %390 : vector<2x32xf32>
    %412 = arith.mulf %396, %404 : vector<2x32xf32>
    %413 = arith.addf %411, %412 : vector<2x32xf32>
    %414 = math.tanh %413 : vector<2x32xf32>
    %415 = arith.mulf %410, %414 : vector<2x32xf32>
    %c0_216 = arith.constant 0 : index
    %c0_217 = arith.constant 0 : index
    %416 = vector.load %arg16[%c0_216, %c0_217] : memref<2x32xf32, #tpu.memory_space<vmem>>, vector<2x32xf32>
    tpu.vector_store %arg16[%c0_216, %c0_217], %415 {strides = array<i32>} : memref<2x32xf32, #tpu.memory_space<vmem>>, vector<2x32xf32>,
    %c0_218 = arith.constant 0 : index
    %c0_219 = arith.constant 0 : index
    %417 = vector.load %arg17[%c0_218, %c0_219] : memref<2x32xf32, #tpu.memory_space<vmem>>, vector<2x32xf32>
    tpu.vector_store %arg17[%c0_218, %c0_219], %413 {strides = array<i32>} : memref<2x32xf32, #tpu.memory_space<vmem>>, vector<2x32xf32>,
    %c10_220 = arith.constant 10 : index
    %c0_221 = arith.constant 0 : index
    %418 = vector.load %arg13[%c10_220, %c0_221] : memref<16x32xf32, #tpu.memory_space<vmem>>, vector<2x32xf32>
    tpu.vector_store %arg13[%c10_220, %c0_221], %415 {strides = array<i32>} : memref<16x32xf32, #tpu.memory_space<vmem>>, vector<2x32xf32>,
    %c0_222 = arith.constant 0 : index
    %c0_223 = arith.constant 0 : index
    %419 = vector.load %arg20[%c0_222, %c0_223] : memref<2x32xf32, #tpu.memory_space<vmem>>, vector<2x32xf32>
    %420 = arith.addf %419, %415 : vector<2x32xf32>
    %c0_224 = arith.constant 0 : index
    %c0_225 = arith.constant 0 : index
    %421 = vector.load %arg20[%c0_224, %c0_225] : memref<2x32xf32, #tpu.memory_space<vmem>>, vector<2x32xf32>
    tpu.vector_store %arg20[%c0_224, %c0_225], %420 {strides = array<i32>} : memref<2x32xf32, #tpu.memory_space<vmem>>, vector<2x32xf32>,
    %422 = vector.extract_strided_slice %14 {offsets = [4, 0], sizes = [2, 128], strides = [1, 1]} : vector<16x128xf32> to vector<2x128xf32>
    %c0_226 = arith.constant 0 : index
    %c0_227 = arith.constant 0 : index
    %423 = vector.load %arg18[%c0_226, %c0_227] : memref<2x32xf32, #tpu.memory_space<vmem>>, vector<2x32xf32>
    %c0_228 = arith.constant 0 : index
    %c0_229 = arith.constant 0 : index
    %424 = vector.load %arg6[%c0_228, %c0_229] : memref<32x128xf32, #tpu.memory_space<vmem>>, vector<32x128xf32>
    %cst_230 = arith.constant dense<0.000000e+00> : vector<2x128xf32>
    %425 = tpu.matmul %423, %424, %cst_230 {dimension_numbers = #tpu.dot_dimension_numbers<[1], [0], [0], [1], [0, 0, 1, 1], [], []>} : vector<2x32xf32>, vector<32x128xf32>, vector<2x128xf32> -> vector<2x128xf32>
    %426 = arith.addf %422, %425 : vector<2x128xf32>
    %c0_231 = arith.constant 0 : index
    %c0_232 = arith.constant 0 : index
    %427 = vector.load %arg19[%c0_231, %c0_232] : memref<2x32xf32, #tpu.memory_space<vmem>>, vector<2x32xf32>
    %428 = vector.extract_strided_slice %426 {offsets = [0, 0], sizes = [2, 32], strides = [1, 1]} : vector<2x128xf32> to vector<2x32xf32>
    %429 = arith.negf %428 : vector<2x32xf32>
    %430 = math.exp %429 : vector<2x32xf32>
    %cst_233 = arith.constant 1.000000e+00 : f32
    %431 = vector.broadcast %cst_233 : f32 to vector<2x32xf32>
    %432 = arith.addf %431, %430 : vector<2x32xf32>
    %433 = arith.divf %431, %432 : vector<2x32xf32>
    %434 = vector.extract_strided_slice %426 {offsets = [0, 32], sizes = [2, 32], strides = [1, 1]} : vector<2x128xf32> to vector<2x32xf32>
    %435 = arith.negf %434 : vector<2x32xf32>
    %436 = math.exp %435 : vector<2x32xf32>
    %cst_234 = arith.constant 1.000000e+00 : f32
    %437 = vector.broadcast %cst_234 : f32 to vector<2x32xf32>
    %438 = arith.addf %437, %436 : vector<2x32xf32>
    %439 = arith.divf %437, %438 : vector<2x32xf32>
    %440 = vector.extract_strided_slice %426 {offsets = [0, 64], sizes = [2, 32], strides = [1, 1]} : vector<2x128xf32> to vector<2x32xf32>
    %441 = math.tanh %440 : vector<2x32xf32>
    %442 = vector.extract_strided_slice %426 {offsets = [0, 96], sizes = [2, 32], strides = [1, 1]} : vector<2x128xf32> to vector<2x32xf32>
    %443 = arith.negf %442 : vector<2x32xf32>
    %444 = math.exp %443 : vector<2x32xf32>
    %cst_235 = arith.constant 1.000000e+00 : f32
    %445 = vector.broadcast %cst_235 : f32 to vector<2x32xf32>
    %446 = arith.addf %445, %444 : vector<2x32xf32>
    %447 = arith.divf %445, %446 : vector<2x32xf32>
    %448 = arith.mulf %439, %427 : vector<2x32xf32>
    %449 = arith.mulf %433, %441 : vector<2x32xf32>
    %450 = arith.addf %448, %449 : vector<2x32xf32>
    %451 = math.tanh %450 : vector<2x32xf32>
    %452 = arith.mulf %447, %451 : vector<2x32xf32>
    %c0_236 = arith.constant 0 : index
    %c0_237 = arith.constant 0 : index
    %453 = vector.load %arg18[%c0_236, %c0_237] : memref<2x32xf32, #tpu.memory_space<vmem>>, vector<2x32xf32>
    tpu.vector_store %arg18[%c0_236, %c0_237], %452 {strides = array<i32>} : memref<2x32xf32, #tpu.memory_space<vmem>>, vector<2x32xf32>,
    %c0_238 = arith.constant 0 : index
    %c0_239 = arith.constant 0 : index
    %454 = vector.load %arg19[%c0_238, %c0_239] : memref<2x32xf32, #tpu.memory_space<vmem>>, vector<2x32xf32>
    tpu.vector_store %arg19[%c0_238, %c0_239], %450 {strides = array<i32>} : memref<2x32xf32, #tpu.memory_space<vmem>>, vector<2x32xf32>,
    %c4_240 = arith.constant 4 : index
    %c0_241 = arith.constant 0 : index
    %455 = vector.load %arg14[%c4_240, %c0_241] : memref<16x32xf32, #tpu.memory_space<vmem>>, vector<2x32xf32>
    tpu.vector_store %arg14[%c4_240, %c0_241], %452 {strides = array<i32>} : memref<16x32xf32, #tpu.memory_space<vmem>>, vector<2x32xf32>,
    %c0_242 = arith.constant 0 : index
    %c0_243 = arith.constant 0 : index
    %456 = vector.load %arg21[%c0_242, %c0_243] : memref<2x32xf32, #tpu.memory_space<vmem>>, vector<2x32xf32>
    %457 = arith.addf %456, %452 : vector<2x32xf32>
    %c0_244 = arith.constant 0 : index
    %c0_245 = arith.constant 0 : index
    %458 = vector.load %arg21[%c0_244, %c0_245] : memref<2x32xf32, #tpu.memory_space<vmem>>, vector<2x32xf32>
    tpu.vector_store %arg21[%c0_244, %c0_245], %457 {strides = array<i32>} : memref<2x32xf32, #tpu.memory_space<vmem>>, vector<2x32xf32>,
    %459 = vector.extract_strided_slice %8 {offsets = [12, 0], sizes = [2, 128], strides = [1, 1]} : vector<16x128xf32> to vector<2x128xf32>
    %c0_246 = arith.constant 0 : index
    %c0_247 = arith.constant 0 : index
    %460 = vector.load %arg16[%c0_246, %c0_247] : memref<2x32xf32, #tpu.memory_space<vmem>>, vector<2x32xf32>
    %c0_248 = arith.constant 0 : index
    %c0_249 = arith.constant 0 : index
    %461 = vector.load %arg5[%c0_248, %c0_249] : memref<32x128xf32, #tpu.memory_space<vmem>>, vector<32x128xf32>
    %cst_250 = arith.constant dense<0.000000e+00> : vector<2x128xf32>
    %462 = tpu.matmul %460, %461, %cst_250 {dimension_numbers = #tpu.dot_dimension_numbers<[1], [0], [0], [1], [0, 0, 1, 1], [], []>} : vector<2x32xf32>, vector<32x128xf32>, vector<2x128xf32> -> vector<2x128xf32>
    %463 = arith.addf %459, %462 : vector<2x128xf32>
    %c0_251 = arith.constant 0 : index
    %c0_252 = arith.constant 0 : index
    %464 = vector.load %arg17[%c0_251, %c0_252] : memref<2x32xf32, #tpu.memory_space<vmem>>, vector<2x32xf32>
    %465 = vector.extract_strided_slice %463 {offsets = [0, 0], sizes = [2, 32], strides = [1, 1]} : vector<2x128xf32> to vector<2x32xf32>
    %466 = arith.negf %465 : vector<2x32xf32>
    %467 = math.exp %466 : vector<2x32xf32>
    %cst_253 = arith.constant 1.000000e+00 : f32
    %468 = vector.broadcast %cst_253 : f32 to vector<2x32xf32>
    %469 = arith.addf %468, %467 : vector<2x32xf32>
    %470 = arith.divf %468, %469 : vector<2x32xf32>
    %471 = vector.extract_strided_slice %463 {offsets = [0, 32], sizes = [2, 32], strides = [1, 1]} : vector<2x128xf32> to vector<2x32xf32>
    %472 = arith.negf %471 : vector<2x32xf32>
    %473 = math.exp %472 : vector<2x32xf32>
    %cst_254 = arith.constant 1.000000e+00 : f32
    %474 = vector.broadcast %cst_254 : f32 to vector<2x32xf32>
    %475 = arith.addf %474, %473 : vector<2x32xf32>
    %476 = arith.divf %474, %475 : vector<2x32xf32>
    %477 = vector.extract_strided_slice %463 {offsets = [0, 64], sizes = [2, 32], strides = [1, 1]} : vector<2x128xf32> to vector<2x32xf32>
    %478 = math.tanh %477 : vector<2x32xf32>
    %479 = vector.extract_strided_slice %463 {offsets = [0, 96], sizes = [2, 32], strides = [1, 1]} : vector<2x128xf32> to vector<2x32xf32>
    %480 = arith.negf %479 : vector<2x32xf32>
    %481 = math.exp %480 : vector<2x32xf32>
    %cst_255 = arith.constant 1.000000e+00 : f32
    %482 = vector.broadcast %cst_255 : f32 to vector<2x32xf32>
    %483 = arith.addf %482, %481 : vector<2x32xf32>
    %484 = arith.divf %482, %483 : vector<2x32xf32>
    %485 = arith.mulf %476, %464 : vector<2x32xf32>
    %486 = arith.mulf %470, %478 : vector<2x32xf32>
    %487 = arith.addf %485, %486 : vector<2x32xf32>
    %488 = math.tanh %487 : vector<2x32xf32>
    %489 = arith.mulf %484, %488 : vector<2x32xf32>
    %c0_256 = arith.constant 0 : index
    %c0_257 = arith.constant 0 : index
    %490 = vector.load %arg16[%c0_256, %c0_257] : memref<2x32xf32, #tpu.memory_space<vmem>>, vector<2x32xf32>
    tpu.vector_store %arg16[%c0_256, %c0_257], %489 {strides = array<i32>} : memref<2x32xf32, #tpu.memory_space<vmem>>, vector<2x32xf32>,
    %c0_258 = arith.constant 0 : index
    %c0_259 = arith.constant 0 : index
    %491 = vector.load %arg17[%c0_258, %c0_259] : memref<2x32xf32, #tpu.memory_space<vmem>>, vector<2x32xf32>
    tpu.vector_store %arg17[%c0_258, %c0_259], %487 {strides = array<i32>} : memref<2x32xf32, #tpu.memory_space<vmem>>, vector<2x32xf32>,
    %c12_260 = arith.constant 12 : index
    %c0_261 = arith.constant 0 : index
    %492 = vector.load %arg13[%c12_260, %c0_261] : memref<16x32xf32, #tpu.memory_space<vmem>>, vector<2x32xf32>
    tpu.vector_store %arg13[%c12_260, %c0_261], %489 {strides = array<i32>} : memref<16x32xf32, #tpu.memory_space<vmem>>, vector<2x32xf32>,
    %c0_262 = arith.constant 0 : index
    %c0_263 = arith.constant 0 : index
    %493 = vector.load %arg20[%c0_262, %c0_263] : memref<2x32xf32, #tpu.memory_space<vmem>>, vector<2x32xf32>
    %494 = arith.addf %493, %489 : vector<2x32xf32>
    %c0_264 = arith.constant 0 : index
    %c0_265 = arith.constant 0 : index
    %495 = vector.load %arg20[%c0_264, %c0_265] : memref<2x32xf32, #tpu.memory_space<vmem>>, vector<2x32xf32>
    tpu.vector_store %arg20[%c0_264, %c0_265], %494 {strides = array<i32>} : memref<2x32xf32, #tpu.memory_space<vmem>>, vector<2x32xf32>,
    %496 = vector.extract_strided_slice %14 {offsets = [2, 0], sizes = [2, 128], strides = [1, 1]} : vector<16x128xf32> to vector<2x128xf32>
    %c0_266 = arith.constant 0 : index
    %c0_267 = arith.constant 0 : index
    %497 = vector.load %arg18[%c0_266, %c0_267] : memref<2x32xf32, #tpu.memory_space<vmem>>, vector<2x32xf32>
    %c0_268 = arith.constant 0 : index
    %c0_269 = arith.constant 0 : index
    %498 = vector.load %arg6[%c0_268, %c0_269] : memref<32x128xf32, #tpu.memory_space<vmem>>, vector<32x128xf32>
    %cst_270 = arith.constant dense<0.000000e+00> : vector<2x128xf32>
    %499 = tpu.matmul %497, %498, %cst_270 {dimension_numbers = #tpu.dot_dimension_numbers<[1], [0], [0], [1], [0, 0, 1, 1], [], []>} : vector<2x32xf32>, vector<32x128xf32>, vector<2x128xf32> -> vector<2x128xf32>
    %500 = arith.addf %496, %499 : vector<2x128xf32>
    %c0_271 = arith.constant 0 : index
    %c0_272 = arith.constant 0 : index
    %501 = vector.load %arg19[%c0_271, %c0_272] : memref<2x32xf32, #tpu.memory_space<vmem>>, vector<2x32xf32>
    %502 = vector.extract_strided_slice %500 {offsets = [0, 0], sizes = [2, 32], strides = [1, 1]} : vector<2x128xf32> to vector<2x32xf32>
    %503 = arith.negf %502 : vector<2x32xf32>
    %504 = math.exp %503 : vector<2x32xf32>
    %cst_273 = arith.constant 1.000000e+00 : f32
    %505 = vector.broadcast %cst_273 : f32 to vector<2x32xf32>
    %506 = arith.addf %505, %504 : vector<2x32xf32>
    %507 = arith.divf %505, %506 : vector<2x32xf32>
    %508 = vector.extract_strided_slice %500 {offsets = [0, 32], sizes = [2, 32], strides = [1, 1]} : vector<2x128xf32> to vector<2x32xf32>
    %509 = arith.negf %508 : vector<2x32xf32>
    %510 = math.exp %509 : vector<2x32xf32>
    %cst_274 = arith.constant 1.000000e+00 : f32
    %511 = vector.broadcast %cst_274 : f32 to vector<2x32xf32>
    %512 = arith.addf %511, %510 : vector<2x32xf32>
    %513 = arith.divf %511, %512 : vector<2x32xf32>
    %514 = vector.extract_strided_slice %500 {offsets = [0, 64], sizes = [2, 32], strides = [1, 1]} : vector<2x128xf32> to vector<2x32xf32>
    %515 = math.tanh %514 : vector<2x32xf32>
    %516 = vector.extract_strided_slice %500 {offsets = [0, 96], sizes = [2, 32], strides = [1, 1]} : vector<2x128xf32> to vector<2x32xf32>
    %517 = arith.negf %516 : vector<2x32xf32>
    %518 = math.exp %517 : vector<2x32xf32>
    %cst_275 = arith.constant 1.000000e+00 : f32
    %519 = vector.broadcast %cst_275 : f32 to vector<2x32xf32>
    %520 = arith.addf %519, %518 : vector<2x32xf32>
    %521 = arith.divf %519, %520 : vector<2x32xf32>
    %522 = arith.mulf %513, %501 : vector<2x32xf32>
    %523 = arith.mulf %507, %515 : vector<2x32xf32>
    %524 = arith.addf %522, %523 : vector<2x32xf32>
    %525 = math.tanh %524 : vector<2x32xf32>
    %526 = arith.mulf %521, %525 : vector<2x32xf32>
    %c0_276 = arith.constant 0 : index
    %c0_277 = arith.constant 0 : index
    %527 = vector.load %arg18[%c0_276, %c0_277] : memref<2x32xf32, #tpu.memory_space<vmem>>, vector<2x32xf32>
    tpu.vector_store %arg18[%c0_276, %c0_277], %526 {strides = array<i32>} : memref<2x32xf32, #tpu.memory_space<vmem>>, vector<2x32xf32>,
    %c0_278 = arith.constant 0 : index
    %c0_279 = arith.constant 0 : index
    %528 = vector.load %arg19[%c0_278, %c0_279] : memref<2x32xf32, #tpu.memory_space<vmem>>, vector<2x32xf32>
    tpu.vector_store %arg19[%c0_278, %c0_279], %524 {strides = array<i32>} : memref<2x32xf32, #tpu.memory_space<vmem>>, vector<2x32xf32>,
    %c2_280 = arith.constant 2 : index
    %c0_281 = arith.constant 0 : index
    %529 = vector.load %arg14[%c2_280, %c0_281] : memref<16x32xf32, #tpu.memory_space<vmem>>, vector<2x32xf32>
    tpu.vector_store %arg14[%c2_280, %c0_281], %526 {strides = array<i32>} : memref<16x32xf32, #tpu.memory_space<vmem>>, vector<2x32xf32>,
    %c0_282 = arith.constant 0 : index
    %c0_283 = arith.constant 0 : index
    %530 = vector.load %arg21[%c0_282, %c0_283] : memref<2x32xf32, #tpu.memory_space<vmem>>, vector<2x32xf32>
    %531 = arith.addf %530, %526 : vector<2x32xf32>
    %c0_284 = arith.constant 0 : index
    %c0_285 = arith.constant 0 : index
    %532 = vector.load %arg21[%c0_284, %c0_285] : memref<2x32xf32, #tpu.memory_space<vmem>>, vector<2x32xf32>
    tpu.vector_store %arg21[%c0_284, %c0_285], %531 {strides = array<i32>} : memref<2x32xf32, #tpu.memory_space<vmem>>, vector<2x32xf32>,
    %533 = vector.extract_strided_slice %8 {offsets = [14, 0], sizes = [2, 128], strides = [1, 1]} : vector<16x128xf32> to vector<2x128xf32>
    %c0_286 = arith.constant 0 : index
    %c0_287 = arith.constant 0 : index
    %534 = vector.load %arg16[%c0_286, %c0_287] : memref<2x32xf32, #tpu.memory_space<vmem>>, vector<2x32xf32>
    %c0_288 = arith.constant 0 : index
    %c0_289 = arith.constant 0 : index
    %535 = vector.load %arg5[%c0_288, %c0_289] : memref<32x128xf32, #tpu.memory_space<vmem>>, vector<32x128xf32>
    %cst_290 = arith.constant dense<0.000000e+00> : vector<2x128xf32>
    %536 = tpu.matmul %534, %535, %cst_290 {dimension_numbers = #tpu.dot_dimension_numbers<[1], [0], [0], [1], [0, 0, 1, 1], [], []>} : vector<2x32xf32>, vector<32x128xf32>, vector<2x128xf32> -> vector<2x128xf32>
    %537 = arith.addf %533, %536 : vector<2x128xf32>
    %c0_291 = arith.constant 0 : index
    %c0_292 = arith.constant 0 : index
    %538 = vector.load %arg17[%c0_291, %c0_292] : memref<2x32xf32, #tpu.memory_space<vmem>>, vector<2x32xf32>
    %539 = vector.extract_strided_slice %537 {offsets = [0, 0], sizes = [2, 32], strides = [1, 1]} : vector<2x128xf32> to vector<2x32xf32>
    %540 = arith.negf %539 : vector<2x32xf32>
    %541 = math.exp %540 : vector<2x32xf32>
    %cst_293 = arith.constant 1.000000e+00 : f32
    %542 = vector.broadcast %cst_293 : f32 to vector<2x32xf32>
    %543 = arith.addf %542, %541 : vector<2x32xf32>
    %544 = arith.divf %542, %543 : vector<2x32xf32>
    %545 = vector.extract_strided_slice %537 {offsets = [0, 32], sizes = [2, 32], strides = [1, 1]} : vector<2x128xf32> to vector<2x32xf32>
    %546 = arith.negf %545 : vector<2x32xf32>
    %547 = math.exp %546 : vector<2x32xf32>
    %cst_294 = arith.constant 1.000000e+00 : f32
    %548 = vector.broadcast %cst_294 : f32 to vector<2x32xf32>
    %549 = arith.addf %548, %547 : vector<2x32xf32>
    %550 = arith.divf %548, %549 : vector<2x32xf32>
    %551 = vector.extract_strided_slice %537 {offsets = [0, 64], sizes = [2, 32], strides = [1, 1]} : vector<2x128xf32> to vector<2x32xf32>
    %552 = math.tanh %551 : vector<2x32xf32>
    %553 = vector.extract_strided_slice %537 {offsets = [0, 96], sizes = [2, 32], strides = [1, 1]} : vector<2x128xf32> to vector<2x32xf32>
    %554 = arith.negf %553 : vector<2x32xf32>
    %555 = math.exp %554 : vector<2x32xf32>
    %cst_295 = arith.constant 1.000000e+00 : f32
    %556 = vector.broadcast %cst_295 : f32 to vector<2x32xf32>
    %557 = arith.addf %556, %555 : vector<2x32xf32>
    %558 = arith.divf %556, %557 : vector<2x32xf32>
    %559 = arith.mulf %550, %538 : vector<2x32xf32>
    %560 = arith.mulf %544, %552 : vector<2x32xf32>
    %561 = arith.addf %559, %560 : vector<2x32xf32>
    %562 = math.tanh %561 : vector<2x32xf32>
    %563 = arith.mulf %558, %562 : vector<2x32xf32>
    %c0_296 = arith.constant 0 : index
    %c0_297 = arith.constant 0 : index
    %564 = vector.load %arg16[%c0_296, %c0_297] : memref<2x32xf32, #tpu.memory_space<vmem>>, vector<2x32xf32>
    tpu.vector_store %arg16[%c0_296, %c0_297], %563 {strides = array<i32>} : memref<2x32xf32, #tpu.memory_space<vmem>>, vector<2x32xf32>,
    %c0_298 = arith.constant 0 : index
    %c0_299 = arith.constant 0 : index
    %565 = vector.load %arg17[%c0_298, %c0_299] : memref<2x32xf32, #tpu.memory_space<vmem>>, vector<2x32xf32>
    tpu.vector_store %arg17[%c0_298, %c0_299], %561 {strides = array<i32>} : memref<2x32xf32, #tpu.memory_space<vmem>>, vector<2x32xf32>,
    %c14_300 = arith.constant 14 : index
    %c0_301 = arith.constant 0 : index
    %566 = vector.load %arg13[%c14_300, %c0_301] : memref<16x32xf32, #tpu.memory_space<vmem>>, vector<2x32xf32>
    tpu.vector_store %arg13[%c14_300, %c0_301], %563 {strides = array<i32>} : memref<16x32xf32, #tpu.memory_space<vmem>>, vector<2x32xf32>,
    %c0_302 = arith.constant 0 : index
    %c0_303 = arith.constant 0 : index
    %567 = vector.load %arg20[%c0_302, %c0_303] : memref<2x32xf32, #tpu.memory_space<vmem>>, vector<2x32xf32>
    %568 = arith.addf %567, %563 : vector<2x32xf32>
    %c0_304 = arith.constant 0 : index
    %c0_305 = arith.constant 0 : index
    %569 = vector.load %arg20[%c0_304, %c0_305] : memref<2x32xf32, #tpu.memory_space<vmem>>, vector<2x32xf32>
    tpu.vector_store %arg20[%c0_304, %c0_305], %568 {strides = array<i32>} : memref<2x32xf32, #tpu.memory_space<vmem>>, vector<2x32xf32>,
    %570 = vector.extract_strided_slice %14 {offsets = [0, 0], sizes = [2, 128], strides = [1, 1]} : vector<16x128xf32> to vector<2x128xf32>
    %c0_306 = arith.constant 0 : index
    %c0_307 = arith.constant 0 : index
    %571 = vector.load %arg18[%c0_306, %c0_307] : memref<2x32xf32, #tpu.memory_space<vmem>>, vector<2x32xf32>
    %c0_308 = arith.constant 0 : index
    %c0_309 = arith.constant 0 : index
    %572 = vector.load %arg6[%c0_308, %c0_309] : memref<32x128xf32, #tpu.memory_space<vmem>>, vector<32x128xf32>
    %cst_310 = arith.constant dense<0.000000e+00> : vector<2x128xf32>
    %573 = tpu.matmul %571, %572, %cst_310 {dimension_numbers = #tpu.dot_dimension_numbers<[1], [0], [0], [1], [0, 0, 1, 1], [], []>} : vector<2x32xf32>, vector<32x128xf32>, vector<2x128xf32> -> vector<2x128xf32>
    %574 = arith.addf %570, %573 : vector<2x128xf32>
    %c0_311 = arith.constant 0 : index
    %c0_312 = arith.constant 0 : index
    %575 = vector.load %arg19[%c0_311, %c0_312] : memref<2x32xf32, #tpu.memory_space<vmem>>, vector<2x32xf32>
    %576 = vector.extract_strided_slice %574 {offsets = [0, 0], sizes = [2, 32], strides = [1, 1]} : vector<2x128xf32> to vector<2x32xf32>
    %577 = arith.negf %576 : vector<2x32xf32>
    %578 = math.exp %577 : vector<2x32xf32>
    %cst_313 = arith.constant 1.000000e+00 : f32
    %579 = vector.broadcast %cst_313 : f32 to vector<2x32xf32>
    %580 = arith.addf %579, %578 : vector<2x32xf32>
    %581 = arith.divf %579, %580 : vector<2x32xf32>
    %582 = vector.extract_strided_slice %574 {offsets = [0, 32], sizes = [2, 32], strides = [1, 1]} : vector<2x128xf32> to vector<2x32xf32>
    %583 = arith.negf %582 : vector<2x32xf32>
    %584 = math.exp %583 : vector<2x32xf32>
    %cst_314 = arith.constant 1.000000e+00 : f32
    %585 = vector.broadcast %cst_314 : f32 to vector<2x32xf32>
    %586 = arith.addf %585, %584 : vector<2x32xf32>
    %587 = arith.divf %585, %586 : vector<2x32xf32>
    %588 = vector.extract_strided_slice %574 {offsets = [0, 64], sizes = [2, 32], strides = [1, 1]} : vector<2x128xf32> to vector<2x32xf32>
    %589 = math.tanh %588 : vector<2x32xf32>
    %590 = vector.extract_strided_slice %574 {offsets = [0, 96], sizes = [2, 32], strides = [1, 1]} : vector<2x128xf32> to vector<2x32xf32>
    %591 = arith.negf %590 : vector<2x32xf32>
    %592 = math.exp %591 : vector<2x32xf32>
    %cst_315 = arith.constant 1.000000e+00 : f32
    %593 = vector.broadcast %cst_315 : f32 to vector<2x32xf32>
    %594 = arith.addf %593, %592 : vector<2x32xf32>
    %595 = arith.divf %593, %594 : vector<2x32xf32>
    %596 = arith.mulf %587, %575 : vector<2x32xf32>
    %597 = arith.mulf %581, %589 : vector<2x32xf32>
    %598 = arith.addf %596, %597 : vector<2x32xf32>
    %599 = math.tanh %598 : vector<2x32xf32>
    %600 = arith.mulf %595, %599 : vector<2x32xf32>
    %c0_316 = arith.constant 0 : index
    %c0_317 = arith.constant 0 : index
    %601 = vector.load %arg18[%c0_316, %c0_317] : memref<2x32xf32, #tpu.memory_space<vmem>>, vector<2x32xf32>
    tpu.vector_store %arg18[%c0_316, %c0_317], %600 {strides = array<i32>} : memref<2x32xf32, #tpu.memory_space<vmem>>, vector<2x32xf32>,
    %c0_318 = arith.constant 0 : index
    %c0_319 = arith.constant 0 : index
    %602 = vector.load %arg19[%c0_318, %c0_319] : memref<2x32xf32, #tpu.memory_space<vmem>>, vector<2x32xf32>
    tpu.vector_store %arg19[%c0_318, %c0_319], %598 {strides = array<i32>} : memref<2x32xf32, #tpu.memory_space<vmem>>, vector<2x32xf32>,
    %c0_320 = arith.constant 0 : index
    %c0_321 = arith.constant 0 : index
    %603 = vector.load %arg14[%c0_320, %c0_321] : memref<16x32xf32, #tpu.memory_space<vmem>>, vector<2x32xf32>
    tpu.vector_store %arg14[%c0_320, %c0_321], %600 {strides = array<i32>} : memref<16x32xf32, #tpu.memory_space<vmem>>, vector<2x32xf32>,
    %c0_322 = arith.constant 0 : index
    %c0_323 = arith.constant 0 : index
    %604 = vector.load %arg21[%c0_322, %c0_323] : memref<2x32xf32, #tpu.memory_space<vmem>>, vector<2x32xf32>
    %605 = arith.addf %604, %600 : vector<2x32xf32>
    %c0_324 = arith.constant 0 : index
    %c0_325 = arith.constant 0 : index
    %606 = vector.load %arg21[%c0_324, %c0_325] : memref<2x32xf32, #tpu.memory_space<vmem>>, vector<2x32xf32>
    tpu.vector_store %arg21[%c0_324, %c0_325], %605 {strides = array<i32>} : memref<2x32xf32, #tpu.memory_space<vmem>>, vector<2x32xf32>,
    %c0_i32_326 = arith.constant 0 : i32
    %607 = arith.cmpi eq, %arg0, %c0_i32_326 : i32
    %608 = arith.extui %607 : i1 to i32
    %c0_i32_327 = arith.constant 0 : i32
    %609 = arith.cmpi ne, %608, %c0_i32_327 : i32
    scf.if %609 {
      %c0_328 = arith.constant 0 : index
      %c0_329 = arith.constant 0 : index
      %610 = vector.load %arg20[%c0_328, %c0_329] : memref<2x32xf32, #tpu.memory_space<vmem>>, vector<2x32xf32>
      %cst_330 = arith.constant 1.250000e-01 : f32
      %611 = vector.broadcast %cst_330 : f32 to vector<2x32xf32>
      %612 = arith.mulf %610, %611 : vector<2x32xf32>
      %c0_331 = arith.constant 0 : index
      %c0_332 = arith.constant 0 : index
      %613 = vector.load %arg15[%c0_331, %c0_332] : memref<2x64xf32, #tpu.memory_space<vmem>>, vector<2x32xf32>
      tpu.vector_store %arg15[%c0_331, %c0_332], %612 {strides = array<i32>} : memref<2x64xf32, #tpu.memory_space<vmem>>, vector<2x32xf32>,
      %c0_333 = arith.constant 0 : index
      %c0_334 = arith.constant 0 : index
      %614 = vector.load %arg21[%c0_333, %c0_334] : memref<2x32xf32, #tpu.memory_space<vmem>>, vector<2x32xf32>
      %cst_335 = arith.constant 1.250000e-01 : f32
      %615 = vector.broadcast %cst_335 : f32 to vector<2x32xf32>
      %616 = arith.mulf %614, %615 : vector<2x32xf32>
      %c0_336 = arith.constant 0 : index
      %c32 = arith.constant 32 : index
      %617 = vector.load %arg15[%c0_336, %c32] : memref<2x64xf32, #tpu.memory_space<vmem>>, vector<2x32xf32>
      tpu.vector_store %arg15[%c0_336, %c32], %616 {strides = array<i32>} : memref<2x64xf32, #tpu.memory_space<vmem>>, vector<2x32xf32>,
    } else {
    }
    return
  }
  func.func @transform_0(%arg0: i32) -> (i32, i32) {
    %c0_i32 = arith.constant 0 : i32
    %c0_i32_0 = arith.constant 0 : i32
    return %arg0, %c0_i32 : i32, i32
  }
  func.func @transform_1(%arg0: i32) -> (i32, i32) {
    %c0_i32 = arith.constant 0 : i32
    %0 = arith.subi %c0_i32, %arg0 : i32
    %c0_i32_0 = arith.constant 0 : i32
    %c0_i32_1 = arith.constant 0 : i32
    return %0, %c0_i32_0 : i32, i32
  }
  func.func @transform_2(%arg0: i32) -> (i32, i32) {
    %c0_i32 = arith.constant 0 : i32
    %c0_i32_0 = arith.constant 0 : i32
    %c0_i32_1 = arith.constant 0 : i32
    return %c0_i32, %c0_i32_0 : i32, i32
  }
  func.func @transform_3(%arg0: i32) -> (i32, i32) {
    %c0_i32 = arith.constant 0 : i32
    %c0_i32_0 = arith.constant 0 : i32
    %c0_i32_1 = arith.constant 0 : i32
    return %c0_i32, %c0_i32_0 : i32, i32
  }
  func.func @transform_4(%arg0: i32) -> (i32, i32) {
    %c0_i32 = arith.constant 0 : i32
    %c0_i32_0 = arith.constant 0 : i32
    %c0_i32_1 = arith.constant 0 : i32
    return %c0_i32, %c0_i32_0 : i32, i32
  }
  func.func @transform_5(%arg0: i32) -> (i32, i32) {
    %c0_i32 = arith.constant 0 : i32
    %c0_i32_0 = arith.constant 0 : i32
    %c0_i32_1 = arith.constant 0 : i32
    return %c0_i32, %c0_i32_0 : i32, i32
  }
  func.func @transform_6(%arg0: i32) -> (i32, i32) {
    %c0_i32 = arith.constant 0 : i32
    %c0_i32_0 = arith.constant 0 : i32
    %c0_i32_1 = arith.constant 0 : i32
    return %c0_i32, %c0_i32_0 : i32, i32
  }
  func.func @transform_7(%arg0: i32) -> (i32, i32) {
    %c0_i32 = arith.constant 0 : i32
    %c0_i32_0 = arith.constant 0 : i32
    %c0_i32_1 = arith.constant 0 : i32
    return %c0_i32, %c0_i32_0 : i32, i32
  }
  func.func @transform_8(%arg0: i32) -> (i32, i32) {
    %c0_i32 = arith.constant 0 : i32
    %c0_i32_0 = arith.constant 0 : i32
    %c0_i32_1 = arith.constant 0 : i32
    return %c0_i32, %c0_i32_0 : i32, i32
  }
  func.func @transform_9(%arg0: i32) -> (i32, i32) {
    %c0_i32 = arith.constant 0 : i32
    %c0_i32_0 = arith.constant 0 : i32
    %c0_i32_1 = arith.constant 0 : i32
    return %c0_i32, %c0_i32_0 : i32, i32
  }
  func.func @transform_10(%arg0: i32) -> (i32, i32) {
    %c0_i32 = arith.constant 0 : i32
    %c0_i32_0 = arith.constant 0 : i32
    %c0_i32_1 = arith.constant 0 : i32
    return %c0_i32, %c0_i32_0 : i32, i32
  }
  func.func @transform_11(%arg0: i32) -> (i32, i32) {
    %c0_i32 = arith.constant 0 : i32
    %c0_i32_0 = arith.constant 0 : i32
    %c0_i32_1 = arith.constant 0 : i32
    return %c0_i32, %c0_i32_0 : i32, i32
  }
  func.func @transform_12(%arg0: i32) -> (i32, i32) {
    %c0_i32 = arith.constant 0 : i32
    %c0_i32_0 = arith.constant 0 : i32
    return %arg0, %c0_i32 : i32, i32
  }
  func.func @transform_13(%arg0: i32) -> (i32, i32) {
    %c0_i32 = arith.constant 0 : i32
    %0 = arith.subi %c0_i32, %arg0 : i32
    %c0_i32_0 = arith.constant 0 : i32
    %c0_i32_1 = arith.constant 0 : i32
    return %0, %c0_i32_0 : i32, i32
  }
  func.func @transform_14(%arg0: i32) -> (i32, i32) {
    %c0_i32 = arith.constant 0 : i32
    %c0_i32_0 = arith.constant 0 : i32
    %c0_i32_1 = arith.constant 0 : i32
    return %c0_i32, %c0_i32_0 : i32, i32
  }
}

module attributes {stable_mosaic.version = 11 : i64} {
  func.func @_bilstm_chunk_kernel(%arg0: i32, %arg1: memref<16x32xf32, #tpu.memory_space<vmem>>, %arg2: memref<16x32xf32, #tpu.memory_space<vmem>>, %arg3: memref<16x32xf32, #tpu.memory_space<vmem>>, %arg4: memref<16x32xf32, #tpu.memory_space<vmem>>, %arg5: memref<32x128xf32, #tpu.memory_space<vmem>>, %arg6: memref<32x128xf32, #tpu.memory_space<vmem>>, %arg7: memref<32x128xf32, #tpu.memory_space<vmem>>, %arg8: memref<32x128xf32, #tpu.memory_space<vmem>>, %arg9: memref<32x128xf32, #tpu.memory_space<vmem>>, %arg10: memref<32x128xf32, #tpu.memory_space<vmem>>, %arg11: memref<1x128xf32, #tpu.memory_space<vmem>>, %arg12: memref<1x128xf32, #tpu.memory_space<vmem>>, %arg13: memref<2x32xf32, #tpu.memory_space<vmem>>, %arg14: memref<2x32xf32, #tpu.memory_space<vmem>>, %arg15: memref<2x32xf32, #tpu.memory_space<vmem>>, %arg16: memref<2x32xf32, #tpu.memory_space<vmem>>, %arg17: memref<16x32xf32, #tpu.memory_space<vmem>>, %arg18: memref<16x32xf32, #tpu.memory_space<vmem>>, %arg19: memref<2x64xf32, #tpu.memory_space<vmem>>, %arg20: memref<2x32xf32, #tpu.memory_space<vmem>>, %arg21: memref<2x32xf32, #tpu.memory_space<vmem>>, %arg22: memref<2x32xf32, #tpu.memory_space<vmem>>, %arg23: memref<2x32xf32, #tpu.memory_space<vmem>>, %arg24: memref<2x32xf32, #tpu.memory_space<vmem>>, %arg25: memref<2x32xf32, #tpu.memory_space<vmem>>) attributes {dimension_semantics = [#tpu.dimension_semantics<arbitrary>], iteration_bounds = array<i64: 1>, scalar_prefetch = 0 : i64, scratch_operands = 6 : i64, tpu.core_type = #tpu.core_type<tc>, window_params = [{transform_indices = @transform_0, window_bounds = array<i64: 16, 32>}, {transform_indices = @transform_1, window_bounds = array<i64: 16, 32>}, {transform_indices = @transform_2, window_bounds = array<i64: 16, 32>}, {transform_indices = @transform_3, window_bounds = array<i64: 16, 32>}, {pipeline_mode = #tpu.pipeline_mode<synchronous>, transform_indices = @transform_4, window_bounds = array<i64: 32, 128>}, {pipeline_mode = #tpu.pipeline_mode<synchronous>, transform_indices = @transform_5, window_bounds = array<i64: 32, 128>}, {pipeline_mode = #tpu.pipeline_mode<synchronous>, transform_indices = @transform_6, window_bounds = array<i64: 32, 128>}, {pipeline_mode = #tpu.pipeline_mode<synchronous>, transform_indices = @transform_7, window_bounds = array<i64: 32, 128>}, {pipeline_mode = #tpu.pipeline_mode<synchronous>, transform_indices = @transform_8, window_bounds = array<i64: 32, 128>}, {pipeline_mode = #tpu.pipeline_mode<synchronous>, transform_indices = @transform_9, window_bounds = array<i64: 32, 128>}, {pipeline_mode = #tpu.pipeline_mode<synchronous>, transform_indices = @transform_10, window_bounds = array<i64: 1, 128>}, {pipeline_mode = #tpu.pipeline_mode<synchronous>, transform_indices = @transform_11, window_bounds = array<i64: 1, 128>}, {pipeline_mode = #tpu.pipeline_mode<synchronous>, transform_indices = @transform_12, window_bounds = array<i64: 2, 32>}, {pipeline_mode = #tpu.pipeline_mode<synchronous>, transform_indices = @transform_13, window_bounds = array<i64: 2, 32>}, {pipeline_mode = #tpu.pipeline_mode<synchronous>, transform_indices = @transform_14, window_bounds = array<i64: 2, 32>}, {pipeline_mode = #tpu.pipeline_mode<synchronous>, transform_indices = @transform_15, window_bounds = array<i64: 2, 32>}, {transform_indices = @transform_16, window_bounds = array<i64: 16, 32>}, {transform_indices = @transform_17, window_bounds = array<i64: 16, 32>}, {pipeline_mode = #tpu.pipeline_mode<synchronous>, transform_indices = @transform_18, window_bounds = array<i64: 2, 64>}]} {
    %c0_i32 = arith.constant 0 : i32
    %0 = arith.cmpi eq, %arg0, %c0_i32 : i32
    %1 = arith.extui %0 : i1 to i32
    %c0_i32_0 = arith.constant 0 : i32
    %2 = arith.cmpi ne, %1, %c0_i32_0 : i32
    scf.if %2 {
      %c0_338 = arith.constant 0 : index
      %c0_339 = arith.constant 0 : index
      %618 = vector.load %arg13[%c0_338, %c0_339] : memref<2x32xf32, #tpu.memory_space<vmem>>, vector<2x32xf32>
      %c0_340 = arith.constant 0 : index
      %c0_341 = arith.constant 0 : index
      %619 = vector.load %arg20[%c0_340, %c0_341] : memref<2x32xf32, #tpu.memory_space<vmem>>, vector<2x32xf32>
      tpu.vector_store %arg20[%c0_340, %c0_341], %618 {strides = array<i32>} : memref<2x32xf32, #tpu.memory_space<vmem>>, vector<2x32xf32>,
      %c0_342 = arith.constant 0 : index
      %c0_343 = arith.constant 0 : index
      %620 = vector.load %arg14[%c0_342, %c0_343] : memref<2x32xf32, #tpu.memory_space<vmem>>, vector<2x32xf32>
      %c0_344 = arith.constant 0 : index
      %c0_345 = arith.constant 0 : index
      %621 = vector.load %arg21[%c0_344, %c0_345] : memref<2x32xf32, #tpu.memory_space<vmem>>, vector<2x32xf32>
      tpu.vector_store %arg21[%c0_344, %c0_345], %620 {strides = array<i32>} : memref<2x32xf32, #tpu.memory_space<vmem>>, vector<2x32xf32>,
      %c0_346 = arith.constant 0 : index
      %c0_347 = arith.constant 0 : index
      %622 = vector.load %arg15[%c0_346, %c0_347] : memref<2x32xf32, #tpu.memory_space<vmem>>, vector<2x32xf32>
      %c0_348 = arith.constant 0 : index
      %c0_349 = arith.constant 0 : index
      %623 = vector.load %arg22[%c0_348, %c0_349] : memref<2x32xf32, #tpu.memory_space<vmem>>, vector<2x32xf32>
      tpu.vector_store %arg22[%c0_348, %c0_349], %622 {strides = array<i32>} : memref<2x32xf32, #tpu.memory_space<vmem>>, vector<2x32xf32>,
      %c0_350 = arith.constant 0 : index
      %c0_351 = arith.constant 0 : index
      %624 = vector.load %arg16[%c0_350, %c0_351] : memref<2x32xf32, #tpu.memory_space<vmem>>, vector<2x32xf32>
      %c0_352 = arith.constant 0 : index
      %c0_353 = arith.constant 0 : index
      %625 = vector.load %arg23[%c0_352, %c0_353] : memref<2x32xf32, #tpu.memory_space<vmem>>, vector<2x32xf32>
      tpu.vector_store %arg23[%c0_352, %c0_353], %624 {strides = array<i32>} : memref<2x32xf32, #tpu.memory_space<vmem>>, vector<2x32xf32>,
      %cst_354 = arith.constant 0.000000e+00 : f32
      %626 = vector.broadcast %cst_354 : f32 to vector<2x32xf32>
      %c0_355 = arith.constant 0 : index
      %c0_356 = arith.constant 0 : index
      %627 = vector.load %arg24[%c0_355, %c0_356] : memref<2x32xf32, #tpu.memory_space<vmem>>, vector<2x32xf32>
      tpu.vector_store %arg24[%c0_355, %c0_356], %626 {strides = array<i32>} : memref<2x32xf32, #tpu.memory_space<vmem>>, vector<2x32xf32>,
      %cst_357 = arith.constant 0.000000e+00 : f32
      %628 = vector.broadcast %cst_357 : f32 to vector<2x32xf32>
      %c0_358 = arith.constant 0 : index
      %c0_359 = arith.constant 0 : index
      %629 = vector.load %arg25[%c0_358, %c0_359] : memref<2x32xf32, #tpu.memory_space<vmem>>, vector<2x32xf32>
      tpu.vector_store %arg25[%c0_358, %c0_359], %628 {strides = array<i32>} : memref<2x32xf32, #tpu.memory_space<vmem>>, vector<2x32xf32>,
    } else {
    }
    %c0 = arith.constant 0 : index
    %c0_1 = arith.constant 0 : index
    %3 = vector.load %arg1[%c0, %c0_1] : memref<16x32xf32, #tpu.memory_space<vmem>>, vector<16x32xf32>
    %c0_2 = arith.constant 0 : index
    %c0_3 = arith.constant 0 : index
    %4 = vector.load %arg5[%c0_2, %c0_3] : memref<32x128xf32, #tpu.memory_space<vmem>>, vector<32x128xf32>
    %cst = arith.constant dense<0.000000e+00> : vector<16x128xf32>
    %5 = tpu.matmul %3, %4, %cst {dimension_numbers = #tpu.dot_dimension_numbers<[1], [0], [0], [1], [0, 0, 1, 1], [], []>} : vector<16x32xf32>, vector<32x128xf32>, vector<16x128xf32> -> vector<16x128xf32>
    %c0_4 = arith.constant 0 : index
    %c0_5 = arith.constant 0 : index
    %6 = vector.load %arg2[%c0_4, %c0_5] : memref<16x32xf32, #tpu.memory_space<vmem>>, vector<16x32xf32>
    %c0_6 = arith.constant 0 : index
    %c0_7 = arith.constant 0 : index
    %7 = vector.load %arg6[%c0_6, %c0_7] : memref<32x128xf32, #tpu.memory_space<vmem>>, vector<32x128xf32>
    %cst_8 = arith.constant dense<0.000000e+00> : vector<16x128xf32>
    %8 = tpu.matmul %6, %7, %cst_8 {dimension_numbers = #tpu.dot_dimension_numbers<[1], [0], [0], [1], [0, 0, 1, 1], [], []>} : vector<16x32xf32>, vector<32x128xf32>, vector<16x128xf32> -> vector<16x128xf32>
    %9 = arith.addf %5, %8 : vector<16x128xf32>
    %c0_9 = arith.constant 0 : index
    %c0_10 = arith.constant 0 : index
    %10 = vector.load %arg11[%c0_9, %c0_10] : memref<1x128xf32, #tpu.memory_space<vmem>>, vector<1x128xf32>
    %11 = vector.broadcast %10 : vector<1x128xf32> to vector<16x128xf32>
    %12 = arith.addf %9, %11 : vector<16x128xf32>
    %c0_11 = arith.constant 0 : index
    %c0_12 = arith.constant 0 : index
    %13 = vector.load %arg3[%c0_11, %c0_12] : memref<16x32xf32, #tpu.memory_space<vmem>>, vector<16x32xf32>
    %c0_13 = arith.constant 0 : index
    %c0_14 = arith.constant 0 : index
    %14 = vector.load %arg7[%c0_13, %c0_14] : memref<32x128xf32, #tpu.memory_space<vmem>>, vector<32x128xf32>
    %cst_15 = arith.constant dense<0.000000e+00> : vector<16x128xf32>
    %15 = tpu.matmul %13, %14, %cst_15 {dimension_numbers = #tpu.dot_dimension_numbers<[1], [0], [0], [1], [0, 0, 1, 1], [], []>} : vector<16x32xf32>, vector<32x128xf32>, vector<16x128xf32> -> vector<16x128xf32>
    %c0_16 = arith.constant 0 : index
    %c0_17 = arith.constant 0 : index
    %16 = vector.load %arg4[%c0_16, %c0_17] : memref<16x32xf32, #tpu.memory_space<vmem>>, vector<16x32xf32>
    %c0_18 = arith.constant 0 : index
    %c0_19 = arith.constant 0 : index
    %17 = vector.load %arg8[%c0_18, %c0_19] : memref<32x128xf32, #tpu.memory_space<vmem>>, vector<32x128xf32>
    %cst_20 = arith.constant dense<0.000000e+00> : vector<16x128xf32>
    %18 = tpu.matmul %16, %17, %cst_20 {dimension_numbers = #tpu.dot_dimension_numbers<[1], [0], [0], [1], [0, 0, 1, 1], [], []>} : vector<16x32xf32>, vector<32x128xf32>, vector<16x128xf32> -> vector<16x128xf32>
    %19 = arith.addf %15, %18 : vector<16x128xf32>
    %c0_21 = arith.constant 0 : index
    %c0_22 = arith.constant 0 : index
    %20 = vector.load %arg12[%c0_21, %c0_22] : memref<1x128xf32, #tpu.memory_space<vmem>>, vector<1x128xf32>
    %21 = vector.broadcast %20 : vector<1x128xf32> to vector<16x128xf32>
    %22 = arith.addf %19, %21 : vector<16x128xf32>
    %23 = vector.extract_strided_slice %12 {offsets = [0, 0], sizes = [2, 128], strides = [1, 1]} : vector<16x128xf32> to vector<2x128xf32>
    %c0_23 = arith.constant 0 : index
    %c0_24 = arith.constant 0 : index
    %24 = vector.load %arg20[%c0_23, %c0_24] : memref<2x32xf32, #tpu.memory_space<vmem>>, vector<2x32xf32>
    %c0_25 = arith.constant 0 : index
    %c0_26 = arith.constant 0 : index
    %25 = vector.load %arg9[%c0_25, %c0_26] : memref<32x128xf32, #tpu.memory_space<vmem>>, vector<32x128xf32>
    %cst_27 = arith.constant dense<0.000000e+00> : vector<2x128xf32>
    %26 = tpu.matmul %24, %25, %cst_27 {dimension_numbers = #tpu.dot_dimension_numbers<[1], [0], [0], [1], [0, 0, 1, 1], [], []>} : vector<2x32xf32>, vector<32x128xf32>, vector<2x128xf32> -> vector<2x128xf32>
    %27 = arith.addf %23, %26 : vector<2x128xf32>
    %c0_28 = arith.constant 0 : index
    %c0_29 = arith.constant 0 : index
    %28 = vector.load %arg21[%c0_28, %c0_29] : memref<2x32xf32, #tpu.memory_space<vmem>>, vector<2x32xf32>
    %29 = vector.extract_strided_slice %27 {offsets = [0, 0], sizes = [2, 32], strides = [1, 1]} : vector<2x128xf32> to vector<2x32xf32>
    %30 = arith.negf %29 : vector<2x32xf32>
    %31 = math.exp %30 : vector<2x32xf32>
    %cst_30 = arith.constant 1.000000e+00 : f32
    %32 = vector.broadcast %cst_30 : f32 to vector<2x32xf32>
    %33 = arith.addf %32, %31 : vector<2x32xf32>
    %34 = arith.divf %32, %33 : vector<2x32xf32>
    %35 = vector.extract_strided_slice %27 {offsets = [0, 32], sizes = [2, 32], strides = [1, 1]} : vector<2x128xf32> to vector<2x32xf32>
    %36 = arith.negf %35 : vector<2x32xf32>
    %37 = math.exp %36 : vector<2x32xf32>
    %cst_31 = arith.constant 1.000000e+00 : f32
    %38 = vector.broadcast %cst_31 : f32 to vector<2x32xf32>
    %39 = arith.addf %38, %37 : vector<2x32xf32>
    %40 = arith.divf %38, %39 : vector<2x32xf32>
    %41 = vector.extract_strided_slice %27 {offsets = [0, 64], sizes = [2, 32], strides = [1, 1]} : vector<2x128xf32> to vector<2x32xf32>
    %42 = math.tanh %41 : vector<2x32xf32>
    %43 = vector.extract_strided_slice %27 {offsets = [0, 96], sizes = [2, 32], strides = [1, 1]} : vector<2x128xf32> to vector<2x32xf32>
    %44 = arith.negf %43 : vector<2x32xf32>
    %45 = math.exp %44 : vector<2x32xf32>
    %cst_32 = arith.constant 1.000000e+00 : f32
    %46 = vector.broadcast %cst_32 : f32 to vector<2x32xf32>
    %47 = arith.addf %46, %45 : vector<2x32xf32>
    %48 = arith.divf %46, %47 : vector<2x32xf32>
    %49 = arith.mulf %40, %28 : vector<2x32xf32>
    %50 = arith.mulf %34, %42 : vector<2x32xf32>
    %51 = arith.addf %49, %50 : vector<2x32xf32>
    %52 = math.tanh %51 : vector<2x32xf32>
    %53 = arith.mulf %48, %52 : vector<2x32xf32>
    %c0_33 = arith.constant 0 : index
    %c0_34 = arith.constant 0 : index
    %54 = vector.load %arg20[%c0_33, %c0_34] : memref<2x32xf32, #tpu.memory_space<vmem>>, vector<2x32xf32>
    tpu.vector_store %arg20[%c0_33, %c0_34], %53 {strides = array<i32>} : memref<2x32xf32, #tpu.memory_space<vmem>>, vector<2x32xf32>,
    %c0_35 = arith.constant 0 : index
    %c0_36 = arith.constant 0 : index
    %55 = vector.load %arg21[%c0_35, %c0_36] : memref<2x32xf32, #tpu.memory_space<vmem>>, vector<2x32xf32>
    tpu.vector_store %arg21[%c0_35, %c0_36], %51 {strides = array<i32>} : memref<2x32xf32, #tpu.memory_space<vmem>>, vector<2x32xf32>,
    %c0_37 = arith.constant 0 : index
    %c0_38 = arith.constant 0 : index
    %56 = vector.load %arg17[%c0_37, %c0_38] : memref<16x32xf32, #tpu.memory_space<vmem>>, vector<2x32xf32>
    tpu.vector_store %arg17[%c0_37, %c0_38], %53 {strides = array<i32>} : memref<16x32xf32, #tpu.memory_space<vmem>>, vector<2x32xf32>,
    %c0_39 = arith.constant 0 : index
    %c0_40 = arith.constant 0 : index
    %57 = vector.load %arg24[%c0_39, %c0_40] : memref<2x32xf32, #tpu.memory_space<vmem>>, vector<2x32xf32>
    %58 = arith.addf %57, %53 : vector<2x32xf32>
    %c0_41 = arith.constant 0 : index
    %c0_42 = arith.constant 0 : index
    %59 = vector.load %arg24[%c0_41, %c0_42] : memref<2x32xf32, #tpu.memory_space<vmem>>, vector<2x32xf32>
    tpu.vector_store %arg24[%c0_41, %c0_42], %58 {strides = array<i32>} : memref<2x32xf32, #tpu.memory_space<vmem>>, vector<2x32xf32>,
    %60 = vector.extract_strided_slice %22 {offsets = [14, 0], sizes = [2, 128], strides = [1, 1]} : vector<16x128xf32> to vector<2x128xf32>
    %c0_43 = arith.constant 0 : index
    %c0_44 = arith.constant 0 : index
    %61 = vector.load %arg22[%c0_43, %c0_44] : memref<2x32xf32, #tpu.memory_space<vmem>>, vector<2x32xf32>
    %c0_45 = arith.constant 0 : index
    %c0_46 = arith.constant 0 : index
    %62 = vector.load %arg10[%c0_45, %c0_46] : memref<32x128xf32, #tpu.memory_space<vmem>>, vector<32x128xf32>
    %cst_47 = arith.constant dense<0.000000e+00> : vector<2x128xf32>
    %63 = tpu.matmul %61, %62, %cst_47 {dimension_numbers = #tpu.dot_dimension_numbers<[1], [0], [0], [1], [0, 0, 1, 1], [], []>} : vector<2x32xf32>, vector<32x128xf32>, vector<2x128xf32> -> vector<2x128xf32>
    %64 = arith.addf %60, %63 : vector<2x128xf32>
    %c0_48 = arith.constant 0 : index
    %c0_49 = arith.constant 0 : index
    %65 = vector.load %arg23[%c0_48, %c0_49] : memref<2x32xf32, #tpu.memory_space<vmem>>, vector<2x32xf32>
    %66 = vector.extract_strided_slice %64 {offsets = [0, 0], sizes = [2, 32], strides = [1, 1]} : vector<2x128xf32> to vector<2x32xf32>
    %67 = arith.negf %66 : vector<2x32xf32>
    %68 = math.exp %67 : vector<2x32xf32>
    %cst_50 = arith.constant 1.000000e+00 : f32
    %69 = vector.broadcast %cst_50 : f32 to vector<2x32xf32>
    %70 = arith.addf %69, %68 : vector<2x32xf32>
    %71 = arith.divf %69, %70 : vector<2x32xf32>
    %72 = vector.extract_strided_slice %64 {offsets = [0, 32], sizes = [2, 32], strides = [1, 1]} : vector<2x128xf32> to vector<2x32xf32>
    %73 = arith.negf %72 : vector<2x32xf32>
    %74 = math.exp %73 : vector<2x32xf32>
    %cst_51 = arith.constant 1.000000e+00 : f32
    %75 = vector.broadcast %cst_51 : f32 to vector<2x32xf32>
    %76 = arith.addf %75, %74 : vector<2x32xf32>
    %77 = arith.divf %75, %76 : vector<2x32xf32>
    %78 = vector.extract_strided_slice %64 {offsets = [0, 64], sizes = [2, 32], strides = [1, 1]} : vector<2x128xf32> to vector<2x32xf32>
    %79 = math.tanh %78 : vector<2x32xf32>
    %80 = vector.extract_strided_slice %64 {offsets = [0, 96], sizes = [2, 32], strides = [1, 1]} : vector<2x128xf32> to vector<2x32xf32>
    %81 = arith.negf %80 : vector<2x32xf32>
    %82 = math.exp %81 : vector<2x32xf32>
    %cst_52 = arith.constant 1.000000e+00 : f32
    %83 = vector.broadcast %cst_52 : f32 to vector<2x32xf32>
    %84 = arith.addf %83, %82 : vector<2x32xf32>
    %85 = arith.divf %83, %84 : vector<2x32xf32>
    %86 = arith.mulf %77, %65 : vector<2x32xf32>
    %87 = arith.mulf %71, %79 : vector<2x32xf32>
    %88 = arith.addf %86, %87 : vector<2x32xf32>
    %89 = math.tanh %88 : vector<2x32xf32>
    %90 = arith.mulf %85, %89 : vector<2x32xf32>
    %c0_53 = arith.constant 0 : index
    %c0_54 = arith.constant 0 : index
    %91 = vector.load %arg22[%c0_53, %c0_54] : memref<2x32xf32, #tpu.memory_space<vmem>>, vector<2x32xf32>
    tpu.vector_store %arg22[%c0_53, %c0_54], %90 {strides = array<i32>} : memref<2x32xf32, #tpu.memory_space<vmem>>, vector<2x32xf32>,
    %c0_55 = arith.constant 0 : index
    %c0_56 = arith.constant 0 : index
    %92 = vector.load %arg23[%c0_55, %c0_56] : memref<2x32xf32, #tpu.memory_space<vmem>>, vector<2x32xf32>
    tpu.vector_store %arg23[%c0_55, %c0_56], %88 {strides = array<i32>} : memref<2x32xf32, #tpu.memory_space<vmem>>, vector<2x32xf32>,
    %c14 = arith.constant 14 : index
    %c0_57 = arith.constant 0 : index
    %93 = vector.load %arg18[%c14, %c0_57] : memref<16x32xf32, #tpu.memory_space<vmem>>, vector<2x32xf32>
    tpu.vector_store %arg18[%c14, %c0_57], %90 {strides = array<i32>} : memref<16x32xf32, #tpu.memory_space<vmem>>, vector<2x32xf32>,
    %c0_58 = arith.constant 0 : index
    %c0_59 = arith.constant 0 : index
    %94 = vector.load %arg25[%c0_58, %c0_59] : memref<2x32xf32, #tpu.memory_space<vmem>>, vector<2x32xf32>
    %95 = arith.addf %94, %90 : vector<2x32xf32>
    %c0_60 = arith.constant 0 : index
    %c0_61 = arith.constant 0 : index
    %96 = vector.load %arg25[%c0_60, %c0_61] : memref<2x32xf32, #tpu.memory_space<vmem>>, vector<2x32xf32>
    tpu.vector_store %arg25[%c0_60, %c0_61], %95 {strides = array<i32>} : memref<2x32xf32, #tpu.memory_space<vmem>>, vector<2x32xf32>,
    %97 = vector.extract_strided_slice %12 {offsets = [2, 0], sizes = [2, 128], strides = [1, 1]} : vector<16x128xf32> to vector<2x128xf32>
    %c0_62 = arith.constant 0 : index
    %c0_63 = arith.constant 0 : index
    %98 = vector.load %arg20[%c0_62, %c0_63] : memref<2x32xf32, #tpu.memory_space<vmem>>, vector<2x32xf32>
    %c0_64 = arith.constant 0 : index
    %c0_65 = arith.constant 0 : index
    %99 = vector.load %arg9[%c0_64, %c0_65] : memref<32x128xf32, #tpu.memory_space<vmem>>, vector<32x128xf32>
    %cst_66 = arith.constant dense<0.000000e+00> : vector<2x128xf32>
    %100 = tpu.matmul %98, %99, %cst_66 {dimension_numbers = #tpu.dot_dimension_numbers<[1], [0], [0], [1], [0, 0, 1, 1], [], []>} : vector<2x32xf32>, vector<32x128xf32>, vector<2x128xf32> -> vector<2x128xf32>
    %101 = arith.addf %97, %100 : vector<2x128xf32>
    %c0_67 = arith.constant 0 : index
    %c0_68 = arith.constant 0 : index
    %102 = vector.load %arg21[%c0_67, %c0_68] : memref<2x32xf32, #tpu.memory_space<vmem>>, vector<2x32xf32>
    %103 = vector.extract_strided_slice %101 {offsets = [0, 0], sizes = [2, 32], strides = [1, 1]} : vector<2x128xf32> to vector<2x32xf32>
    %104 = arith.negf %103 : vector<2x32xf32>
    %105 = math.exp %104 : vector<2x32xf32>
    %cst_69 = arith.constant 1.000000e+00 : f32
    %106 = vector.broadcast %cst_69 : f32 to vector<2x32xf32>
    %107 = arith.addf %106, %105 : vector<2x32xf32>
    %108 = arith.divf %106, %107 : vector<2x32xf32>
    %109 = vector.extract_strided_slice %101 {offsets = [0, 32], sizes = [2, 32], strides = [1, 1]} : vector<2x128xf32> to vector<2x32xf32>
    %110 = arith.negf %109 : vector<2x32xf32>
    %111 = math.exp %110 : vector<2x32xf32>
    %cst_70 = arith.constant 1.000000e+00 : f32
    %112 = vector.broadcast %cst_70 : f32 to vector<2x32xf32>
    %113 = arith.addf %112, %111 : vector<2x32xf32>
    %114 = arith.divf %112, %113 : vector<2x32xf32>
    %115 = vector.extract_strided_slice %101 {offsets = [0, 64], sizes = [2, 32], strides = [1, 1]} : vector<2x128xf32> to vector<2x32xf32>
    %116 = math.tanh %115 : vector<2x32xf32>
    %117 = vector.extract_strided_slice %101 {offsets = [0, 96], sizes = [2, 32], strides = [1, 1]} : vector<2x128xf32> to vector<2x32xf32>
    %118 = arith.negf %117 : vector<2x32xf32>
    %119 = math.exp %118 : vector<2x32xf32>
    %cst_71 = arith.constant 1.000000e+00 : f32
    %120 = vector.broadcast %cst_71 : f32 to vector<2x32xf32>
    %121 = arith.addf %120, %119 : vector<2x32xf32>
    %122 = arith.divf %120, %121 : vector<2x32xf32>
    %123 = arith.mulf %114, %102 : vector<2x32xf32>
    %124 = arith.mulf %108, %116 : vector<2x32xf32>
    %125 = arith.addf %123, %124 : vector<2x32xf32>
    %126 = math.tanh %125 : vector<2x32xf32>
    %127 = arith.mulf %122, %126 : vector<2x32xf32>
    %c0_72 = arith.constant 0 : index
    %c0_73 = arith.constant 0 : index
    %128 = vector.load %arg20[%c0_72, %c0_73] : memref<2x32xf32, #tpu.memory_space<vmem>>, vector<2x32xf32>
    tpu.vector_store %arg20[%c0_72, %c0_73], %127 {strides = array<i32>} : memref<2x32xf32, #tpu.memory_space<vmem>>, vector<2x32xf32>,
    %c0_74 = arith.constant 0 : index
    %c0_75 = arith.constant 0 : index
    %129 = vector.load %arg21[%c0_74, %c0_75] : memref<2x32xf32, #tpu.memory_space<vmem>>, vector<2x32xf32>
    tpu.vector_store %arg21[%c0_74, %c0_75], %125 {strides = array<i32>} : memref<2x32xf32, #tpu.memory_space<vmem>>, vector<2x32xf32>,
    %c2 = arith.constant 2 : index
    %c0_76 = arith.constant 0 : index
    %130 = vector.load %arg17[%c2, %c0_76] : memref<16x32xf32, #tpu.memory_space<vmem>>, vector<2x32xf32>
    tpu.vector_store %arg17[%c2, %c0_76], %127 {strides = array<i32>} : memref<16x32xf32, #tpu.memory_space<vmem>>, vector<2x32xf32>,
    %c0_77 = arith.constant 0 : index
    %c0_78 = arith.constant 0 : index
    %131 = vector.load %arg24[%c0_77, %c0_78] : memref<2x32xf32, #tpu.memory_space<vmem>>, vector<2x32xf32>
    %132 = arith.addf %131, %127 : vector<2x32xf32>
    %c0_79 = arith.constant 0 : index
    %c0_80 = arith.constant 0 : index
    %133 = vector.load %arg24[%c0_79, %c0_80] : memref<2x32xf32, #tpu.memory_space<vmem>>, vector<2x32xf32>
    tpu.vector_store %arg24[%c0_79, %c0_80], %132 {strides = array<i32>} : memref<2x32xf32, #tpu.memory_space<vmem>>, vector<2x32xf32>,
    %134 = vector.extract_strided_slice %22 {offsets = [12, 0], sizes = [2, 128], strides = [1, 1]} : vector<16x128xf32> to vector<2x128xf32>
    %c0_81 = arith.constant 0 : index
    %c0_82 = arith.constant 0 : index
    %135 = vector.load %arg22[%c0_81, %c0_82] : memref<2x32xf32, #tpu.memory_space<vmem>>, vector<2x32xf32>
    %c0_83 = arith.constant 0 : index
    %c0_84 = arith.constant 0 : index
    %136 = vector.load %arg10[%c0_83, %c0_84] : memref<32x128xf32, #tpu.memory_space<vmem>>, vector<32x128xf32>
    %cst_85 = arith.constant dense<0.000000e+00> : vector<2x128xf32>
    %137 = tpu.matmul %135, %136, %cst_85 {dimension_numbers = #tpu.dot_dimension_numbers<[1], [0], [0], [1], [0, 0, 1, 1], [], []>} : vector<2x32xf32>, vector<32x128xf32>, vector<2x128xf32> -> vector<2x128xf32>
    %138 = arith.addf %134, %137 : vector<2x128xf32>
    %c0_86 = arith.constant 0 : index
    %c0_87 = arith.constant 0 : index
    %139 = vector.load %arg23[%c0_86, %c0_87] : memref<2x32xf32, #tpu.memory_space<vmem>>, vector<2x32xf32>
    %140 = vector.extract_strided_slice %138 {offsets = [0, 0], sizes = [2, 32], strides = [1, 1]} : vector<2x128xf32> to vector<2x32xf32>
    %141 = arith.negf %140 : vector<2x32xf32>
    %142 = math.exp %141 : vector<2x32xf32>
    %cst_88 = arith.constant 1.000000e+00 : f32
    %143 = vector.broadcast %cst_88 : f32 to vector<2x32xf32>
    %144 = arith.addf %143, %142 : vector<2x32xf32>
    %145 = arith.divf %143, %144 : vector<2x32xf32>
    %146 = vector.extract_strided_slice %138 {offsets = [0, 32], sizes = [2, 32], strides = [1, 1]} : vector<2x128xf32> to vector<2x32xf32>
    %147 = arith.negf %146 : vector<2x32xf32>
    %148 = math.exp %147 : vector<2x32xf32>
    %cst_89 = arith.constant 1.000000e+00 : f32
    %149 = vector.broadcast %cst_89 : f32 to vector<2x32xf32>
    %150 = arith.addf %149, %148 : vector<2x32xf32>
    %151 = arith.divf %149, %150 : vector<2x32xf32>
    %152 = vector.extract_strided_slice %138 {offsets = [0, 64], sizes = [2, 32], strides = [1, 1]} : vector<2x128xf32> to vector<2x32xf32>
    %153 = math.tanh %152 : vector<2x32xf32>
    %154 = vector.extract_strided_slice %138 {offsets = [0, 96], sizes = [2, 32], strides = [1, 1]} : vector<2x128xf32> to vector<2x32xf32>
    %155 = arith.negf %154 : vector<2x32xf32>
    %156 = math.exp %155 : vector<2x32xf32>
    %cst_90 = arith.constant 1.000000e+00 : f32
    %157 = vector.broadcast %cst_90 : f32 to vector<2x32xf32>
    %158 = arith.addf %157, %156 : vector<2x32xf32>
    %159 = arith.divf %157, %158 : vector<2x32xf32>
    %160 = arith.mulf %151, %139 : vector<2x32xf32>
    %161 = arith.mulf %145, %153 : vector<2x32xf32>
    %162 = arith.addf %160, %161 : vector<2x32xf32>
    %163 = math.tanh %162 : vector<2x32xf32>
    %164 = arith.mulf %159, %163 : vector<2x32xf32>
    %c0_91 = arith.constant 0 : index
    %c0_92 = arith.constant 0 : index
    %165 = vector.load %arg22[%c0_91, %c0_92] : memref<2x32xf32, #tpu.memory_space<vmem>>, vector<2x32xf32>
    tpu.vector_store %arg22[%c0_91, %c0_92], %164 {strides = array<i32>} : memref<2x32xf32, #tpu.memory_space<vmem>>, vector<2x32xf32>,
    %c0_93 = arith.constant 0 : index
    %c0_94 = arith.constant 0 : index
    %166 = vector.load %arg23[%c0_93, %c0_94] : memref<2x32xf32, #tpu.memory_space<vmem>>, vector<2x32xf32>
    tpu.vector_store %arg23[%c0_93, %c0_94], %162 {strides = array<i32>} : memref<2x32xf32, #tpu.memory_space<vmem>>, vector<2x32xf32>,
    %c12 = arith.constant 12 : index
    %c0_95 = arith.constant 0 : index
    %167 = vector.load %arg18[%c12, %c0_95] : memref<16x32xf32, #tpu.memory_space<vmem>>, vector<2x32xf32>
    tpu.vector_store %arg18[%c12, %c0_95], %164 {strides = array<i32>} : memref<16x32xf32, #tpu.memory_space<vmem>>, vector<2x32xf32>,
    %c0_96 = arith.constant 0 : index
    %c0_97 = arith.constant 0 : index
    %168 = vector.load %arg25[%c0_96, %c0_97] : memref<2x32xf32, #tpu.memory_space<vmem>>, vector<2x32xf32>
    %169 = arith.addf %168, %164 : vector<2x32xf32>
    %c0_98 = arith.constant 0 : index
    %c0_99 = arith.constant 0 : index
    %170 = vector.load %arg25[%c0_98, %c0_99] : memref<2x32xf32, #tpu.memory_space<vmem>>, vector<2x32xf32>
    tpu.vector_store %arg25[%c0_98, %c0_99], %169 {strides = array<i32>} : memref<2x32xf32, #tpu.memory_space<vmem>>, vector<2x32xf32>,
    %171 = vector.extract_strided_slice %12 {offsets = [4, 0], sizes = [2, 128], strides = [1, 1]} : vector<16x128xf32> to vector<2x128xf32>
    %c0_100 = arith.constant 0 : index
    %c0_101 = arith.constant 0 : index
    %172 = vector.load %arg20[%c0_100, %c0_101] : memref<2x32xf32, #tpu.memory_space<vmem>>, vector<2x32xf32>
    %c0_102 = arith.constant 0 : index
    %c0_103 = arith.constant 0 : index
    %173 = vector.load %arg9[%c0_102, %c0_103] : memref<32x128xf32, #tpu.memory_space<vmem>>, vector<32x128xf32>
    %cst_104 = arith.constant dense<0.000000e+00> : vector<2x128xf32>
    %174 = tpu.matmul %172, %173, %cst_104 {dimension_numbers = #tpu.dot_dimension_numbers<[1], [0], [0], [1], [0, 0, 1, 1], [], []>} : vector<2x32xf32>, vector<32x128xf32>, vector<2x128xf32> -> vector<2x128xf32>
    %175 = arith.addf %171, %174 : vector<2x128xf32>
    %c0_105 = arith.constant 0 : index
    %c0_106 = arith.constant 0 : index
    %176 = vector.load %arg21[%c0_105, %c0_106] : memref<2x32xf32, #tpu.memory_space<vmem>>, vector<2x32xf32>
    %177 = vector.extract_strided_slice %175 {offsets = [0, 0], sizes = [2, 32], strides = [1, 1]} : vector<2x128xf32> to vector<2x32xf32>
    %178 = arith.negf %177 : vector<2x32xf32>
    %179 = math.exp %178 : vector<2x32xf32>
    %cst_107 = arith.constant 1.000000e+00 : f32
    %180 = vector.broadcast %cst_107 : f32 to vector<2x32xf32>
    %181 = arith.addf %180, %179 : vector<2x32xf32>
    %182 = arith.divf %180, %181 : vector<2x32xf32>
    %183 = vector.extract_strided_slice %175 {offsets = [0, 32], sizes = [2, 32], strides = [1, 1]} : vector<2x128xf32> to vector<2x32xf32>
    %184 = arith.negf %183 : vector<2x32xf32>
    %185 = math.exp %184 : vector<2x32xf32>
    %cst_108 = arith.constant 1.000000e+00 : f32
    %186 = vector.broadcast %cst_108 : f32 to vector<2x32xf32>
    %187 = arith.addf %186, %185 : vector<2x32xf32>
    %188 = arith.divf %186, %187 : vector<2x32xf32>
    %189 = vector.extract_strided_slice %175 {offsets = [0, 64], sizes = [2, 32], strides = [1, 1]} : vector<2x128xf32> to vector<2x32xf32>
    %190 = math.tanh %189 : vector<2x32xf32>
    %191 = vector.extract_strided_slice %175 {offsets = [0, 96], sizes = [2, 32], strides = [1, 1]} : vector<2x128xf32> to vector<2x32xf32>
    %192 = arith.negf %191 : vector<2x32xf32>
    %193 = math.exp %192 : vector<2x32xf32>
    %cst_109 = arith.constant 1.000000e+00 : f32
    %194 = vector.broadcast %cst_109 : f32 to vector<2x32xf32>
    %195 = arith.addf %194, %193 : vector<2x32xf32>
    %196 = arith.divf %194, %195 : vector<2x32xf32>
    %197 = arith.mulf %188, %176 : vector<2x32xf32>
    %198 = arith.mulf %182, %190 : vector<2x32xf32>
    %199 = arith.addf %197, %198 : vector<2x32xf32>
    %200 = math.tanh %199 : vector<2x32xf32>
    %201 = arith.mulf %196, %200 : vector<2x32xf32>
    %c0_110 = arith.constant 0 : index
    %c0_111 = arith.constant 0 : index
    %202 = vector.load %arg20[%c0_110, %c0_111] : memref<2x32xf32, #tpu.memory_space<vmem>>, vector<2x32xf32>
    tpu.vector_store %arg20[%c0_110, %c0_111], %201 {strides = array<i32>} : memref<2x32xf32, #tpu.memory_space<vmem>>, vector<2x32xf32>,
    %c0_112 = arith.constant 0 : index
    %c0_113 = arith.constant 0 : index
    %203 = vector.load %arg21[%c0_112, %c0_113] : memref<2x32xf32, #tpu.memory_space<vmem>>, vector<2x32xf32>
    tpu.vector_store %arg21[%c0_112, %c0_113], %199 {strides = array<i32>} : memref<2x32xf32, #tpu.memory_space<vmem>>, vector<2x32xf32>,
    %c4 = arith.constant 4 : index
    %c0_114 = arith.constant 0 : index
    %204 = vector.load %arg17[%c4, %c0_114] : memref<16x32xf32, #tpu.memory_space<vmem>>, vector<2x32xf32>
    tpu.vector_store %arg17[%c4, %c0_114], %201 {strides = array<i32>} : memref<16x32xf32, #tpu.memory_space<vmem>>, vector<2x32xf32>,
    %c0_115 = arith.constant 0 : index
    %c0_116 = arith.constant 0 : index
    %205 = vector.load %arg24[%c0_115, %c0_116] : memref<2x32xf32, #tpu.memory_space<vmem>>, vector<2x32xf32>
    %206 = arith.addf %205, %201 : vector<2x32xf32>
    %c0_117 = arith.constant 0 : index
    %c0_118 = arith.constant 0 : index
    %207 = vector.load %arg24[%c0_117, %c0_118] : memref<2x32xf32, #tpu.memory_space<vmem>>, vector<2x32xf32>
    tpu.vector_store %arg24[%c0_117, %c0_118], %206 {strides = array<i32>} : memref<2x32xf32, #tpu.memory_space<vmem>>, vector<2x32xf32>,
    %208 = vector.extract_strided_slice %22 {offsets = [10, 0], sizes = [2, 128], strides = [1, 1]} : vector<16x128xf32> to vector<2x128xf32>
    %c0_119 = arith.constant 0 : index
    %c0_120 = arith.constant 0 : index
    %209 = vector.load %arg22[%c0_119, %c0_120] : memref<2x32xf32, #tpu.memory_space<vmem>>, vector<2x32xf32>
    %c0_121 = arith.constant 0 : index
    %c0_122 = arith.constant 0 : index
    %210 = vector.load %arg10[%c0_121, %c0_122] : memref<32x128xf32, #tpu.memory_space<vmem>>, vector<32x128xf32>
    %cst_123 = arith.constant dense<0.000000e+00> : vector<2x128xf32>
    %211 = tpu.matmul %209, %210, %cst_123 {dimension_numbers = #tpu.dot_dimension_numbers<[1], [0], [0], [1], [0, 0, 1, 1], [], []>} : vector<2x32xf32>, vector<32x128xf32>, vector<2x128xf32> -> vector<2x128xf32>
    %212 = arith.addf %208, %211 : vector<2x128xf32>
    %c0_124 = arith.constant 0 : index
    %c0_125 = arith.constant 0 : index
    %213 = vector.load %arg23[%c0_124, %c0_125] : memref<2x32xf32, #tpu.memory_space<vmem>>, vector<2x32xf32>
    %214 = vector.extract_strided_slice %212 {offsets = [0, 0], sizes = [2, 32], strides = [1, 1]} : vector<2x128xf32> to vector<2x32xf32>
    %215 = arith.negf %214 : vector<2x32xf32>
    %216 = math.exp %215 : vector<2x32xf32>
    %cst_126 = arith.constant 1.000000e+00 : f32
    %217 = vector.broadcast %cst_126 : f32 to vector<2x32xf32>
    %218 = arith.addf %217, %216 : vector<2x32xf32>
    %219 = arith.divf %217, %218 : vector<2x32xf32>
    %220 = vector.extract_strided_slice %212 {offsets = [0, 32], sizes = [2, 32], strides = [1, 1]} : vector<2x128xf32> to vector<2x32xf32>
    %221 = arith.negf %220 : vector<2x32xf32>
    %222 = math.exp %221 : vector<2x32xf32>
    %cst_127 = arith.constant 1.000000e+00 : f32
    %223 = vector.broadcast %cst_127 : f32 to vector<2x32xf32>
    %224 = arith.addf %223, %222 : vector<2x32xf32>
    %225 = arith.divf %223, %224 : vector<2x32xf32>
    %226 = vector.extract_strided_slice %212 {offsets = [0, 64], sizes = [2, 32], strides = [1, 1]} : vector<2x128xf32> to vector<2x32xf32>
    %227 = math.tanh %226 : vector<2x32xf32>
    %228 = vector.extract_strided_slice %212 {offsets = [0, 96], sizes = [2, 32], strides = [1, 1]} : vector<2x128xf32> to vector<2x32xf32>
    %229 = arith.negf %228 : vector<2x32xf32>
    %230 = math.exp %229 : vector<2x32xf32>
    %cst_128 = arith.constant 1.000000e+00 : f32
    %231 = vector.broadcast %cst_128 : f32 to vector<2x32xf32>
    %232 = arith.addf %231, %230 : vector<2x32xf32>
    %233 = arith.divf %231, %232 : vector<2x32xf32>
    %234 = arith.mulf %225, %213 : vector<2x32xf32>
    %235 = arith.mulf %219, %227 : vector<2x32xf32>
    %236 = arith.addf %234, %235 : vector<2x32xf32>
    %237 = math.tanh %236 : vector<2x32xf32>
    %238 = arith.mulf %233, %237 : vector<2x32xf32>
    %c0_129 = arith.constant 0 : index
    %c0_130 = arith.constant 0 : index
    %239 = vector.load %arg22[%c0_129, %c0_130] : memref<2x32xf32, #tpu.memory_space<vmem>>, vector<2x32xf32>
    tpu.vector_store %arg22[%c0_129, %c0_130], %238 {strides = array<i32>} : memref<2x32xf32, #tpu.memory_space<vmem>>, vector<2x32xf32>,
    %c0_131 = arith.constant 0 : index
    %c0_132 = arith.constant 0 : index
    %240 = vector.load %arg23[%c0_131, %c0_132] : memref<2x32xf32, #tpu.memory_space<vmem>>, vector<2x32xf32>
    tpu.vector_store %arg23[%c0_131, %c0_132], %236 {strides = array<i32>} : memref<2x32xf32, #tpu.memory_space<vmem>>, vector<2x32xf32>,
    %c10 = arith.constant 10 : index
    %c0_133 = arith.constant 0 : index
    %241 = vector.load %arg18[%c10, %c0_133] : memref<16x32xf32, #tpu.memory_space<vmem>>, vector<2x32xf32>
    tpu.vector_store %arg18[%c10, %c0_133], %238 {strides = array<i32>} : memref<16x32xf32, #tpu.memory_space<vmem>>, vector<2x32xf32>,
    %c0_134 = arith.constant 0 : index
    %c0_135 = arith.constant 0 : index
    %242 = vector.load %arg25[%c0_134, %c0_135] : memref<2x32xf32, #tpu.memory_space<vmem>>, vector<2x32xf32>
    %243 = arith.addf %242, %238 : vector<2x32xf32>
    %c0_136 = arith.constant 0 : index
    %c0_137 = arith.constant 0 : index
    %244 = vector.load %arg25[%c0_136, %c0_137] : memref<2x32xf32, #tpu.memory_space<vmem>>, vector<2x32xf32>
    tpu.vector_store %arg25[%c0_136, %c0_137], %243 {strides = array<i32>} : memref<2x32xf32, #tpu.memory_space<vmem>>, vector<2x32xf32>,
    %245 = vector.extract_strided_slice %12 {offsets = [6, 0], sizes = [2, 128], strides = [1, 1]} : vector<16x128xf32> to vector<2x128xf32>
    %c0_138 = arith.constant 0 : index
    %c0_139 = arith.constant 0 : index
    %246 = vector.load %arg20[%c0_138, %c0_139] : memref<2x32xf32, #tpu.memory_space<vmem>>, vector<2x32xf32>
    %c0_140 = arith.constant 0 : index
    %c0_141 = arith.constant 0 : index
    %247 = vector.load %arg9[%c0_140, %c0_141] : memref<32x128xf32, #tpu.memory_space<vmem>>, vector<32x128xf32>
    %cst_142 = arith.constant dense<0.000000e+00> : vector<2x128xf32>
    %248 = tpu.matmul %246, %247, %cst_142 {dimension_numbers = #tpu.dot_dimension_numbers<[1], [0], [0], [1], [0, 0, 1, 1], [], []>} : vector<2x32xf32>, vector<32x128xf32>, vector<2x128xf32> -> vector<2x128xf32>
    %249 = arith.addf %245, %248 : vector<2x128xf32>
    %c0_143 = arith.constant 0 : index
    %c0_144 = arith.constant 0 : index
    %250 = vector.load %arg21[%c0_143, %c0_144] : memref<2x32xf32, #tpu.memory_space<vmem>>, vector<2x32xf32>
    %251 = vector.extract_strided_slice %249 {offsets = [0, 0], sizes = [2, 32], strides = [1, 1]} : vector<2x128xf32> to vector<2x32xf32>
    %252 = arith.negf %251 : vector<2x32xf32>
    %253 = math.exp %252 : vector<2x32xf32>
    %cst_145 = arith.constant 1.000000e+00 : f32
    %254 = vector.broadcast %cst_145 : f32 to vector<2x32xf32>
    %255 = arith.addf %254, %253 : vector<2x32xf32>
    %256 = arith.divf %254, %255 : vector<2x32xf32>
    %257 = vector.extract_strided_slice %249 {offsets = [0, 32], sizes = [2, 32], strides = [1, 1]} : vector<2x128xf32> to vector<2x32xf32>
    %258 = arith.negf %257 : vector<2x32xf32>
    %259 = math.exp %258 : vector<2x32xf32>
    %cst_146 = arith.constant 1.000000e+00 : f32
    %260 = vector.broadcast %cst_146 : f32 to vector<2x32xf32>
    %261 = arith.addf %260, %259 : vector<2x32xf32>
    %262 = arith.divf %260, %261 : vector<2x32xf32>
    %263 = vector.extract_strided_slice %249 {offsets = [0, 64], sizes = [2, 32], strides = [1, 1]} : vector<2x128xf32> to vector<2x32xf32>
    %264 = math.tanh %263 : vector<2x32xf32>
    %265 = vector.extract_strided_slice %249 {offsets = [0, 96], sizes = [2, 32], strides = [1, 1]} : vector<2x128xf32> to vector<2x32xf32>
    %266 = arith.negf %265 : vector<2x32xf32>
    %267 = math.exp %266 : vector<2x32xf32>
    %cst_147 = arith.constant 1.000000e+00 : f32
    %268 = vector.broadcast %cst_147 : f32 to vector<2x32xf32>
    %269 = arith.addf %268, %267 : vector<2x32xf32>
    %270 = arith.divf %268, %269 : vector<2x32xf32>
    %271 = arith.mulf %262, %250 : vector<2x32xf32>
    %272 = arith.mulf %256, %264 : vector<2x32xf32>
    %273 = arith.addf %271, %272 : vector<2x32xf32>
    %274 = math.tanh %273 : vector<2x32xf32>
    %275 = arith.mulf %270, %274 : vector<2x32xf32>
    %c0_148 = arith.constant 0 : index
    %c0_149 = arith.constant 0 : index
    %276 = vector.load %arg20[%c0_148, %c0_149] : memref<2x32xf32, #tpu.memory_space<vmem>>, vector<2x32xf32>
    tpu.vector_store %arg20[%c0_148, %c0_149], %275 {strides = array<i32>} : memref<2x32xf32, #tpu.memory_space<vmem>>, vector<2x32xf32>,
    %c0_150 = arith.constant 0 : index
    %c0_151 = arith.constant 0 : index
    %277 = vector.load %arg21[%c0_150, %c0_151] : memref<2x32xf32, #tpu.memory_space<vmem>>, vector<2x32xf32>
    tpu.vector_store %arg21[%c0_150, %c0_151], %273 {strides = array<i32>} : memref<2x32xf32, #tpu.memory_space<vmem>>, vector<2x32xf32>,
    %c6 = arith.constant 6 : index
    %c0_152 = arith.constant 0 : index
    %278 = vector.load %arg17[%c6, %c0_152] : memref<16x32xf32, #tpu.memory_space<vmem>>, vector<2x32xf32>
    tpu.vector_store %arg17[%c6, %c0_152], %275 {strides = array<i32>} : memref<16x32xf32, #tpu.memory_space<vmem>>, vector<2x32xf32>,
    %c0_153 = arith.constant 0 : index
    %c0_154 = arith.constant 0 : index
    %279 = vector.load %arg24[%c0_153, %c0_154] : memref<2x32xf32, #tpu.memory_space<vmem>>, vector<2x32xf32>
    %280 = arith.addf %279, %275 : vector<2x32xf32>
    %c0_155 = arith.constant 0 : index
    %c0_156 = arith.constant 0 : index
    %281 = vector.load %arg24[%c0_155, %c0_156] : memref<2x32xf32, #tpu.memory_space<vmem>>, vector<2x32xf32>
    tpu.vector_store %arg24[%c0_155, %c0_156], %280 {strides = array<i32>} : memref<2x32xf32, #tpu.memory_space<vmem>>, vector<2x32xf32>,
    %282 = vector.extract_strided_slice %22 {offsets = [8, 0], sizes = [2, 128], strides = [1, 1]} : vector<16x128xf32> to vector<2x128xf32>
    %c0_157 = arith.constant 0 : index
    %c0_158 = arith.constant 0 : index
    %283 = vector.load %arg22[%c0_157, %c0_158] : memref<2x32xf32, #tpu.memory_space<vmem>>, vector<2x32xf32>
    %c0_159 = arith.constant 0 : index
    %c0_160 = arith.constant 0 : index
    %284 = vector.load %arg10[%c0_159, %c0_160] : memref<32x128xf32, #tpu.memory_space<vmem>>, vector<32x128xf32>
    %cst_161 = arith.constant dense<0.000000e+00> : vector<2x128xf32>
    %285 = tpu.matmul %283, %284, %cst_161 {dimension_numbers = #tpu.dot_dimension_numbers<[1], [0], [0], [1], [0, 0, 1, 1], [], []>} : vector<2x32xf32>, vector<32x128xf32>, vector<2x128xf32> -> vector<2x128xf32>
    %286 = arith.addf %282, %285 : vector<2x128xf32>
    %c0_162 = arith.constant 0 : index
    %c0_163 = arith.constant 0 : index
    %287 = vector.load %arg23[%c0_162, %c0_163] : memref<2x32xf32, #tpu.memory_space<vmem>>, vector<2x32xf32>
    %288 = vector.extract_strided_slice %286 {offsets = [0, 0], sizes = [2, 32], strides = [1, 1]} : vector<2x128xf32> to vector<2x32xf32>
    %289 = arith.negf %288 : vector<2x32xf32>
    %290 = math.exp %289 : vector<2x32xf32>
    %cst_164 = arith.constant 1.000000e+00 : f32
    %291 = vector.broadcast %cst_164 : f32 to vector<2x32xf32>
    %292 = arith.addf %291, %290 : vector<2x32xf32>
    %293 = arith.divf %291, %292 : vector<2x32xf32>
    %294 = vector.extract_strided_slice %286 {offsets = [0, 32], sizes = [2, 32], strides = [1, 1]} : vector<2x128xf32> to vector<2x32xf32>
    %295 = arith.negf %294 : vector<2x32xf32>
    %296 = math.exp %295 : vector<2x32xf32>
    %cst_165 = arith.constant 1.000000e+00 : f32
    %297 = vector.broadcast %cst_165 : f32 to vector<2x32xf32>
    %298 = arith.addf %297, %296 : vector<2x32xf32>
    %299 = arith.divf %297, %298 : vector<2x32xf32>
    %300 = vector.extract_strided_slice %286 {offsets = [0, 64], sizes = [2, 32], strides = [1, 1]} : vector<2x128xf32> to vector<2x32xf32>
    %301 = math.tanh %300 : vector<2x32xf32>
    %302 = vector.extract_strided_slice %286 {offsets = [0, 96], sizes = [2, 32], strides = [1, 1]} : vector<2x128xf32> to vector<2x32xf32>
    %303 = arith.negf %302 : vector<2x32xf32>
    %304 = math.exp %303 : vector<2x32xf32>
    %cst_166 = arith.constant 1.000000e+00 : f32
    %305 = vector.broadcast %cst_166 : f32 to vector<2x32xf32>
    %306 = arith.addf %305, %304 : vector<2x32xf32>
    %307 = arith.divf %305, %306 : vector<2x32xf32>
    %308 = arith.mulf %299, %287 : vector<2x32xf32>
    %309 = arith.mulf %293, %301 : vector<2x32xf32>
    %310 = arith.addf %308, %309 : vector<2x32xf32>
    %311 = math.tanh %310 : vector<2x32xf32>
    %312 = arith.mulf %307, %311 : vector<2x32xf32>
    %c0_167 = arith.constant 0 : index
    %c0_168 = arith.constant 0 : index
    %313 = vector.load %arg22[%c0_167, %c0_168] : memref<2x32xf32, #tpu.memory_space<vmem>>, vector<2x32xf32>
    tpu.vector_store %arg22[%c0_167, %c0_168], %312 {strides = array<i32>} : memref<2x32xf32, #tpu.memory_space<vmem>>, vector<2x32xf32>,
    %c0_169 = arith.constant 0 : index
    %c0_170 = arith.constant 0 : index
    %314 = vector.load %arg23[%c0_169, %c0_170] : memref<2x32xf32, #tpu.memory_space<vmem>>, vector<2x32xf32>
    tpu.vector_store %arg23[%c0_169, %c0_170], %310 {strides = array<i32>} : memref<2x32xf32, #tpu.memory_space<vmem>>, vector<2x32xf32>,
    %c8 = arith.constant 8 : index
    %c0_171 = arith.constant 0 : index
    %315 = vector.load %arg18[%c8, %c0_171] : memref<16x32xf32, #tpu.memory_space<vmem>>, vector<2x32xf32>
    tpu.vector_store %arg18[%c8, %c0_171], %312 {strides = array<i32>} : memref<16x32xf32, #tpu.memory_space<vmem>>, vector<2x32xf32>,
    %c0_172 = arith.constant 0 : index
    %c0_173 = arith.constant 0 : index
    %316 = vector.load %arg25[%c0_172, %c0_173] : memref<2x32xf32, #tpu.memory_space<vmem>>, vector<2x32xf32>
    %317 = arith.addf %316, %312 : vector<2x32xf32>
    %c0_174 = arith.constant 0 : index
    %c0_175 = arith.constant 0 : index
    %318 = vector.load %arg25[%c0_174, %c0_175] : memref<2x32xf32, #tpu.memory_space<vmem>>, vector<2x32xf32>
    tpu.vector_store %arg25[%c0_174, %c0_175], %317 {strides = array<i32>} : memref<2x32xf32, #tpu.memory_space<vmem>>, vector<2x32xf32>,
    %319 = vector.extract_strided_slice %12 {offsets = [8, 0], sizes = [2, 128], strides = [1, 1]} : vector<16x128xf32> to vector<2x128xf32>
    %c0_176 = arith.constant 0 : index
    %c0_177 = arith.constant 0 : index
    %320 = vector.load %arg20[%c0_176, %c0_177] : memref<2x32xf32, #tpu.memory_space<vmem>>, vector<2x32xf32>
    %c0_178 = arith.constant 0 : index
    %c0_179 = arith.constant 0 : index
    %321 = vector.load %arg9[%c0_178, %c0_179] : memref<32x128xf32, #tpu.memory_space<vmem>>, vector<32x128xf32>
    %cst_180 = arith.constant dense<0.000000e+00> : vector<2x128xf32>
    %322 = tpu.matmul %320, %321, %cst_180 {dimension_numbers = #tpu.dot_dimension_numbers<[1], [0], [0], [1], [0, 0, 1, 1], [], []>} : vector<2x32xf32>, vector<32x128xf32>, vector<2x128xf32> -> vector<2x128xf32>
    %323 = arith.addf %319, %322 : vector<2x128xf32>
    %c0_181 = arith.constant 0 : index
    %c0_182 = arith.constant 0 : index
    %324 = vector.load %arg21[%c0_181, %c0_182] : memref<2x32xf32, #tpu.memory_space<vmem>>, vector<2x32xf32>
    %325 = vector.extract_strided_slice %323 {offsets = [0, 0], sizes = [2, 32], strides = [1, 1]} : vector<2x128xf32> to vector<2x32xf32>
    %326 = arith.negf %325 : vector<2x32xf32>
    %327 = math.exp %326 : vector<2x32xf32>
    %cst_183 = arith.constant 1.000000e+00 : f32
    %328 = vector.broadcast %cst_183 : f32 to vector<2x32xf32>
    %329 = arith.addf %328, %327 : vector<2x32xf32>
    %330 = arith.divf %328, %329 : vector<2x32xf32>
    %331 = vector.extract_strided_slice %323 {offsets = [0, 32], sizes = [2, 32], strides = [1, 1]} : vector<2x128xf32> to vector<2x32xf32>
    %332 = arith.negf %331 : vector<2x32xf32>
    %333 = math.exp %332 : vector<2x32xf32>
    %cst_184 = arith.constant 1.000000e+00 : f32
    %334 = vector.broadcast %cst_184 : f32 to vector<2x32xf32>
    %335 = arith.addf %334, %333 : vector<2x32xf32>
    %336 = arith.divf %334, %335 : vector<2x32xf32>
    %337 = vector.extract_strided_slice %323 {offsets = [0, 64], sizes = [2, 32], strides = [1, 1]} : vector<2x128xf32> to vector<2x32xf32>
    %338 = math.tanh %337 : vector<2x32xf32>
    %339 = vector.extract_strided_slice %323 {offsets = [0, 96], sizes = [2, 32], strides = [1, 1]} : vector<2x128xf32> to vector<2x32xf32>
    %340 = arith.negf %339 : vector<2x32xf32>
    %341 = math.exp %340 : vector<2x32xf32>
    %cst_185 = arith.constant 1.000000e+00 : f32
    %342 = vector.broadcast %cst_185 : f32 to vector<2x32xf32>
    %343 = arith.addf %342, %341 : vector<2x32xf32>
    %344 = arith.divf %342, %343 : vector<2x32xf32>
    %345 = arith.mulf %336, %324 : vector<2x32xf32>
    %346 = arith.mulf %330, %338 : vector<2x32xf32>
    %347 = arith.addf %345, %346 : vector<2x32xf32>
    %348 = math.tanh %347 : vector<2x32xf32>
    %349 = arith.mulf %344, %348 : vector<2x32xf32>
    %c0_186 = arith.constant 0 : index
    %c0_187 = arith.constant 0 : index
    %350 = vector.load %arg20[%c0_186, %c0_187] : memref<2x32xf32, #tpu.memory_space<vmem>>, vector<2x32xf32>
    tpu.vector_store %arg20[%c0_186, %c0_187], %349 {strides = array<i32>} : memref<2x32xf32, #tpu.memory_space<vmem>>, vector<2x32xf32>,
    %c0_188 = arith.constant 0 : index
    %c0_189 = arith.constant 0 : index
    %351 = vector.load %arg21[%c0_188, %c0_189] : memref<2x32xf32, #tpu.memory_space<vmem>>, vector<2x32xf32>
    tpu.vector_store %arg21[%c0_188, %c0_189], %347 {strides = array<i32>} : memref<2x32xf32, #tpu.memory_space<vmem>>, vector<2x32xf32>,
    %c8_190 = arith.constant 8 : index
    %c0_191 = arith.constant 0 : index
    %352 = vector.load %arg17[%c8_190, %c0_191] : memref<16x32xf32, #tpu.memory_space<vmem>>, vector<2x32xf32>
    tpu.vector_store %arg17[%c8_190, %c0_191], %349 {strides = array<i32>} : memref<16x32xf32, #tpu.memory_space<vmem>>, vector<2x32xf32>,
    %c0_192 = arith.constant 0 : index
    %c0_193 = arith.constant 0 : index
    %353 = vector.load %arg24[%c0_192, %c0_193] : memref<2x32xf32, #tpu.memory_space<vmem>>, vector<2x32xf32>
    %354 = arith.addf %353, %349 : vector<2x32xf32>
    %c0_194 = arith.constant 0 : index
    %c0_195 = arith.constant 0 : index
    %355 = vector.load %arg24[%c0_194, %c0_195] : memref<2x32xf32, #tpu.memory_space<vmem>>, vector<2x32xf32>
    tpu.vector_store %arg24[%c0_194, %c0_195], %354 {strides = array<i32>} : memref<2x32xf32, #tpu.memory_space<vmem>>, vector<2x32xf32>,
    %356 = vector.extract_strided_slice %22 {offsets = [6, 0], sizes = [2, 128], strides = [1, 1]} : vector<16x128xf32> to vector<2x128xf32>
    %c0_196 = arith.constant 0 : index
    %c0_197 = arith.constant 0 : index
    %357 = vector.load %arg22[%c0_196, %c0_197] : memref<2x32xf32, #tpu.memory_space<vmem>>, vector<2x32xf32>
    %c0_198 = arith.constant 0 : index
    %c0_199 = arith.constant 0 : index
    %358 = vector.load %arg10[%c0_198, %c0_199] : memref<32x128xf32, #tpu.memory_space<vmem>>, vector<32x128xf32>
    %cst_200 = arith.constant dense<0.000000e+00> : vector<2x128xf32>
    %359 = tpu.matmul %357, %358, %cst_200 {dimension_numbers = #tpu.dot_dimension_numbers<[1], [0], [0], [1], [0, 0, 1, 1], [], []>} : vector<2x32xf32>, vector<32x128xf32>, vector<2x128xf32> -> vector<2x128xf32>
    %360 = arith.addf %356, %359 : vector<2x128xf32>
    %c0_201 = arith.constant 0 : index
    %c0_202 = arith.constant 0 : index
    %361 = vector.load %arg23[%c0_201, %c0_202] : memref<2x32xf32, #tpu.memory_space<vmem>>, vector<2x32xf32>
    %362 = vector.extract_strided_slice %360 {offsets = [0, 0], sizes = [2, 32], strides = [1, 1]} : vector<2x128xf32> to vector<2x32xf32>
    %363 = arith.negf %362 : vector<2x32xf32>
    %364 = math.exp %363 : vector<2x32xf32>
    %cst_203 = arith.constant 1.000000e+00 : f32
    %365 = vector.broadcast %cst_203 : f32 to vector<2x32xf32>
    %366 = arith.addf %365, %364 : vector<2x32xf32>
    %367 = arith.divf %365, %366 : vector<2x32xf32>
    %368 = vector.extract_strided_slice %360 {offsets = [0, 32], sizes = [2, 32], strides = [1, 1]} : vector<2x128xf32> to vector<2x32xf32>
    %369 = arith.negf %368 : vector<2x32xf32>
    %370 = math.exp %369 : vector<2x32xf32>
    %cst_204 = arith.constant 1.000000e+00 : f32
    %371 = vector.broadcast %cst_204 : f32 to vector<2x32xf32>
    %372 = arith.addf %371, %370 : vector<2x32xf32>
    %373 = arith.divf %371, %372 : vector<2x32xf32>
    %374 = vector.extract_strided_slice %360 {offsets = [0, 64], sizes = [2, 32], strides = [1, 1]} : vector<2x128xf32> to vector<2x32xf32>
    %375 = math.tanh %374 : vector<2x32xf32>
    %376 = vector.extract_strided_slice %360 {offsets = [0, 96], sizes = [2, 32], strides = [1, 1]} : vector<2x128xf32> to vector<2x32xf32>
    %377 = arith.negf %376 : vector<2x32xf32>
    %378 = math.exp %377 : vector<2x32xf32>
    %cst_205 = arith.constant 1.000000e+00 : f32
    %379 = vector.broadcast %cst_205 : f32 to vector<2x32xf32>
    %380 = arith.addf %379, %378 : vector<2x32xf32>
    %381 = arith.divf %379, %380 : vector<2x32xf32>
    %382 = arith.mulf %373, %361 : vector<2x32xf32>
    %383 = arith.mulf %367, %375 : vector<2x32xf32>
    %384 = arith.addf %382, %383 : vector<2x32xf32>
    %385 = math.tanh %384 : vector<2x32xf32>
    %386 = arith.mulf %381, %385 : vector<2x32xf32>
    %c0_206 = arith.constant 0 : index
    %c0_207 = arith.constant 0 : index
    %387 = vector.load %arg22[%c0_206, %c0_207] : memref<2x32xf32, #tpu.memory_space<vmem>>, vector<2x32xf32>
    tpu.vector_store %arg22[%c0_206, %c0_207], %386 {strides = array<i32>} : memref<2x32xf32, #tpu.memory_space<vmem>>, vector<2x32xf32>,
    %c0_208 = arith.constant 0 : index
    %c0_209 = arith.constant 0 : index
    %388 = vector.load %arg23[%c0_208, %c0_209] : memref<2x32xf32, #tpu.memory_space<vmem>>, vector<2x32xf32>
    tpu.vector_store %arg23[%c0_208, %c0_209], %384 {strides = array<i32>} : memref<2x32xf32, #tpu.memory_space<vmem>>, vector<2x32xf32>,
    %c6_210 = arith.constant 6 : index
    %c0_211 = arith.constant 0 : index
    %389 = vector.load %arg18[%c6_210, %c0_211] : memref<16x32xf32, #tpu.memory_space<vmem>>, vector<2x32xf32>
    tpu.vector_store %arg18[%c6_210, %c0_211], %386 {strides = array<i32>} : memref<16x32xf32, #tpu.memory_space<vmem>>, vector<2x32xf32>,
    %c0_212 = arith.constant 0 : index
    %c0_213 = arith.constant 0 : index
    %390 = vector.load %arg25[%c0_212, %c0_213] : memref<2x32xf32, #tpu.memory_space<vmem>>, vector<2x32xf32>
    %391 = arith.addf %390, %386 : vector<2x32xf32>
    %c0_214 = arith.constant 0 : index
    %c0_215 = arith.constant 0 : index
    %392 = vector.load %arg25[%c0_214, %c0_215] : memref<2x32xf32, #tpu.memory_space<vmem>>, vector<2x32xf32>
    tpu.vector_store %arg25[%c0_214, %c0_215], %391 {strides = array<i32>} : memref<2x32xf32, #tpu.memory_space<vmem>>, vector<2x32xf32>,
    %393 = vector.extract_strided_slice %12 {offsets = [10, 0], sizes = [2, 128], strides = [1, 1]} : vector<16x128xf32> to vector<2x128xf32>
    %c0_216 = arith.constant 0 : index
    %c0_217 = arith.constant 0 : index
    %394 = vector.load %arg20[%c0_216, %c0_217] : memref<2x32xf32, #tpu.memory_space<vmem>>, vector<2x32xf32>
    %c0_218 = arith.constant 0 : index
    %c0_219 = arith.constant 0 : index
    %395 = vector.load %arg9[%c0_218, %c0_219] : memref<32x128xf32, #tpu.memory_space<vmem>>, vector<32x128xf32>
    %cst_220 = arith.constant dense<0.000000e+00> : vector<2x128xf32>
    %396 = tpu.matmul %394, %395, %cst_220 {dimension_numbers = #tpu.dot_dimension_numbers<[1], [0], [0], [1], [0, 0, 1, 1], [], []>} : vector<2x32xf32>, vector<32x128xf32>, vector<2x128xf32> -> vector<2x128xf32>
    %397 = arith.addf %393, %396 : vector<2x128xf32>
    %c0_221 = arith.constant 0 : index
    %c0_222 = arith.constant 0 : index
    %398 = vector.load %arg21[%c0_221, %c0_222] : memref<2x32xf32, #tpu.memory_space<vmem>>, vector<2x32xf32>
    %399 = vector.extract_strided_slice %397 {offsets = [0, 0], sizes = [2, 32], strides = [1, 1]} : vector<2x128xf32> to vector<2x32xf32>
    %400 = arith.negf %399 : vector<2x32xf32>
    %401 = math.exp %400 : vector<2x32xf32>
    %cst_223 = arith.constant 1.000000e+00 : f32
    %402 = vector.broadcast %cst_223 : f32 to vector<2x32xf32>
    %403 = arith.addf %402, %401 : vector<2x32xf32>
    %404 = arith.divf %402, %403 : vector<2x32xf32>
    %405 = vector.extract_strided_slice %397 {offsets = [0, 32], sizes = [2, 32], strides = [1, 1]} : vector<2x128xf32> to vector<2x32xf32>
    %406 = arith.negf %405 : vector<2x32xf32>
    %407 = math.exp %406 : vector<2x32xf32>
    %cst_224 = arith.constant 1.000000e+00 : f32
    %408 = vector.broadcast %cst_224 : f32 to vector<2x32xf32>
    %409 = arith.addf %408, %407 : vector<2x32xf32>
    %410 = arith.divf %408, %409 : vector<2x32xf32>
    %411 = vector.extract_strided_slice %397 {offsets = [0, 64], sizes = [2, 32], strides = [1, 1]} : vector<2x128xf32> to vector<2x32xf32>
    %412 = math.tanh %411 : vector<2x32xf32>
    %413 = vector.extract_strided_slice %397 {offsets = [0, 96], sizes = [2, 32], strides = [1, 1]} : vector<2x128xf32> to vector<2x32xf32>
    %414 = arith.negf %413 : vector<2x32xf32>
    %415 = math.exp %414 : vector<2x32xf32>
    %cst_225 = arith.constant 1.000000e+00 : f32
    %416 = vector.broadcast %cst_225 : f32 to vector<2x32xf32>
    %417 = arith.addf %416, %415 : vector<2x32xf32>
    %418 = arith.divf %416, %417 : vector<2x32xf32>
    %419 = arith.mulf %410, %398 : vector<2x32xf32>
    %420 = arith.mulf %404, %412 : vector<2x32xf32>
    %421 = arith.addf %419, %420 : vector<2x32xf32>
    %422 = math.tanh %421 : vector<2x32xf32>
    %423 = arith.mulf %418, %422 : vector<2x32xf32>
    %c0_226 = arith.constant 0 : index
    %c0_227 = arith.constant 0 : index
    %424 = vector.load %arg20[%c0_226, %c0_227] : memref<2x32xf32, #tpu.memory_space<vmem>>, vector<2x32xf32>
    tpu.vector_store %arg20[%c0_226, %c0_227], %423 {strides = array<i32>} : memref<2x32xf32, #tpu.memory_space<vmem>>, vector<2x32xf32>,
    %c0_228 = arith.constant 0 : index
    %c0_229 = arith.constant 0 : index
    %425 = vector.load %arg21[%c0_228, %c0_229] : memref<2x32xf32, #tpu.memory_space<vmem>>, vector<2x32xf32>
    tpu.vector_store %arg21[%c0_228, %c0_229], %421 {strides = array<i32>} : memref<2x32xf32, #tpu.memory_space<vmem>>, vector<2x32xf32>,
    %c10_230 = arith.constant 10 : index
    %c0_231 = arith.constant 0 : index
    %426 = vector.load %arg17[%c10_230, %c0_231] : memref<16x32xf32, #tpu.memory_space<vmem>>, vector<2x32xf32>
    tpu.vector_store %arg17[%c10_230, %c0_231], %423 {strides = array<i32>} : memref<16x32xf32, #tpu.memory_space<vmem>>, vector<2x32xf32>,
    %c0_232 = arith.constant 0 : index
    %c0_233 = arith.constant 0 : index
    %427 = vector.load %arg24[%c0_232, %c0_233] : memref<2x32xf32, #tpu.memory_space<vmem>>, vector<2x32xf32>
    %428 = arith.addf %427, %423 : vector<2x32xf32>
    %c0_234 = arith.constant 0 : index
    %c0_235 = arith.constant 0 : index
    %429 = vector.load %arg24[%c0_234, %c0_235] : memref<2x32xf32, #tpu.memory_space<vmem>>, vector<2x32xf32>
    tpu.vector_store %arg24[%c0_234, %c0_235], %428 {strides = array<i32>} : memref<2x32xf32, #tpu.memory_space<vmem>>, vector<2x32xf32>,
    %430 = vector.extract_strided_slice %22 {offsets = [4, 0], sizes = [2, 128], strides = [1, 1]} : vector<16x128xf32> to vector<2x128xf32>
    %c0_236 = arith.constant 0 : index
    %c0_237 = arith.constant 0 : index
    %431 = vector.load %arg22[%c0_236, %c0_237] : memref<2x32xf32, #tpu.memory_space<vmem>>, vector<2x32xf32>
    %c0_238 = arith.constant 0 : index
    %c0_239 = arith.constant 0 : index
    %432 = vector.load %arg10[%c0_238, %c0_239] : memref<32x128xf32, #tpu.memory_space<vmem>>, vector<32x128xf32>
    %cst_240 = arith.constant dense<0.000000e+00> : vector<2x128xf32>
    %433 = tpu.matmul %431, %432, %cst_240 {dimension_numbers = #tpu.dot_dimension_numbers<[1], [0], [0], [1], [0, 0, 1, 1], [], []>} : vector<2x32xf32>, vector<32x128xf32>, vector<2x128xf32> -> vector<2x128xf32>
    %434 = arith.addf %430, %433 : vector<2x128xf32>
    %c0_241 = arith.constant 0 : index
    %c0_242 = arith.constant 0 : index
    %435 = vector.load %arg23[%c0_241, %c0_242] : memref<2x32xf32, #tpu.memory_space<vmem>>, vector<2x32xf32>
    %436 = vector.extract_strided_slice %434 {offsets = [0, 0], sizes = [2, 32], strides = [1, 1]} : vector<2x128xf32> to vector<2x32xf32>
    %437 = arith.negf %436 : vector<2x32xf32>
    %438 = math.exp %437 : vector<2x32xf32>
    %cst_243 = arith.constant 1.000000e+00 : f32
    %439 = vector.broadcast %cst_243 : f32 to vector<2x32xf32>
    %440 = arith.addf %439, %438 : vector<2x32xf32>
    %441 = arith.divf %439, %440 : vector<2x32xf32>
    %442 = vector.extract_strided_slice %434 {offsets = [0, 32], sizes = [2, 32], strides = [1, 1]} : vector<2x128xf32> to vector<2x32xf32>
    %443 = arith.negf %442 : vector<2x32xf32>
    %444 = math.exp %443 : vector<2x32xf32>
    %cst_244 = arith.constant 1.000000e+00 : f32
    %445 = vector.broadcast %cst_244 : f32 to vector<2x32xf32>
    %446 = arith.addf %445, %444 : vector<2x32xf32>
    %447 = arith.divf %445, %446 : vector<2x32xf32>
    %448 = vector.extract_strided_slice %434 {offsets = [0, 64], sizes = [2, 32], strides = [1, 1]} : vector<2x128xf32> to vector<2x32xf32>
    %449 = math.tanh %448 : vector<2x32xf32>
    %450 = vector.extract_strided_slice %434 {offsets = [0, 96], sizes = [2, 32], strides = [1, 1]} : vector<2x128xf32> to vector<2x32xf32>
    %451 = arith.negf %450 : vector<2x32xf32>
    %452 = math.exp %451 : vector<2x32xf32>
    %cst_245 = arith.constant 1.000000e+00 : f32
    %453 = vector.broadcast %cst_245 : f32 to vector<2x32xf32>
    %454 = arith.addf %453, %452 : vector<2x32xf32>
    %455 = arith.divf %453, %454 : vector<2x32xf32>
    %456 = arith.mulf %447, %435 : vector<2x32xf32>
    %457 = arith.mulf %441, %449 : vector<2x32xf32>
    %458 = arith.addf %456, %457 : vector<2x32xf32>
    %459 = math.tanh %458 : vector<2x32xf32>
    %460 = arith.mulf %455, %459 : vector<2x32xf32>
    %c0_246 = arith.constant 0 : index
    %c0_247 = arith.constant 0 : index
    %461 = vector.load %arg22[%c0_246, %c0_247] : memref<2x32xf32, #tpu.memory_space<vmem>>, vector<2x32xf32>
    tpu.vector_store %arg22[%c0_246, %c0_247], %460 {strides = array<i32>} : memref<2x32xf32, #tpu.memory_space<vmem>>, vector<2x32xf32>,
    %c0_248 = arith.constant 0 : index
    %c0_249 = arith.constant 0 : index
    %462 = vector.load %arg23[%c0_248, %c0_249] : memref<2x32xf32, #tpu.memory_space<vmem>>, vector<2x32xf32>
    tpu.vector_store %arg23[%c0_248, %c0_249], %458 {strides = array<i32>} : memref<2x32xf32, #tpu.memory_space<vmem>>, vector<2x32xf32>,
    %c4_250 = arith.constant 4 : index
    %c0_251 = arith.constant 0 : index
    %463 = vector.load %arg18[%c4_250, %c0_251] : memref<16x32xf32, #tpu.memory_space<vmem>>, vector<2x32xf32>
    tpu.vector_store %arg18[%c4_250, %c0_251], %460 {strides = array<i32>} : memref<16x32xf32, #tpu.memory_space<vmem>>, vector<2x32xf32>,
    %c0_252 = arith.constant 0 : index
    %c0_253 = arith.constant 0 : index
    %464 = vector.load %arg25[%c0_252, %c0_253] : memref<2x32xf32, #tpu.memory_space<vmem>>, vector<2x32xf32>
    %465 = arith.addf %464, %460 : vector<2x32xf32>
    %c0_254 = arith.constant 0 : index
    %c0_255 = arith.constant 0 : index
    %466 = vector.load %arg25[%c0_254, %c0_255] : memref<2x32xf32, #tpu.memory_space<vmem>>, vector<2x32xf32>
    tpu.vector_store %arg25[%c0_254, %c0_255], %465 {strides = array<i32>} : memref<2x32xf32, #tpu.memory_space<vmem>>, vector<2x32xf32>,
    %467 = vector.extract_strided_slice %12 {offsets = [12, 0], sizes = [2, 128], strides = [1, 1]} : vector<16x128xf32> to vector<2x128xf32>
    %c0_256 = arith.constant 0 : index
    %c0_257 = arith.constant 0 : index
    %468 = vector.load %arg20[%c0_256, %c0_257] : memref<2x32xf32, #tpu.memory_space<vmem>>, vector<2x32xf32>
    %c0_258 = arith.constant 0 : index
    %c0_259 = arith.constant 0 : index
    %469 = vector.load %arg9[%c0_258, %c0_259] : memref<32x128xf32, #tpu.memory_space<vmem>>, vector<32x128xf32>
    %cst_260 = arith.constant dense<0.000000e+00> : vector<2x128xf32>
    %470 = tpu.matmul %468, %469, %cst_260 {dimension_numbers = #tpu.dot_dimension_numbers<[1], [0], [0], [1], [0, 0, 1, 1], [], []>} : vector<2x32xf32>, vector<32x128xf32>, vector<2x128xf32> -> vector<2x128xf32>
    %471 = arith.addf %467, %470 : vector<2x128xf32>
    %c0_261 = arith.constant 0 : index
    %c0_262 = arith.constant 0 : index
    %472 = vector.load %arg21[%c0_261, %c0_262] : memref<2x32xf32, #tpu.memory_space<vmem>>, vector<2x32xf32>
    %473 = vector.extract_strided_slice %471 {offsets = [0, 0], sizes = [2, 32], strides = [1, 1]} : vector<2x128xf32> to vector<2x32xf32>
    %474 = arith.negf %473 : vector<2x32xf32>
    %475 = math.exp %474 : vector<2x32xf32>
    %cst_263 = arith.constant 1.000000e+00 : f32
    %476 = vector.broadcast %cst_263 : f32 to vector<2x32xf32>
    %477 = arith.addf %476, %475 : vector<2x32xf32>
    %478 = arith.divf %476, %477 : vector<2x32xf32>
    %479 = vector.extract_strided_slice %471 {offsets = [0, 32], sizes = [2, 32], strides = [1, 1]} : vector<2x128xf32> to vector<2x32xf32>
    %480 = arith.negf %479 : vector<2x32xf32>
    %481 = math.exp %480 : vector<2x32xf32>
    %cst_264 = arith.constant 1.000000e+00 : f32
    %482 = vector.broadcast %cst_264 : f32 to vector<2x32xf32>
    %483 = arith.addf %482, %481 : vector<2x32xf32>
    %484 = arith.divf %482, %483 : vector<2x32xf32>
    %485 = vector.extract_strided_slice %471 {offsets = [0, 64], sizes = [2, 32], strides = [1, 1]} : vector<2x128xf32> to vector<2x32xf32>
    %486 = math.tanh %485 : vector<2x32xf32>
    %487 = vector.extract_strided_slice %471 {offsets = [0, 96], sizes = [2, 32], strides = [1, 1]} : vector<2x128xf32> to vector<2x32xf32>
    %488 = arith.negf %487 : vector<2x32xf32>
    %489 = math.exp %488 : vector<2x32xf32>
    %cst_265 = arith.constant 1.000000e+00 : f32
    %490 = vector.broadcast %cst_265 : f32 to vector<2x32xf32>
    %491 = arith.addf %490, %489 : vector<2x32xf32>
    %492 = arith.divf %490, %491 : vector<2x32xf32>
    %493 = arith.mulf %484, %472 : vector<2x32xf32>
    %494 = arith.mulf %478, %486 : vector<2x32xf32>
    %495 = arith.addf %493, %494 : vector<2x32xf32>
    %496 = math.tanh %495 : vector<2x32xf32>
    %497 = arith.mulf %492, %496 : vector<2x32xf32>
    %c0_266 = arith.constant 0 : index
    %c0_267 = arith.constant 0 : index
    %498 = vector.load %arg20[%c0_266, %c0_267] : memref<2x32xf32, #tpu.memory_space<vmem>>, vector<2x32xf32>
    tpu.vector_store %arg20[%c0_266, %c0_267], %497 {strides = array<i32>} : memref<2x32xf32, #tpu.memory_space<vmem>>, vector<2x32xf32>,
    %c0_268 = arith.constant 0 : index
    %c0_269 = arith.constant 0 : index
    %499 = vector.load %arg21[%c0_268, %c0_269] : memref<2x32xf32, #tpu.memory_space<vmem>>, vector<2x32xf32>
    tpu.vector_store %arg21[%c0_268, %c0_269], %495 {strides = array<i32>} : memref<2x32xf32, #tpu.memory_space<vmem>>, vector<2x32xf32>,
    %c12_270 = arith.constant 12 : index
    %c0_271 = arith.constant 0 : index
    %500 = vector.load %arg17[%c12_270, %c0_271] : memref<16x32xf32, #tpu.memory_space<vmem>>, vector<2x32xf32>
    tpu.vector_store %arg17[%c12_270, %c0_271], %497 {strides = array<i32>} : memref<16x32xf32, #tpu.memory_space<vmem>>, vector<2x32xf32>,
    %c0_272 = arith.constant 0 : index
    %c0_273 = arith.constant 0 : index
    %501 = vector.load %arg24[%c0_272, %c0_273] : memref<2x32xf32, #tpu.memory_space<vmem>>, vector<2x32xf32>
    %502 = arith.addf %501, %497 : vector<2x32xf32>
    %c0_274 = arith.constant 0 : index
    %c0_275 = arith.constant 0 : index
    %503 = vector.load %arg24[%c0_274, %c0_275] : memref<2x32xf32, #tpu.memory_space<vmem>>, vector<2x32xf32>
    tpu.vector_store %arg24[%c0_274, %c0_275], %502 {strides = array<i32>} : memref<2x32xf32, #tpu.memory_space<vmem>>, vector<2x32xf32>,
    %504 = vector.extract_strided_slice %22 {offsets = [2, 0], sizes = [2, 128], strides = [1, 1]} : vector<16x128xf32> to vector<2x128xf32>
    %c0_276 = arith.constant 0 : index
    %c0_277 = arith.constant 0 : index
    %505 = vector.load %arg22[%c0_276, %c0_277] : memref<2x32xf32, #tpu.memory_space<vmem>>, vector<2x32xf32>
    %c0_278 = arith.constant 0 : index
    %c0_279 = arith.constant 0 : index
    %506 = vector.load %arg10[%c0_278, %c0_279] : memref<32x128xf32, #tpu.memory_space<vmem>>, vector<32x128xf32>
    %cst_280 = arith.constant dense<0.000000e+00> : vector<2x128xf32>
    %507 = tpu.matmul %505, %506, %cst_280 {dimension_numbers = #tpu.dot_dimension_numbers<[1], [0], [0], [1], [0, 0, 1, 1], [], []>} : vector<2x32xf32>, vector<32x128xf32>, vector<2x128xf32> -> vector<2x128xf32>
    %508 = arith.addf %504, %507 : vector<2x128xf32>
    %c0_281 = arith.constant 0 : index
    %c0_282 = arith.constant 0 : index
    %509 = vector.load %arg23[%c0_281, %c0_282] : memref<2x32xf32, #tpu.memory_space<vmem>>, vector<2x32xf32>
    %510 = vector.extract_strided_slice %508 {offsets = [0, 0], sizes = [2, 32], strides = [1, 1]} : vector<2x128xf32> to vector<2x32xf32>
    %511 = arith.negf %510 : vector<2x32xf32>
    %512 = math.exp %511 : vector<2x32xf32>
    %cst_283 = arith.constant 1.000000e+00 : f32
    %513 = vector.broadcast %cst_283 : f32 to vector<2x32xf32>
    %514 = arith.addf %513, %512 : vector<2x32xf32>
    %515 = arith.divf %513, %514 : vector<2x32xf32>
    %516 = vector.extract_strided_slice %508 {offsets = [0, 32], sizes = [2, 32], strides = [1, 1]} : vector<2x128xf32> to vector<2x32xf32>
    %517 = arith.negf %516 : vector<2x32xf32>
    %518 = math.exp %517 : vector<2x32xf32>
    %cst_284 = arith.constant 1.000000e+00 : f32
    %519 = vector.broadcast %cst_284 : f32 to vector<2x32xf32>
    %520 = arith.addf %519, %518 : vector<2x32xf32>
    %521 = arith.divf %519, %520 : vector<2x32xf32>
    %522 = vector.extract_strided_slice %508 {offsets = [0, 64], sizes = [2, 32], strides = [1, 1]} : vector<2x128xf32> to vector<2x32xf32>
    %523 = math.tanh %522 : vector<2x32xf32>
    %524 = vector.extract_strided_slice %508 {offsets = [0, 96], sizes = [2, 32], strides = [1, 1]} : vector<2x128xf32> to vector<2x32xf32>
    %525 = arith.negf %524 : vector<2x32xf32>
    %526 = math.exp %525 : vector<2x32xf32>
    %cst_285 = arith.constant 1.000000e+00 : f32
    %527 = vector.broadcast %cst_285 : f32 to vector<2x32xf32>
    %528 = arith.addf %527, %526 : vector<2x32xf32>
    %529 = arith.divf %527, %528 : vector<2x32xf32>
    %530 = arith.mulf %521, %509 : vector<2x32xf32>
    %531 = arith.mulf %515, %523 : vector<2x32xf32>
    %532 = arith.addf %530, %531 : vector<2x32xf32>
    %533 = math.tanh %532 : vector<2x32xf32>
    %534 = arith.mulf %529, %533 : vector<2x32xf32>
    %c0_286 = arith.constant 0 : index
    %c0_287 = arith.constant 0 : index
    %535 = vector.load %arg22[%c0_286, %c0_287] : memref<2x32xf32, #tpu.memory_space<vmem>>, vector<2x32xf32>
    tpu.vector_store %arg22[%c0_286, %c0_287], %534 {strides = array<i32>} : memref<2x32xf32, #tpu.memory_space<vmem>>, vector<2x32xf32>,
    %c0_288 = arith.constant 0 : index
    %c0_289 = arith.constant 0 : index
    %536 = vector.load %arg23[%c0_288, %c0_289] : memref<2x32xf32, #tpu.memory_space<vmem>>, vector<2x32xf32>
    tpu.vector_store %arg23[%c0_288, %c0_289], %532 {strides = array<i32>} : memref<2x32xf32, #tpu.memory_space<vmem>>, vector<2x32xf32>,
    %c2_290 = arith.constant 2 : index
    %c0_291 = arith.constant 0 : index
    %537 = vector.load %arg18[%c2_290, %c0_291] : memref<16x32xf32, #tpu.memory_space<vmem>>, vector<2x32xf32>
    tpu.vector_store %arg18[%c2_290, %c0_291], %534 {strides = array<i32>} : memref<16x32xf32, #tpu.memory_space<vmem>>, vector<2x32xf32>,
    %c0_292 = arith.constant 0 : index
    %c0_293 = arith.constant 0 : index
    %538 = vector.load %arg25[%c0_292, %c0_293] : memref<2x32xf32, #tpu.memory_space<vmem>>, vector<2x32xf32>
    %539 = arith.addf %538, %534 : vector<2x32xf32>
    %c0_294 = arith.constant 0 : index
    %c0_295 = arith.constant 0 : index
    %540 = vector.load %arg25[%c0_294, %c0_295] : memref<2x32xf32, #tpu.memory_space<vmem>>, vector<2x32xf32>
    tpu.vector_store %arg25[%c0_294, %c0_295], %539 {strides = array<i32>} : memref<2x32xf32, #tpu.memory_space<vmem>>, vector<2x32xf32>,
    %541 = vector.extract_strided_slice %12 {offsets = [14, 0], sizes = [2, 128], strides = [1, 1]} : vector<16x128xf32> to vector<2x128xf32>
    %c0_296 = arith.constant 0 : index
    %c0_297 = arith.constant 0 : index
    %542 = vector.load %arg20[%c0_296, %c0_297] : memref<2x32xf32, #tpu.memory_space<vmem>>, vector<2x32xf32>
    %c0_298 = arith.constant 0 : index
    %c0_299 = arith.constant 0 : index
    %543 = vector.load %arg9[%c0_298, %c0_299] : memref<32x128xf32, #tpu.memory_space<vmem>>, vector<32x128xf32>
    %cst_300 = arith.constant dense<0.000000e+00> : vector<2x128xf32>
    %544 = tpu.matmul %542, %543, %cst_300 {dimension_numbers = #tpu.dot_dimension_numbers<[1], [0], [0], [1], [0, 0, 1, 1], [], []>} : vector<2x32xf32>, vector<32x128xf32>, vector<2x128xf32> -> vector<2x128xf32>
    %545 = arith.addf %541, %544 : vector<2x128xf32>
    %c0_301 = arith.constant 0 : index
    %c0_302 = arith.constant 0 : index
    %546 = vector.load %arg21[%c0_301, %c0_302] : memref<2x32xf32, #tpu.memory_space<vmem>>, vector<2x32xf32>
    %547 = vector.extract_strided_slice %545 {offsets = [0, 0], sizes = [2, 32], strides = [1, 1]} : vector<2x128xf32> to vector<2x32xf32>
    %548 = arith.negf %547 : vector<2x32xf32>
    %549 = math.exp %548 : vector<2x32xf32>
    %cst_303 = arith.constant 1.000000e+00 : f32
    %550 = vector.broadcast %cst_303 : f32 to vector<2x32xf32>
    %551 = arith.addf %550, %549 : vector<2x32xf32>
    %552 = arith.divf %550, %551 : vector<2x32xf32>
    %553 = vector.extract_strided_slice %545 {offsets = [0, 32], sizes = [2, 32], strides = [1, 1]} : vector<2x128xf32> to vector<2x32xf32>
    %554 = arith.negf %553 : vector<2x32xf32>
    %555 = math.exp %554 : vector<2x32xf32>
    %cst_304 = arith.constant 1.000000e+00 : f32
    %556 = vector.broadcast %cst_304 : f32 to vector<2x32xf32>
    %557 = arith.addf %556, %555 : vector<2x32xf32>
    %558 = arith.divf %556, %557 : vector<2x32xf32>
    %559 = vector.extract_strided_slice %545 {offsets = [0, 64], sizes = [2, 32], strides = [1, 1]} : vector<2x128xf32> to vector<2x32xf32>
    %560 = math.tanh %559 : vector<2x32xf32>
    %561 = vector.extract_strided_slice %545 {offsets = [0, 96], sizes = [2, 32], strides = [1, 1]} : vector<2x128xf32> to vector<2x32xf32>
    %562 = arith.negf %561 : vector<2x32xf32>
    %563 = math.exp %562 : vector<2x32xf32>
    %cst_305 = arith.constant 1.000000e+00 : f32
    %564 = vector.broadcast %cst_305 : f32 to vector<2x32xf32>
    %565 = arith.addf %564, %563 : vector<2x32xf32>
    %566 = arith.divf %564, %565 : vector<2x32xf32>
    %567 = arith.mulf %558, %546 : vector<2x32xf32>
    %568 = arith.mulf %552, %560 : vector<2x32xf32>
    %569 = arith.addf %567, %568 : vector<2x32xf32>
    %570 = math.tanh %569 : vector<2x32xf32>
    %571 = arith.mulf %566, %570 : vector<2x32xf32>
    %c0_306 = arith.constant 0 : index
    %c0_307 = arith.constant 0 : index
    %572 = vector.load %arg20[%c0_306, %c0_307] : memref<2x32xf32, #tpu.memory_space<vmem>>, vector<2x32xf32>
    tpu.vector_store %arg20[%c0_306, %c0_307], %571 {strides = array<i32>} : memref<2x32xf32, #tpu.memory_space<vmem>>, vector<2x32xf32>,
    %c0_308 = arith.constant 0 : index
    %c0_309 = arith.constant 0 : index
    %573 = vector.load %arg21[%c0_308, %c0_309] : memref<2x32xf32, #tpu.memory_space<vmem>>, vector<2x32xf32>
    tpu.vector_store %arg21[%c0_308, %c0_309], %569 {strides = array<i32>} : memref<2x32xf32, #tpu.memory_space<vmem>>, vector<2x32xf32>,
    %c14_310 = arith.constant 14 : index
    %c0_311 = arith.constant 0 : index
    %574 = vector.load %arg17[%c14_310, %c0_311] : memref<16x32xf32, #tpu.memory_space<vmem>>, vector<2x32xf32>
    tpu.vector_store %arg17[%c14_310, %c0_311], %571 {strides = array<i32>} : memref<16x32xf32, #tpu.memory_space<vmem>>, vector<2x32xf32>,
    %c0_312 = arith.constant 0 : index
    %c0_313 = arith.constant 0 : index
    %575 = vector.load %arg24[%c0_312, %c0_313] : memref<2x32xf32, #tpu.memory_space<vmem>>, vector<2x32xf32>
    %576 = arith.addf %575, %571 : vector<2x32xf32>
    %c0_314 = arith.constant 0 : index
    %c0_315 = arith.constant 0 : index
    %577 = vector.load %arg24[%c0_314, %c0_315] : memref<2x32xf32, #tpu.memory_space<vmem>>, vector<2x32xf32>
    tpu.vector_store %arg24[%c0_314, %c0_315], %576 {strides = array<i32>} : memref<2x32xf32, #tpu.memory_space<vmem>>, vector<2x32xf32>,
    %578 = vector.extract_strided_slice %22 {offsets = [0, 0], sizes = [2, 128], strides = [1, 1]} : vector<16x128xf32> to vector<2x128xf32>
    %c0_316 = arith.constant 0 : index
    %c0_317 = arith.constant 0 : index
    %579 = vector.load %arg22[%c0_316, %c0_317] : memref<2x32xf32, #tpu.memory_space<vmem>>, vector<2x32xf32>
    %c0_318 = arith.constant 0 : index
    %c0_319 = arith.constant 0 : index
    %580 = vector.load %arg10[%c0_318, %c0_319] : memref<32x128xf32, #tpu.memory_space<vmem>>, vector<32x128xf32>
    %cst_320 = arith.constant dense<0.000000e+00> : vector<2x128xf32>
    %581 = tpu.matmul %579, %580, %cst_320 {dimension_numbers = #tpu.dot_dimension_numbers<[1], [0], [0], [1], [0, 0, 1, 1], [], []>} : vector<2x32xf32>, vector<32x128xf32>, vector<2x128xf32> -> vector<2x128xf32>
    %582 = arith.addf %578, %581 : vector<2x128xf32>
    %c0_321 = arith.constant 0 : index
    %c0_322 = arith.constant 0 : index
    %583 = vector.load %arg23[%c0_321, %c0_322] : memref<2x32xf32, #tpu.memory_space<vmem>>, vector<2x32xf32>
    %584 = vector.extract_strided_slice %582 {offsets = [0, 0], sizes = [2, 32], strides = [1, 1]} : vector<2x128xf32> to vector<2x32xf32>
    %585 = arith.negf %584 : vector<2x32xf32>
    %586 = math.exp %585 : vector<2x32xf32>
    %cst_323 = arith.constant 1.000000e+00 : f32
    %587 = vector.broadcast %cst_323 : f32 to vector<2x32xf32>
    %588 = arith.addf %587, %586 : vector<2x32xf32>
    %589 = arith.divf %587, %588 : vector<2x32xf32>
    %590 = vector.extract_strided_slice %582 {offsets = [0, 32], sizes = [2, 32], strides = [1, 1]} : vector<2x128xf32> to vector<2x32xf32>
    %591 = arith.negf %590 : vector<2x32xf32>
    %592 = math.exp %591 : vector<2x32xf32>
    %cst_324 = arith.constant 1.000000e+00 : f32
    %593 = vector.broadcast %cst_324 : f32 to vector<2x32xf32>
    %594 = arith.addf %593, %592 : vector<2x32xf32>
    %595 = arith.divf %593, %594 : vector<2x32xf32>
    %596 = vector.extract_strided_slice %582 {offsets = [0, 64], sizes = [2, 32], strides = [1, 1]} : vector<2x128xf32> to vector<2x32xf32>
    %597 = math.tanh %596 : vector<2x32xf32>
    %598 = vector.extract_strided_slice %582 {offsets = [0, 96], sizes = [2, 32], strides = [1, 1]} : vector<2x128xf32> to vector<2x32xf32>
    %599 = arith.negf %598 : vector<2x32xf32>
    %600 = math.exp %599 : vector<2x32xf32>
    %cst_325 = arith.constant 1.000000e+00 : f32
    %601 = vector.broadcast %cst_325 : f32 to vector<2x32xf32>
    %602 = arith.addf %601, %600 : vector<2x32xf32>
    %603 = arith.divf %601, %602 : vector<2x32xf32>
    %604 = arith.mulf %595, %583 : vector<2x32xf32>
    %605 = arith.mulf %589, %597 : vector<2x32xf32>
    %606 = arith.addf %604, %605 : vector<2x32xf32>
    %607 = math.tanh %606 : vector<2x32xf32>
    %608 = arith.mulf %603, %607 : vector<2x32xf32>
    %c0_326 = arith.constant 0 : index
    %c0_327 = arith.constant 0 : index
    %609 = vector.load %arg22[%c0_326, %c0_327] : memref<2x32xf32, #tpu.memory_space<vmem>>, vector<2x32xf32>
    tpu.vector_store %arg22[%c0_326, %c0_327], %608 {strides = array<i32>} : memref<2x32xf32, #tpu.memory_space<vmem>>, vector<2x32xf32>,
    %c0_328 = arith.constant 0 : index
    %c0_329 = arith.constant 0 : index
    %610 = vector.load %arg23[%c0_328, %c0_329] : memref<2x32xf32, #tpu.memory_space<vmem>>, vector<2x32xf32>
    tpu.vector_store %arg23[%c0_328, %c0_329], %606 {strides = array<i32>} : memref<2x32xf32, #tpu.memory_space<vmem>>, vector<2x32xf32>,
    %c0_330 = arith.constant 0 : index
    %c0_331 = arith.constant 0 : index
    %611 = vector.load %arg18[%c0_330, %c0_331] : memref<16x32xf32, #tpu.memory_space<vmem>>, vector<2x32xf32>
    tpu.vector_store %arg18[%c0_330, %c0_331], %608 {strides = array<i32>} : memref<16x32xf32, #tpu.memory_space<vmem>>, vector<2x32xf32>,
    %c0_332 = arith.constant 0 : index
    %c0_333 = arith.constant 0 : index
    %612 = vector.load %arg25[%c0_332, %c0_333] : memref<2x32xf32, #tpu.memory_space<vmem>>, vector<2x32xf32>
    %613 = arith.addf %612, %608 : vector<2x32xf32>
    %c0_334 = arith.constant 0 : index
    %c0_335 = arith.constant 0 : index
    %614 = vector.load %arg25[%c0_334, %c0_335] : memref<2x32xf32, #tpu.memory_space<vmem>>, vector<2x32xf32>
    tpu.vector_store %arg25[%c0_334, %c0_335], %613 {strides = array<i32>} : memref<2x32xf32, #tpu.memory_space<vmem>>, vector<2x32xf32>,
    %c0_i32_336 = arith.constant 0 : i32
    %615 = arith.cmpi eq, %arg0, %c0_i32_336 : i32
    %616 = arith.extui %615 : i1 to i32
    %c0_i32_337 = arith.constant 0 : i32
    %617 = arith.cmpi ne, %616, %c0_i32_337 : i32
    scf.if %617 {
      %c0_338 = arith.constant 0 : index
      %c0_339 = arith.constant 0 : index
      %618 = vector.load %arg24[%c0_338, %c0_339] : memref<2x32xf32, #tpu.memory_space<vmem>>, vector<2x32xf32>
      %cst_340 = arith.constant 1.250000e-01 : f32
      %619 = vector.broadcast %cst_340 : f32 to vector<2x32xf32>
      %620 = arith.mulf %618, %619 : vector<2x32xf32>
      %c0_341 = arith.constant 0 : index
      %c0_342 = arith.constant 0 : index
      %621 = vector.load %arg19[%c0_341, %c0_342] : memref<2x64xf32, #tpu.memory_space<vmem>>, vector<2x32xf32>
      tpu.vector_store %arg19[%c0_341, %c0_342], %620 {strides = array<i32>} : memref<2x64xf32, #tpu.memory_space<vmem>>, vector<2x32xf32>,
      %c0_343 = arith.constant 0 : index
      %c0_344 = arith.constant 0 : index
      %622 = vector.load %arg25[%c0_343, %c0_344] : memref<2x32xf32, #tpu.memory_space<vmem>>, vector<2x32xf32>
      %cst_345 = arith.constant 1.250000e-01 : f32
      %623 = vector.broadcast %cst_345 : f32 to vector<2x32xf32>
      %624 = arith.mulf %622, %623 : vector<2x32xf32>
      %c0_346 = arith.constant 0 : index
      %c32 = arith.constant 32 : index
      %625 = vector.load %arg19[%c0_346, %c32] : memref<2x64xf32, #tpu.memory_space<vmem>>, vector<2x32xf32>
      tpu.vector_store %arg19[%c0_346, %c32], %624 {strides = array<i32>} : memref<2x64xf32, #tpu.memory_space<vmem>>, vector<2x32xf32>,
    } else {
    }
    return
  }
  func.func @transform_0(%arg0: i32) -> (i32, i32) {
    %c0_i32 = arith.constant 0 : i32
    %c0_i32_0 = arith.constant 0 : i32
    return %arg0, %c0_i32 : i32, i32
  }
  func.func @transform_1(%arg0: i32) -> (i32, i32) {
    %c0_i32 = arith.constant 0 : i32
    %c0_i32_0 = arith.constant 0 : i32
    return %arg0, %c0_i32 : i32, i32
  }
  func.func @transform_2(%arg0: i32) -> (i32, i32) {
    %c0_i32 = arith.constant 0 : i32
    %0 = arith.subi %c0_i32, %arg0 : i32
    %c0_i32_0 = arith.constant 0 : i32
    %c0_i32_1 = arith.constant 0 : i32
    return %0, %c0_i32_0 : i32, i32
  }
  func.func @transform_3(%arg0: i32) -> (i32, i32) {
    %c0_i32 = arith.constant 0 : i32
    %0 = arith.subi %c0_i32, %arg0 : i32
    %c0_i32_0 = arith.constant 0 : i32
    %c0_i32_1 = arith.constant 0 : i32
    return %0, %c0_i32_0 : i32, i32
  }
  func.func @transform_4(%arg0: i32) -> (i32, i32) {
    %c0_i32 = arith.constant 0 : i32
    %c0_i32_0 = arith.constant 0 : i32
    %c0_i32_1 = arith.constant 0 : i32
    return %c0_i32, %c0_i32_0 : i32, i32
  }
  func.func @transform_5(%arg0: i32) -> (i32, i32) {
    %c0_i32 = arith.constant 0 : i32
    %c0_i32_0 = arith.constant 0 : i32
    %c0_i32_1 = arith.constant 0 : i32
    return %c0_i32, %c0_i32_0 : i32, i32
  }
  func.func @transform_6(%arg0: i32) -> (i32, i32) {
    %c0_i32 = arith.constant 0 : i32
    %c0_i32_0 = arith.constant 0 : i32
    %c0_i32_1 = arith.constant 0 : i32
    return %c0_i32, %c0_i32_0 : i32, i32
  }
  func.func @transform_7(%arg0: i32) -> (i32, i32) {
    %c0_i32 = arith.constant 0 : i32
    %c0_i32_0 = arith.constant 0 : i32
    %c0_i32_1 = arith.constant 0 : i32
    return %c0_i32, %c0_i32_0 : i32, i32
  }
  func.func @transform_8(%arg0: i32) -> (i32, i32) {
    %c0_i32 = arith.constant 0 : i32
    %c0_i32_0 = arith.constant 0 : i32
    %c0_i32_1 = arith.constant 0 : i32
    return %c0_i32, %c0_i32_0 : i32, i32
  }
  func.func @transform_9(%arg0: i32) -> (i32, i32) {
    %c0_i32 = arith.constant 0 : i32
    %c0_i32_0 = arith.constant 0 : i32
    %c0_i32_1 = arith.constant 0 : i32
    return %c0_i32, %c0_i32_0 : i32, i32
  }
  func.func @transform_10(%arg0: i32) -> (i32, i32) {
    %c0_i32 = arith.constant 0 : i32
    %c0_i32_0 = arith.constant 0 : i32
    %c0_i32_1 = arith.constant 0 : i32
    return %c0_i32, %c0_i32_0 : i32, i32
  }
  func.func @transform_11(%arg0: i32) -> (i32, i32) {
    %c0_i32 = arith.constant 0 : i32
    %c0_i32_0 = arith.constant 0 : i32
    %c0_i32_1 = arith.constant 0 : i32
    return %c0_i32, %c0_i32_0 : i32, i32
  }
  func.func @transform_12(%arg0: i32) -> (i32, i32) {
    %c0_i32 = arith.constant 0 : i32
    %c0_i32_0 = arith.constant 0 : i32
    %c0_i32_1 = arith.constant 0 : i32
    return %c0_i32, %c0_i32_0 : i32, i32
  }
  func.func @transform_13(%arg0: i32) -> (i32, i32) {
    %c0_i32 = arith.constant 0 : i32
    %c0_i32_0 = arith.constant 0 : i32
    %c0_i32_1 = arith.constant 0 : i32
    return %c0_i32, %c0_i32_0 : i32, i32
  }
  func.func @transform_14(%arg0: i32) -> (i32, i32) {
    %c0_i32 = arith.constant 0 : i32
    %c0_i32_0 = arith.constant 0 : i32
    %c0_i32_1 = arith.constant 0 : i32
    return %c0_i32, %c0_i32_0 : i32, i32
  }
  func.func @transform_15(%arg0: i32) -> (i32, i32) {
    %c0_i32 = arith.constant 0 : i32
    %c0_i32_0 = arith.constant 0 : i32
    %c0_i32_1 = arith.constant 0 : i32
    return %c0_i32, %c0_i32_0 : i32, i32
  }
  func.func @transform_16(%arg0: i32) -> (i32, i32) {
    %c0_i32 = arith.constant 0 : i32
    %c0_i32_0 = arith.constant 0 : i32
    return %arg0, %c0_i32 : i32, i32
  }
  func.func @transform_17(%arg0: i32) -> (i32, i32) {
    %c0_i32 = arith.constant 0 : i32
    %0 = arith.subi %c0_i32, %arg0 : i32
    %c0_i32_0 = arith.constant 0 : i32
    %c0_i32_1 = arith.constant 0 : i32
    return %0, %c0_i32_0 : i32, i32
  }
  func.func @transform_18(%arg0: i32) -> (i32, i32) {
    %c0_i32 = arith.constant 0 : i32
    %c0_i32_0 = arith.constant 0 : i32
    %c0_i32_1 = arith.constant 0 : i32
    return %c0_i32, %c0_i32_0 : i32, i32
  }
}

</mosaic_0001>

<llo_original>
// kernel: embed_sentence_forward.3
$region0: #{embed_sentence_forward.3}
  #allocation0 [shape = 'u32[]', space=smem, size = 0x4, offset = 0x4, fixed_abs, tag = 'smem constant byte address 0x4 - core index']
  #allocation1 [shape = 'u32[144,128]{1,0:T(1,128)}', space=vmem, size = 0x12000, scoped, tag = 'internal scratch']
  #allocation2 [shape = 'f32[2,32]{1,0:T(2,128)}', space=vmem, size = 0x400, scoped, tag = 'scratch operand']
  #allocation3 [shape = 'f32[2,32]{1,0:T(2,128)}', space=vmem, size = 0x400, scoped, tag = 'scratch operand']
  #allocation4 [shape = 'f32[2,32]{1,0:T(2,128)}', space=vmem, size = 0x400, scoped, tag = 'scratch operand']
  #allocation5 [shape = 'f32[2,32]{1,0:T(2,128)}', space=vmem, size = 0x400, scoped, tag = 'scratch operand']
  #allocation6 [shape = 'f32[2,32]{1,0:T(2,128)}', space=vmem, size = 0x400, scoped, tag = 'scratch operand']
  #allocation7 [shape = 'f32[2,32]{1,0:T(2,128)}', space=vmem, size = 0x400, scoped, tag = 'scratch operand']
  %s0 = inlined_call_operand.vmem [shape: f32[16,32], index: 0, kind: input, shape index: {}, may-alias: {0,2}]
  %s1 = inlined_call_operand.vmem [shape: f32[16,32], index: 1, kind: input, shape index: {}, may-alias: {1,3}]
  %s2 = inlined_call_operand.vmem [shape: f32[16,32], index: 2, kind: input, shape index: {}, may-alias: {0,2}]
  %s3 = inlined_call_operand.vmem [shape: f32[16,32], index: 3, kind: input, shape index: {}, may-alias: {1,3}]
  %s4 = inlined_call_operand.vmem [shape: f32[32,128], index: 4, kind: input, shape index: {}]
  %s5 = inlined_call_operand.vmem [shape: f32[32,128], index: 5, kind: input, shape index: {}]
  %s6 = inlined_call_operand.vmem [shape: f32[32,128], index: 6, kind: input, shape index: {}]
  %s7 = inlined_call_operand.vmem [shape: f32[32,128], index: 7, kind: input, shape index: {}]
  %s8 = inlined_call_operand.vmem [shape: f32[32,128], index: 8, kind: input, shape index: {}]
  %s9 = inlined_call_operand.vmem [shape: f32[32,128], index: 9, kind: input, shape index: {}]
  %s10 = inlined_call_operand.vmem [shape: f32[1,128], index: 10, kind: input, shape index: {}]
  %s11 = inlined_call_operand.vmem [shape: f32[1,128], index: 11, kind: input, shape index: {}]
  %s12 = inlined_call_operand.vmem [shape: f32[2,32], index: 12, kind: input, shape index: {}]
  %s13 = inlined_call_operand.vmem [shape: f32[2,32], index: 13, kind: input, shape index: {}]
  %s14 = inlined_call_operand.vmem [shape: f32[2,32], index: 14, kind: input, shape index: {}]
  %s15 = inlined_call_operand.vmem [shape: f32[2,32], index: 15, kind: input, shape index: {}]
  %s16 = inlined_call_operand.hbm [shape: f32[16,32], index: 16, kind: output, shape index: {0}]
  %s17 = inlined_call_operand.hbm [shape: f32[16,32], index: 17, kind: output, shape index: {1}]
  %s18 = inlined_call_operand.hbm [shape: f32[2,64], index: 18, kind: output, shape index: {2}]
  %19 = xla_tuple %s16, %s17, %s18
  %s20 = sld [smem:[#allocation0]]
  $region98: #{embed_sentence_forward.3} parent=0
    _
  %s22 = ssub.s32 1, %s20
  %s23 = scalar_select 0, %s22, %s20
  $region1: #{embed_sentence_forward.3} parent=0
    #allocation8 [shape = 'u8[8192]{0}', space=vmem, size = 0x2000, scoped, tag = 'output window, operand 0, single buffered']
    #allocation9 [shape = 's32[1]{0}', space=sflag, size = 0x4, scoped, tag = 'scoped memory for embed_sentence_forward.3']
    #allocation10 [shape = 'u8[8192]{0}', space=vmem, size = 0x2000, scoped, tag = 'output window, operand 1, single buffered']
    #allocation11 [shape = 's32[1]{0}', space=sflag, size = 0x4, scoped, tag = 'scoped memory for embed_sentence_forward.3']
    #allocation12 [shape = 'u8[1024]{0}', space=vmem, size = 0x400, scoped, tag = 'output window, operand 2, single buffered']
    %24 = vsyncpa [#allocation9], 0
    %25 = vsyncpa [#allocation11], 0
    // Predicated region
    $region2: #{embed_sentence_forward.3} parent=1 // pred_check
      _
    $region3: #{embed_sentence_forward.3} parent=1 // pred_check_branch
      %27 = sbr.rel (0) target = $region5
    $region4: #{embed_sentence_forward.3} parent=1 // pred_region
      _
    $region5: #{embed_sentence_forward.3} parent=1 // pred_fallthru
      _
    // Predicated region
    $region6: #{embed_sentence_forward.3} parent=1 // pred_check
      _
    $region7: #{embed_sentence_forward.3} parent=1 // pred_check_branch
      %29 = sbr.rel (0) target = $region9
    $region8: #{embed_sentence_forward.3} parent=1 // pred_region
      _
    $region9: #{embed_sentence_forward.3} parent=1 // pred_fallthru
      _
    // Predicated region
    $region10: #{embed_sentence_forward.3} parent=1 // pred_check
      _
    $region11: #{embed_sentence_forward.3} parent=1 // pred_check_branch
      %31 = sbr.rel (0) target = $region13
    $region12: #{embed_sentence_forward.3} parent=1 // pred_region
      %s32 = ssub.s32 0, 0
      %s33 = smul.u32 2, %s32
      %p34 = scmp.lt.s32.totalorder %s33, 1
      %s35 = scalar_select %p34, %s33, 1
      %s36 = smul.addr %s35, 8
      %s37 = scalar_lea.vmem %s2, %s36
      %s38 = ssub.s32 0, 0
      %s39 = smul.u32 2, %s38
    $region13: #{embed_sentence_forward.3} parent=1 // pred_fallthru
      _
    // Predicated region
    $region14: #{embed_sentence_forward.3} parent=1 // pred_check
      _
    $region15: #{embed_sentence_forward.3} parent=1 // pred_check_branch
      %41 = sbr.rel (0) target = $region17
    $region16: #{embed_sentence_forward.3} parent=1 // pred_region
      %s42 = ssub.s32 0, 0
      %s43 = smul.u32 2, %s42
      %p44 = scmp.lt.s32.totalorder %s43, 1
      %s45 = scalar_select %p44, %s43, 1
      %s46 = smul.addr %s45, 8
      %s47 = scalar_lea.vmem %s3, %s46
      %s48 = ssub.s32 0, 0
      %s49 = smul.u32 2, %s48
    $region17: #{embed_sentence_forward.3} parent=1 // pred_fallthru
      _
    // Predicated region
    $region18: #{embed_sentence_forward.3} parent=1 // pred_check
      _
    $region19: #{embed_sentence_forward.3} parent=1 // pred_check_branch
      %51 = sbr.rel (0) target = $region21
    $region20: #{embed_sentence_forward.3} parent=1 // pred_region
      _
    $region21: #{embed_sentence_forward.3} parent=1 // pred_fallthru
      _
    // Predicated region
    $region22: #{embed_sentence_forward.3} parent=1 // pred_check
      _
    $region23: #{embed_sentence_forward.3} parent=1 // pred_check_branch
      %53 = sbr.rel (0) target = $region25
    $region24: #{embed_sentence_forward.3} parent=1 // pred_region
      _
    $region25: #{embed_sentence_forward.3} parent=1 // pred_fallthru
      _
    // Predicated region
    $region26: #{embed_sentence_forward.3} parent=1 // pred_check
      _
    $region27: #{embed_sentence_forward.3} parent=1 // pred_check_branch
      %55 = sbr.rel (0) target = $region29
    $region28: #{embed_sentence_forward.3} parent=1 // pred_region
      _
    $region29: #{embed_sentence_forward.3} parent=1 // pred_fallthru
      _
    // Predicated region
    $region30: #{embed_sentence_forward.3} parent=1 // pred_check
      _
    $region31: #{embed_sentence_forward.3} parent=1 // pred_check_branch
      %57 = sbr.rel (0) target = $region33
    $region32: #{embed_sentence_forward.3} parent=1 // pred_region
      _
    $region33: #{embed_sentence_forward.3} parent=1 // pred_fallthru
      _
    // Predicated region
    $region34: #{embed_sentence_forward.3} parent=1 // pred_check
      _
    $region35: #{embed_sentence_forward.3} parent=1 // pred_check_branch
      %59 = sbr.rel (0) target = $region37
    $region36: #{embed_sentence_forward.3} parent=1 // pred_region
      _
    $region37: #{embed_sentence_forward.3} parent=1 // pred_fallthru
      _
    // Predicated region
    $region38: #{embed_sentence_forward.3} parent=1 // pred_check
      _
    $region39: #{embed_sentence_forward.3} parent=1 // pred_check_branch
      %61 = sbr.rel (0) target = $region41
    $region40: #{embed_sentence_forward.3} parent=1 // pred_region
      _
    $region41: #{embed_sentence_forward.3} parent=1 // pred_fallthru
      _
    // Predicated region
    $region42: #{embed_sentence_forward.3} parent=1 // pred_check
      _
    $region43: #{embed_sentence_forward.3} parent=1 // pred_check_branch
      %63 = sbr.rel (0) target = $region45
    $region44: #{embed_sentence_forward.3} parent=1 // pred_region
      _
    $region45: #{embed_sentence_forward.3} parent=1 // pred_fallthru
      _
    // Predicated region
    $region46: #{embed_sentence_forward.3} parent=1 // pred_check
      _
    $region47: #{embed_sentence_forward.3} parent=1 // pred_check_branch
      %65 = sbr.rel (0) target = $region49
    $region48: #{embed_sentence_forward.3} parent=1 // pred_region
      _
    $region49: #{embed_sentence_forward.3} parent=1 // pred_fallthru
      _
    // Predicated region
    $region50: #{embed_sentence_forward.3} parent=1 // pred_check
      _
    $region51: #{embed_sentence_forward.3} parent=1 // pred_check_branch
      %67 = sbr.rel (0) target = $region53
    $region52: #{embed_sentence_forward.3} parent=1 // pred_region
      _
    $region53: #{embed_sentence_forward.3} parent=1 // pred_fallthru
      _
    // Predicated region
    $region54: #{embed_sentence_forward.3} parent=1 // pred_check
      _
    $region55: #{embed_sentence_forward.3} parent=1 // pred_check_branch
      %69 = sbr.rel (0) target = $region57
    $region56: #{embed_sentence_forward.3} parent=1 // pred_region
      _
    $region57: #{embed_sentence_forward.3} parent=1 // pred_fallthru
      _
    // Predicated region
    $region58: #{embed_sentence_forward.3} parent=1 // pred_check
      _
    $region59: #{embed_sentence_forward.3} parent=1 // pred_check_branch
      %71 = sbr.rel (0) target = $region61
    $region60: #{embed_sentence_forward.3} parent=1 // pred_region
      _
    $region61: #{embed_sentence_forward.3} parent=1 // pred_fallthru
      _
    // Predicated region
    $region62: #{embed_sentence_forward.3} parent=1 // pred_check
      _
    $region63: #{embed_sentence_forward.3} parent=1 // pred_check_branch
      %73 = sbr.rel (0) target = $region65
    $region64: #{embed_sentence_forward.3} parent=1 // pred_region
      _
    $region65: #{embed_sentence_forward.3} parent=1 // pred_fallthru
      _
    %s74 = ssub.s32 0, 0
    %s75 = smul.u32 2, %s74
    %p76 = scmp.lt.s32.totalorder %s75, 1
    %s77 = scalar_select %p76, %s75, 1
    %s78 = smul.addr %s77, 8
    %s79 = scalar_lea.vmem %s2, %s78
    %s80 = ssub.s32 0, 0
    %s81 = smul.u32 2, %s80
    %p82 = scmp.lt.s32.totalorder %s81, 1
    %s83 = scalar_select %p82, %s81, 1
    %s84 = smul.addr %s83, 8
    %s85 = scalar_lea.vmem %s3, %s84
    %s86 = ssub.s32 0, 0
    %s87 = smul.u32 2, %s86
    %p88 = scmp.lt.s32.totalorder %s87, 1
    %s89 = scalar_select %p88, %s87, 1
    %s90 = smul.addr %s89, 8
    %s91 = scalar_lea.vmem %s2, %s90
    %s92 = ssub.s32 0, 0
    %s93 = smul.u32 2, %s92
    %s94 = ssub.s32 0, 0
    %s95 = smul.u32 2, %s94
    %p96 = scmp.lt.s32.totalorder %s95, 1
    %s97 = scalar_select %p96, %s95, 1
    %s98 = smul.addr %s97, 8
    %s99 = scalar_lea.vmem %s3, %s98
    %s100 = ssub.s32 0, 0
    %s101 = smul.u32 2, %s100
    %s102 = ssub.s32 0, 0
    %s103 = smul.u32 2, %s102
    %p104 = scmp.eq.s32.totalorder 0, 0
    // Predicated region
    $region66: #{embed_sentence_forward.3} parent=1 // pred_check
      %p105 = pneg %p104
    $region67: #{embed_sentence_forward.3} parent=1 // pred_check_branch
      %107 = sbr.rel (%p105) target = $region69
    $region68: #{embed_sentence_forward.3} parent=1 // pred_region
      %v108 = vld [vmem:[%s12] sm:$0x3]
      %vm109 = vcmask 254976
      %110 = vst.msk [vmem:[#allocation2] sm:$0x3] %vm109, %v108
      %v111 = vld [vmem:[%s13] sm:$0x3]
      %112 = vst.msk [vmem:[#allocation3] sm:$0x3] %vm109, %v111
      %v113 = vld [vmem:[%s14] sm:$0x3]
      %114 = vst.msk [vmem:[#allocation4] sm:$0x3] %vm109, %v113
      %v115 = vld [vmem:[%s15] sm:$0x3]
      %116 = vst.msk [vmem:[#allocation5] sm:$0x3] %vm109, %v115
      %117 = vst.msk [vmem:[#allocation6] sm:$0x3] %vm109, 0.0
      %118 = vst.msk [vmem:[#allocation7] sm:$0x3] %vm109, 0.0
    $region69: #{embed_sentence_forward.3} parent=1 // pred_fallthru
      _
    %v119 = vld [vmem:[%s0] sm:$0xff]
    %v120 = vld [vmem:[%s0 + $0x8] sm:$0xff]
    %v121 = vld [vmem:[%s4] sm:$0xff]
    %v122 = vld [vmem:[%s4 + $0x8] sm:$0xff]
    %v123 = vld [vmem:[%s4 + $0x10] sm:$0xff]
    %v124 = vld [vmem:[%s4 + $0x18] sm:$0xff]
    %v125 = vld [vmem:[%s1] sm:$0xff]
    %v126 = vld [vmem:[%s1 + $0x8] sm:$0xff]
    %v127 = vld [vmem:[%s5] sm:$0xff]
    %v128 = vld [vmem:[%s5 + $0x8] sm:$0xff]
    %v129 = vld [vmem:[%s5 + $0x10] sm:$0xff]
    %v130 = vld [vmem:[%s5 + $0x18] sm:$0xff]
    %vm131 = vcmask 261120
    %v133 = vsel %vm131, %v125, 0
    %v136 = vsel %vm131, %v126, 0
    %138 = vmatprep.subr.mxu0 0.0
    %139 = vmatpush1.msra.mxu0 0.0
    %140 = vmatprep.subr.mxu0 0.0
    %141 = vmatpush1.msra.mxu0 0.0
    %142 = vmatprep.subr.mxu0 0.0
    %143 = vmatpush1.msra.mxu0 0.0
    %144 = vmatprep.subr.mxu0 0.0
    %145 = vmatpush1.msra.mxu0 0.0
    %146 = vmatprep.subr.mxu0 0.0
    %147 = vmatpush1.msra.mxu0 0.0
    %148 = vmatprep.subr.mxu0 0.0
    %149 = vmatpush1.msra.mxu0 0.0
    %150 = vmatprep.subr.mxu0 0.0
    %151 = vmatpush1.msra.mxu0 0.0
    %152 = vmatprep.subr.mxu0 0.0
    %153 = vmatpush1.msra.mxu0 0.0
    %154 = vmatprep.subr.mxu0 0.0
    %155 = vmatpush1.msra.mxu0 0.0
    %156 = vmatprep.subr.mxu0 0.0
    %157 = vmatpush1.msra.mxu0 0.0
    %158 = vmatprep.subr.mxu0 0.0
    %159 = vmatpush1.msra.mxu0 0.0
    %160 = vmatprep.subr.mxu0 0.0
    %161 = vmatpush1.msra.mxu0 0.0
    %162 = vmatprep.subr.mxu0 0.0
    %163 = vmatpush1.msra.mxu0 %v130
    %164 = vmatprep.subr.mxu0 0.0
    %165 = vmatpush1.msra.mxu0 %v129
    %166 = vmatprep.subr.mxu0 0.0
    %167 = vmatpush1.msra.mxu0 %v128
    %168 = vmatprep.subr.mxu0 0.0
    %169 = vmatpush1.msra.mxu0 %v127
    %170 = vmatprep.subr.mxu0 0.0
    %171 = vmatpush2.msra.mxu0 0.0
    %172 = vmatprep.subr.mxu0 0.0
    %173 = vmatpush2.msra.mxu0 0.0
    %174 = vmatprep.subr.mxu0 0.0
    %175 = vmatpush2.msra.mxu0 0.0
    %176 = vmatprep.subr.mxu0 0.0
    %177 = vmatpush2.msra.mxu0 0.0
    %178 = vmatprep.subr.mxu0 0.0
    %179 = vmatpush2.msra.mxu0 0.0
    %180 = vmatprep.subr.mxu0 0.0
    %181 = vmatpush2.msra.mxu0 0.0
    %182 = vmatprep.subr.mxu0 0.0
    %183 = vmatpush2.msra.mxu0 0.0
    %184 = vmatprep.subr.mxu0 0.0
    %185 = vmatpush2.msra.mxu0 0.0
    %186 = vmatprep.subr.mxu0 0.0
    %187 = vmatpush2.msra.mxu0 0.0
    %188 = vmatprep.subr.mxu0 0.0
    %189 = vmatpush2.msra.mxu0 0.0
    %190 = vmatprep.subr.mxu0 0.0
    %191 = vmatpush2.msra.mxu0 0.0
    %192 = vmatprep.subr.mxu0 0.0
    %193 = vmatpush2.msra.mxu0 0.0
    %194 = vmatprep.subr.mxu0 0.0
    %195 = vmatpush2.msra.mxu0 0.0
    %196 = vmatprep.subr.mxu0 0.0
    %197 = vmatpush2.msra.mxu0 0.0
    %198 = vmatprep.subr.mxu0 0.0
    %199 = vmatpush2.msra.mxu0 0.0
    %200 = vmatprep.subr.mxu0 0.0
    %201 = vmatpush2.msra.mxu0 0.0
    %202 = vmatprep.mubr.f32.mxu0 0.0
    %203 = vmatmul.mubr.f32.gmra.mxu0 %v133
    %v204 = vpop.f32.mrf.mxu0
    %v205 = vadd.f32 0.0, %v204
    %v206 = vpop.f32.mrf.mxu0
    %207 = vmatprep.mubr.f32.mxu0 0.0
    %208 = vmatmul.mubr.f32.gmra.mxu0 %v136
    %v209 = vpop.f32.mrf.mxu0
    %v210 = vadd.f32 0.0, %v209
    %v211 = vpop.f32.mrf.mxu0
    %212 = vdwg.mxu0
    %v214 = vsel %vm131, %v119, 0
    %v217 = vsel %vm131, %v120, 0
    %219 = vmatprep.subr.mxu0 0.0
    %220 = vmatpush1.msra.mxu0 0.0
    %221 = vmatprep.subr.mxu0 0.0
    %222 = vmatpush1.msra.mxu0 0.0
    %223 = vmatprep.subr.mxu0 0.0
    %224 = vmatpush1.msra.mxu0 0.0
    %225 = vmatprep.subr.mxu0 0.0
    %226 = vmatpush1.msra.mxu0 0.0
    %227 = vmatprep.subr.mxu0 0.0
    %228 = vmatpush1.msra.mxu0 0.0
    %229 = vmatprep.subr.mxu0 0.0
    %230 = vmatpush1.msra.mxu0 0.0
    %231 = vmatprep.subr.mxu0 0.0
    %232 = vmatpush1.msra.mxu0 0.0
    %233 = vmatprep.subr.mxu0 0.0
    %234 = vmatpush1.msra.mxu0 0.0
    %235 = vmatprep.subr.mxu0 0.0
    %236 = vmatpush1.msra.mxu0 0.0
    %237 = vmatprep.subr.mxu0 0.0
    %238 = vmatpush1.msra.mxu0 0.0
    %239 = vmatprep.subr.mxu0 0.0
    %240 = vmatpush1.msra.mxu0 0.0
    %241 = vmatprep.subr.mxu0 0.0
    %242 = vmatpush1.msra.mxu0 0.0
    %243 = vmatprep.subr.mxu0 0.0
    %244 = vmatpush1.msra.mxu0 %v124
    %245 = vmatprep.subr.mxu0 0.0
    %246 = vmatpush1.msra.mxu0 %v123
    %247 = vmatprep.subr.mxu0 0.0
    %248 = vmatpush1.msra.mxu0 %v122
    %249 = vmatprep.subr.mxu0 0.0
    %250 = vmatpush1.msra.mxu0 %v121
    %251 = vmatprep.subr.mxu0 0.0
    %252 = vmatpush2.msra.mxu0 0.0
    %253 = vmatprep.subr.mxu0 0.0
    %254 = vmatpush2.msra.mxu0 0.0
    %255 = vmatprep.subr.mxu0 0.0
    %256 = vmatpush2.msra.mxu0 0.0
    %257 = vmatprep.subr.mxu0 0.0
    %258 = vmatpush2.msra.mxu0 0.0
    %259 = vmatprep.subr.mxu0 0.0
    %260 = vmatpush2.msra.mxu0 0.0
    %261 = vmatprep.subr.mxu0 0.0
    %262 = vmatpush2.msra.mxu0 0.0
    %263 = vmatprep.subr.mxu0 0.0
    %264 = vmatpush2.msra.mxu0 0.0
    %265 = vmatprep.subr.mxu0 0.0
    %266 = vmatpush2.msra.mxu0 0.0
    %267 = vmatprep.subr.mxu0 0.0
    %268 = vmatpush2.msra.mxu0 0.0
    %269 = vmatprep.subr.mxu0 0.0
    %270 = vmatpush2.msra.mxu0 0.0
    %271 = vmatprep.subr.mxu0 0.0
    %272 = vmatpush2.msra.mxu0 0.0
    %273 = vmatprep.subr.mxu0 0.0
    %274 = vmatpush2.msra.mxu0 0.0
    %275 = vmatprep.subr.mxu0 0.0
    %276 = vmatpush2.msra.mxu0 0.0
    %277 = vmatprep.subr.mxu0 0.0
    %278 = vmatpush2.msra.mxu0 0.0
    %279 = vmatprep.subr.mxu0 0.0
    %280 = vmatpush2.msra.mxu0 0.0
    %281 = vmatprep.subr.mxu0 0.0
    %282 = vmatpush2.msra.mxu0 0.0
    %283 = vmatprep.mubr.f32.mxu0 0.0
    %284 = vmatmul.mubr.f32.gmra.mxu0 %v214
    %v285 = vpop.f32.mrf.mxu0
    %v286 = vadd.f32 %v205, %v285
    %v287 = vpop.f32.mrf.mxu0
    %288 = vmatprep.mubr.f32.mxu0 0.0
    %289 = vmatmul.mubr.f32.gmra.mxu0 %v217
    %v290 = vpop.f32.mrf.mxu0
    %v291 = vadd.f32 %v210, %v290
    %v292 = vpop.f32.mrf.mxu0
    %293 = vdwg.mxu0
    %v294 = vld [vmem:[%s10] sm:$0x1]
    %v296 = vlaneseq
    %v297 = vshrl.u32 %v296, 7
    %v298 = vsub.s32 0, %v297
    %v299 = vrot.slane %v294, %v298
    %v301 = vadd.f32 %v286, %v299
    %v302 = vadd.f32 %v291, %v299
    %v303 = vld [vmem:[%s91] sm:$0xff]
    %v304 = vld [vmem:[%s91 + $0x8] sm:$0xff]
    %v305 = vld [vmem:[%s6] sm:$0xff]
    %v306 = vld [vmem:[%s6 + $0x8] sm:$0xff]
    %v307 = vld [vmem:[%s6 + $0x10] sm:$0xff]
    %v308 = vld [vmem:[%s6 + $0x18] sm:$0xff]
    %v309 = vld [vmem:[%s99] sm:$0xff]
    %v310 = vld [vmem:[%s99 + $0x8] sm:$0xff]
    %v311 = vld [vmem:[%s7] sm:$0xff]
    %v312 = vld [vmem:[%s7 + $0x8] sm:$0xff]
    %v313 = vld [vmem:[%s7 + $0x10] sm:$0xff]
    %v314 = vld [vmem:[%s7 + $0x18] sm:$0xff]
    %v316 = vsel %vm131, %v309, 0
    %v319 = vsel %vm131, %v310, 0
    %321 = vmatprep.subr.mxu0 0.0
    %322 = vmatpush1.msra.mxu0 0.0
    %323 = vmatprep.subr.mxu0 0.0
    %324 = vmatpush1.msra.mxu0 0.0
    %325 = vmatprep.subr.mxu0 0.0
    %326 = vmatpush1.msra.mxu0 0.0
    %327 = vmatprep.subr.mxu0 0.0
    %328 = vmatpush1.msra.mxu0 0.0
    %329 = vmatprep.subr.mxu0 0.0
    %330 = vmatpush1.msra.mxu0 0.0
    %331 = vmatprep.subr.mxu0 0.0
    %332 = vmatpush1.msra.mxu0 0.0
    %333 = vmatprep.subr.mxu0 0.0
    %334 = vmatpush1.msra.mxu0 0.0
    %335 = vmatprep.subr.mxu0 0.0
    %336 = vmatpush1.msra.mxu0 0.0
    %337 = vmatprep.subr.mxu0 0.0
    %338 = vmatpush1.msra.mxu0 0.0
    %339 = vmatprep.subr.mxu0 0.0
    %340 = vmatpush1.msra.mxu0 0.0
    %341 = vmatprep.subr.mxu0 0.0
    %342 = vmatpush1.msra.mxu0 0.0
    %343 = vmatprep.subr.mxu0 0.0
    %344 = vmatpush1.msra.mxu0 0.0
    %345 = vmatprep.subr.mxu0 0.0
    %346 = vmatpush1.msra.mxu0 %v314
    %347 = vmatprep.subr.mxu0 0.0
    %348 = vmatpush1.msra.mxu0 %v313
    %349 = vmatprep.subr.mxu0 0.0
    %350 = vmatpush1.msra.mxu0 %v312
    %351 = vmatprep.subr.mxu0 0.0
    %352 = vmatpush1.msra.mxu0 %v311
    %353 = vmatprep.subr.mxu0 0.0
    %354 = vmatpush2.msra.mxu0 0.0
    %355 = vmatprep.subr.mxu0 0.0
    %356 = vmatpush2.msra.mxu0 0.0
    %357 = vmatprep.subr.mxu0 0.0
    %358 = vmatpush2.msra.mxu0 0.0
    %359 = vmatprep.subr.mxu0 0.0
    %360 = vmatpush2.msra.mxu0 0.0
    %361 = vmatprep.subr.mxu0 0.0
    %362 = vmatpush2.msra.mxu0 0.0
    %363 = vmatprep.subr.mxu0 0.0
    %364 = vmatpush2.msra.mxu0 0.0
    %365 = vmatprep.subr.mxu0 0.0
    %366 = vmatpush2.msra.mxu0 0.0
    %367 = vmatprep.subr.mxu0 0.0
    %368 = vmatpush2.msra.mxu0 0.0
    %369 = vmatprep.subr.mxu0 0.0
    %370 = vmatpush2.msra.mxu0 0.0
    %371 = vmatprep.subr.mxu0 0.0
    %372 = vmatpush2.msra.mxu0 0.0
    %373 = vmatprep.subr.mxu0 0.0
    %374 = vmatpush2.msra.mxu0 0.0
    %375 = vmatprep.subr.mxu0 0.0
    %376 = vmatpush2.msra.mxu0 0.0
    %377 = vmatprep.subr.mxu0 0.0
    %378 = vmatpush2.msra.mxu0 0.0
    %379 = vmatprep.subr.mxu0 0.0
    %380 = vmatpush2.msra.mxu0 0.0
    %381 = vmatprep.subr.mxu0 0.0
    %382 = vmatpush2.msra.mxu0 0.0
    %383 = vmatprep.subr.mxu0 0.0
    %384 = vmatpush2.msra.mxu0 0.0
    %385 = vmatprep.mubr.f32.mxu0 0.0
    %386 = vmatmul.mubr.f32.gmra.mxu0 %v316
    %v387 = vpop.f32.mrf.mxu0
    %v388 = vadd.f32 0.0, %v387
    %v389 = vpop.f32.mrf.mxu0
    %390 = vmatprep.mubr.f32.mxu0 0.0
    %391 = vmatmul.mubr.f32.gmra.mxu0 %v319
    %v392 = vpop.f32.mrf.mxu0
    %v393 = vadd.f32 0.0, %v392
    %v394 = vpop.f32.mrf.mxu0
    %395 = vdwg.mxu0
    %v397 = vsel %vm131, %v303, 0
    %v400 = vsel %vm131, %v304, 0
    %402 = vmatprep.subr.mxu0 0.0
    %403 = vmatpush1.msra.mxu0 0.0
    %404 = vmatprep.subr.mxu0 0.0
    %405 = vmatpush1.msra.mxu0 0.0
    %406 = vmatprep.subr.mxu0 0.0
    %407 = vmatpush1.msra.mxu0 0.0
    %408 = vmatprep.subr.mxu0 0.0
    %409 = vmatpush1.msra.mxu0 0.0
    %410 = vmatprep.subr.mxu0 0.0
    %411 = vmatpush1.msra.mxu0 0.0
    %412 = vmatprep.subr.mxu0 0.0
    %413 = vmatpush1.msra.mxu0 0.0
    %414 = vmatprep.subr.mxu0 0.0
    %415 = vmatpush1.msra.mxu0 0.0
    %416 = vmatprep.subr.mxu0 0.0
    %417 = vmatpush1.msra.mxu0 0.0
    %418 = vmatprep.subr.mxu0 0.0
    %419 = vmatpush1.msra.mxu0 0.0
    %420 = vmatprep.subr.mxu0 0.0
    %421 = vmatpush1.msra.mxu0 0.0
    %422 = vmatprep.subr.mxu0 0.0
    %423 = vmatpush1.msra.mxu0 0.0
    %424 = vmatprep.subr.mxu0 0.0
    %425 = vmatpush1.msra.mxu0 0.0
    %426 = vmatprep.subr.mxu0 0.0
    %427 = vmatpush1.msra.mxu0 %v308
    %428 = vmatprep.subr.mxu0 0.0
    %429 = vmatpush1.msra.mxu0 %v307
    %430 = vmatprep.subr.mxu0 0.0
    %431 = vmatpush1.msra.mxu0 %v306
    %432 = vmatprep.subr.mxu0 0.0
    %433 = vmatpush1.msra.mxu0 %v305
    %434 = vmatprep.subr.mxu0 0.0
    %435 = vmatpush2.msra.mxu0 0.0
    %436 = vmatprep.subr.mxu0 0.0
    %437 = vmatpush2.msra.mxu0 0.0
    %438 = vmatprep.subr.mxu0 0.0
    %439 = vmatpush2.msra.mxu0 0.0
    %440 = vmatprep.subr.mxu0 0.0
    %441 = vmatpush2.msra.mxu0 0.0
    %442 = vmatprep.subr.mxu0 0.0
    %443 = vmatpush2.msra.mxu0 0.0
    %444 = vmatprep.subr.mxu0 0.0
    %445 = vmatpush2.msra.mxu0 0.0
    %446 = vmatprep.subr.mxu0 0.0
    %447 = vmatpush2.msra.mxu0 0.0
    %448 = vmatprep.subr.mxu0 0.0
    %449 = vmatpush2.msra.mxu0 0.0
    %450 = vmatprep.subr.mxu0 0.0
    %451 = vmatpush2.msra.mxu0 0.0
    %452 = vmatprep.subr.mxu0 0.0
    %453 = vmatpush2.msra.mxu0 0.0
    %454 = vmatprep.subr.mxu0 0.0
    %455 = vmatpush2.msra.mxu0 0.0
    %456 = vmatprep.subr.mxu0 0.0
    %457 = vmatpush2.msra.mxu0 0.0
    %458 = vmatprep.subr.mxu0 0.0
    %459 = vmatpush2.msra.mxu0 0.0
    %460 = vmatprep.subr.mxu0 0.0
    %461 = vmatpush2.msra.mxu0 0.0
    %462 = vmatprep.subr.mxu0 0.0
    %463 = vmatpush2.msra.mxu0 0.0
    %464 = vmatprep.subr.mxu0 0.0
    %465 = vmatpush2.msra.mxu0 0.0
    %466 = vmatprep.mubr.f32.mxu0 0.0
    %467 = vmatmul.mubr.f32.gmra.mxu0 %v397
    %v468 = vpop.f32.mrf.mxu0
    %v469 = vadd.f32 %v388, %v468
    %v470 = vpop.f32.mrf.mxu0
    %471 = vmatprep.mubr.f32.mxu0 0.0
    %472 = vmatmul.mubr.f32.gmra.mxu0 %v400
    %v473 = vpop.f32.mrf.mxu0
    %v474 = vadd.f32 %v393, %v473
    %v475 = vpop.f32.mrf.mxu0
    %476 = vdwg.mxu0
    %v477 = vld [vmem:[%s11] sm:$0x1]
    %v479 = vlaneseq
    %v480 = vshrl.u32 %v479, 7
    %v481 = vsub.s32 0, %v480
    %v482 = vrot.slane %v477, %v481
    %v484 = vadd.f32 %v469, %v482
    %v485 = vadd.f32 %v474, %v482
    %v486 = vld [vmem:[#allocation2] sm:$0x3]
    %v487 = vld [vmem:[%s8] sm:$0xff]
    %v488 = vld [vmem:[%s8 + $0x8] sm:$0xff]
    %v489 = vld [vmem:[%s8 + $0x10] sm:$0xff]
    %v490 = vld [vmem:[%s8 + $0x18] sm:$0xff]
    %v492 = vsel %vm131, %v486, 0
    %494 = vmatprep.subr.mxu0 0.0
    %495 = vmatpush1.msra.mxu0 0.0
    %496 = vmatprep.subr.mxu0 0.0
    %497 = vmatpush1.msra.mxu0 0.0
    %498 = vmatprep.subr.mxu0 0.0
    %499 = vmatpush1.msra.mxu0 0.0
    %500 = vmatprep.subr.mxu0 0.0
    %501 = vmatpush1.msra.mxu0 0.0
    %502 = vmatprep.subr.mxu0 0.0
    %503 = vmatpush1.msra.mxu0 0.0
    %504 = vmatprep.subr.mxu0 0.0
    %505 = vmatpush1.msra.mxu0 0.0
    %506 = vmatprep.subr.mxu0 0.0
    %507 = vmatpush1.msra.mxu0 0.0
    %508 = vmatprep.subr.mxu0 0.0
    %509 = vmatpush1.msra.mxu0 0.0
    %510 = vmatprep.subr.mxu0 0.0
    %511 = vmatpush1.msra.mxu0 0.0
    %512 = vmatprep.subr.mxu0 0.0
    %513 = vmatpush1.msra.mxu0 0.0
    %514 = vmatprep.subr.mxu0 0.0
    %515 = vmatpush1.msra.mxu0 0.0
    %516 = vmatprep.subr.mxu0 0.0
    %517 = vmatpush1.msra.mxu0 0.0
    %518 = vmatprep.subr.mxu0 0.0
    %519 = vmatpush1.msra.mxu0 %v490
    %520 = vmatprep.subr.mxu0 0.0
    %521 = vmatpush1.msra.mxu0 %v489
    %522 = vmatprep.subr.mxu0 0.0
    %523 = vmatpush1.msra.mxu0 %v488
    %524 = vmatprep.subr.mxu0 0.0
    %525 = vmatpush1.msra.mxu0 %v487
    %526 = vmatprep.subr.mxu0 0.0
    %527 = vmatpush2.msra.mxu0 0.0
    %528 = vmatprep.subr.mxu0 0.0
    %529 = vmatpush2.msra.mxu0 0.0
    %530 = vmatprep.subr.mxu0 0.0
    %531 = vmatpush2.msra.mxu0 0.0
    %532 = vmatprep.subr.mxu0 0.0
    %533 = vmatpush2.msra.mxu0 0.0
    %534 = vmatprep.subr.mxu0 0.0
    %535 = vmatpush2.msra.mxu0 0.0
    %536 = vmatprep.subr.mxu0 0.0
    %537 = vmatpush2.msra.mxu0 0.0
    %538 = vmatprep.subr.mxu0 0.0
    %539 = vmatpush2.msra.mxu0 0.0
    %540 = vmatprep.subr.mxu0 0.0
    %541 = vmatpush2.msra.mxu0 0.0
    %542 = vmatprep.subr.mxu0 0.0
    %543 = vmatpush2.msra.mxu0 0.0
    %544 = vmatprep.subr.mxu0 0.0
    %545 = vmatpush2.msra.mxu0 0.0
    %546 = vmatprep.subr.mxu0 0.0
    %547 = vmatpush2.msra.mxu0 0.0
    %548 = vmatprep.subr.mxu0 0.0
    %549 = vmatpush2.msra.mxu0 0.0
    %550 = vmatprep.subr.mxu0 0.0
    %551 = vmatpush2.msra.mxu0 0.0
    %552 = vmatprep.subr.mxu0 0.0
    %553 = vmatpush2.msra.mxu0 0.0
    %554 = vmatprep.subr.mxu0 0.0
    %555 = vmatpush2.msra.mxu0 0.0
    %556 = vmatprep.subr.mxu0 0.0
    %557 = vmatpush2.msra.mxu0 0.0
    %558 = vmatprep.mubr.f32.mxu0 0.0
    %559 = vmatmul.mubr.f32.gmra.mxu0 %v492
    %v560 = vpop.f32.mrf.mxu0
    %v561 = vadd.f32 0.0, %v560
    %v562 = vpop.f32.mrf.mxu0
    %563 = vdwg.mxu0
    %v564 = vadd.f32 %v301, %v561
    %v565 = vld [vmem:[#allocation3] sm:$0x3]
    %v566 = vxor.u32 %v564, 2147483648
    %v567 = vmul.f32 %v566, 1.442695
    %v568 = vpow.pop %v567
    %v569 = vadd.f32 %v568, 1.0
    %v570 = vrcp.pop %v569
    %v571 = vmul.f32 1.0, %v570
    %v572 = vtanh.pop %v564
    %574 = vrot.lane.b32.xlu0 %v565, 32
    %v575 = vpop.permute.xlu0 %574
    %v577 = vmul.f32 %v571, %v575
    %579 = vrot.lane.b32.xlu0 %v572, 64
    %v580 = vpop.permute.xlu0 %579
    %v582 = vmul.f32 %v571, %v580
    %584 = vrot.lane.b32.xlu0 %v582, 32
    %v585 = vpop.permute.xlu0 %584
    %v587 = vadd.f32 %v577, %v585
    %v588 = vtanh.pop %v587
    %590 = vrot.lane.b32.xlu0 %v588, 64
    %v591 = vpop.permute.xlu0 %590
    %v593 = vmul.f32 %v571, %v591
    %595 = vrot.lane.b32.xlu0 %v593, 32
    %v596 = vpop.permute.xlu0 %595
    %vm598 = vcmask 254976
    %599 = vst.msk [vmem:[#allocation2] sm:$0x3] %vm598, %v596
    %601 = vrot.lane.b32.xlu0 %v587, 96
    %v602 = vpop.permute.xlu0 %601
    %604 = vst.msk [vmem:[#allocation3] sm:$0x3] %vm598, %v602
    %605 = vst.msk [vmem:[#allocation8] sm:$0x3] %vm598, %v596
    %v606 = vld [vmem:[#allocation6] sm:$0x3]
    %v607 = vadd.f32 %v606, %v596
    %608 = vst.msk [vmem:[#allocation6] sm:$0x3] %vm598, %v607
    %v609 = vld [vmem:[#allocation4] sm:$0x3]
    %v610 = vld [vmem:[%s9] sm:$0xff]
    %v611 = vld [vmem:[%s9 + $0x8] sm:$0xff]
    %v612 = vld [vmem:[%s9 + $0x10] sm:$0xff]
    %v613 = vld [vmem:[%s9 + $0x18] sm:$0xff]
    %v615 = vsel %vm131, %v609, 0
    %617 = vmatprep.subr.mxu0 0.0
    %618 = vmatpush1.msra.mxu0 0.0
    %619 = vmatprep.subr.mxu0 0.0
    %620 = vmatpush1.msra.mxu0 0.0
    %621 = vmatprep.subr.mxu0 0.0
    %622 = vmatpush1.msra.mxu0 0.0
    %623 = vmatprep.subr.mxu0 0.0
    %624 = vmatpush1.msra.mxu0 0.0
    %625 = vmatprep.subr.mxu0 0.0
    %626 = vmatpush1.msra.mxu0 0.0
    %627 = vmatprep.subr.mxu0 0.0
    %628 = vmatpush1.msra.mxu0 0.0
    %629 = vmatprep.subr.mxu0 0.0
    %630 = vmatpush1.msra.mxu0 0.0
    %631 = vmatprep.subr.mxu0 0.0
    %632 = vmatpush1.msra.mxu0 0.0
    %633 = vmatprep.subr.mxu0 0.0
    %634 = vmatpush1.msra.mxu0 0.0
    %635 = vmatprep.subr.mxu0 0.0
    %636 = vmatpush1.msra.mxu0 0.0
    %637 = vmatprep.subr.mxu0 0.0
    %638 = vmatpush1.msra.mxu0 0.0
    %639 = vmatprep.subr.mxu0 0.0
    %640 = vmatpush1.msra.mxu0 0.0
    %641 = vmatprep.subr.mxu0 0.0
    %642 = vmatpush1.msra.mxu0 %v613
    %643 = vmatprep.subr.mxu0 0.0
    %644 = vmatpush1.msra.mxu0 %v612
    %645 = vmatprep.subr.mxu0 0.0
    %646 = vmatpush1.msra.mxu0 %v611
    %647 = vmatprep.subr.mxu0 0.0
    %648 = vmatpush1.msra.mxu0 %v610
    %649 = vmatprep.subr.mxu0 0.0
    %650 = vmatpush2.msra.mxu0 0.0
    %651 = vmatprep.subr.mxu0 0.0
    %652 = vmatpush2.msra.mxu0 0.0
    %653 = vmatprep.subr.mxu0 0.0
    %654 = vmatpush2.msra.mxu0 0.0
    %655 = vmatprep.subr.mxu0 0.0
    %656 = vmatpush2.msra.mxu0 0.0
    %657 = vmatprep.subr.mxu0 0.0
    %658 = vmatpush2.msra.mxu0 0.0
    %659 = vmatprep.subr.mxu0 0.0
    %660 = vmatpush2.msra.mxu0 0.0
    %661 = vmatprep.subr.mxu0 0.0
    %662 = vmatpush2.msra.mxu0 0.0
    %663 = vmatprep.subr.mxu0 0.0
    %664 = vmatpush2.msra.mxu0 0.0
    %665 = vmatprep.subr.mxu0 0.0
    %666 = vmatpush2.msra.mxu0 0.0
    %667 = vmatprep.subr.mxu0 0.0
    %668 = vmatpush2.msra.mxu0 0.0
    %669 = vmatprep.subr.mxu0 0.0
    %670 = vmatpush2.msra.mxu0 0.0
    %671 = vmatprep.subr.mxu0 0.0
    %672 = vmatpush2.msra.mxu0 0.0
    %673 = vmatprep.subr.mxu0 0.0
    %674 = vmatpush2.msra.mxu0 0.0
    %675 = vmatprep.subr.mxu0 0.0
    %676 = vmatpush2.msra.mxu0 0.0
    %677 = vmatprep.subr.mxu0 0.0
    %678 = vmatpush2.msra.mxu0 0.0
    %679 = vmatprep.subr.mxu0 0.0
    %680 = vmatpush2.msra.mxu0 0.0
    %681 = vmatprep.mubr.f32.mxu0 0.0
    %682 = vmatmul.mubr.f32.gmra.mxu0 %v615
    %v683 = vpop.f32.mrf.mxu0
    %v684 = vadd.f32 0.0, %v683
    %v685 = vpop.f32.mrf.mxu0
    %686 = vdwg.mxu0
    %v688 = vrot.slane %v684, 2
    %v690 = vadd.f32 %v485, %v688
    %v691 = vld [vmem:[#allocation5] sm:$0x3]
    %v692 = vxor.u32 %v690, 2147483648
    %v693 = vmul.f32 %v692, 1.442695
    %v694 = vpow.pop %v693
    %v695 = vadd.f32 %v694, 1.0
    %v696 = vrcp.pop %v695
    %v697 = vmul.f32 1.0, %v696
    %v698 = vtanh.pop %v690
    %v700 = vrot.slane %v691, 2
    %701 = vrot.lane.b32.xlu0 %v700, 32
    %v702 = vpop.permute.xlu0 %701
    %v704 = vmul.f32 %v697, %v702
    %706 = vrot.lane.b32.xlu0 %v698, 64
    %v707 = vpop.permute.xlu0 %706
    %v709 = vmul.f32 %v697, %v707
    %711 = vrot.lane.b32.xlu0 %v709, 32
    %v712 = vpop.permute.xlu0 %711
    %v714 = vadd.f32 %v704, %v712
    %v715 = vtanh.pop %v714
    %717 = vrot.lane.b32.xlu0 %v715, 64
    %v718 = vpop.permute.xlu0 %717
    %v720 = vmul.f32 %v697, %v718
    %722 = vrot.lane.b32.xlu0 %v720, 32
    %v723 = vpop.permute.xlu0 %722
    %vm725 = vcmask 261126
    %726 = vst.msk [vmem:[#allocation4 - $0x6] sm:$0xc0] %vm725, %v723
    %728 = vrot.lane.b32.xlu0 %v714, 96
    %v729 = vpop.permute.xlu0 %728
    %731 = vst.msk [vmem:[#allocation5 - $0x6] sm:$0xc0] %vm725, %v729
    %732 = vst.msk [vmem:[#allocation10 + $0x8] sm:$0xc0] %vm725, %v723
    %v733 = vld [vmem:[#allocation7] sm:$0x3]
    %v734 = vrot.slane %v720, 6
    %735 = vrot.lane.b32.xlu0 %v734, 32
    %v736 = vpop.permute.xlu0 %735
    %v738 = vadd.f32 %v733, %v736
    %739 = vst.msk [vmem:[#allocation7] sm:$0x3] %vm598, %v738
    %v740 = vld [vmem:[#allocation2] sm:$0x3]
    %v741 = vld [vmem:[%s8] sm:$0xff]
    %v742 = vld [vmem:[%s8 + $0x8] sm:$0xff]
    %v743 = vld [vmem:[%s8 + $0x10] sm:$0xff]
    %v744 = vld [vmem:[%s8 + $0x18] sm:$0xff]
    %v746 = vsel %vm131, %v740, 0
    %748 = vmatprep.subr.mxu0 0.0
    %749 = vmatpush1.msra.mxu0 0.0
    %750 = vmatprep.subr.mxu0 0.0
    %751 = vmatpush1.msra.mxu0 0.0
    %752 = vmatprep.subr.mxu0 0.0
    %753 = vmatpush1.msra.mxu0 0.0
    %754 = vmatprep.subr.mxu0 0.0
    %755 = vmatpush1.msra.mxu0 0.0
    %756 = vmatprep.subr.mxu0 0.0
    %757 = vmatpush1.msra.mxu0 0.0
    %758 = vmatprep.subr.mxu0 0.0
    %759 = vmatpush1.msra.mxu0 0.0
    %760 = vmatprep.subr.mxu0 0.0
    %761 = vmatpush1.msra.mxu0 0.0
    %762 = vmatprep.subr.mxu0 0.0
    %763 = vmatpush1.msra.mxu0 0.0
    %764 = vmatprep.subr.mxu0 0.0
    %765 = vmatpush1.msra.mxu0 0.0
    %766 = vmatprep.subr.mxu0 0.0
    %767 = vmatpush1.msra.mxu0 0.0
    %768 = vmatprep.subr.mxu0 0.0
    %769 = vmatpush1.msra.mxu0 0.0
    %770 = vmatprep.subr.mxu0 0.0
    %771 = vmatpush1.msra.mxu0 0.0
    %772 = vmatprep.subr.mxu0 0.0
    %773 = vmatpush1.msra.mxu0 %v744
    %774 = vmatprep.subr.mxu0 0.0
    %775 = vmatpush1.msra.mxu0 %v743
    %776 = vmatprep.subr.mxu0 0.0
    %777 = vmatpush1.msra.mxu0 %v742
    %778 = vmatprep.subr.mxu0 0.0
    %779 = vmatpush1.msra.mxu0 %v741
    %780 = vmatprep.subr.mxu0 0.0
    %781 = vmatpush2.msra.mxu0 0.0
    %782 = vmatprep.subr.mxu0 0.0
    %783 = vmatpush2.msra.mxu0 0.0
    %784 = vmatprep.subr.mxu0 0.0
    %785 = vmatpush2.msra.mxu0 0.0
    %786 = vmatprep.subr.mxu0 0.0
    %787 = vmatpush2.msra.mxu0 0.0
    %788 = vmatprep.subr.mxu0 0.0
    %789 = vmatpush2.msra.mxu0 0.0
    %790 = vmatprep.subr.mxu0 0.0
    %791 = vmatpush2.msra.mxu0 0.0
    %792 = vmatprep.subr.mxu0 0.0
    %793 = vmatpush2.msra.mxu0 0.0
    %794 = vmatprep.subr.mxu0 0.0
    %795 = vmatpush2.msra.mxu0 0.0
    %796 = vmatprep.subr.mxu0 0.0
    %797 = vmatpush2.msra.mxu0 0.0
    %798 = vmatprep.subr.mxu0 0.0
    %799 = vmatpush2.msra.mxu0 0.0
    %800 = vmatprep.subr.mxu0 0.0
    %801 = vmatpush2.msra.mxu0 0.0
    %802 = vmatprep.subr.mxu0 0.0
    %803 = vmatpush2.msra.mxu0 0.0
    %804 = vmatprep.subr.mxu0 0.0
    %805 = vmatpush2.msra.mxu0 0.0
    %806 = vmatprep.subr.mxu0 0.0
    %807 = vmatpush2.msra.mxu0 0.0
    %808 = vmatprep.subr.mxu0 0.0
    %809 = vmatpush2.msra.mxu0 0.0
    %810 = vmatprep.subr.mxu0 0.0
    %811 = vmatpush2.msra.mxu0 0.0
    %812 = vmatprep.mubr.f32.mxu0 0.0
    %813 = vmatmul.mubr.f32.gmra.mxu0 %v746
    %v814 = vpop.f32.mrf.mxu0
    %v815 = vadd.f32 0.0, %v814
    %v816 = vpop.f32.mrf.mxu0
    %817 = vdwg.mxu0
    %v819 = vrot.slane %v815, 6
    %v821 = vadd.f32 %v301, %v819
    %v822 = vld [vmem:[#allocation3] sm:$0x3]
    %v823 = vxor.u32 %v821, 2147483648
    %v824 = vmul.f32 %v823, 1.442695
    %v825 = vpow.pop %v824
    %v826 = vadd.f32 %v825, 1.0
    %v827 = vrcp.pop %v826
    %v828 = vmul.f32 1.0, %v827
    %v829 = vtanh.pop %v821
    %v831 = vrot.slane %v822, 6
    %832 = vrot.lane.b32.xlu0 %v831, 32
    %v833 = vpop.permute.xlu0 %832
    %v835 = vmul.f32 %v828, %v833
    %837 = vrot.lane.b32.xlu0 %v829, 64
    %v838 = vpop.permute.xlu0 %837
    %v840 = vmul.f32 %v828, %v838
    %842 = vrot.lane.b32.xlu0 %v840, 32
    %v843 = vpop.permute.xlu0 %842
    %v845 = vadd.f32 %v835, %v843
    %v846 = vtanh.pop %v845
    %848 = vrot.lane.b32.xlu0 %v846, 64
    %v849 = vpop.permute.xlu0 %848
    %v851 = vmul.f32 %v828, %v849
    %853 = vrot.lane.b32.xlu0 %v851, 32
    %v854 = vpop.permute.xlu0 %853
    %vm856 = vcmask 257026
    %857 = vst.msk [vmem:[#allocation2 - $0x2] sm:$0xc] %vm856, %v854
    %859 = vrot.lane.b32.xlu0 %v845, 96
    %v860 = vpop.permute.xlu0 %859
    %862 = vst.msk [vmem:[#allocation3 - $0x2] sm:$0xc] %vm856, %v860
    %863 = vst.msk [vmem:[#allocation8] sm:$0xc] %vm856, %v854
    %v864 = vld [vmem:[#allocation6] sm:$0x3]
    %v865 = vrot.slane %v851, 2
    %866 = vrot.lane.b32.xlu0 %v865, 32
    %v867 = vpop.permute.xlu0 %866
    %v869 = vadd.f32 %v864, %v867
    %870 = vst.msk [vmem:[#allocation6] sm:$0x3] %vm598, %v869
    %v871 = vld [vmem:[#allocation4] sm:$0x3]
    %v872 = vld [vmem:[%s9] sm:$0xff]
    %v873 = vld [vmem:[%s9 + $0x8] sm:$0xff]
    %v874 = vld [vmem:[%s9 + $0x10] sm:$0xff]
    %v875 = vld [vmem:[%s9 + $0x18] sm:$0xff]
    %v877 = vsel %vm131, %v871, 0
    %879 = vmatprep.subr.mxu0 0.0
    %880 = vmatpush1.msra.mxu0 0.0
    %881 = vmatprep.subr.mxu0 0.0
    %882 = vmatpush1.msra.mxu0 0.0
    %883 = vmatprep.subr.mxu0 0.0
    %884 = vmatpush1.msra.mxu0 0.0
    %885 = vmatprep.subr.mxu0 0.0
    %886 = vmatpush1.msra.mxu0 0.0
    %887 = vmatprep.subr.mxu0 0.0
    %888 = vmatpush1.msra.mxu0 0.0
    %889 = vmatprep.subr.mxu0 0.0
    %890 = vmatpush1.msra.mxu0 0.0
    %891 = vmatprep.subr.mxu0 0.0
    %892 = vmatpush1.msra.mxu0 0.0
    %893 = vmatprep.subr.mxu0 0.0
    %894 = vmatpush1.msra.mxu0 0.0
    %895 = vmatprep.subr.mxu0 0.0
    %896 = vmatpush1.msra.mxu0 0.0
    %897 = vmatprep.subr.mxu0 0.0
    %898 = vmatpush1.msra.mxu0 0.0
    %899 = vmatprep.subr.mxu0 0.0
    %900 = vmatpush1.msra.mxu0 0.0
    %901 = vmatprep.subr.mxu0 0.0
    %902 = vmatpush1.msra.mxu0 0.0
    %903 = vmatprep.subr.mxu0 0.0
    %904 = vmatpush1.msra.mxu0 %v875
    %905 = vmatprep.subr.mxu0 0.0
    %906 = vmatpush1.msra.mxu0 %v874
    %907 = vmatprep.subr.mxu0 0.0
    %908 = vmatpush1.msra.mxu0 %v873
    %909 = vmatprep.subr.mxu0 0.0
    %910 = vmatpush1.msra.mxu0 %v872
    %911 = vmatprep.subr.mxu0 0.0
    %912 = vmatpush2.msra.mxu0 0.0
    %913 = vmatprep.subr.mxu0 0.0
    %914 = vmatpush2.msra.mxu0 0.0
    %915 = vmatprep.subr.mxu0 0.0
    %916 = vmatpush2.msra.mxu0 0.0
    %917 = vmatprep.subr.mxu0 0.0
    %918 = vmatpush2.msra.mxu0 0.0
    %919 = vmatprep.subr.mxu0 0.0
    %920 = vmatpush2.msra.mxu0 0.0
    %921 = vmatprep.subr.mxu0 0.0
    %922 = vmatpush2.msra.mxu0 0.0
    %923 = vmatprep.subr.mxu0 0.0
    %924 = vmatpush2.msra.mxu0 0.0
    %925 = vmatprep.subr.mxu0 0.0
    %926 = vmatpush2.msra.mxu0 0.0
    %927 = vmatprep.subr.mxu0 0.0
    %928 = vmatpush2.msra.mxu0 0.0
    %929 = vmatprep.subr.mxu0 0.0
    %930 = vmatpush2.msra.mxu0 0.0
    %931 = vmatprep.subr.mxu0 0.0
    %932 = vmatpush2.msra.mxu0 0.0
    %933 = vmatprep.subr.mxu0 0.0
    %934 = vmatpush2.msra.mxu0 0.0
    %935 = vmatprep.subr.mxu0 0.0
    %936 = vmatpush2.msra.mxu0 0.0
    %937 = vmatprep.subr.mxu0 0.0
    %938 = vmatpush2.msra.mxu0 0.0
    %939 = vmatprep.subr.mxu0 0.0
    %940 = vmatpush2.msra.mxu0 0.0
    %941 = vmatprep.subr.mxu0 0.0
    %942 = vmatpush2.msra.mxu0 0.0
    %943 = vmatprep.mubr.f32.mxu0 0.0
    %944 = vmatmul.mubr.f32.gmra.mxu0 %v877
    %v945 = vpop.f32.mrf.mxu0
    %v946 = vadd.f32 0.0, %v945
    %v947 = vpop.f32.mrf.mxu0
    %948 = vdwg.mxu0
    %v950 = vrot.slane %v946, 4
    %v952 = vadd.f32 %v485, %v950
    %v953 = vld [vmem:[#allocation5] sm:$0x3]
    %v954 = vxor.u32 %v952, 2147483648
    %v955 = vmul.f32 %v954, 1.442695
    %v956 = vpow.pop %v955
    %v957 = vadd.f32 %v956, 1.0
    %v958 = vrcp.pop %v957
    %v959 = vmul.f32 1.0, %v958
    %v960 = vtanh.pop %v952
    %v962 = vrot.slane %v953, 4
    %963 = vrot.lane.b32.xlu0 %v962, 32
    %v964 = vpop.permute.xlu0 %963
    %v966 = vmul.f32 %v959, %v964
    %968 = vrot.lane.b32.xlu0 %v960, 64
    %v969 = vpop.permute.xlu0 %968
    %v971 = vmul.f32 %v959, %v969
    %973 = vrot.lane.b32.xlu0 %v971, 32
    %v974 = vpop.permute.xlu0 %973
    %v976 = vadd.f32 %v966, %v974
    %v977 = vtanh.pop %v976
    %979 = vrot.lane.b32.xlu0 %v977, 64
    %v980 = vpop.permute.xlu0 %979
    %v982 = vmul.f32 %v959, %v980
    %984 = vrot.lane.b32.xlu0 %v982, 32
    %v985 = vpop.permute.xlu0 %984
    %vm987 = vcmask 259076
    %988 = vst.msk [vmem:[#allocation4 - $0x4] sm:$0x30] %vm987, %v985
    %990 = vrot.lane.b32.xlu0 %v976, 96
    %v991 = vpop.permute.xlu0 %990
    %993 = vst.msk [vmem:[#allocation5 - $0x4] sm:$0x30] %vm987, %v991
    %994 = vst.msk [vmem:[#allocation10 + $0x8] sm:$0x30] %vm987, %v985
    %v995 = vld [vmem:[#allocation7] sm:$0x3]
    %v996 = vrot.slane %v982, 4
    %997 = vrot.lane.b32.xlu0 %v996, 32
    %v998 = vpop.permute.xlu0 %997
    %v1000 = vadd.f32 %v995, %v998
    %1001 = vst.msk [vmem:[#allocation7] sm:$0x3] %vm598, %v1000
    %v1002 = vld [vmem:[#allocation2] sm:$0x3]
    %v1003 = vld [vmem:[%s8] sm:$0xff]
    %v1004 = vld [vmem:[%s8 + $0x8] sm:$0xff]
    %v1005 = vld [vmem:[%s8 + $0x10] sm:$0xff]
    %v1006 = vld [vmem:[%s8 + $0x18] sm:$0xff]
    %v1008 = vsel %vm131, %v1002, 0
    %1010 = vmatprep.subr.mxu0 0.0
    %1011 = vmatpush1.msra.mxu0 0.0
    %1012 = vmatprep.subr.mxu0 0.0
    %1013 = vmatpush1.msra.mxu0 0.0
    %1014 = vmatprep.subr.mxu0 0.0
    %1015 = vmatpush1.msra.mxu0 0.0
    %1016 = vmatprep.subr.mxu0 0.0
    %1017 = vmatpush1.msra.mxu0 0.0
    %1018 = vmatprep.subr.mxu0 0.0
    %1019 = vmatpush1.msra.mxu0 0.0
    %1020 = vmatprep.subr.mxu0 0.0
    %1021 = vmatpush1.msra.mxu0 0.0
    %1022 = vmatprep.subr.mxu0 0.0
    %1023 = vmatpush1.msra.mxu0 0.0
    %1024 = vmatprep.subr.mxu0 0.0
    %1025 = vmatpush1.msra.mxu0 0.0
    %1026 = vmatprep.subr.mxu0 0.0
    %1027 = vmatpush1.msra.mxu0 0.0
    %1028 = vmatprep.subr.mxu0 0.0
    %1029 = vmatpush1.msra.mxu0 0.0
    %1030 = vmatprep.subr.mxu0 0.0
    %1031 = vmatpush1.msra.mxu0 0.0
    %1032 = vmatprep.subr.mxu0 0.0
    %1033 = vmatpush1.msra.mxu0 0.0
    %1034 = vmatprep.subr.mxu0 0.0
    %1035 = vmatpush1.msra.mxu0 %v1006
    %1036 = vmatprep.subr.mxu0 0.0
    %1037 = vmatpush1.msra.mxu0 %v1005
    %1038 = vmatprep.subr.mxu0 0.0
    %1039 = vmatpush1.msra.mxu0 %v1004
    %1040 = vmatprep.subr.mxu0 0.0
    %1041 = vmatpush1.msra.mxu0 %v1003
    %1042 = vmatprep.subr.mxu0 0.0
    %1043 = vmatpush2.msra.mxu0 0.0
    %1044 = vmatprep.subr.mxu0 0.0
    %1045 = vmatpush2.msra.mxu0 0.0
    %1046 = vmatprep.subr.mxu0 0.0
    %1047 = vmatpush2.msra.mxu0 0.0
    %1048 = vmatprep.subr.mxu0 0.0
    %1049 = vmatpush2.msra.mxu0 0.0
    %1050 = vmatprep.subr.mxu0 0.0
    %1051 = vmatpush2.msra.mxu0 0.0
    %1052 = vmatprep.subr.mxu0 0.0
    %1053 = vmatpush2.msra.mxu0 0.0
    %1054 = vmatprep.subr.mxu0 0.0
    %1055 = vmatpush2.msra.mxu0 0.0
    %1056 = vmatprep.subr.mxu0 0.0
    %1057 = vmatpush2.msra.mxu0 0.0
    %1058 = vmatprep.subr.mxu0 0.0
    %1059 = vmatpush2.msra.mxu0 0.0
    %1060 = vmatprep.subr.mxu0 0.0
    %1061 = vmatpush2.msra.mxu0 0.0
    %1062 = vmatprep.subr.mxu0 0.0
    %1063 = vmatpush2.msra.mxu0 0.0
    %1064 = vmatprep.subr.mxu0 0.0
    %1065 = vmatpush2.msra.mxu0 0.0
    %1066 = vmatprep.subr.mxu0 0.0
    %1067 = vmatpush2.msra.mxu0 0.0
    %1068 = vmatprep.subr.mxu0 0.0
    %1069 = vmatpush2.msra.mxu0 0.0
    %1070 = vmatprep.subr.mxu0 0.0
    %1071 = vmatpush2.msra.mxu0 0.0
    %1072 = vmatprep.subr.mxu0 0.0
    %1073 = vmatpush2.msra.mxu0 0.0
    %1074 = vmatprep.mubr.f32.mxu0 0.0
    %1075 = vmatmul.mubr.f32.gmra.mxu0 %v1008
    %v1076 = vpop.f32.mrf.mxu0
    %v1077 = vadd.f32 0.0, %v1076
    %v1078 = vpop.f32.mrf.mxu0
    %1079 = vdwg.mxu0
    %v1081 = vrot.slane %v1077, 4
    %v1083 = vadd.f32 %v301, %v1081
    %v1084 = vld [vmem:[#allocation3] sm:$0x3]
    %v1085 = vxor.u32 %v1083, 2147483648
    %v1086 = vmul.f32 %v1085, 1.442695
    %v1087 = vpow.pop %v1086
    %v1088 = vadd.f32 %v1087, 1.0
    %v1089 = vrcp.pop %v1088
    %v1090 = vmul.f32 1.0, %v1089
    %v1091 = vtanh.pop %v1083
    %v1093 = vrot.slane %v1084, 4
    %1094 = vrot.lane.b32.xlu0 %v1093, 32
    %v1095 = vpop.permute.xlu0 %1094
    %v1097 = vmul.f32 %v1090, %v1095
    %1099 = vrot.lane.b32.xlu0 %v1091, 64
    %v1100 = vpop.permute.xlu0 %1099
    %v1102 = vmul.f32 %v1090, %v1100
    %1104 = vrot.lane.b32.xlu0 %v1102, 32
    %v1105 = vpop.permute.xlu0 %1104
    %v1107 = vadd.f32 %v1097, %v1105
    %v1108 = vtanh.pop %v1107
    %1110 = vrot.lane.b32.xlu0 %v1108, 64
    %v1111 = vpop.permute.xlu0 %1110
    %v1113 = vmul.f32 %v1090, %v1111
    %1115 = vrot.lane.b32.xlu0 %v1113, 32
    %v1116 = vpop.permute.xlu0 %1115
    %1118 = vst.msk [vmem:[#allocation2 - $0x4] sm:$0x30] %vm987, %v1116
    %1120 = vrot.lane.b32.xlu0 %v1107, 96
    %v1121 = vpop.permute.xlu0 %1120
    %1123 = vst.msk [vmem:[#allocation3 - $0x4] sm:$0x30] %vm987, %v1121
    %1124 = vst.msk [vmem:[#allocation8] sm:$0x30] %vm987, %v1116
    %v1125 = vld [vmem:[#allocation6] sm:$0x3]
    %v1126 = vrot.slane %v1113, 4
    %1127 = vrot.lane.b32.xlu0 %v1126, 32
    %v1128 = vpop.permute.xlu0 %1127
    %v1130 = vadd.f32 %v1125, %v1128
    %1131 = vst.msk [vmem:[#allocation6] sm:$0x3] %vm598, %v1130
    %v1132 = vld [vmem:[#allocation4] sm:$0x3]
    %v1133 = vld [vmem:[%s9] sm:$0xff]
    %v1134 = vld [vmem:[%s9 + $0x8] sm:$0xff]
    %v1135 = vld [vmem:[%s9 + $0x10] sm:$0xff]
    %v1136 = vld [vmem:[%s9 + $0x18] sm:$0xff]
    %v1138 = vsel %vm131, %v1132, 0
    %1140 = vmatprep.subr.mxu0 0.0
    %1141 = vmatpush1.msra.mxu0 0.0
    %1142 = vmatprep.subr.mxu0 0.0
    %1143 = vmatpush1.msra.mxu0 0.0
    %1144 = vmatprep.subr.mxu0 0.0
    %1145 = vmatpush1.msra.mxu0 0.0
    %1146 = vmatprep.subr.mxu0 0.0
    %1147 = vmatpush1.msra.mxu0 0.0
    %1148 = vmatprep.subr.mxu0 0.0
    %1149 = vmatpush1.msra.mxu0 0.0
    %1150 = vmatprep.subr.mxu0 0.0
    %1151 = vmatpush1.msra.mxu0 0.0
    %1152 = vmatprep.subr.mxu0 0.0
    %1153 = vmatpush1.msra.mxu0 0.0
    %1154 = vmatprep.subr.mxu0 0.0
    %1155 = vmatpush1.msra.mxu0 0.0
    %1156 = vmatprep.subr.mxu0 0.0
    %1157 = vmatpush1.msra.mxu0 0.0
    %1158 = vmatprep.subr.mxu0 0.0
    %1159 = vmatpush1.msra.mxu0 0.0
    %1160 = vmatprep.subr.mxu0 0.0
    %1161 = vmatpush1.msra.mxu0 0.0
    %1162 = vmatprep.subr.mxu0 0.0
    %1163 = vmatpush1.msra.mxu0 0.0
    %1164 = vmatprep.subr.mxu0 0.0
    %1165 = vmatpush1.msra.mxu0 %v1136
    %1166 = vmatprep.subr.mxu0 0.0
    %1167 = vmatpush1.msra.mxu0 %v1135
    %1168 = vmatprep.subr.mxu0 0.0
    %1169 = vmatpush1.msra.mxu0 %v1134
    %1170 = vmatprep.subr.mxu0 0.0
    %1171 = vmatpush1.msra.mxu0 %v1133
    %1172 = vmatprep.subr.mxu0 0.0
    %1173 = vmatpush2.msra.mxu0 0.0
    %1174 = vmatprep.subr.mxu0 0.0
    %1175 = vmatpush2.msra.mxu0 0.0
    %1176 = vmatprep.subr.mxu0 0.0
    %1177 = vmatpush2.msra.mxu0 0.0
    %1178 = vmatprep.subr.mxu0 0.0
    %1179 = vmatpush2.msra.mxu0 0.0
    %1180 = vmatprep.subr.mxu0 0.0
    %1181 = vmatpush2.msra.mxu0 0.0
    %1182 = vmatprep.subr.mxu0 0.0
    %1183 = vmatpush2.msra.mxu0 0.0
    %1184 = vmatprep.subr.mxu0 0.0
    %1185 = vmatpush2.msra.mxu0 0.0
    %1186 = vmatprep.subr.mxu0 0.0
    %1187 = vmatpush2.msra.mxu0 0.0
    %1188 = vmatprep.subr.mxu0 0.0
    %1189 = vmatpush2.msra.mxu0 0.0
    %1190 = vmatprep.subr.mxu0 0.0
    %1191 = vmatpush2.msra.mxu0 0.0
    %1192 = vmatprep.subr.mxu0 0.0
    %1193 = vmatpush2.msra.mxu0 0.0
    %1194 = vmatprep.subr.mxu0 0.0
    %1195 = vmatpush2.msra.mxu0 0.0
    %1196 = vmatprep.subr.mxu0 0.0
    %1197 = vmatpush2.msra.mxu0 0.0
    %1198 = vmatprep.subr.mxu0 0.0
    %1199 = vmatpush2.msra.mxu0 0.0
    %1200 = vmatprep.subr.mxu0 0.0
    %1201 = vmatpush2.msra.mxu0 0.0
    %1202 = vmatprep.subr.mxu0 0.0
    %1203 = vmatpush2.msra.mxu0 0.0
    %1204 = vmatprep.mubr.f32.mxu0 0.0
    %1205 = vmatmul.mubr.f32.gmra.mxu0 %v1138
    %v1206 = vpop.f32.mrf.mxu0
    %v1207 = vadd.f32 0.0, %v1206
    %v1208 = vpop.f32.mrf.mxu0
    %1209 = vdwg.mxu0
    %v1211 = vrot.slane %v1207, 6
    %v1213 = vadd.f32 %v485, %v1211
    %v1214 = vld [vmem:[#allocation5] sm:$0x3]
    %v1215 = vxor.u32 %v1213, 2147483648
    %v1216 = vmul.f32 %v1215, 1.442695
    %v1217 = vpow.pop %v1216
    %v1218 = vadd.f32 %v1217, 1.0
    %v1219 = vrcp.pop %v1218
    %v1220 = vmul.f32 1.0, %v1219
    %v1221 = vtanh.pop %v1213
    %v1223 = vrot.slane %v1214, 6
    %1224 = vrot.lane.b32.xlu0 %v1223, 32
    %v1225 = vpop.permute.xlu0 %1224
    %v1227 = vmul.f32 %v1220, %v1225
    %1229 = vrot.lane.b32.xlu0 %v1221, 64
    %v1230 = vpop.permute.xlu0 %1229
    %v1232 = vmul.f32 %v1220, %v1230
    %1234 = vrot.lane.b32.xlu0 %v1232, 32
    %v1235 = vpop.permute.xlu0 %1234
    %v1237 = vadd.f32 %v1227, %v1235
    %v1238 = vtanh.pop %v1237
    %1240 = vrot.lane.b32.xlu0 %v1238, 64
    %v1241 = vpop.permute.xlu0 %1240
    %v1243 = vmul.f32 %v1220, %v1241
    %1245 = vrot.lane.b32.xlu0 %v1243, 32
    %v1246 = vpop.permute.xlu0 %1245
    %1248 = vst.msk [vmem:[#allocation4 - $0x2] sm:$0xc] %vm856, %v1246
    %1250 = vrot.lane.b32.xlu0 %v1237, 96
    %v1251 = vpop.permute.xlu0 %1250
    %1253 = vst.msk [vmem:[#allocation5 - $0x2] sm:$0xc] %vm856, %v1251
    %1254 = vst.msk [vmem:[#allocation10 + $0x8] sm:$0xc] %vm856, %v1246
    %v1255 = vld [vmem:[#allocation7] sm:$0x3]
    %v1256 = vrot.slane %v1243, 2
    %1257 = vrot.lane.b32.xlu0 %v1256, 32
    %v1258 = vpop.permute.xlu0 %1257
    %v1260 = vadd.f32 %v1255, %v1258
    %1261 = vst.msk [vmem:[#allocation7] sm:$0x3] %vm598, %v1260
    %v1262 = vld [vmem:[#allocation2] sm:$0x3]
    %v1263 = vld [vmem:[%s8] sm:$0xff]
    %v1264 = vld [vmem:[%s8 + $0x8] sm:$0xff]
    %v1265 = vld [vmem:[%s8 + $0x10] sm:$0xff]
    %v1266 = vld [vmem:[%s8 + $0x18] sm:$0xff]
    %v1268 = vsel %vm131, %v1262, 0
    %1270 = vmatprep.subr.mxu0 0.0
    %1271 = vmatpush1.msra.mxu0 0.0
    %1272 = vmatprep.subr.mxu0 0.0
    %1273 = vmatpush1.msra.mxu0 0.0
    %1274 = vmatprep.subr.mxu0 0.0
    %1275 = vmatpush1.msra.mxu0 0.0
    %1276 = vmatprep.subr.mxu0 0.0
    %1277 = vmatpush1.msra.mxu0 0.0
    %1278 = vmatprep.subr.mxu0 0.0
    %1279 = vmatpush1.msra.mxu0 0.0
    %1280 = vmatprep.subr.mxu0 0.0
    %1281 = vmatpush1.msra.mxu0 0.0
    %1282 = vmatprep.subr.mxu0 0.0
    %1283 = vmatpush1.msra.mxu0 0.0
    %1284 = vmatprep.subr.mxu0 0.0
    %1285 = vmatpush1.msra.mxu0 0.0
    %1286 = vmatprep.subr.mxu0 0.0
    %1287 = vmatpush1.msra.mxu0 0.0
    %1288 = vmatprep.subr.mxu0 0.0
    %1289 = vmatpush1.msra.mxu0 0.0
    %1290 = vmatprep.subr.mxu0 0.0
    %1291 = vmatpush1.msra.mxu0 0.0
    %1292 = vmatprep.subr.mxu0 0.0
    %1293 = vmatpush1.msra.mxu0 0.0
    %1294 = vmatprep.subr.mxu0 0.0
    %1295 = vmatpush1.msra.mxu0 %v1266
    %1296 = vmatprep.subr.mxu0 0.0
    %1297 = vmatpush1.msra.mxu0 %v1265
    %1298 = vmatprep.subr.mxu0 0.0
    %1299 = vmatpush1.msra.mxu0 %v1264
    %1300 = vmatprep.subr.mxu0 0.0
    %1301 = vmatpush1.msra.mxu0 %v1263
    %1302 = vmatprep.subr.mxu0 0.0
    %1303 = vmatpush2.msra.mxu0 0.0
    %1304 = vmatprep.subr.mxu0 0.0
    %1305 = vmatpush2.msra.mxu0 0.0
    %1306 = vmatprep.subr.mxu0 0.0
    %1307 = vmatpush2.msra.mxu0 0.0
    %1308 = vmatprep.subr.mxu0 0.0
    %1309 = vmatpush2.msra.mxu0 0.0
    %1310 = vmatprep.subr.mxu0 0.0
    %1311 = vmatpush2.msra.mxu0 0.0
    %1312 = vmatprep.subr.mxu0 0.0
    %1313 = vmatpush2.msra.mxu0 0.0
    %1314 = vmatprep.subr.mxu0 0.0
    %1315 = vmatpush2.msra.mxu0 0.0
    %1316 = vmatprep.subr.mxu0 0.0
    %1317 = vmatpush2.msra.mxu0 0.0
    %1318 = vmatprep.subr.mxu0 0.0
    %1319 = vmatpush2.msra.mxu0 0.0
    %1320 = vmatprep.subr.mxu0 0.0
    %1321 = vmatpush2.msra.mxu0 0.0
    %1322 = vmatprep.subr.mxu0 0.0
    %1323 = vmatpush2.msra.mxu0 0.0
    %1324 = vmatprep.subr.mxu0 0.0
    %1325 = vmatpush2.msra.mxu0 0.0
    %1326 = vmatprep.subr.mxu0 0.0
    %1327 = vmatpush2.msra.mxu0 0.0
    %1328 = vmatprep.subr.mxu0 0.0
    %1329 = vmatpush2.msra.mxu0 0.0
    %1330 = vmatprep.subr.mxu0 0.0
    %1331 = vmatpush2.msra.mxu0 0.0
    %1332 = vmatprep.subr.mxu0 0.0
    %1333 = vmatpush2.msra.mxu0 0.0
    %1334 = vmatprep.mubr.f32.mxu0 0.0
    %1335 = vmatmul.mubr.f32.gmra.mxu0 %v1268
    %v1336 = vpop.f32.mrf.mxu0
    %v1337 = vadd.f32 0.0, %v1336
    %v1338 = vpop.f32.mrf.mxu0
    %1339 = vdwg.mxu0
    %v1341 = vrot.slane %v1337, 2
    %v1343 = vadd.f32 %v301, %v1341
    %v1344 = vld [vmem:[#allocation3] sm:$0x3]
    %v1345 = vxor.u32 %v1343, 2147483648
    %v1346 = vmul.f32 %v1345, 1.442695
    %v1347 = vpow.pop %v1346
    %v1348 = vadd.f32 %v1347, 1.0
    %v1349 = vrcp.pop %v1348
    %v1350 = vmul.f32 1.0, %v1349
    %v1351 = vtanh.pop %v1343
    %v1353 = vrot.slane %v1344, 2
    %1354 = vrot.lane.b32.xlu0 %v1353, 32
    %v1355 = vpop.permute.xlu0 %1354
    %v1357 = vmul.f32 %v1350, %v1355
    %1359 = vrot.lane.b32.xlu0 %v1351, 64
    %v1360 = vpop.permute.xlu0 %1359
    %v1362 = vmul.f32 %v1350, %v1360
    %1364 = vrot.lane.b32.xlu0 %v1362, 32
    %v1365 = vpop.permute.xlu0 %1364
    %v1367 = vadd.f32 %v1357, %v1365
    %v1368 = vtanh.pop %v1367
    %1370 = vrot.lane.b32.xlu0 %v1368, 64
    %v1371 = vpop.permute.xlu0 %1370
    %v1373 = vmul.f32 %v1350, %v1371
    %1375 = vrot.lane.b32.xlu0 %v1373, 32
    %v1376 = vpop.permute.xlu0 %1375
    %1378 = vst.msk [vmem:[#allocation2 - $0x6] sm:$0xc0] %vm725, %v1376
    %1380 = vrot.lane.b32.xlu0 %v1367, 96
    %v1381 = vpop.permute.xlu0 %1380
    %1383 = vst.msk [vmem:[#allocation3 - $0x6] sm:$0xc0] %vm725, %v1381
    %1384 = vst.msk [vmem:[#allocation8] sm:$0xc0] %vm725, %v1376
    %v1385 = vld [vmem:[#allocation6] sm:$0x3]
    %v1386 = vrot.slane %v1373, 6
    %1387 = vrot.lane.b32.xlu0 %v1386, 32
    %v1388 = vpop.permute.xlu0 %1387
    %v1390 = vadd.f32 %v1385, %v1388
    %1391 = vst.msk [vmem:[#allocation6] sm:$0x3] %vm598, %v1390
    %v1392 = vld [vmem:[#allocation4] sm:$0x3]
    %v1393 = vld [vmem:[%s9] sm:$0xff]
    %v1394 = vld [vmem:[%s9 + $0x8] sm:$0xff]
    %v1395 = vld [vmem:[%s9 + $0x10] sm:$0xff]
    %v1396 = vld [vmem:[%s9 + $0x18] sm:$0xff]
    %v1398 = vsel %vm131, %v1392, 0
    %1400 = vmatprep.subr.mxu0 0.0
    %1401 = vmatpush1.msra.mxu0 0.0
    %1402 = vmatprep.subr.mxu0 0.0
    %1403 = vmatpush1.msra.mxu0 0.0
    %1404 = vmatprep.subr.mxu0 0.0
    %1405 = vmatpush1.msra.mxu0 0.0
    %1406 = vmatprep.subr.mxu0 0.0
    %1407 = vmatpush1.msra.mxu0 0.0
    %1408 = vmatprep.subr.mxu0 0.0
    %1409 = vmatpush1.msra.mxu0 0.0
    %1410 = vmatprep.subr.mxu0 0.0
    %1411 = vmatpush1.msra.mxu0 0.0
    %1412 = vmatprep.subr.mxu0 0.0
    %1413 = vmatpush1.msra.mxu0 0.0
    %1414 = vmatprep.subr.mxu0 0.0
    %1415 = vmatpush1.msra.mxu0 0.0
    %1416 = vmatprep.subr.mxu0 0.0
    %1417 = vmatpush1.msra.mxu0 0.0
    %1418 = vmatprep.subr.mxu0 0.0
    %1419 = vmatpush1.msra.mxu0 0.0
    %1420 = vmatprep.subr.mxu0 0.0
    %1421 = vmatpush1.msra.mxu0 0.0
    %1422 = vmatprep.subr.mxu0 0.0
    %1423 = vmatpush1.msra.mxu0 0.0
    %1424 = vmatprep.subr.mxu0 0.0
    %1425 = vmatpush1.msra.mxu0 %v1396
    %1426 = vmatprep.subr.mxu0 0.0
    %1427 = vmatpush1.msra.mxu0 %v1395
    %1428 = vmatprep.subr.mxu0 0.0
    %1429 = vmatpush1.msra.mxu0 %v1394
    %1430 = vmatprep.subr.mxu0 0.0
    %1431 = vmatpush1.msra.mxu0 %v1393
    %1432 = vmatprep.subr.mxu0 0.0
    %1433 = vmatpush2.msra.mxu0 0.0
    %1434 = vmatprep.subr.mxu0 0.0
    %1435 = vmatpush2.msra.mxu0 0.0
    %1436 = vmatprep.subr.mxu0 0.0
    %1437 = vmatpush2.msra.mxu0 0.0
    %1438 = vmatprep.subr.mxu0 0.0
    %1439 = vmatpush2.msra.mxu0 0.0
    %1440 = vmatprep.subr.mxu0 0.0
    %1441 = vmatpush2.msra.mxu0 0.0
    %1442 = vmatprep.subr.mxu0 0.0
    %1443 = vmatpush2.msra.mxu0 0.0
    %1444 = vmatprep.subr.mxu0 0.0
    %1445 = vmatpush2.msra.mxu0 0.0
    %1446 = vmatprep.subr.mxu0 0.0
    %1447 = vmatpush2.msra.mxu0 0.0
    %1448 = vmatprep.subr.mxu0 0.0
    %1449 = vmatpush2.msra.mxu0 0.0
    %1450 = vmatprep.subr.mxu0 0.0
    %1451 = vmatpush2.msra.mxu0 0.0
    %1452 = vmatprep.subr.mxu0 0.0
    %1453 = vmatpush2.msra.mxu0 0.0
    %1454 = vmatprep.subr.mxu0 0.0
    %1455 = vmatpush2.msra.mxu0 0.0
    %1456 = vmatprep.subr.mxu0 0.0
    %1457 = vmatpush2.msra.mxu0 0.0
    %1458 = vmatprep.subr.mxu0 0.0
    %1459 = vmatpush2.msra.mxu0 0.0
    %1460 = vmatprep.subr.mxu0 0.0
    %1461 = vmatpush2.msra.mxu0 0.0
    %1462 = vmatprep.subr.mxu0 0.0
    %1463 = vmatpush2.msra.mxu0 0.0
    %1464 = vmatprep.mubr.f32.mxu0 0.0
    %1465 = vmatmul.mubr.f32.gmra.mxu0 %v1398
    %v1466 = vpop.f32.mrf.mxu0
    %v1467 = vadd.f32 0.0, %v1466
    %v1468 = vpop.f32.mrf.mxu0
    %1469 = vdwg.mxu0
    %v1470 = vadd.f32 %v485, %v1467
    %v1471 = vld [vmem:[#allocation5] sm:$0x3]
    %v1472 = vxor.u32 %v1470, 2147483648
    %v1473 = vmul.f32 %v1472, 1.442695
    %v1474 = vpow.pop %v1473
    %v1475 = vadd.f32 %v1474, 1.0
    %v1476 = vrcp.pop %v1475
    %v1477 = vmul.f32 1.0, %v1476
    %v1478 = vtanh.pop %v1470
    %1480 = vrot.lane.b32.xlu0 %v1471, 32
    %v1481 = vpop.permute.xlu0 %1480
    %v1483 = vmul.f32 %v1477, %v1481
    %1485 = vrot.lane.b32.xlu0 %v1478, 64
    %v1486 = vpop.permute.xlu0 %1485
    %v1488 = vmul.f32 %v1477, %v1486
    %1490 = vrot.lane.b32.xlu0 %v1488, 32
    %v1491 = vpop.permute.xlu0 %1490
    %v1493 = vadd.f32 %v1483, %v1491
    %v1494 = vtanh.pop %v1493
    %1496 = vrot.lane.b32.xlu0 %v1494, 64
    %v1497 = vpop.permute.xlu0 %1496
    %v1499 = vmul.f32 %v1477, %v1497
    %1501 = vrot.lane.b32.xlu0 %v1499, 32
    %v1502 = vpop.permute.xlu0 %1501
    %1504 = vst.msk [vmem:[#allocation4] sm:$0x3] %vm598, %v1502
    %1506 = vrot.lane.b32.xlu0 %v1493, 96
    %v1507 = vpop.permute.xlu0 %1506
    %1509 = vst.msk [vmem:[#allocation5] sm:$0x3] %vm598, %v1507
    %1510 = vst.msk [vmem:[#allocation10 + $0x8] sm:$0x3] %vm598, %v1502
    %v1511 = vld [vmem:[#allocation7] sm:$0x3]
    %v1512 = vadd.f32 %v1511, %v1502
    %1513 = vst.msk [vmem:[#allocation7] sm:$0x3] %vm598, %v1512
    %v1514 = vld [vmem:[#allocation2] sm:$0x3]
    %v1515 = vld [vmem:[%s8] sm:$0xff]
    %v1516 = vld [vmem:[%s8 + $0x8] sm:$0xff]
    %v1517 = vld [vmem:[%s8 + $0x10] sm:$0xff]
    %v1518 = vld [vmem:[%s8 + $0x18] sm:$0xff]
    %v1520 = vsel %vm131, %v1514, 0
    %1522 = vmatprep.subr.mxu0 0.0
    %1523 = vmatpush1.msra.mxu0 0.0
    %1524 = vmatprep.subr.mxu0 0.0
    %1525 = vmatpush1.msra.mxu0 0.0
    %1526 = vmatprep.subr.mxu0 0.0
    %1527 = vmatpush1.msra.mxu0 0.0
    %1528 = vmatprep.subr.mxu0 0.0
    %1529 = vmatpush1.msra.mxu0 0.0
    %1530 = vmatprep.subr.mxu0 0.0
    %1531 = vmatpush1.msra.mxu0 0.0
    %1532 = vmatprep.subr.mxu0 0.0
    %1533 = vmatpush1.msra.mxu0 0.0
    %1534 = vmatprep.subr.mxu0 0.0
    %1535 = vmatpush1.msra.mxu0 0.0
    %1536 = vmatprep.subr.mxu0 0.0
    %1537 = vmatpush1.msra.mxu0 0.0
    %1538 = vmatprep.subr.mxu0 0.0
    %1539 = vmatpush1.msra.mxu0 0.0
    %1540 = vmatprep.subr.mxu0 0.0
    %1541 = vmatpush1.msra.mxu0 0.0
    %1542 = vmatprep.subr.mxu0 0.0
    %1543 = vmatpush1.msra.mxu0 0.0
    %1544 = vmatprep.subr.mxu0 0.0
    %1545 = vmatpush1.msra.mxu0 0.0
    %1546 = vmatprep.subr.mxu0 0.0
    %1547 = vmatpush1.msra.mxu0 %v1518
    %1548 = vmatprep.subr.mxu0 0.0
    %1549 = vmatpush1.msra.mxu0 %v1517
    %1550 = vmatprep.subr.mxu0 0.0
    %1551 = vmatpush1.msra.mxu0 %v1516
    %1552 = vmatprep.subr.mxu0 0.0
    %1553 = vmatpush1.msra.mxu0 %v1515
    %1554 = vmatprep.subr.mxu0 0.0
    %1555 = vmatpush2.msra.mxu0 0.0
    %1556 = vmatprep.subr.mxu0 0.0
    %1557 = vmatpush2.msra.mxu0 0.0
    %1558 = vmatprep.subr.mxu0 0.0
    %1559 = vmatpush2.msra.mxu0 0.0
    %1560 = vmatprep.subr.mxu0 0.0
    %1561 = vmatpush2.msra.mxu0 0.0
    %1562 = vmatprep.subr.mxu0 0.0
    %1563 = vmatpush2.msra.mxu0 0.0
    %1564 = vmatprep.subr.mxu0 0.0
    %1565 = vmatpush2.msra.mxu0 0.0
    %1566 = vmatprep.subr.mxu0 0.0
    %1567 = vmatpush2.msra.mxu0 0.0
    %1568 = vmatprep.subr.mxu0 0.0
    %1569 = vmatpush2.msra.mxu0 0.0
    %1570 = vmatprep.subr.mxu0 0.0
    %1571 = vmatpush2.msra.mxu0 0.0
    %1572 = vmatprep.subr.mxu0 0.0
    %1573 = vmatpush2.msra.mxu0 0.0
    %1574 = vmatprep.subr.mxu0 0.0
    %1575 = vmatpush2.msra.mxu0 0.0
    %1576 = vmatprep.subr.mxu0 0.0
    %1577 = vmatpush2.msra.mxu0 0.0
    %1578 = vmatprep.subr.mxu0 0.0
    %1579 = vmatpush2.msra.mxu0 0.0
    %1580 = vmatprep.subr.mxu0 0.0
    %1581 = vmatpush2.msra.mxu0 0.0
    %1582 = vmatprep.subr.mxu0 0.0
    %1583 = vmatpush2.msra.mxu0 0.0
    %1584 = vmatprep.subr.mxu0 0.0
    %1585 = vmatpush2.msra.mxu0 0.0
    %1586 = vmatprep.mubr.f32.mxu0 0.0
    %1587 = vmatmul.mubr.f32.gmra.mxu0 %v1520
    %v1588 = vpop.f32.mrf.mxu0
    %v1589 = vadd.f32 0.0, %v1588
    %v1590 = vpop.f32.mrf.mxu0
    %1591 = vdwg.mxu0
    %v1592 = vadd.f32 %v302, %v1589
    %v1593 = vld [vmem:[#allocation3] sm:$0x3]
    %v1594 = vxor.u32 %v1592, 2147483648
    %v1595 = vmul.f32 %v1594, 1.442695
    %v1596 = vpow.pop %v1595
    %v1597 = vadd.f32 %v1596, 1.0
    %v1598 = vrcp.pop %v1597
    %v1599 = vmul.f32 1.0, %v1598
    %v1600 = vtanh.pop %v1592
    %1602 = vrot.lane.b32.xlu0 %v1593, 32
    %v1603 = vpop.permute.xlu0 %1602
    %v1605 = vmul.f32 %v1599, %v1603
    %1607 = vrot.lane.b32.xlu0 %v1600, 64
    %v1608 = vpop.permute.xlu0 %1607
    %v1610 = vmul.f32 %v1599, %v1608
    %1612 = vrot.lane.b32.xlu0 %v1610, 32
    %v1613 = vpop.permute.xlu0 %1612
    %v1615 = vadd.f32 %v1605, %v1613
    %v1616 = vtanh.pop %v1615
    %1618 = vrot.lane.b32.xlu0 %v1616, 64
    %v1619 = vpop.permute.xlu0 %1618
    %v1621 = vmul.f32 %v1599, %v1619
    %1623 = vrot.lane.b32.xlu0 %v1621, 32
    %v1624 = vpop.permute.xlu0 %1623
    %1626 = vst.msk [vmem:[#allocation2] sm:$0x3] %vm598, %v1624
    %1628 = vrot.lane.b32.xlu0 %v1615, 96
    %v1629 = vpop.permute.xlu0 %1628
    %1631 = vst.msk [vmem:[#allocation3] sm:$0x3] %vm598, %v1629
    %1632 = vst.msk [vmem:[#allocation8 + $0x8] sm:$0x3] %vm598, %v1624
    %v1633 = vld [vmem:[#allocation6] sm:$0x3]
    %v1634 = vadd.f32 %v1633, %v1624
    %1635 = vst.msk [vmem:[#allocation6] sm:$0x3] %vm598, %v1634
    %v1636 = vld [vmem:[#allocation4] sm:$0x3]
    %v1637 = vld [vmem:[%s9] sm:$0xff]
    %v1638 = vld [vmem:[%s9 + $0x8] sm:$0xff]
    %v1639 = vld [vmem:[%s9 + $0x10] sm:$0xff]
    %v1640 = vld [vmem:[%s9 + $0x18] sm:$0xff]
    %v1642 = vsel %vm131, %v1636, 0
    %1644 = vmatprep.subr.mxu0 0.0
    %1645 = vmatpush1.msra.mxu0 0.0
    %1646 = vmatprep.subr.mxu0 0.0
    %1647 = vmatpush1.msra.mxu0 0.0
    %1648 = vmatprep.subr.mxu0 0.0
    %1649 = vmatpush1.msra.mxu0 0.0
    %1650 = vmatprep.subr.mxu0 0.0
    %1651 = vmatpush1.msra.mxu0 0.0
    %1652 = vmatprep.subr.mxu0 0.0
    %1653 = vmatpush1.msra.mxu0 0.0
    %1654 = vmatprep.subr.mxu0 0.0
    %1655 = vmatpush1.msra.mxu0 0.0
    %1656 = vmatprep.subr.mxu0 0.0
    %1657 = vmatpush1.msra.mxu0 0.0
    %1658 = vmatprep.subr.mxu0 0.0
    %1659 = vmatpush1.msra.mxu0 0.0
    %1660 = vmatprep.subr.mxu0 0.0
    %1661 = vmatpush1.msra.mxu0 0.0
    %1662 = vmatprep.subr.mxu0 0.0
    %1663 = vmatpush1.msra.mxu0 0.0
    %1664 = vmatprep.subr.mxu0 0.0
    %1665 = vmatpush1.msra.mxu0 0.0
    %1666 = vmatprep.subr.mxu0 0.0
    %1667 = vmatpush1.msra.mxu0 0.0
    %1668 = vmatprep.subr.mxu0 0.0
    %1669 = vmatpush1.msra.mxu0 %v1640
    %1670 = vmatprep.subr.mxu0 0.0
    %1671 = vmatpush1.msra.mxu0 %v1639
    %1672 = vmatprep.subr.mxu0 0.0
    %1673 = vmatpush1.msra.mxu0 %v1638
    %1674 = vmatprep.subr.mxu0 0.0
    %1675 = vmatpush1.msra.mxu0 %v1637
    %1676 = vmatprep.subr.mxu0 0.0
    %1677 = vmatpush2.msra.mxu0 0.0
    %1678 = vmatprep.subr.mxu0 0.0
    %1679 = vmatpush2.msra.mxu0 0.0
    %1680 = vmatprep.subr.mxu0 0.0
    %1681 = vmatpush2.msra.mxu0 0.0
    %1682 = vmatprep.subr.mxu0 0.0
    %1683 = vmatpush2.msra.mxu0 0.0
    %1684 = vmatprep.subr.mxu0 0.0
    %1685 = vmatpush2.msra.mxu0 0.0
    %1686 = vmatprep.subr.mxu0 0.0
    %1687 = vmatpush2.msra.mxu0 0.0
    %1688 = vmatprep.subr.mxu0 0.0
    %1689 = vmatpush2.msra.mxu0 0.0
    %1690 = vmatprep.subr.mxu0 0.0
    %1691 = vmatpush2.msra.mxu0 0.0
    %1692 = vmatprep.subr.mxu0 0.0
    %1693 = vmatpush2.msra.mxu0 0.0
    %1694 = vmatprep.subr.mxu0 0.0
    %1695 = vmatpush2.msra.mxu0 0.0
    %1696 = vmatprep.subr.mxu0 0.0
    %1697 = vmatpush2.msra.mxu0 0.0
    %1698 = vmatprep.subr.mxu0 0.0
    %1699 = vmatpush2.msra.mxu0 0.0
    %1700 = vmatprep.subr.mxu0 0.0
    %1701 = vmatpush2.msra.mxu0 0.0
    %1702 = vmatprep.subr.mxu0 0.0
    %1703 = vmatpush2.msra.mxu0 0.0
    %1704 = vmatprep.subr.mxu0 0.0
    %1705 = vmatpush2.msra.mxu0 0.0
    %1706 = vmatprep.subr.mxu0 0.0
    %1707 = vmatpush2.msra.mxu0 0.0
    %1708 = vmatprep.mubr.f32.mxu0 0.0
    %1709 = vmatmul.mubr.f32.gmra.mxu0 %v1642
    %v1710 = vpop.f32.mrf.mxu0
    %v1711 = vadd.f32 0.0, %v1710
    %v1712 = vpop.f32.mrf.mxu0
    %1713 = vdwg.mxu0
    %v1715 = vrot.slane %v1711, 2
    %v1717 = vadd.f32 %v484, %v1715
    %v1718 = vld [vmem:[#allocation5] sm:$0x3]
    %v1719 = vxor.u32 %v1717, 2147483648
    %v1720 = vmul.f32 %v1719, 1.442695
    %v1721 = vpow.pop %v1720
    %v1722 = vadd.f32 %v1721, 1.0
    %v1723 = vrcp.pop %v1722
    %v1724 = vmul.f32 1.0, %v1723
    %v1725 = vtanh.pop %v1717
    %v1727 = vrot.slane %v1718, 2
    %1728 = vrot.lane.b32.xlu0 %v1727, 32
    %v1729 = vpop.permute.xlu0 %1728
    %v1731 = vmul.f32 %v1724, %v1729
    %1733 = vrot.lane.b32.xlu0 %v1725, 64
    %v1734 = vpop.permute.xlu0 %1733
    %v1736 = vmul.f32 %v1724, %v1734
    %1738 = vrot.lane.b32.xlu0 %v1736, 32
    %v1739 = vpop.permute.xlu0 %1738
    %v1741 = vadd.f32 %v1731, %v1739
    %v1742 = vtanh.pop %v1741
    %1744 = vrot.lane.b32.xlu0 %v1742, 64
    %v1745 = vpop.permute.xlu0 %1744
    %v1747 = vmul.f32 %v1724, %v1745
    %1749 = vrot.lane.b32.xlu0 %v1747, 32
    %v1750 = vpop.permute.xlu0 %1749
    %1752 = vst.msk [vmem:[#allocation4 - $0x6] sm:$0xc0] %vm725, %v1750
    %1754 = vrot.lane.b32.xlu0 %v1741, 96
    %v1755 = vpop.permute.xlu0 %1754
    %1757 = vst.msk [vmem:[#allocation5 - $0x6] sm:$0xc0] %vm725, %v1755
    %1758 = vst.msk [vmem:[#allocation10] sm:$0xc0] %vm725, %v1750
    %v1759 = vld [vmem:[#allocation7] sm:$0x3]
    %v1760 = vrot.slane %v1747, 6
    %1761 = vrot.lane.b32.xlu0 %v1760, 32
    %v1762 = vpop.permute.xlu0 %1761
    %v1764 = vadd.f32 %v1759, %v1762
    %1765 = vst.msk [vmem:[#allocation7] sm:$0x3] %vm598, %v1764
    %v1766 = vld [vmem:[#allocation2] sm:$0x3]
    %v1767 = vld [vmem:[%s8] sm:$0xff]
    %v1768 = vld [vmem:[%s8 + $0x8] sm:$0xff]
    %v1769 = vld [vmem:[%s8 + $0x10] sm:$0xff]
    %v1770 = vld [vmem:[%s8 + $0x18] sm:$0xff]
    %v1772 = vsel %vm131, %v1766, 0
    %1774 = vmatprep.subr.mxu0 0.0
    %1775 = vmatpush1.msra.mxu0 0.0
    %1776 = vmatprep.subr.mxu0 0.0
    %1777 = vmatpush1.msra.mxu0 0.0
    %1778 = vmatprep.subr.mxu0 0.0
    %1779 = vmatpush1.msra.mxu0 0.0
    %1780 = vmatprep.subr.mxu0 0.0
    %1781 = vmatpush1.msra.mxu0 0.0
    %1782 = vmatprep.subr.mxu0 0.0
    %1783 = vmatpush1.msra.mxu0 0.0
    %1784 = vmatprep.subr.mxu0 0.0
    %1785 = vmatpush1.msra.mxu0 0.0
    %1786 = vmatprep.subr.mxu0 0.0
    %1787 = vmatpush1.msra.mxu0 0.0
    %1788 = vmatprep.subr.mxu0 0.0
    %1789 = vmatpush1.msra.mxu0 0.0
    %1790 = vmatprep.subr.mxu0 0.0
    %1791 = vmatpush1.msra.mxu0 0.0
    %1792 = vmatprep.subr.mxu0 0.0
    %1793 = vmatpush1.msra.mxu0 0.0
    %1794 = vmatprep.subr.mxu0 0.0
    %1795 = vmatpush1.msra.mxu0 0.0
    %1796 = vmatprep.subr.mxu0 0.0
    %1797 = vmatpush1.msra.mxu0 0.0
    %1798 = vmatprep.subr.mxu0 0.0
    %1799 = vmatpush1.msra.mxu0 %v1770
    %1800 = vmatprep.subr.mxu0 0.0
    %1801 = vmatpush1.msra.mxu0 %v1769
    %1802 = vmatprep.subr.mxu0 0.0
    %1803 = vmatpush1.msra.mxu0 %v1768
    %1804 = vmatprep.subr.mxu0 0.0
    %1805 = vmatpush1.msra.mxu0 %v1767
    %1806 = vmatprep.subr.mxu0 0.0
    %1807 = vmatpush2.msra.mxu0 0.0
    %1808 = vmatprep.subr.mxu0 0.0
    %1809 = vmatpush2.msra.mxu0 0.0
    %1810 = vmatprep.subr.mxu0 0.0
    %1811 = vmatpush2.msra.mxu0 0.0
    %1812 = vmatprep.subr.mxu0 0.0
    %1813 = vmatpush2.msra.mxu0 0.0
    %1814 = vmatprep.subr.mxu0 0.0
    %1815 = vmatpush2.msra.mxu0 0.0
    %1816 = vmatprep.subr.mxu0 0.0
    %1817 = vmatpush2.msra.mxu0 0.0
    %1818 = vmatprep.subr.mxu0 0.0
    %1819 = vmatpush2.msra.mxu0 0.0
    %1820 = vmatprep.subr.mxu0 0.0
    %1821 = vmatpush2.msra.mxu0 0.0
    %1822 = vmatprep.subr.mxu0 0.0
    %1823 = vmatpush2.msra.mxu0 0.0
    %1824 = vmatprep.subr.mxu0 0.0
    %1825 = vmatpush2.msra.mxu0 0.0
    %1826 = vmatprep.subr.mxu0 0.0
    %1827 = vmatpush2.msra.mxu0 0.0
    %1828 = vmatprep.subr.mxu0 0.0
    %1829 = vmatpush2.msra.mxu0 0.0
    %1830 = vmatprep.subr.mxu0 0.0
    %1831 = vmatpush2.msra.mxu0 0.0
    %1832 = vmatprep.subr.mxu0 0.0
    %1833 = vmatpush2.msra.mxu0 0.0
    %1834 = vmatprep.subr.mxu0 0.0
    %1835 = vmatpush2.msra.mxu0 0.0
    %1836 = vmatprep.subr.mxu0 0.0
    %1837 = vmatpush2.msra.mxu0 0.0
    %1838 = vmatprep.mubr.f32.mxu0 0.0
    %1839 = vmatmul.mubr.f32.gmra.mxu0 %v1772
    %v1840 = vpop.f32.mrf.mxu0
    %v1841 = vadd.f32 0.0, %v1840
    %v1842 = vpop.f32.mrf.mxu0
    %1843 = vdwg.mxu0
    %v1845 = vrot.slane %v1841, 6
    %v1847 = vadd.f32 %v302, %v1845
    %v1848 = vld [vmem:[#allocation3] sm:$0x3]
    %v1849 = vxor.u32 %v1847, 2147483648
    %v1850 = vmul.f32 %v1849, 1.442695
    %v1851 = vpow.pop %v1850
    %v1852 = vadd.f32 %v1851, 1.0
    %v1853 = vrcp.pop %v1852
    %v1854 = vmul.f32 1.0, %v1853
    %v1855 = vtanh.pop %v1847
    %v1857 = vrot.slane %v1848, 6
    %1858 = vrot.lane.b32.xlu0 %v1857, 32
    %v1859 = vpop.permute.xlu0 %1858
    %v1861 = vmul.f32 %v1854, %v1859
    %1863 = vrot.lane.b32.xlu0 %v1855, 64
    %v1864 = vpop.permute.xlu0 %1863
    %v1866 = vmul.f32 %v1854, %v1864
    %1868 = vrot.lane.b32.xlu0 %v1866, 32
    %v1869 = vpop.permute.xlu0 %1868
    %v1871 = vadd.f32 %v1861, %v1869
    %v1872 = vtanh.pop %v1871
    %1874 = vrot.lane.b32.xlu0 %v1872, 64
    %v1875 = vpop.permute.xlu0 %1874
    %v1877 = vmul.f32 %v1854, %v1875
    %1879 = vrot.lane.b32.xlu0 %v1877, 32
    %v1880 = vpop.permute.xlu0 %1879
    %1882 = vst.msk [vmem:[#allocation2 - $0x2] sm:$0xc] %vm856, %v1880
    %1884 = vrot.lane.b32.xlu0 %v1871, 96
    %v1885 = vpop.permute.xlu0 %1884
    %1887 = vst.msk [vmem:[#allocation3 - $0x2] sm:$0xc] %vm856, %v1885
    %1888 = vst.msk [vmem:[#allocation8 + $0x8] sm:$0xc] %vm856, %v1880
    %v1889 = vld [vmem:[#allocation6] sm:$0x3]
    %v1890 = vrot.slane %v1877, 2
    %1891 = vrot.lane.b32.xlu0 %v1890, 32
    %v1892 = vpop.permute.xlu0 %1891
    %v1894 = vadd.f32 %v1889, %v1892
    %1895 = vst.msk [vmem:[#allocation6] sm:$0x3] %vm598, %v1894
    %v1896 = vld [vmem:[#allocation4] sm:$0x3]
    %v1897 = vld [vmem:[%s9] sm:$0xff]
    %v1898 = vld [vmem:[%s9 + $0x8] sm:$0xff]
    %v1899 = vld [vmem:[%s9 + $0x10] sm:$0xff]
    %v1900 = vld [vmem:[%s9 + $0x18] sm:$0xff]
    %v1902 = vsel %vm131, %v1896, 0
    %1904 = vmatprep.subr.mxu0 0.0
    %1905 = vmatpush1.msra.mxu0 0.0
    %1906 = vmatprep.subr.mxu0 0.0
    %1907 = vmatpush1.msra.mxu0 0.0
    %1908 = vmatprep.subr.mxu0 0.0
    %1909 = vmatpush1.msra.mxu0 0.0
    %1910 = vmatprep.subr.mxu0 0.0
    %1911 = vmatpush1.msra.mxu0 0.0
    %1912 = vmatprep.subr.mxu0 0.0
    %1913 = vmatpush1.msra.mxu0 0.0
    %1914 = vmatprep.subr.mxu0 0.0
    %1915 = vmatpush1.msra.mxu0 0.0
    %1916 = vmatprep.subr.mxu0 0.0
    %1917 = vmatpush1.msra.mxu0 0.0
    %1918 = vmatprep.subr.mxu0 0.0
    %1919 = vmatpush1.msra.mxu0 0.0
    %1920 = vmatprep.subr.mxu0 0.0
    %1921 = vmatpush1.msra.mxu0 0.0
    %1922 = vmatprep.subr.mxu0 0.0
    %1923 = vmatpush1.msra.mxu0 0.0
    %1924 = vmatprep.subr.mxu0 0.0
    %1925 = vmatpush1.msra.mxu0 0.0
    %1926 = vmatprep.subr.mxu0 0.0
    %1927 = vmatpush1.msra.mxu0 0.0
    %1928 = vmatprep.subr.mxu0 0.0
    %1929 = vmatpush1.msra.mxu0 %v1900
    %1930 = vmatprep.subr.mxu0 0.0
    %1931 = vmatpush1.msra.mxu0 %v1899
    %1932 = vmatprep.subr.mxu0 0.0
    %1933 = vmatpush1.msra.mxu0 %v1898
    %1934 = vmatprep.subr.mxu0 0.0
    %1935 = vmatpush1.msra.mxu0 %v1897
    %1936 = vmatprep.subr.mxu0 0.0
    %1937 = vmatpush2.msra.mxu0 0.0
    %1938 = vmatprep.subr.mxu0 0.0
    %1939 = vmatpush2.msra.mxu0 0.0
    %1940 = vmatprep.subr.mxu0 0.0
    %1941 = vmatpush2.msra.mxu0 0.0
    %1942 = vmatprep.subr.mxu0 0.0
    %1943 = vmatpush2.msra.mxu0 0.0
    %1944 = vmatprep.subr.mxu0 0.0
    %1945 = vmatpush2.msra.mxu0 0.0
    %1946 = vmatprep.subr.mxu0 0.0
    %1947 = vmatpush2.msra.mxu0 0.0
    %1948 = vmatprep.subr.mxu0 0.0
    %1949 = vmatpush2.msra.mxu0 0.0
    %1950 = vmatprep.subr.mxu0 0.0
    %1951 = vmatpush2.msra.mxu0 0.0
    %1952 = vmatprep.subr.mxu0 0.0
    %1953 = vmatpush2.msra.mxu0 0.0
    %1954 = vmatprep.subr.mxu0 0.0
    %1955 = vmatpush2.msra.mxu0 0.0
    %1956 = vmatprep.subr.mxu0 0.0
    %1957 = vmatpush2.msra.mxu0 0.0
    %1958 = vmatprep.subr.mxu0 0.0
    %1959 = vmatpush2.msra.mxu0 0.0
    %1960 = vmatprep.subr.mxu0 0.0
    %1961 = vmatpush2.msra.mxu0 0.0
    %1962 = vmatprep.subr.mxu0 0.0
    %1963 = vmatpush2.msra.mxu0 0.0
    %1964 = vmatprep.subr.mxu0 0.0
    %1965 = vmatpush2.msra.mxu0 0.0
    %1966 = vmatprep.subr.mxu0 0.0
    %1967 = vmatpush2.msra.mxu0 0.0
    %1968 = vmatprep.mubr.f32.mxu0 0.0
    %1969 = vmatmul.mubr.f32.gmra.mxu0 %v1902
    %v1970 = vpop.f32.mrf.mxu0
    %v1971 = vadd.f32 0.0, %v1970
    %v1972 = vpop.f32.mrf.mxu0
    %1973 = vdwg.mxu0
    %v1975 = vrot.slane %v1971, 4
    %v1977 = vadd.f32 %v484, %v1975
    %v1978 = vld [vmem:[#allocation5] sm:$0x3]
    %v1979 = vxor.u32 %v1977, 2147483648
    %v1980 = vmul.f32 %v1979, 1.442695
    %v1981 = vpow.pop %v1980
    %v1982 = vadd.f32 %v1981, 1.0
    %v1983 = vrcp.pop %v1982
    %v1984 = vmul.f32 1.0, %v1983
    %v1985 = vtanh.pop %v1977
    %v1987 = vrot.slane %v1978, 4
    %1988 = vrot.lane.b32.xlu0 %v1987, 32
    %v1989 = vpop.permute.xlu0 %1988
    %v1991 = vmul.f32 %v1984, %v1989
    %1993 = vrot.lane.b32.xlu0 %v1985, 64
    %v1994 = vpop.permute.xlu0 %1993
    %v1996 = vmul.f32 %v1984, %v1994
    %1998 = vrot.lane.b32.xlu0 %v1996, 32
    %v1999 = vpop.permute.xlu0 %1998
    %v2001 = vadd.f32 %v1991, %v1999
    %v2002 = vtanh.pop %v2001
    %2004 = vrot.lane.b32.xlu0 %v2002, 64
    %v2005 = vpop.permute.xlu0 %2004
    %v2007 = vmul.f32 %v1984, %v2005
    %2009 = vrot.lane.b32.xlu0 %v2007, 32
    %v2010 = vpop.permute.xlu0 %2009
    %2012 = vst.msk [vmem:[#allocation4 - $0x4] sm:$0x30] %vm987, %v2010
    %2014 = vrot.lane.b32.xlu0 %v2001, 96
    %v2015 = vpop.permute.xlu0 %2014
    %2017 = vst.msk [vmem:[#allocation5 - $0x4] sm:$0x30] %vm987, %v2015
    %2018 = vst.msk [vmem:[#allocation10] sm:$0x30] %vm987, %v2010
    %v2019 = vld [vmem:[#allocation7] sm:$0x3]
    %v2020 = vrot.slane %v2007, 4
    %2021 = vrot.lane.b32.xlu0 %v2020, 32
    %v2022 = vpop.permute.xlu0 %2021
    %v2024 = vadd.f32 %v2019, %v2022
    %2025 = vst.msk [vmem:[#allocation7] sm:$0x3] %vm598, %v2024
    %v2026 = vld [vmem:[#allocation2] sm:$0x3]
    %v2027 = vld [vmem:[%s8] sm:$0xff]
    %v2028 = vld [vmem:[%s8 + $0x8] sm:$0xff]
    %v2029 = vld [vmem:[%s8 + $0x10] sm:$0xff]
    %v2030 = vld [vmem:[%s8 + $0x18] sm:$0xff]
    %v2032 = vsel %vm131, %v2026, 0
    %2034 = vmatprep.subr.mxu0 0.0
    %2035 = vmatpush1.msra.mxu0 0.0
    %2036 = vmatprep.subr.mxu0 0.0
    %2037 = vmatpush1.msra.mxu0 0.0
    %2038 = vmatprep.subr.mxu0 0.0
    %2039 = vmatpush1.msra.mxu0 0.0
    %2040 = vmatprep.subr.mxu0 0.0
    %2041 = vmatpush1.msra.mxu0 0.0
    %2042 = vmatprep.subr.mxu0 0.0
    %2043 = vmatpush1.msra.mxu0 0.0
    %2044 = vmatprep.subr.mxu0 0.0
    %2045 = vmatpush1.msra.mxu0 0.0
    %2046 = vmatprep.subr.mxu0 0.0
    %2047 = vmatpush1.msra.mxu0 0.0
    %2048 = vmatprep.subr.mxu0 0.0
    %2049 = vmatpush1.msra.mxu0 0.0
    %2050 = vmatprep.subr.mxu0 0.0
    %2051 = vmatpush1.msra.mxu0 0.0
    %2052 = vmatprep.subr.mxu0 0.0
    %2053 = vmatpush1.msra.mxu0 0.0
    %2054 = vmatprep.subr.mxu0 0.0
    %2055 = vmatpush1.msra.mxu0 0.0
    %2056 = vmatprep.subr.mxu0 0.0
    %2057 = vmatpush1.msra.mxu0 0.0
    %2058 = vmatprep.subr.mxu0 0.0
    %2059 = vmatpush1.msra.mxu0 %v2030
    %2060 = vmatprep.subr.mxu0 0.0
    %2061 = vmatpush1.msra.mxu0 %v2029
    %2062 = vmatprep.subr.mxu0 0.0
    %2063 = vmatpush1.msra.mxu0 %v2028
    %2064 = vmatprep.subr.mxu0 0.0
    %2065 = vmatpush1.msra.mxu0 %v2027
    %2066 = vmatprep.subr.mxu0 0.0
    %2067 = vmatpush2.msra.mxu0 0.0
    %2068 = vmatprep.subr.mxu0 0.0
    %2069 = vmatpush2.msra.mxu0 0.0
    %2070 = vmatprep.subr.mxu0 0.0
    %2071 = vmatpush2.msra.mxu0 0.0
    %2072 = vmatprep.subr.mxu0 0.0
    %2073 = vmatpush2.msra.mxu0 0.0
    %2074 = vmatprep.subr.mxu0 0.0
    %2075 = vmatpush2.msra.mxu0 0.0
    %2076 = vmatprep.subr.mxu0 0.0
    %2077 = vmatpush2.msra.mxu0 0.0
    %2078 = vmatprep.subr.mxu0 0.0
    %2079 = vmatpush2.msra.mxu0 0.0
    %2080 = vmatprep.subr.mxu0 0.0
    %2081 = vmatpush2.msra.mxu0 0.0
    %2082 = vmatprep.subr.mxu0 0.0
    %2083 = vmatpush2.msra.mxu0 0.0
    %2084 = vmatprep.subr.mxu0 0.0
    %2085 = vmatpush2.msra.mxu0 0.0
    %2086 = vmatprep.subr.mxu0 0.0
    %2087 = vmatpush2.msra.mxu0 0.0
    %2088 = vmatprep.subr.mxu0 0.0
    %2089 = vmatpush2.msra.mxu0 0.0
    %2090 = vmatprep.subr.mxu0 0.0
    %2091 = vmatpush2.msra.mxu0 0.0
    %2092 = vmatprep.subr.mxu0 0.0
    %2093 = vmatpush2.msra.mxu0 0.0
    %2094 = vmatprep.subr.mxu0 0.0
    %2095 = vmatpush2.msra.mxu0 0.0
    %2096 = vmatprep.subr.mxu0 0.0
    %2097 = vmatpush2.msra.mxu0 0.0
    %2098 = vmatprep.mubr.f32.mxu0 0.0
    %2099 = vmatmul.mubr.f32.gmra.mxu0 %v2032
    %v2100 = vpop.f32.mrf.mxu0
    %v2101 = vadd.f32 0.0, %v2100
    %v2102 = vpop.f32.mrf.mxu0
    %2103 = vdwg.mxu0
    %v2105 = vrot.slane %v2101, 4
    %v2107 = vadd.f32 %v302, %v2105
    %v2108 = vld [vmem:[#allocation3] sm:$0x3]
    %v2109 = vxor.u32 %v2107, 2147483648
    %v2110 = vmul.f32 %v2109, 1.442695
    %v2111 = vpow.pop %v2110
    %v2112 = vadd.f32 %v2111, 1.0
    %v2113 = vrcp.pop %v2112
    %v2114 = vmul.f32 1.0, %v2113
    %v2115 = vtanh.pop %v2107
    %v2117 = vrot.slane %v2108, 4
    %2118 = vrot.lane.b32.xlu0 %v2117, 32
    %v2119 = vpop.permute.xlu0 %2118
    %v2121 = vmul.f32 %v2114, %v2119
    %2123 = vrot.lane.b32.xlu0 %v2115, 64
    %v2124 = vpop.permute.xlu0 %2123
    %v2126 = vmul.f32 %v2114, %v2124
    %2128 = vrot.lane.b32.xlu0 %v2126, 32
    %v2129 = vpop.permute.xlu0 %2128
    %v2131 = vadd.f32 %v2121, %v2129
    %v2132 = vtanh.pop %v2131
    %2134 = vrot.lane.b32.xlu0 %v2132, 64
    %v2135 = vpop.permute.xlu0 %2134
    %v2137 = vmul.f32 %v2114, %v2135
    %2139 = vrot.lane.b32.xlu0 %v2137, 32
    %v2140 = vpop.permute.xlu0 %2139
    %2142 = vst.msk [vmem:[#allocation2 - $0x4] sm:$0x30] %vm987, %v2140
    %2144 = vrot.lane.b32.xlu0 %v2131, 96
    %v2145 = vpop.permute.xlu0 %2144
    %2147 = vst.msk [vmem:[#allocation3 - $0x4] sm:$0x30] %vm987, %v2145
    %2148 = vst.msk [vmem:[#allocation8 + $0x8] sm:$0x30] %vm987, %v2140
    %v2149 = vld [vmem:[#allocation6] sm:$0x3]
    %v2150 = vrot.slane %v2137, 4
    %2151 = vrot.lane.b32.xlu0 %v2150, 32
    %v2152 = vpop.permute.xlu0 %2151
    %v2154 = vadd.f32 %v2149, %v2152
    %2155 = vst.msk [vmem:[#allocation6] sm:$0x3] %vm598, %v2154
    %v2156 = vld [vmem:[#allocation4] sm:$0x3]
    %v2157 = vld [vmem:[%s9] sm:$0xff]
    %v2158 = vld [vmem:[%s9 + $0x8] sm:$0xff]
    %v2159 = vld [vmem:[%s9 + $0x10] sm:$0xff]
    %v2160 = vld [vmem:[%s9 + $0x18] sm:$0xff]
    %v2162 = vsel %vm131, %v2156, 0
    %2164 = vmatprep.subr.mxu0 0.0
    %2165 = vmatpush1.msra.mxu0 0.0
    %2166 = vmatprep.subr.mxu0 0.0
    %2167 = vmatpush1.msra.mxu0 0.0
    %2168 = vmatprep.subr.mxu0 0.0
    %2169 = vmatpush1.msra.mxu0 0.0
    %2170 = vmatprep.subr.mxu0 0.0
    %2171 = vmatpush1.msra.mxu0 0.0
    %2172 = vmatprep.subr.mxu0 0.0
    %2173 = vmatpush1.msra.mxu0 0.0
    %2174 = vmatprep.subr.mxu0 0.0
    %2175 = vmatpush1.msra.mxu0 0.0
    %2176 = vmatprep.subr.mxu0 0.0
    %2177 = vmatpush1.msra.mxu0 0.0
    %2178 = vmatprep.subr.mxu0 0.0
    %2179 = vmatpush1.msra.mxu0 0.0
    %2180 = vmatprep.subr.mxu0 0.0
    %2181 = vmatpush1.msra.mxu0 0.0
    %2182 = vmatprep.subr.mxu0 0.0
    %2183 = vmatpush1.msra.mxu0 0.0
    %2184 = vmatprep.subr.mxu0 0.0
    %2185 = vmatpush1.msra.mxu0 0.0
    %2186 = vmatprep.subr.mxu0 0.0
    %2187 = vmatpush1.msra.mxu0 0.0
    %2188 = vmatprep.subr.mxu0 0.0
    %2189 = vmatpush1.msra.mxu0 %v2160
    %2190 = vmatprep.subr.mxu0 0.0
    %2191 = vmatpush1.msra.mxu0 %v2159
    %2192 = vmatprep.subr.mxu0 0.0
    %2193 = vmatpush1.msra.mxu0 %v2158
    %2194 = vmatprep.subr.mxu0 0.0
    %2195 = vmatpush1.msra.mxu0 %v2157
    %2196 = vmatprep.subr.mxu0 0.0
    %2197 = vmatpush2.msra.mxu0 0.0
    %2198 = vmatprep.subr.mxu0 0.0
    %2199 = vmatpush2.msra.mxu0 0.0
    %2200 = vmatprep.subr.mxu0 0.0
    %2201 = vmatpush2.msra.mxu0 0.0
    %2202 = vmatprep.subr.mxu0 0.0
    %2203 = vmatpush2.msra.mxu0 0.0
    %2204 = vmatprep.subr.mxu0 0.0
    %2205 = vmatpush2.msra.mxu0 0.0
    %2206 = vmatprep.subr.mxu0 0.0
    %2207 = vmatpush2.msra.mxu0 0.0
    %2208 = vmatprep.subr.mxu0 0.0
    %2209 = vmatpush2.msra.mxu0 0.0
    %2210 = vmatprep.subr.mxu0 0.0
    %2211 = vmatpush2.msra.mxu0 0.0
    %2212 = vmatprep.subr.mxu0 0.0
    %2213 = vmatpush2.msra.mxu0 0.0
    %2214 = vmatprep.subr.mxu0 0.0
    %2215 = vmatpush2.msra.mxu0 0.0
    %2216 = vmatprep.subr.mxu0 0.0
    %2217 = vmatpush2.msra.mxu0 0.0
    %2218 = vmatprep.subr.mxu0 0.0
    %2219 = vmatpush2.msra.mxu0 0.0
    %2220 = vmatprep.subr.mxu0 0.0
    %2221 = vmatpush2.msra.mxu0 0.0
    %2222 = vmatprep.subr.mxu0 0.0
    %2223 = vmatpush2.msra.mxu0 0.0
    %2224 = vmatprep.subr.mxu0 0.0
    %2225 = vmatpush2.msra.mxu0 0.0
    %2226 = vmatprep.subr.mxu0 0.0
    %2227 = vmatpush2.msra.mxu0 0.0
    %2228 = vmatprep.mubr.f32.mxu0 0.0
    %2229 = vmatmul.mubr.f32.gmra.mxu0 %v2162
    %v2230 = vpop.f32.mrf.mxu0
    %v2231 = vadd.f32 0.0, %v2230
    %v2232 = vpop.f32.mrf.mxu0
    %2233 = vdwg.mxu0
    %v2235 = vrot.slane %v2231, 6
    %v2237 = vadd.f32 %v484, %v2235
    %v2238 = vld [vmem:[#allocation5] sm:$0x3]
    %v2239 = vxor.u32 %v2237, 2147483648
    %v2240 = vmul.f32 %v2239, 1.442695
    %v2241 = vpow.pop %v2240
    %v2242 = vadd.f32 %v2241, 1.0
    %v2243 = vrcp.pop %v2242
    %v2244 = vmul.f32 1.0, %v2243
    %v2245 = vtanh.pop %v2237
    %v2247 = vrot.slane %v2238, 6
    %2248 = vrot.lane.b32.xlu0 %v2247, 32
    %v2249 = vpop.permute.xlu0 %2248
    %v2251 = vmul.f32 %v2244, %v2249
    %2253 = vrot.lane.b32.xlu0 %v2245, 64
    %v2254 = vpop.permute.xlu0 %2253
    %v2256 = vmul.f32 %v2244, %v2254
    %2258 = vrot.lane.b32.xlu0 %v2256, 32
    %v2259 = vpop.permute.xlu0 %2258
    %v2261 = vadd.f32 %v2251, %v2259
    %v2262 = vtanh.pop %v2261
    %2264 = vrot.lane.b32.xlu0 %v2262, 64
    %v2265 = vpop.permute.xlu0 %2264
    %v2267 = vmul.f32 %v2244, %v2265
    %2269 = vrot.lane.b32.xlu0 %v2267, 32
    %v2270 = vpop.permute.xlu0 %2269
    %2272 = vst.msk [vmem:[#allocation4 - $0x2] sm:$0xc] %vm856, %v2270
    %2274 = vrot.lane.b32.xlu0 %v2261, 96
    %v2275 = vpop.permute.xlu0 %2274
    %2277 = vst.msk [vmem:[#allocation5 - $0x2] sm:$0xc] %vm856, %v2275
    %2278 = vst.msk [vmem:[#allocation10] sm:$0xc] %vm856, %v2270
    %v2279 = vld [vmem:[#allocation7] sm:$0x3]
    %v2280 = vrot.slane %v2267, 2
    %2281 = vrot.lane.b32.xlu0 %v2280, 32
    %v2282 = vpop.permute.xlu0 %2281
    %v2284 = vadd.f32 %v2279, %v2282
    %2285 = vst.msk [vmem:[#allocation7] sm:$0x3] %vm598, %v2284
    %v2286 = vld [vmem:[#allocation2] sm:$0x3]
    %v2287 = vld [vmem:[%s8] sm:$0xff]
    %v2288 = vld [vmem:[%s8 + $0x8] sm:$0xff]
    %v2289 = vld [vmem:[%s8 + $0x10] sm:$0xff]
    %v2290 = vld [vmem:[%s8 + $0x18] sm:$0xff]
    %v2292 = vsel %vm131, %v2286, 0
    %2294 = vmatprep.subr.mxu0 0.0
    %2295 = vmatpush1.msra.mxu0 0.0
    %2296 = vmatprep.subr.mxu0 0.0
    %2297 = vmatpush1.msra.mxu0 0.0
    %2298 = vmatprep.subr.mxu0 0.0
    %2299 = vmatpush1.msra.mxu0 0.0
    %2300 = vmatprep.subr.mxu0 0.0
    %2301 = vmatpush1.msra.mxu0 0.0
    %2302 = vmatprep.subr.mxu0 0.0
    %2303 = vmatpush1.msra.mxu0 0.0
    %2304 = vmatprep.subr.mxu0 0.0
    %2305 = vmatpush1.msra.mxu0 0.0
    %2306 = vmatprep.subr.mxu0 0.0
    %2307 = vmatpush1.msra.mxu0 0.0
    %2308 = vmatprep.subr.mxu0 0.0
    %2309 = vmatpush1.msra.mxu0 0.0
    %2310 = vmatprep.subr.mxu0 0.0
    %2311 = vmatpush1.msra.mxu0 0.0
    %2312 = vmatprep.subr.mxu0 0.0
    %2313 = vmatpush1.msra.mxu0 0.0
    %2314 = vmatprep.subr.mxu0 0.0
    %2315 = vmatpush1.msra.mxu0 0.0
    %2316 = vmatprep.subr.mxu0 0.0
    %2317 = vmatpush1.msra.mxu0 0.0
    %2318 = vmatprep.subr.mxu0 0.0
    %2319 = vmatpush1.msra.mxu0 %v2290
    %2320 = vmatprep.subr.mxu0 0.0
    %2321 = vmatpush1.msra.mxu0 %v2289
    %2322 = vmatprep.subr.mxu0 0.0
    %2323 = vmatpush1.msra.mxu0 %v2288
    %2324 = vmatprep.subr.mxu0 0.0
    %2325 = vmatpush1.msra.mxu0 %v2287
    %2326 = vmatprep.subr.mxu0 0.0
    %2327 = vmatpush2.msra.mxu0 0.0
    %2328 = vmatprep.subr.mxu0 0.0
    %2329 = vmatpush2.msra.mxu0 0.0
    %2330 = vmatprep.subr.mxu0 0.0
    %2331 = vmatpush2.msra.mxu0 0.0
    %2332 = vmatprep.subr.mxu0 0.0
    %2333 = vmatpush2.msra.mxu0 0.0
    %2334 = vmatprep.subr.mxu0 0.0
    %2335 = vmatpush2.msra.mxu0 0.0
    %2336 = vmatprep.subr.mxu0 0.0
    %2337 = vmatpush2.msra.mxu0 0.0
    %2338 = vmatprep.subr.mxu0 0.0
    %2339 = vmatpush2.msra.mxu0 0.0
    %2340 = vmatprep.subr.mxu0 0.0
    %2341 = vmatpush2.msra.mxu0 0.0
    %2342 = vmatprep.subr.mxu0 0.0
    %2343 = vmatpush2.msra.mxu0 0.0
    %2344 = vmatprep.subr.mxu0 0.0
    %2345 = vmatpush2.msra.mxu0 0.0
    %2346 = vmatprep.subr.mxu0 0.0
    %2347 = vmatpush2.msra.mxu0 0.0
    %2348 = vmatprep.subr.mxu0 0.0
    %2349 = vmatpush2.msra.mxu0 0.0
    %2350 = vmatprep.subr.mxu0 0.0
    %2351 = vmatpush2.msra.mxu0 0.0
    %2352 = vmatprep.subr.mxu0 0.0
    %2353 = vmatpush2.msra.mxu0 0.0
    %2354 = vmatprep.subr.mxu0 0.0
    %2355 = vmatpush2.msra.mxu0 0.0
    %2356 = vmatprep.subr.mxu0 0.0
    %2357 = vmatpush2.msra.mxu0 0.0
    %2358 = vmatprep.mubr.f32.mxu0 0.0
    %2359 = vmatmul.mubr.f32.gmra.mxu0 %v2292
    %v2360 = vpop.f32.mrf.mxu0
    %v2361 = vadd.f32 0.0, %v2360
    %v2362 = vpop.f32.mrf.mxu0
    %2363 = vdwg.mxu0
    %v2365 = vrot.slane %v2361, 2
    %v2367 = vadd.f32 %v302, %v2365
    %v2368 = vld [vmem:[#allocation3] sm:$0x3]
    %v2369 = vxor.u32 %v2367, 2147483648
    %v2370 = vmul.f32 %v2369, 1.442695
    %v2371 = vpow.pop %v2370
    %v2372 = vadd.f32 %v2371, 1.0
    %v2373 = vrcp.pop %v2372
    %v2374 = vmul.f32 1.0, %v2373
    %v2375 = vtanh.pop %v2367
    %v2377 = vrot.slane %v2368, 2
    %2378 = vrot.lane.b32.xlu0 %v2377, 32
    %v2379 = vpop.permute.xlu0 %2378
    %v2381 = vmul.f32 %v2374, %v2379
    %2383 = vrot.lane.b32.xlu0 %v2375, 64
    %v2384 = vpop.permute.xlu0 %2383
    %v2386 = vmul.f32 %v2374, %v2384
    %2388 = vrot.lane.b32.xlu0 %v2386, 32
    %v2389 = vpop.permute.xlu0 %2388
    %v2391 = vadd.f32 %v2381, %v2389
    %v2392 = vtanh.pop %v2391
    %2394 = vrot.lane.b32.xlu0 %v2392, 64
    %v2395 = vpop.permute.xlu0 %2394
    %v2397 = vmul.f32 %v2374, %v2395
    %2399 = vrot.lane.b32.xlu0 %v2397, 32
    %v2400 = vpop.permute.xlu0 %2399
    %2402 = vst.msk [vmem:[#allocation2 - $0x6] sm:$0xc0] %vm725, %v2400
    %2404 = vrot.lane.b32.xlu0 %v2391, 96
    %v2405 = vpop.permute.xlu0 %2404
    %2407 = vst.msk [vmem:[#allocation3 - $0x6] sm:$0xc0] %vm725, %v2405
    %2408 = vst.msk [vmem:[#allocation8 + $0x8] sm:$0xc0] %vm725, %v2400
    %v2409 = vld [vmem:[#allocation6] sm:$0x3]
    %v2410 = vrot.slane %v2397, 6
    %2411 = vrot.lane.b32.xlu0 %v2410, 32
    %v2412 = vpop.permute.xlu0 %2411
    %v2414 = vadd.f32 %v2409, %v2412
    %2415 = vst.msk [vmem:[#allocation6] sm:$0x3] %vm598, %v2414
    %v2416 = vld [vmem:[#allocation4] sm:$0x3]
    %v2417 = vld [vmem:[%s9] sm:$0xff]
    %v2418 = vld [vmem:[%s9 + $0x8] sm:$0xff]
    %v2419 = vld [vmem:[%s9 + $0x10] sm:$0xff]
    %v2420 = vld [vmem:[%s9 + $0x18] sm:$0xff]
    %v2422 = vsel %vm131, %v2416, 0
    %2424 = vmatprep.subr.mxu0 0.0
    %2425 = vmatpush1.msra.mxu0 0.0
    %2426 = vmatprep.subr.mxu0 0.0
    %2427 = vmatpush1.msra.mxu0 0.0
    %2428 = vmatprep.subr.mxu0 0.0
    %2429 = vmatpush1.msra.mxu0 0.0
    %2430 = vmatprep.subr.mxu0 0.0
    %2431 = vmatpush1.msra.mxu0 0.0
    %2432 = vmatprep.subr.mxu0 0.0
    %2433 = vmatpush1.msra.mxu0 0.0
    %2434 = vmatprep.subr.mxu0 0.0
    %2435 = vmatpush1.msra.mxu0 0.0
    %2436 = vmatprep.subr.mxu0 0.0
    %2437 = vmatpush1.msra.mxu0 0.0
    %2438 = vmatprep.subr.mxu0 0.0
    %2439 = vmatpush1.msra.mxu0 0.0
    %2440 = vmatprep.subr.mxu0 0.0
    %2441 = vmatpush1.msra.mxu0 0.0
    %2442 = vmatprep.subr.mxu0 0.0
    %2443 = vmatpush1.msra.mxu0 0.0
    %2444 = vmatprep.subr.mxu0 0.0
    %2445 = vmatpush1.msra.mxu0 0.0
    %2446 = vmatprep.subr.mxu0 0.0
    %2447 = vmatpush1.msra.mxu0 0.0
    %2448 = vmatprep.subr.mxu0 0.0
    %2449 = vmatpush1.msra.mxu0 %v2420
    %2450 = vmatprep.subr.mxu0 0.0
    %2451 = vmatpush1.msra.mxu0 %v2419
    %2452 = vmatprep.subr.mxu0 0.0
    %2453 = vmatpush1.msra.mxu0 %v2418
    %2454 = vmatprep.subr.mxu0 0.0
    %2455 = vmatpush1.msra.mxu0 %v2417
    %2456 = vmatprep.subr.mxu0 0.0
    %2457 = vmatpush2.msra.mxu0 0.0
    %2458 = vmatprep.subr.mxu0 0.0
    %2459 = vmatpush2.msra.mxu0 0.0
    %2460 = vmatprep.subr.mxu0 0.0
    %2461 = vmatpush2.msra.mxu0 0.0
    %2462 = vmatprep.subr.mxu0 0.0
    %2463 = vmatpush2.msra.mxu0 0.0
    %2464 = vmatprep.subr.mxu0 0.0
    %2465 = vmatpush2.msra.mxu0 0.0
    %2466 = vmatprep.subr.mxu0 0.0
    %2467 = vmatpush2.msra.mxu0 0.0
    %2468 = vmatprep.subr.mxu0 0.0
    %2469 = vmatpush2.msra.mxu0 0.0
    %2470 = vmatprep.subr.mxu0 0.0
    %2471 = vmatpush2.msra.mxu0 0.0
    %2472 = vmatprep.subr.mxu0 0.0
    %2473 = vmatpush2.msra.mxu0 0.0
    %2474 = vmatprep.subr.mxu0 0.0
    %2475 = vmatpush2.msra.mxu0 0.0
    %2476 = vmatprep.subr.mxu0 0.0
    %2477 = vmatpush2.msra.mxu0 0.0
    %2478 = vmatprep.subr.mxu0 0.0
    %2479 = vmatpush2.msra.mxu0 0.0
    %2480 = vmatprep.subr.mxu0 0.0
    %2481 = vmatpush2.msra.mxu0 0.0
    %2482 = vmatprep.subr.mxu0 0.0
    %2483 = vmatpush2.msra.mxu0 0.0
    %2484 = vmatprep.subr.mxu0 0.0
    %2485 = vmatpush2.msra.mxu0 0.0
    %2486 = vmatprep.subr.mxu0 0.0
    %2487 = vmatpush2.msra.mxu0 0.0
    %2488 = vmatprep.mubr.f32.mxu0 0.0
    %2489 = vmatmul.mubr.f32.gmra.mxu0 %v2422
    %v2490 = vpop.f32.mrf.mxu0
    %v2491 = vadd.f32 0.0, %v2490
    %v2492 = vpop.f32.mrf.mxu0
    %2493 = vdwg.mxu0
    %v2494 = vadd.f32 %v484, %v2491
    %v2495 = vld [vmem:[#allocation5] sm:$0x3]
    %v2496 = vxor.u32 %v2494, 2147483648
    %v2497 = vmul.f32 %v2496, 1.442695
    %v2498 = vpow.pop %v2497
    %v2499 = vadd.f32 %v2498, 1.0
    %v2500 = vrcp.pop %v2499
    %v2501 = vmul.f32 1.0, %v2500
    %v2502 = vtanh.pop %v2494
    %2504 = vrot.lane.b32.xlu0 %v2495, 32
    %v2505 = vpop.permute.xlu0 %2504
    %v2507 = vmul.f32 %v2501, %v2505
    %2509 = vrot.lane.b32.xlu0 %v2502, 64
    %v2510 = vpop.permute.xlu0 %2509
    %v2512 = vmul.f32 %v2501, %v2510
    %2514 = vrot.lane.b32.xlu0 %v2512, 32
    %v2515 = vpop.permute.xlu0 %2514
    %v2517 = vadd.f32 %v2507, %v2515
    %v2518 = vtanh.pop %v2517
    %2520 = vrot.lane.b32.xlu0 %v2518, 64
    %v2521 = vpop.permute.xlu0 %2520
    %v2523 = vmul.f32 %v2501, %v2521
    %2525 = vrot.lane.b32.xlu0 %v2523, 32
    %v2526 = vpop.permute.xlu0 %2525
    %2528 = vst.msk [vmem:[#allocation4] sm:$0x3] %vm598, %v2526
    %2530 = vrot.lane.b32.xlu0 %v2517, 96
    %v2531 = vpop.permute.xlu0 %2530
    %2533 = vst.msk [vmem:[#allocation5] sm:$0x3] %vm598, %v2531
    %2534 = vst.msk [vmem:[#allocation10] sm:$0x3] %vm598, %v2526
    %v2535 = vld [vmem:[#allocation7] sm:$0x3]
    %v2536 = vadd.f32 %v2535, %v2526
    %2537 = vst.msk [vmem:[#allocation7] sm:$0x3] %vm598, %v2536
    // Predicated region
    $region70: #{embed_sentence_forward.3} parent=1 // pred_check
      %p2538 = pneg %p104
    $region71: #{embed_sentence_forward.3} parent=1 // pred_check_branch
      %2540 = sbr.rel (%p2538) target = $region73
    $region72: #{embed_sentence_forward.3} parent=1 // pred_region
      %v2541 = vld [vmem:[#allocation6] sm:$0x3]
      %v2542 = vmul.f32 %v2541, 0.125
      %2543 = vst.msk [vmem:[#allocation12] sm:$0x3] %vm598, %v2542
      %v2544 = vld [vmem:[#allocation7] sm:$0x3]
      %v2545 = vmul.f32 %v2544, 0.125
      %2547 = vrot.lane.b32.xlu0 %v2545, 32
      %v2548 = vpop.permute.xlu0 %2547
      %vm2550 = vcmask 517376
      %2551 = vst.msk [vmem:[#allocation12] sm:$0x3] %vm2550, %v2548
    $region73: #{embed_sentence_forward.3} parent=1 // pred_fallthru
      _
    // Predicated region
    $region74: #{embed_sentence_forward.3} parent=1 // pred_check
      _
    $region75: #{embed_sentence_forward.3} parent=1 // pred_check_branch
      %2553 = sbr.rel (0) target = $region77
    $region76: #{embed_sentence_forward.3} parent=1 // pred_region
      %s2555 = ssub.s32 256, 256
      %2556 = vsyncadd [#allocation9], %s2555
      %s2557 = sshll.u32 [#allocation8], 4
      %s2558 = int_to_ptr.vmem [resolvable:$true] %s2557
      %2563 = dma.vmem_to_hbm [thread:$0]  %s2558, 256, %s16, [#allocation9], 128, 128, 8
    $region77: #{embed_sentence_forward.3} parent=1 // pred_fallthru
      _
    // Predicated region
    $region78: #{embed_sentence_forward.3} parent=1 // pred_check
      _
    $region79: #{embed_sentence_forward.3} parent=1 // pred_check_branch
      %2565 = sbr.rel (0) target = $region81
    $region80: #{embed_sentence_forward.3} parent=1 // pred_region
      %s2566 = ssub.s32 0, 0
      %s2567 = smul.u32 2, %s2566
      %s2569 = ssub.s32 256, 256
      %2570 = vsyncadd [#allocation11], %s2569
      %s2571 = smul.addr %s2567, 128
      %s2572 = scalar_lea.hbm %s17, %s2571
      %s2573 = sshll.u32 [#allocation10], 4
      %s2574 = int_to_ptr.vmem [resolvable:$true] %s2573
      %2579 = dma.vmem_to_hbm [thread:$0]  %s2574, 256, %s2572, [#allocation11], 128, 128, 8
    $region81: #{embed_sentence_forward.3} parent=1 // pred_fallthru
      _
    // Predicated region
    $region82: #{embed_sentence_forward.3} parent=1 // pred_check
      _
    $region83: #{embed_sentence_forward.3} parent=1 // pred_check_branch
      %2581 = sbr.rel (0) target = $region85
    $region84: #{embed_sentence_forward.3} parent=1 // pred_region
      %s2583 = ssub.s32 32, 32
      %2584 = vsyncadd [#allocation11], %s2583
      %s2586 = sshll.u32 [#allocation12], 4
      %s2587 = int_to_ptr.vmem [resolvable:$true] %s2586
      %2589 = dma.vmem_to_hbm [thread:$0]  %s2587, 32, %s18, [#allocation11]
    $region85: #{embed_sentence_forward.3} parent=1 // pred_fallthru
      _
    // Predicated region
    $region86: #{embed_sentence_forward.3} parent=1 // pred_check
      _
    $region87: #{embed_sentence_forward.3} parent=1 // pred_check_branch
      %2591 = sbr.rel (0) target = $region89
    $region88: #{embed_sentence_forward.3} parent=1 // pred_region
      %2592 = dma.done [#allocation9], 256
    $region89: #{embed_sentence_forward.3} parent=1 // pred_fallthru
      _
    // Predicated region
    $region90: #{embed_sentence_forward.3} parent=1 // pred_check
      _
    $region91: #{embed_sentence_forward.3} parent=1 // pred_check_branch
      %2594 = sbr.rel (0) target = $region93
    $region92: #{embed_sentence_forward.3} parent=1 // pred_region
      %2595 = dma.done [#allocation11], 256
    $region93: #{embed_sentence_forward.3} parent=1 // pred_fallthru
      _
    // Predicated region
    $region94: #{embed_sentence_forward.3} parent=1 // pred_check
      _
    $region95: #{embed_sentence_forward.3} parent=1 // pred_check_branch
      %2597 = sbr.rel (0) target = $region97
    $region96: #{embed_sentence_forward.3} parent=1 // pred_region
      %2598 = dma.done [#allocation11], 32
    $region97: #{embed_sentence_forward.3} parent=1 // pred_fallthru
      _
    %2599 = vsyncpa [#allocation9], 1
    %2600 = vsyncpa [#allocation11], 1

// kernel: embed_sentence_forward.2
$region0: #{embed_sentence_forward.2}
  #allocation0 [shape = 'u32[]', space=smem, size = 0x4, offset = 0x4, fixed_abs, tag = 'smem constant byte address 0x4 - core index']
  #allocation1 [shape = 'u32[144,128]{1,0:T(1,128)}', space=vmem, size = 0x12000, scoped, tag = 'internal scratch']
  #allocation2 [shape = 'f32[2,32]{1,0:T(2,128)}', space=vmem, size = 0x400, scoped, tag = 'scratch operand']
  #allocation3 [shape = 'f32[2,32]{1,0:T(2,128)}', space=vmem, size = 0x400, scoped, tag = 'scratch operand']
  #allocation4 [shape = 'f32[2,32]{1,0:T(2,128)}', space=vmem, size = 0x400, scoped, tag = 'scratch operand']
  #allocation5 [shape = 'f32[2,32]{1,0:T(2,128)}', space=vmem, size = 0x400, scoped, tag = 'scratch operand']
  #allocation6 [shape = 'f32[2,32]{1,0:T(2,128)}', space=vmem, size = 0x400, scoped, tag = 'scratch operand']
  #allocation7 [shape = 'f32[2,32]{1,0:T(2,128)}', space=vmem, size = 0x400, scoped, tag = 'scratch operand']
  %s0 = inlined_call_operand.vmem [shape: f32[16,16], index: 0, kind: input, shape index: {}, may-alias: {0,1}]
  %s1 = inlined_call_operand.vmem [shape: f32[16,16], index: 1, kind: input, shape index: {}, may-alias: {0,1}]
  %s2 = inlined_call_operand.vmem [shape: f32[16,128], index: 2, kind: input, shape index: {}]
  %s3 = inlined_call_operand.vmem [shape: f32[16,128], index: 3, kind: input, shape index: {}]
  %s4 = inlined_call_operand.vmem [shape: f32[32,128], index: 4, kind: input, shape index: {}]
  %s5 = inlined_call_operand.vmem [shape: f32[32,128], index: 5, kind: input, shape index: {}]
  %s6 = inlined_call_operand.vmem [shape: f32[1,128], index: 6, kind: input, shape index: {}]
  %s7 = inlined_call_operand.vmem [shape: f32[1,128], index: 7, kind: input, shape index: {}]
  %s8 = inlined_call_operand.vmem [shape: f32[2,32], index: 8, kind: input, shape index: {}]
  %s9 = inlined_call_operand.vmem [shape: f32[2,32], index: 9, kind: input, shape index: {}]
  %s10 = inlined_call_operand.vmem [shape: f32[2,32], index: 10, kind: input, shape index: {}]
  %s11 = inlined_call_operand.vmem [shape: f32[2,32], index: 11, kind: input, shape index: {}]
  %s12 = inlined_call_operand.vmem [shape: f32[16,32], index: 12, kind: output, shape index: {0}]
  %s13 = inlined_call_operand.vmem [shape: f32[16,32], index: 13, kind: output, shape index: {1}]
  %s14 = inlined_call_operand.hbm [shape: f32[2,64], index: 14, kind: output, shape index: {2}]
  %15 = xla_tuple %s12, %s13, %s14
  %s16 = sld [smem:[#allocation0]]
  $region82: #{embed_sentence_forward.2} parent=0
    _
  %s18 = ssub.s32 1, %s16
  %s19 = scalar_select 0, %s18, %s16
  $region1: #{embed_sentence_forward.2} parent=0
    #allocation8 [shape = 'u8[1024]{0}', space=vmem, size = 0x400, scoped, tag = 'output window, operand 2, single buffered']
    #allocation9 [shape = 's32[1]{0}', space=sflag, size = 0x4, scoped, tag = 'scoped memory for embed_sentence_forward.2']
    %20 = vsyncpa [#allocation9], 0
    // Predicated region
    $region2: #{embed_sentence_forward.2} parent=1 // pred_check
      _
    $region3: #{embed_sentence_forward.2} parent=1 // pred_check_branch
      %22 = sbr.rel (0) target = $region5
    $region4: #{embed_sentence_forward.2} parent=1 // pred_region
      _
    $region5: #{embed_sentence_forward.2} parent=1 // pred_fallthru
      _
    // Predicated region
    $region6: #{embed_sentence_forward.2} parent=1 // pred_check
      _
    $region7: #{embed_sentence_forward.2} parent=1 // pred_check_branch
      %24 = sbr.rel (0) target = $region9
    $region8: #{embed_sentence_forward.2} parent=1 // pred_region
      %s25 = ssub.s32 0, 0
      %s26 = smul.u32 2, %s25
      %p27 = scmp.lt.s32.totalorder %s26, 1
      %s28 = scalar_select %p27, %s26, 1
      %s29 = smul.addr %s28, 8
      %s30 = scalar_lea.vmem %s1, %s29
      %s31 = ssub.s32 0, 0
      %s32 = smul.u32 2, %s31
    $region9: #{embed_sentence_forward.2} parent=1 // pred_fallthru
      _
    // Predicated region
    $region10: #{embed_sentence_forward.2} parent=1 // pred_check
      _
    $region11: #{embed_sentence_forward.2} parent=1 // pred_check_branch
      %34 = sbr.rel (0) target = $region13
    $region12: #{embed_sentence_forward.2} parent=1 // pred_region
      _
    $region13: #{embed_sentence_forward.2} parent=1 // pred_fallthru
      _
    // Predicated region
    $region14: #{embed_sentence_forward.2} parent=1 // pred_check
      _
    $region15: #{embed_sentence_forward.2} parent=1 // pred_check_branch
      %36 = sbr.rel (0) target = $region17
    $region16: #{embed_sentence_forward.2} parent=1 // pred_region
      _
    $region17: #{embed_sentence_forward.2} parent=1 // pred_fallthru
      _
    // Predicated region
    $region18: #{embed_sentence_forward.2} parent=1 // pred_check
      _
    $region19: #{embed_sentence_forward.2} parent=1 // pred_check_branch
      %38 = sbr.rel (0) target = $region21
    $region20: #{embed_sentence_forward.2} parent=1 // pred_region
      _
    $region21: #{embed_sentence_forward.2} parent=1 // pred_fallthru
      _
    // Predicated region
    $region22: #{embed_sentence_forward.2} parent=1 // pred_check
      _
    $region23: #{embed_sentence_forward.2} parent=1 // pred_check_branch
      %40 = sbr.rel (0) target = $region25
    $region24: #{embed_sentence_forward.2} parent=1 // pred_region
      _
    $region25: #{embed_sentence_forward.2} parent=1 // pred_fallthru
      _
    // Predicated region
    $region26: #{embed_sentence_forward.2} parent=1 // pred_check
      _
    $region27: #{embed_sentence_forward.2} parent=1 // pred_check_branch
      %42 = sbr.rel (0) target = $region29
    $region28: #{embed_sentence_forward.2} parent=1 // pred_region
      _
    $region29: #{embed_sentence_forward.2} parent=1 // pred_fallthru
      _
    // Predicated region
    $region30: #{embed_sentence_forward.2} parent=1 // pred_check
      _
    $region31: #{embed_sentence_forward.2} parent=1 // pred_check_branch
      %44 = sbr.rel (0) target = $region33
    $region32: #{embed_sentence_forward.2} parent=1 // pred_region
      _
    $region33: #{embed_sentence_forward.2} parent=1 // pred_fallthru
      _
    // Predicated region
    $region34: #{embed_sentence_forward.2} parent=1 // pred_check
      _
    $region35: #{embed_sentence_forward.2} parent=1 // pred_check_branch
      %46 = sbr.rel (0) target = $region37
    $region36: #{embed_sentence_forward.2} parent=1 // pred_region
      _
    $region37: #{embed_sentence_forward.2} parent=1 // pred_fallthru
      _
    // Predicated region
    $region38: #{embed_sentence_forward.2} parent=1 // pred_check
      _
    $region39: #{embed_sentence_forward.2} parent=1 // pred_check_branch
      %48 = sbr.rel (0) target = $region41
    $region40: #{embed_sentence_forward.2} parent=1 // pred_region
      _
    $region41: #{embed_sentence_forward.2} parent=1 // pred_fallthru
      _
    // Predicated region
    $region42: #{embed_sentence_forward.2} parent=1 // pred_check
      _
    $region43: #{embed_sentence_forward.2} parent=1 // pred_check_branch
      %50 = sbr.rel (0) target = $region45
    $region44: #{embed_sentence_forward.2} parent=1 // pred_region
      _
    $region45: #{embed_sentence_forward.2} parent=1 // pred_fallthru
      _
    // Predicated region
    $region46: #{embed_sentence_forward.2} parent=1 // pred_check
      _
    $region47: #{embed_sentence_forward.2} parent=1 // pred_check_branch
      %52 = sbr.rel (0) target = $region49
    $region48: #{embed_sentence_forward.2} parent=1 // pred_region
      _
    $region49: #{embed_sentence_forward.2} parent=1 // pred_fallthru
      _
    %s53 = ssub.s32 0, 0
    %s54 = smul.u32 2, %s53
    %p55 = scmp.lt.s32.totalorder %s54, 1
    %s56 = scalar_select %p55, %s54, 1
    %s57 = smul.addr %s56, 8
    %s58 = scalar_lea.vmem %s1, %s57
    %s59 = ssub.s32 0, 0
    %s60 = smul.u32 2, %s59
    %p61 = scmp.lt.s32.totalorder %s60, 1
    %s62 = scalar_select %p61, %s60, 1
    %s63 = smul.addr %s62, 8
    %s64 = scalar_lea.vmem %s13, %s63
    %s65 = ssub.s32 0, 0
    %s66 = smul.u32 2, %s65
    %p67 = scmp.lt.s32.totalorder %s66, 1
    %s68 = scalar_select %p67, %s66, 1
    %s69 = smul.addr %s68, 8
    %s70 = scalar_lea.vmem %s1, %s69
    %s71 = ssub.s32 0, 0
    %s72 = smul.u32 2, %s71
    %s73 = ssub.s32 0, 0
    %s74 = smul.u32 2, %s73
    %p75 = scmp.lt.s32.totalorder %s74, 1
    %s76 = scalar_select %p75, %s74, 1
    %s77 = smul.addr %s76, 8
    %s78 = scalar_lea.vmem %s13, %s77
    %s79 = ssub.s32 0, 0
    %s80 = smul.u32 2, %s79
    %p81 = scmp.eq.s32.totalorder 0, 0
    // Predicated region
    $region50: #{embed_sentence_forward.2} parent=1 // pred_check
      %p82 = pneg %p81
    $region51: #{embed_sentence_forward.2} parent=1 // pred_check_branch
      %84 = sbr.rel (%p82) target = $region53
    $region52: #{embed_sentence_forward.2} parent=1 // pred_region
      %v85 = vld [vmem:[%s8] sm:$0x3]
      %vm86 = vcmask 254976
      %87 = vst.msk [vmem:[#allocation2] sm:$0x3] %vm86, %v85
      %v88 = vld [vmem:[%s9] sm:$0x3]
      %89 = vst.msk [vmem:[#allocation3] sm:$0x3] %vm86, %v88
      %v90 = vld [vmem:[%s10] sm:$0x3]
      %91 = vst.msk [vmem:[#allocation4] sm:$0x3] %vm86, %v90
      %v92 = vld [vmem:[%s11] sm:$0x3]
      %93 = vst.msk [vmem:[#allocation5] sm:$0x3] %vm86, %v92
      %94 = vst.msk [vmem:[#allocation6] sm:$0x3] %vm86, 0.0
      %95 = vst.msk [vmem:[#allocation7] sm:$0x3] %vm86, 0.0
    $region53: #{embed_sentence_forward.2} parent=1 // pred_fallthru
      _
    %v96 = vld [vmem:[%s0] sm:$0xff]
    %v97 = vld [vmem:[%s0 + $0x8] sm:$0xff]
    %v98 = vld [vmem:[%s2] sm:$0xff]
    %v99 = vld [vmem:[%s2 + $0x8] sm:$0xff]
    %v100 = vld [vmem:[%s6] sm:$0x1]
    %v102 = vlaneseq
    %v103 = vshrl.u32 %v102, 7
    %v104 = vsub.s32 0, %v103
    %v105 = vrot.slane %v100, %v104
    %vm107 = vcmask 130048
    %v109 = vsel %vm107, %v96, 0
    %v112 = vsel %vm107, %v97, 0
    %114 = vmatprep.subr.mxu0 0.0
    %115 = vmatpush1.msra.mxu0 0.0
    %116 = vmatprep.subr.mxu0 0.0
    %117 = vmatpush1.msra.mxu0 0.0
    %118 = vmatprep.subr.mxu0 0.0
    %119 = vmatpush1.msra.mxu0 0.0
    %120 = vmatprep.subr.mxu0 0.0
    %121 = vmatpush1.msra.mxu0 0.0
    %122 = vmatprep.subr.mxu0 0.0
    %123 = vmatpush1.msra.mxu0 0.0
    %124 = vmatprep.subr.mxu0 0.0
    %125 = vmatpush1.msra.mxu0 0.0
    %126 = vmatprep.subr.mxu0 0.0
    %127 = vmatpush1.msra.mxu0 0.0
    %128 = vmatprep.subr.mxu0 0.0
    %129 = vmatpush1.msra.mxu0 0.0
    %130 = vmatprep.subr.mxu0 0.0
    %131 = vmatpush1.msra.mxu0 0.0
    %132 = vmatprep.subr.mxu0 0.0
    %133 = vmatpush1.msra.mxu0 0.0
    %134 = vmatprep.subr.mxu0 0.0
    %135 = vmatpush1.msra.mxu0 0.0
    %136 = vmatprep.subr.mxu0 0.0
    %137 = vmatpush1.msra.mxu0 0.0
    %138 = vmatprep.subr.mxu0 0.0
    %139 = vmatpush1.msra.mxu0 0.0
    %140 = vmatprep.subr.mxu0 0.0
    %141 = vmatpush1.msra.mxu0 0.0
    %142 = vmatprep.subr.mxu0 0.0
    %143 = vmatpush1.msra.mxu0 %v99
    %144 = vmatprep.subr.mxu0 0.0
    %145 = vmatpush1.msra.mxu0 %v98
    %146 = vmatprep.subr.mxu0 0.0
    %147 = vmatpush2.msra.mxu0 0.0
    %148 = vmatprep.subr.mxu0 0.0
    %149 = vmatpush2.msra.mxu0 0.0
    %150 = vmatprep.subr.mxu0 0.0
    %151 = vmatpush2.msra.mxu0 0.0
    %152 = vmatprep.subr.mxu0 0.0
    %153 = vmatpush2.msra.mxu0 0.0
    %154 = vmatprep.subr.mxu0 0.0
    %155 = vmatpush2.msra.mxu0 0.0
    %156 = vmatprep.subr.mxu0 0.0
    %157 = vmatpush2.msra.mxu0 0.0
    %158 = vmatprep.subr.mxu0 0.0
    %159 = vmatpush2.msra.mxu0 0.0
    %160 = vmatprep.subr.mxu0 0.0
    %161 = vmatpush2.msra.mxu0 0.0
    %162 = vmatprep.subr.mxu0 0.0
    %163 = vmatpush2.msra.mxu0 0.0
    %164 = vmatprep.subr.mxu0 0.0
    %165 = vmatpush2.msra.mxu0 0.0
    %166 = vmatprep.subr.mxu0 0.0
    %167 = vmatpush2.msra.mxu0 0.0
    %168 = vmatprep.subr.mxu0 0.0
    %169 = vmatpush2.msra.mxu0 0.0
    %170 = vmatprep.subr.mxu0 0.0
    %171 = vmatpush2.msra.mxu0 0.0
    %172 = vmatprep.subr.mxu0 0.0
    %173 = vmatpush2.msra.mxu0 0.0
    %174 = vmatprep.subr.mxu0 0.0
    %175 = vmatpush2.msra.mxu0 0.0
    %176 = vmatprep.subr.mxu0 0.0
    %177 = vmatpush2.msra.mxu0 0.0
    %178 = vmatprep.mubr.f32.mxu0 0.0
    %179 = vmatmul.mubr.f32.gmra.mxu0 %v109
    %v180 = vpop.f32.mrf.mxu0
    %v181 = vadd.f32 %v105, %v180
    %v182 = vpop.f32.mrf.mxu0
    %183 = vmatprep.mubr.f32.mxu0 0.0
    %184 = vmatmul.mubr.f32.gmra.mxu0 %v112
    %v185 = vpop.f32.mrf.mxu0
    %v186 = vadd.f32 %v105, %v185
    %v187 = vpop.f32.mrf.mxu0
    %188 = vdwg.mxu0
    %v189 = vld [vmem:[%s70] sm:$0xff]
    %v190 = vld [vmem:[%s70 + $0x8] sm:$0xff]
    %v191 = vld [vmem:[%s3] sm:$0xff]
    %v192 = vld [vmem:[%s3 + $0x8] sm:$0xff]
    %v193 = vld [vmem:[%s7] sm:$0x1]
    %v195 = vlaneseq
    %v196 = vshrl.u32 %v195, 7
    %v197 = vsub.s32 0, %v196
    %v198 = vrot.slane %v193, %v197
    %v201 = vsel %vm107, %v189, 0
    %v204 = vsel %vm107, %v190, 0
    %206 = vmatprep.subr.mxu0 0.0
    %207 = vmatpush1.msra.mxu0 0.0
    %208 = vmatprep.subr.mxu0 0.0
    %209 = vmatpush1.msra.mxu0 0.0
    %210 = vmatprep.subr.mxu0 0.0
    %211 = vmatpush1.msra.mxu0 0.0
    %212 = vmatprep.subr.mxu0 0.0
    %213 = vmatpush1.msra.mxu0 0.0
    %214 = vmatprep.subr.mxu0 0.0
    %215 = vmatpush1.msra.mxu0 0.0
    %216 = vmatprep.subr.mxu0 0.0
    %217 = vmatpush1.msra.mxu0 0.0
    %218 = vmatprep.subr.mxu0 0.0
    %219 = vmatpush1.msra.mxu0 0.0
    %220 = vmatprep.subr.mxu0 0.0
    %221 = vmatpush1.msra.mxu0 0.0
    %222 = vmatprep.subr.mxu0 0.0
    %223 = vmatpush1.msra.mxu0 0.0
    %224 = vmatprep.subr.mxu0 0.0
    %225 = vmatpush1.msra.mxu0 0.0
    %226 = vmatprep.subr.mxu0 0.0
    %227 = vmatpush1.msra.mxu0 0.0
    %228 = vmatprep.subr.mxu0 0.0
    %229 = vmatpush1.msra.mxu0 0.0
    %230 = vmatprep.subr.mxu0 0.0
    %231 = vmatpush1.msra.mxu0 0.0
    %232 = vmatprep.subr.mxu0 0.0
    %233 = vmatpush1.msra.mxu0 0.0
    %234 = vmatprep.subr.mxu0 0.0
    %235 = vmatpush1.msra.mxu0 %v192
    %236 = vmatprep.subr.mxu0 0.0
    %237 = vmatpush1.msra.mxu0 %v191
    %238 = vmatprep.subr.mxu0 0.0
    %239 = vmatpush2.msra.mxu0 0.0
    %240 = vmatprep.subr.mxu0 0.0
    %241 = vmatpush2.msra.mxu0 0.0
    %242 = vmatprep.subr.mxu0 0.0
    %243 = vmatpush2.msra.mxu0 0.0
    %244 = vmatprep.subr.mxu0 0.0
    %245 = vmatpush2.msra.mxu0 0.0
    %246 = vmatprep.subr.mxu0 0.0
    %247 = vmatpush2.msra.mxu0 0.0
    %248 = vmatprep.subr.mxu0 0.0
    %249 = vmatpush2.msra.mxu0 0.0
    %250 = vmatprep.subr.mxu0 0.0
    %251 = vmatpush2.msra.mxu0 0.0
    %252 = vmatprep.subr.mxu0 0.0
    %253 = vmatpush2.msra.mxu0 0.0
    %254 = vmatprep.subr.mxu0 0.0
    %255 = vmatpush2.msra.mxu0 0.0
    %256 = vmatprep.subr.mxu0 0.0
    %257 = vmatpush2.msra.mxu0 0.0
    %258 = vmatprep.subr.mxu0 0.0
    %259 = vmatpush2.msra.mxu0 0.0
    %260 = vmatprep.subr.mxu0 0.0
    %261 = vmatpush2.msra.mxu0 0.0
    %262 = vmatprep.subr.mxu0 0.0
    %263 = vmatpush2.msra.mxu0 0.0
    %264 = vmatprep.subr.mxu0 0.0
    %265 = vmatpush2.msra.mxu0 0.0
    %266 = vmatprep.subr.mxu0 0.0
    %267 = vmatpush2.msra.mxu0 0.0
    %268 = vmatprep.subr.mxu0 0.0
    %269 = vmatpush2.msra.mxu0 0.0
    %270 = vmatprep.mubr.f32.mxu0 0.0
    %271 = vmatmul.mubr.f32.gmra.mxu0 %v201
    %v272 = vpop.f32.mrf.mxu0
    %v273 = vadd.f32 %v198, %v272
    %v274 = vpop.f32.mrf.mxu0
    %275 = vmatprep.mubr.f32.mxu0 0.0
    %276 = vmatmul.mubr.f32.gmra.mxu0 %v204
    %v277 = vpop.f32.mrf.mxu0
    %v278 = vadd.f32 %v198, %v277
    %v279 = vpop.f32.mrf.mxu0
    %280 = vdwg.mxu0
    %v281 = vld [vmem:[#allocation2] sm:$0x3]
    %v282 = vld [vmem:[%s4] sm:$0xff]
    %v283 = vld [vmem:[%s4 + $0x8] sm:$0xff]
    %v284 = vld [vmem:[%s4 + $0x10] sm:$0xff]
    %v285 = vld [vmem:[%s4 + $0x18] sm:$0xff]
    %vm286 = vcmask 261120
    %v288 = vsel %vm286, %v281, 0
    %290 = vmatprep.subr.mxu0 0.0
    %291 = vmatpush1.msra.mxu0 0.0
    %292 = vmatprep.subr.mxu0 0.0
    %293 = vmatpush1.msra.mxu0 0.0
    %294 = vmatprep.subr.mxu0 0.0
    %295 = vmatpush1.msra.mxu0 0.0
    %296 = vmatprep.subr.mxu0 0.0
    %297 = vmatpush1.msra.mxu0 0.0
    %298 = vmatprep.subr.mxu0 0.0
    %299 = vmatpush1.msra.mxu0 0.0
    %300 = vmatprep.subr.mxu0 0.0
    %301 = vmatpush1.msra.mxu0 0.0
    %302 = vmatprep.subr.mxu0 0.0
    %303 = vmatpush1.msra.mxu0 0.0
    %304 = vmatprep.subr.mxu0 0.0
    %305 = vmatpush1.msra.mxu0 0.0
    %306 = vmatprep.subr.mxu0 0.0
    %307 = vmatpush1.msra.mxu0 0.0
    %308 = vmatprep.subr.mxu0 0.0
    %309 = vmatpush1.msra.mxu0 0.0
    %310 = vmatprep.subr.mxu0 0.0
    %311 = vmatpush1.msra.mxu0 0.0
    %312 = vmatprep.subr.mxu0 0.0
    %313 = vmatpush1.msra.mxu0 0.0
    %314 = vmatprep.subr.mxu0 0.0
    %315 = vmatpush1.msra.mxu0 %v285
    %316 = vmatprep.subr.mxu0 0.0
    %317 = vmatpush1.msra.mxu0 %v284
    %318 = vmatprep.subr.mxu0 0.0
    %319 = vmatpush1.msra.mxu0 %v283
    %320 = vmatprep.subr.mxu0 0.0
    %321 = vmatpush1.msra.mxu0 %v282
    %322 = vmatprep.subr.mxu0 0.0
    %323 = vmatpush2.msra.mxu0 0.0
    %324 = vmatprep.subr.mxu0 0.0
    %325 = vmatpush2.msra.mxu0 0.0
    %326 = vmatprep.subr.mxu0 0.0
    %327 = vmatpush2.msra.mxu0 0.0
    %328 = vmatprep.subr.mxu0 0.0
    %329 = vmatpush2.msra.mxu0 0.0
    %330 = vmatprep.subr.mxu0 0.0
    %331 = vmatpush2.msra.mxu0 0.0
    %332 = vmatprep.subr.mxu0 0.0
    %333 = vmatpush2.msra.mxu0 0.0
    %334 = vmatprep.subr.mxu0 0.0
    %335 = vmatpush2.msra.mxu0 0.0
    %336 = vmatprep.subr.mxu0 0.0
    %337 = vmatpush2.msra.mxu0 0.0
    %338 = vmatprep.subr.mxu0 0.0
    %339 = vmatpush2.msra.mxu0 0.0
    %340 = vmatprep.subr.mxu0 0.0
    %341 = vmatpush2.msra.mxu0 0.0
    %342 = vmatprep.subr.mxu0 0.0
    %343 = vmatpush2.msra.mxu0 0.0
    %344 = vmatprep.subr.mxu0 0.0
    %345 = vmatpush2.msra.mxu0 0.0
    %346 = vmatprep.subr.mxu0 0.0
    %347 = vmatpush2.msra.mxu0 0.0
    %348 = vmatprep.subr.mxu0 0.0
    %349 = vmatpush2.msra.mxu0 0.0
    %350 = vmatprep.subr.mxu0 0.0
    %351 = vmatpush2.msra.mxu0 0.0
    %352 = vmatprep.subr.mxu0 0.0
    %353 = vmatpush2.msra.mxu0 0.0
    %354 = vmatprep.mubr.f32.mxu0 0.0
    %355 = vmatmul.mubr.f32.gmra.mxu0 %v288
    %v356 = vpop.f32.mrf.mxu0
    %v357 = vadd.f32 0.0, %v356
    %v358 = vpop.f32.mrf.mxu0
    %359 = vdwg.mxu0
    %v360 = vadd.f32 %v181, %v357
    %v361 = vld [vmem:[#allocation3] sm:$0x3]
    %v362 = vxor.u32 %v360, 2147483648
    %v363 = vmul.f32 %v362, 1.442695
    %v364 = vpow.pop %v363
    %v365 = vadd.f32 %v364, 1.0
    %v366 = vrcp.pop %v365
    %v367 = vmul.f32 1.0, %v366
    %v368 = vtanh.pop %v360
    %370 = vrot.lane.b32.xlu0 %v361, 32
    %v371 = vpop.permute.xlu0 %370
    %v373 = vmul.f32 %v367, %v371
    %375 = vrot.lane.b32.xlu0 %v368, 64
    %v376 = vpop.permute.xlu0 %375
    %v378 = vmul.f32 %v367, %v376
    %380 = vrot.lane.b32.xlu0 %v378, 32
    %v381 = vpop.permute.xlu0 %380
    %v383 = vadd.f32 %v373, %v381
    %v384 = vtanh.pop %v383
    %386 = vrot.lane.b32.xlu0 %v384, 64
    %v387 = vpop.permute.xlu0 %386
    %v389 = vmul.f32 %v367, %v387
    %391 = vrot.lane.b32.xlu0 %v389, 32
    %v392 = vpop.permute.xlu0 %391
    %vm394 = vcmask 254976
    %395 = vst.msk [vmem:[#allocation2] sm:$0x3] %vm394, %v392
    %397 = vrot.lane.b32.xlu0 %v383, 96
    %v398 = vpop.permute.xlu0 %397
    %400 = vst.msk [vmem:[#allocation3] sm:$0x3] %vm394, %v398
    %401 = vst.msk [vmem:[%s12] sm:$0x3] %vm394, %v392
    %v402 = vld [vmem:[#allocation6] sm:$0x3]
    %v403 = vadd.f32 %v402, %v392
    %404 = vst.msk [vmem:[#allocation6] sm:$0x3] %vm394, %v403
    %v405 = vld [vmem:[#allocation4] sm:$0x3]
    %v406 = vld [vmem:[%s5] sm:$0xff]
    %v407 = vld [vmem:[%s5 + $0x8] sm:$0xff]
    %v408 = vld [vmem:[%s5 + $0x10] sm:$0xff]
    %v409 = vld [vmem:[%s5 + $0x18] sm:$0xff]
    %v411 = vsel %vm286, %v405, 0
    %413 = vmatprep.subr.mxu0 0.0
    %414 = vmatpush1.msra.mxu0 0.0
    %415 = vmatprep.subr.mxu0 0.0
    %416 = vmatpush1.msra.mxu0 0.0
    %417 = vmatprep.subr.mxu0 0.0
    %418 = vmatpush1.msra.mxu0 0.0
    %419 = vmatprep.subr.mxu0 0.0
    %420 = vmatpush1.msra.mxu0 0.0
    %421 = vmatprep.subr.mxu0 0.0
    %422 = vmatpush1.msra.mxu0 0.0
    %423 = vmatprep.subr.mxu0 0.0
    %424 = vmatpush1.msra.mxu0 0.0
    %425 = vmatprep.subr.mxu0 0.0
    %426 = vmatpush1.msra.mxu0 0.0
    %427 = vmatprep.subr.mxu0 0.0
    %428 = vmatpush1.msra.mxu0 0.0
    %429 = vmatprep.subr.mxu0 0.0
    %430 = vmatpush1.msra.mxu0 0.0
    %431 = vmatprep.subr.mxu0 0.0
    %432 = vmatpush1.msra.mxu0 0.0
    %433 = vmatprep.subr.mxu0 0.0
    %434 = vmatpush1.msra.mxu0 0.0
    %435 = vmatprep.subr.mxu0 0.0
    %436 = vmatpush1.msra.mxu0 0.0
    %437 = vmatprep.subr.mxu0 0.0
    %438 = vmatpush1.msra.mxu0 %v409
    %439 = vmatprep.subr.mxu0 0.0
    %440 = vmatpush1.msra.mxu0 %v408
    %441 = vmatprep.subr.mxu0 0.0
    %442 = vmatpush1.msra.mxu0 %v407
    %443 = vmatprep.subr.mxu0 0.0
    %444 = vmatpush1.msra.mxu0 %v406
    %445 = vmatprep.subr.mxu0 0.0
    %446 = vmatpush2.msra.mxu0 0.0
    %447 = vmatprep.subr.mxu0 0.0
    %448 = vmatpush2.msra.mxu0 0.0
    %449 = vmatprep.subr.mxu0 0.0
    %450 = vmatpush2.msra.mxu0 0.0
    %451 = vmatprep.subr.mxu0 0.0
    %452 = vmatpush2.msra.mxu0 0.0
    %453 = vmatprep.subr.mxu0 0.0
    %454 = vmatpush2.msra.mxu0 0.0
    %455 = vmatprep.subr.mxu0 0.0
    %456 = vmatpush2.msra.mxu0 0.0
    %457 = vmatprep.subr.mxu0 0.0
    %458 = vmatpush2.msra.mxu0 0.0
    %459 = vmatprep.subr.mxu0 0.0
    %460 = vmatpush2.msra.mxu0 0.0
    %461 = vmatprep.subr.mxu0 0.0
    %462 = vmatpush2.msra.mxu0 0.0
    %463 = vmatprep.subr.mxu0 0.0
    %464 = vmatpush2.msra.mxu0 0.0
    %465 = vmatprep.subr.mxu0 0.0
    %466 = vmatpush2.msra.mxu0 0.0
    %467 = vmatprep.subr.mxu0 0.0
    %468 = vmatpush2.msra.mxu0 0.0
    %469 = vmatprep.subr.mxu0 0.0
    %470 = vmatpush2.msra.mxu0 0.0
    %471 = vmatprep.subr.mxu0 0.0
    %472 = vmatpush2.msra.mxu0 0.0
    %473 = vmatprep.subr.mxu0 0.0
    %474 = vmatpush2.msra.mxu0 0.0
    %475 = vmatprep.subr.mxu0 0.0
    %476 = vmatpush2.msra.mxu0 0.0
    %477 = vmatprep.mubr.f32.mxu0 0.0
    %478 = vmatmul.mubr.f32.gmra.mxu0 %v411
    %v479 = vpop.f32.mrf.mxu0
    %v480 = vadd.f32 0.0, %v479
    %v481 = vpop.f32.mrf.mxu0
    %482 = vdwg.mxu0
    %v484 = vrot.slane %v480, 2
    %v486 = vadd.f32 %v278, %v484
    %v487 = vld [vmem:[#allocation5] sm:$0x3]
    %v488 = vxor.u32 %v486, 2147483648
    %v489 = vmul.f32 %v488, 1.442695
    %v490 = vpow.pop %v489
    %v491 = vadd.f32 %v490, 1.0
    %v492 = vrcp.pop %v491
    %v493 = vmul.f32 1.0, %v492
    %v494 = vtanh.pop %v486
    %v496 = vrot.slane %v487, 2
    %497 = vrot.lane.b32.xlu0 %v496, 32
    %v498 = vpop.permute.xlu0 %497
    %v500 = vmul.f32 %v493, %v498
    %502 = vrot.lane.b32.xlu0 %v494, 64
    %v503 = vpop.permute.xlu0 %502
    %v505 = vmul.f32 %v493, %v503
    %507 = vrot.lane.b32.xlu0 %v505, 32
    %v508 = vpop.permute.xlu0 %507
    %v510 = vadd.f32 %v500, %v508
    %v511 = vtanh.pop %v510
    %513 = vrot.lane.b32.xlu0 %v511, 64
    %v514 = vpop.permute.xlu0 %513
    %v516 = vmul.f32 %v493, %v514
    %518 = vrot.lane.b32.xlu0 %v516, 32
    %v519 = vpop.permute.xlu0 %518
    %vm521 = vcmask 261126
    %522 = vst.msk [vmem:[#allocation4 - $0x6] sm:$0xc0] %vm521, %v519
    %524 = vrot.lane.b32.xlu0 %v510, 96
    %v525 = vpop.permute.xlu0 %524
    %527 = vst.msk [vmem:[#allocation5 - $0x6] sm:$0xc0] %vm521, %v525
    %528 = vst.msk [vmem:[%s78 + $0x8] sm:$0xc0] %vm521, %v519
    %v529 = vld [vmem:[#allocation7] sm:$0x3]
    %v530 = vrot.slane %v516, 6
    %531 = vrot.lane.b32.xlu0 %v530, 32
    %v532 = vpop.permute.xlu0 %531
    %v534 = vadd.f32 %v529, %v532
    %535 = vst.msk [vmem:[#allocation7] sm:$0x3] %vm394, %v534
    %v536 = vld [vmem:[#allocation2] sm:$0x3]
    %v537 = vld [vmem:[%s4] sm:$0xff]
    %v538 = vld [vmem:[%s4 + $0x8] sm:$0xff]
    %v539 = vld [vmem:[%s4 + $0x10] sm:$0xff]
    %v540 = vld [vmem:[%s4 + $0x18] sm:$0xff]
    %v542 = vsel %vm286, %v536, 0
    %544 = vmatprep.subr.mxu0 0.0
    %545 = vmatpush1.msra.mxu0 0.0
    %546 = vmatprep.subr.mxu0 0.0
    %547 = vmatpush1.msra.mxu0 0.0
    %548 = vmatprep.subr.mxu0 0.0
    %549 = vmatpush1.msra.mxu0 0.0
    %550 = vmatprep.subr.mxu0 0.0
    %551 = vmatpush1.msra.mxu0 0.0
    %552 = vmatprep.subr.mxu0 0.0
    %553 = vmatpush1.msra.mxu0 0.0
    %554 = vmatprep.subr.mxu0 0.0
    %555 = vmatpush1.msra.mxu0 0.0
    %556 = vmatprep.subr.mxu0 0.0
    %557 = vmatpush1.msra.mxu0 0.0
    %558 = vmatprep.subr.mxu0 0.0
    %559 = vmatpush1.msra.mxu0 0.0
    %560 = vmatprep.subr.mxu0 0.0
    %561 = vmatpush1.msra.mxu0 0.0
    %562 = vmatprep.subr.mxu0 0.0
    %563 = vmatpush1.msra.mxu0 0.0
    %564 = vmatprep.subr.mxu0 0.0
    %565 = vmatpush1.msra.mxu0 0.0
    %566 = vmatprep.subr.mxu0 0.0
    %567 = vmatpush1.msra.mxu0 0.0
    %568 = vmatprep.subr.mxu0 0.0
    %569 = vmatpush1.msra.mxu0 %v540
    %570 = vmatprep.subr.mxu0 0.0
    %571 = vmatpush1.msra.mxu0 %v539
    %572 = vmatprep.subr.mxu0 0.0
    %573 = vmatpush1.msra.mxu0 %v538
    %574 = vmatprep.subr.mxu0 0.0
    %575 = vmatpush1.msra.mxu0 %v537
    %576 = vmatprep.subr.mxu0 0.0
    %577 = vmatpush2.msra.mxu0 0.0
    %578 = vmatprep.subr.mxu0 0.0
    %579 = vmatpush2.msra.mxu0 0.0
    %580 = vmatprep.subr.mxu0 0.0
    %581 = vmatpush2.msra.mxu0 0.0
    %582 = vmatprep.subr.mxu0 0.0
    %583 = vmatpush2.msra.mxu0 0.0
    %584 = vmatprep.subr.mxu0 0.0
    %585 = vmatpush2.msra.mxu0 0.0
    %586 = vmatprep.subr.mxu0 0.0
    %587 = vmatpush2.msra.mxu0 0.0
    %588 = vmatprep.subr.mxu0 0.0
    %589 = vmatpush2.msra.mxu0 0.0
    %590 = vmatprep.subr.mxu0 0.0
    %591 = vmatpush2.msra.mxu0 0.0
    %592 = vmatprep.subr.mxu0 0.0
    %593 = vmatpush2.msra.mxu0 0.0
    %594 = vmatprep.subr.mxu0 0.0
    %595 = vmatpush2.msra.mxu0 0.0
    %596 = vmatprep.subr.mxu0 0.0
    %597 = vmatpush2.msra.mxu0 0.0
    %598 = vmatprep.subr.mxu0 0.0
    %599 = vmatpush2.msra.mxu0 0.0
    %600 = vmatprep.subr.mxu0 0.0
    %601 = vmatpush2.msra.mxu0 0.0
    %602 = vmatprep.subr.mxu0 0.0
    %603 = vmatpush2.msra.mxu0 0.0
    %604 = vmatprep.subr.mxu0 0.0
    %605 = vmatpush2.msra.mxu0 0.0
    %606 = vmatprep.subr.mxu0 0.0
    %607 = vmatpush2.msra.mxu0 0.0
    %608 = vmatprep.mubr.f32.mxu0 0.0
    %609 = vmatmul.mubr.f32.gmra.mxu0 %v542
    %v610 = vpop.f32.mrf.mxu0
    %v611 = vadd.f32 0.0, %v610
    %v612 = vpop.f32.mrf.mxu0
    %613 = vdwg.mxu0
    %v615 = vrot.slane %v611, 6
    %v617 = vadd.f32 %v181, %v615
    %v618 = vld [vmem:[#allocation3] sm:$0x3]
    %v619 = vxor.u32 %v617, 2147483648
    %v620 = vmul.f32 %v619, 1.442695
    %v621 = vpow.pop %v620
    %v622 = vadd.f32 %v621, 1.0
    %v623 = vrcp.pop %v622
    %v624 = vmul.f32 1.0, %v623
    %v625 = vtanh.pop %v617
    %v627 = vrot.slane %v618, 6
    %628 = vrot.lane.b32.xlu0 %v627, 32
    %v629 = vpop.permute.xlu0 %628
    %v631 = vmul.f32 %v624, %v629
    %633 = vrot.lane.b32.xlu0 %v625, 64
    %v634 = vpop.permute.xlu0 %633
    %v636 = vmul.f32 %v624, %v634
    %638 = vrot.lane.b32.xlu0 %v636, 32
    %v639 = vpop.permute.xlu0 %638
    %v641 = vadd.f32 %v631, %v639
    %v642 = vtanh.pop %v641
    %644 = vrot.lane.b32.xlu0 %v642, 64
    %v645 = vpop.permute.xlu0 %644
    %v647 = vmul.f32 %v624, %v645
    %649 = vrot.lane.b32.xlu0 %v647, 32
    %v650 = vpop.permute.xlu0 %649
    %vm652 = vcmask 257026
    %653 = vst.msk [vmem:[#allocation2 - $0x2] sm:$0xc] %vm652, %v650
    %655 = vrot.lane.b32.xlu0 %v641, 96
    %v656 = vpop.permute.xlu0 %655
    %658 = vst.msk [vmem:[#allocation3 - $0x2] sm:$0xc] %vm652, %v656
    %659 = vst.msk [vmem:[%s12] sm:$0xc] %vm652, %v650
    %v660 = vld [vmem:[#allocation6] sm:$0x3]
    %v661 = vrot.slane %v647, 2
    %662 = vrot.lane.b32.xlu0 %v661, 32
    %v663 = vpop.permute.xlu0 %662
    %v665 = vadd.f32 %v660, %v663
    %666 = vst.msk [vmem:[#allocation6] sm:$0x3] %vm394, %v665
    %v667 = vld [vmem:[#allocation4] sm:$0x3]
    %v668 = vld [vmem:[%s5] sm:$0xff]
    %v669 = vld [vmem:[%s5 + $0x8] sm:$0xff]
    %v670 = vld [vmem:[%s5 + $0x10] sm:$0xff]
    %v671 = vld [vmem:[%s5 + $0x18] sm:$0xff]
    %v673 = vsel %vm286, %v667, 0
    %675 = vmatprep.subr.mxu0 0.0
    %676 = vmatpush1.msra.mxu0 0.0
    %677 = vmatprep.subr.mxu0 0.0
    %678 = vmatpush1.msra.mxu0 0.0
    %679 = vmatprep.subr.mxu0 0.0
    %680 = vmatpush1.msra.mxu0 0.0
    %681 = vmatprep.subr.mxu0 0.0
    %682 = vmatpush1.msra.mxu0 0.0
    %683 = vmatprep.subr.mxu0 0.0
    %684 = vmatpush1.msra.mxu0 0.0
    %685 = vmatprep.subr.mxu0 0.0
    %686 = vmatpush1.msra.mxu0 0.0
    %687 = vmatprep.subr.mxu0 0.0
    %688 = vmatpush1.msra.mxu0 0.0
    %689 = vmatprep.subr.mxu0 0.0
    %690 = vmatpush1.msra.mxu0 0.0
    %691 = vmatprep.subr.mxu0 0.0
    %692 = vmatpush1.msra.mxu0 0.0
    %693 = vmatprep.subr.mxu0 0.0
    %694 = vmatpush1.msra.mxu0 0.0
    %695 = vmatprep.subr.mxu0 0.0
    %696 = vmatpush1.msra.mxu0 0.0
    %697 = vmatprep.subr.mxu0 0.0
    %698 = vmatpush1.msra.mxu0 0.0
    %699 = vmatprep.subr.mxu0 0.0
    %700 = vmatpush1.msra.mxu0 %v671
    %701 = vmatprep.subr.mxu0 0.0
    %702 = vmatpush1.msra.mxu0 %v670
    %703 = vmatprep.subr.mxu0 0.0
    %704 = vmatpush1.msra.mxu0 %v669
    %705 = vmatprep.subr.mxu0 0.0
    %706 = vmatpush1.msra.mxu0 %v668
    %707 = vmatprep.subr.mxu0 0.0
    %708 = vmatpush2.msra.mxu0 0.0
    %709 = vmatprep.subr.mxu0 0.0
    %710 = vmatpush2.msra.mxu0 0.0
    %711 = vmatprep.subr.mxu0 0.0
    %712 = vmatpush2.msra.mxu0 0.0
    %713 = vmatprep.subr.mxu0 0.0
    %714 = vmatpush2.msra.mxu0 0.0
    %715 = vmatprep.subr.mxu0 0.0
    %716 = vmatpush2.msra.mxu0 0.0
    %717 = vmatprep.subr.mxu0 0.0
    %718 = vmatpush2.msra.mxu0 0.0
    %719 = vmatprep.subr.mxu0 0.0
    %720 = vmatpush2.msra.mxu0 0.0
    %721 = vmatprep.subr.mxu0 0.0
    %722 = vmatpush2.msra.mxu0 0.0
    %723 = vmatprep.subr.mxu0 0.0
    %724 = vmatpush2.msra.mxu0 0.0
    %725 = vmatprep.subr.mxu0 0.0
    %726 = vmatpush2.msra.mxu0 0.0
    %727 = vmatprep.subr.mxu0 0.0
    %728 = vmatpush2.msra.mxu0 0.0
    %729 = vmatprep.subr.mxu0 0.0
    %730 = vmatpush2.msra.mxu0 0.0
    %731 = vmatprep.subr.mxu0 0.0
    %732 = vmatpush2.msra.mxu0 0.0
    %733 = vmatprep.subr.mxu0 0.0
    %734 = vmatpush2.msra.mxu0 0.0
    %735 = vmatprep.subr.mxu0 0.0
    %736 = vmatpush2.msra.mxu0 0.0
    %737 = vmatprep.subr.mxu0 0.0
    %738 = vmatpush2.msra.mxu0 0.0
    %739 = vmatprep.mubr.f32.mxu0 0.0
    %740 = vmatmul.mubr.f32.gmra.mxu0 %v673
    %v741 = vpop.f32.mrf.mxu0
    %v742 = vadd.f32 0.0, %v741
    %v743 = vpop.f32.mrf.mxu0
    %744 = vdwg.mxu0
    %v746 = vrot.slane %v742, 4
    %v748 = vadd.f32 %v278, %v746
    %v749 = vld [vmem:[#allocation5] sm:$0x3]
    %v750 = vxor.u32 %v748, 2147483648
    %v751 = vmul.f32 %v750, 1.442695
    %v752 = vpow.pop %v751
    %v753 = vadd.f32 %v752, 1.0
    %v754 = vrcp.pop %v753
    %v755 = vmul.f32 1.0, %v754
    %v756 = vtanh.pop %v748
    %v758 = vrot.slane %v749, 4
    %759 = vrot.lane.b32.xlu0 %v758, 32
    %v760 = vpop.permute.xlu0 %759
    %v762 = vmul.f32 %v755, %v760
    %764 = vrot.lane.b32.xlu0 %v756, 64
    %v765 = vpop.permute.xlu0 %764
    %v767 = vmul.f32 %v755, %v765
    %769 = vrot.lane.b32.xlu0 %v767, 32
    %v770 = vpop.permute.xlu0 %769
    %v772 = vadd.f32 %v762, %v770
    %v773 = vtanh.pop %v772
    %775 = vrot.lane.b32.xlu0 %v773, 64
    %v776 = vpop.permute.xlu0 %775
    %v778 = vmul.f32 %v755, %v776
    %780 = vrot.lane.b32.xlu0 %v778, 32
    %v781 = vpop.permute.xlu0 %780
    %vm783 = vcmask 259076
    %784 = vst.msk [vmem:[#allocation4 - $0x4] sm:$0x30] %vm783, %v781
    %786 = vrot.lane.b32.xlu0 %v772, 96
    %v787 = vpop.permute.xlu0 %786
    %789 = vst.msk [vmem:[#allocation5 - $0x4] sm:$0x30] %vm783, %v787
    %790 = vst.msk [vmem:[%s78 + $0x8] sm:$0x30] %vm783, %v781
    %v791 = vld [vmem:[#allocation7] sm:$0x3]
    %v792 = vrot.slane %v778, 4
    %793 = vrot.lane.b32.xlu0 %v792, 32
    %v794 = vpop.permute.xlu0 %793
    %v796 = vadd.f32 %v791, %v794
    %797 = vst.msk [vmem:[#allocation7] sm:$0x3] %vm394, %v796
    %v798 = vld [vmem:[#allocation2] sm:$0x3]
    %v799 = vld [vmem:[%s4] sm:$0xff]
    %v800 = vld [vmem:[%s4 + $0x8] sm:$0xff]
    %v801 = vld [vmem:[%s4 + $0x10] sm:$0xff]
    %v802 = vld [vmem:[%s4 + $0x18] sm:$0xff]
    %v804 = vsel %vm286, %v798, 0
    %806 = vmatprep.subr.mxu0 0.0
    %807 = vmatpush1.msra.mxu0 0.0
    %808 = vmatprep.subr.mxu0 0.0
    %809 = vmatpush1.msra.mxu0 0.0
    %810 = vmatprep.subr.mxu0 0.0
    %811 = vmatpush1.msra.mxu0 0.0
    %812 = vmatprep.subr.mxu0 0.0
    %813 = vmatpush1.msra.mxu0 0.0
    %814 = vmatprep.subr.mxu0 0.0
    %815 = vmatpush1.msra.mxu0 0.0
    %816 = vmatprep.subr.mxu0 0.0
    %817 = vmatpush1.msra.mxu0 0.0
    %818 = vmatprep.subr.mxu0 0.0
    %819 = vmatpush1.msra.mxu0 0.0
    %820 = vmatprep.subr.mxu0 0.0
    %821 = vmatpush1.msra.mxu0 0.0
    %822 = vmatprep.subr.mxu0 0.0
    %823 = vmatpush1.msra.mxu0 0.0
    %824 = vmatprep.subr.mxu0 0.0
    %825 = vmatpush1.msra.mxu0 0.0
    %826 = vmatprep.subr.mxu0 0.0
    %827 = vmatpush1.msra.mxu0 0.0
    %828 = vmatprep.subr.mxu0 0.0
    %829 = vmatpush1.msra.mxu0 0.0
    %830 = vmatprep.subr.mxu0 0.0
    %831 = vmatpush1.msra.mxu0 %v802
    %832 = vmatprep.subr.mxu0 0.0
    %833 = vmatpush1.msra.mxu0 %v801
    %834 = vmatprep.subr.mxu0 0.0
    %835 = vmatpush1.msra.mxu0 %v800
    %836 = vmatprep.subr.mxu0 0.0
    %837 = vmatpush1.msra.mxu0 %v799
    %838 = vmatprep.subr.mxu0 0.0
    %839 = vmatpush2.msra.mxu0 0.0
    %840 = vmatprep.subr.mxu0 0.0
    %841 = vmatpush2.msra.mxu0 0.0
    %842 = vmatprep.subr.mxu0 0.0
    %843 = vmatpush2.msra.mxu0 0.0
    %844 = vmatprep.subr.mxu0 0.0
    %845 = vmatpush2.msra.mxu0 0.0
    %846 = vmatprep.subr.mxu0 0.0
    %847 = vmatpush2.msra.mxu0 0.0
    %848 = vmatprep.subr.mxu0 0.0
    %849 = vmatpush2.msra.mxu0 0.0
    %850 = vmatprep.subr.mxu0 0.0
    %851 = vmatpush2.msra.mxu0 0.0
    %852 = vmatprep.subr.mxu0 0.0
    %853 = vmatpush2.msra.mxu0 0.0
    %854 = vmatprep.subr.mxu0 0.0
    %855 = vmatpush2.msra.mxu0 0.0
    %856 = vmatprep.subr.mxu0 0.0
    %857 = vmatpush2.msra.mxu0 0.0
    %858 = vmatprep.subr.mxu0 0.0
    %859 = vmatpush2.msra.mxu0 0.0
    %860 = vmatprep.subr.mxu0 0.0
    %861 = vmatpush2.msra.mxu0 0.0
    %862 = vmatprep.subr.mxu0 0.0
    %863 = vmatpush2.msra.mxu0 0.0
    %864 = vmatprep.subr.mxu0 0.0
    %865 = vmatpush2.msra.mxu0 0.0
    %866 = vmatprep.subr.mxu0 0.0
    %867 = vmatpush2.msra.mxu0 0.0
    %868 = vmatprep.subr.mxu0 0.0
    %869 = vmatpush2.msra.mxu0 0.0
    %870 = vmatprep.mubr.f32.mxu0 0.0
    %871 = vmatmul.mubr.f32.gmra.mxu0 %v804
    %v872 = vpop.f32.mrf.mxu0
    %v873 = vadd.f32 0.0, %v872
    %v874 = vpop.f32.mrf.mxu0
    %875 = vdwg.mxu0
    %v877 = vrot.slane %v873, 4
    %v879 = vadd.f32 %v181, %v877
    %v880 = vld [vmem:[#allocation3] sm:$0x3]
    %v881 = vxor.u32 %v879, 2147483648
    %v882 = vmul.f32 %v881, 1.442695
    %v883 = vpow.pop %v882
    %v884 = vadd.f32 %v883, 1.0
    %v885 = vrcp.pop %v884
    %v886 = vmul.f32 1.0, %v885
    %v887 = vtanh.pop %v879
    %v889 = vrot.slane %v880, 4
    %890 = vrot.lane.b32.xlu0 %v889, 32
    %v891 = vpop.permute.xlu0 %890
    %v893 = vmul.f32 %v886, %v891
    %895 = vrot.lane.b32.xlu0 %v887, 64
    %v896 = vpop.permute.xlu0 %895
    %v898 = vmul.f32 %v886, %v896
    %900 = vrot.lane.b32.xlu0 %v898, 32
    %v901 = vpop.permute.xlu0 %900
    %v903 = vadd.f32 %v893, %v901
    %v904 = vtanh.pop %v903
    %906 = vrot.lane.b32.xlu0 %v904, 64
    %v907 = vpop.permute.xlu0 %906
    %v909 = vmul.f32 %v886, %v907
    %911 = vrot.lane.b32.xlu0 %v909, 32
    %v912 = vpop.permute.xlu0 %911
    %914 = vst.msk [vmem:[#allocation2 - $0x4] sm:$0x30] %vm783, %v912
    %916 = vrot.lane.b32.xlu0 %v903, 96
    %v917 = vpop.permute.xlu0 %916
    %919 = vst.msk [vmem:[#allocation3 - $0x4] sm:$0x30] %vm783, %v917
    %920 = vst.msk [vmem:[%s12] sm:$0x30] %vm783, %v912
    %v921 = vld [vmem:[#allocation6] sm:$0x3]
    %v922 = vrot.slane %v909, 4
    %923 = vrot.lane.b32.xlu0 %v922, 32
    %v924 = vpop.permute.xlu0 %923
    %v926 = vadd.f32 %v921, %v924
    %927 = vst.msk [vmem:[#allocation6] sm:$0x3] %vm394, %v926
    %v928 = vld [vmem:[#allocation4] sm:$0x3]
    %v929 = vld [vmem:[%s5] sm:$0xff]
    %v930 = vld [vmem:[%s5 + $0x8] sm:$0xff]
    %v931 = vld [vmem:[%s5 + $0x10] sm:$0xff]
    %v932 = vld [vmem:[%s5 + $0x18] sm:$0xff]
    %v934 = vsel %vm286, %v928, 0
    %936 = vmatprep.subr.mxu0 0.0
    %937 = vmatpush1.msra.mxu0 0.0
    %938 = vmatprep.subr.mxu0 0.0
    %939 = vmatpush1.msra.mxu0 0.0
    %940 = vmatprep.subr.mxu0 0.0
    %941 = vmatpush1.msra.mxu0 0.0
    %942 = vmatprep.subr.mxu0 0.0
    %943 = vmatpush1.msra.mxu0 0.0
    %944 = vmatprep.subr.mxu0 0.0
    %945 = vmatpush1.msra.mxu0 0.0
    %946 = vmatprep.subr.mxu0 0.0
    %947 = vmatpush1.msra.mxu0 0.0
    %948 = vmatprep.subr.mxu0 0.0
    %949 = vmatpush1.msra.mxu0 0.0
    %950 = vmatprep.subr.mxu0 0.0
    %951 = vmatpush1.msra.mxu0 0.0
    %952 = vmatprep.subr.mxu0 0.0
    %953 = vmatpush1.msra.mxu0 0.0
    %954 = vmatprep.subr.mxu0 0.0
    %955 = vmatpush1.msra.mxu0 0.0
    %956 = vmatprep.subr.mxu0 0.0
    %957 = vmatpush1.msra.mxu0 0.0
    %958 = vmatprep.subr.mxu0 0.0
    %959 = vmatpush1.msra.mxu0 0.0
    %960 = vmatprep.subr.mxu0 0.0
    %961 = vmatpush1.msra.mxu0 %v932
    %962 = vmatprep.subr.mxu0 0.0
    %963 = vmatpush1.msra.mxu0 %v931
    %964 = vmatprep.subr.mxu0 0.0
    %965 = vmatpush1.msra.mxu0 %v930
    %966 = vmatprep.subr.mxu0 0.0
    %967 = vmatpush1.msra.mxu0 %v929
    %968 = vmatprep.subr.mxu0 0.0
    %969 = vmatpush2.msra.mxu0 0.0
    %970 = vmatprep.subr.mxu0 0.0
    %971 = vmatpush2.msra.mxu0 0.0
    %972 = vmatprep.subr.mxu0 0.0
    %973 = vmatpush2.msra.mxu0 0.0
    %974 = vmatprep.subr.mxu0 0.0
    %975 = vmatpush2.msra.mxu0 0.0
    %976 = vmatprep.subr.mxu0 0.0
    %977 = vmatpush2.msra.mxu0 0.0
    %978 = vmatprep.subr.mxu0 0.0
    %979 = vmatpush2.msra.mxu0 0.0
    %980 = vmatprep.subr.mxu0 0.0
    %981 = vmatpush2.msra.mxu0 0.0
    %982 = vmatprep.subr.mxu0 0.0
    %983 = vmatpush2.msra.mxu0 0.0
    %984 = vmatprep.subr.mxu0 0.0
    %985 = vmatpush2.msra.mxu0 0.0
    %986 = vmatprep.subr.mxu0 0.0
    %987 = vmatpush2.msra.mxu0 0.0
    %988 = vmatprep.subr.mxu0 0.0
    %989 = vmatpush2.msra.mxu0 0.0
    %990 = vmatprep.subr.mxu0 0.0
    %991 = vmatpush2.msra.mxu0 0.0
    %992 = vmatprep.subr.mxu0 0.0
    %993 = vmatpush2.msra.mxu0 0.0
    %994 = vmatprep.subr.mxu0 0.0
    %995 = vmatpush2.msra.mxu0 0.0
    %996 = vmatprep.subr.mxu0 0.0
    %997 = vmatpush2.msra.mxu0 0.0
    %998 = vmatprep.subr.mxu0 0.0
    %999 = vmatpush2.msra.mxu0 0.0
    %1000 = vmatprep.mubr.f32.mxu0 0.0
    %1001 = vmatmul.mubr.f32.gmra.mxu0 %v934
    %v1002 = vpop.f32.mrf.mxu0
    %v1003 = vadd.f32 0.0, %v1002
    %v1004 = vpop.f32.mrf.mxu0
    %1005 = vdwg.mxu0
    %v1007 = vrot.slane %v1003, 6
    %v1009 = vadd.f32 %v278, %v1007
    %v1010 = vld [vmem:[#allocation5] sm:$0x3]
    %v1011 = vxor.u32 %v1009, 2147483648
    %v1012 = vmul.f32 %v1011, 1.442695
    %v1013 = vpow.pop %v1012
    %v1014 = vadd.f32 %v1013, 1.0
    %v1015 = vrcp.pop %v1014
    %v1016 = vmul.f32 1.0, %v1015
    %v1017 = vtanh.pop %v1009
    %v1019 = vrot.slane %v1010, 6
    %1020 = vrot.lane.b32.xlu0 %v1019, 32
    %v1021 = vpop.permute.xlu0 %1020
    %v1023 = vmul.f32 %v1016, %v1021
    %1025 = vrot.lane.b32.xlu0 %v1017, 64
    %v1026 = vpop.permute.xlu0 %1025
    %v1028 = vmul.f32 %v1016, %v1026
    %1030 = vrot.lane.b32.xlu0 %v1028, 32
    %v1031 = vpop.permute.xlu0 %1030
    %v1033 = vadd.f32 %v1023, %v1031
    %v1034 = vtanh.pop %v1033
    %1036 = vrot.lane.b32.xlu0 %v1034, 64
    %v1037 = vpop.permute.xlu0 %1036
    %v1039 = vmul.f32 %v1016, %v1037
    %1041 = vrot.lane.b32.xlu0 %v1039, 32
    %v1042 = vpop.permute.xlu0 %1041
    %1044 = vst.msk [vmem:[#allocation4 - $0x2] sm:$0xc] %vm652, %v1042
    %1046 = vrot.lane.b32.xlu0 %v1033, 96
    %v1047 = vpop.permute.xlu0 %1046
    %1049 = vst.msk [vmem:[#allocation5 - $0x2] sm:$0xc] %vm652, %v1047
    %1050 = vst.msk [vmem:[%s78 + $0x8] sm:$0xc] %vm652, %v1042
    %v1051 = vld [vmem:[#allocation7] sm:$0x3]
    %v1052 = vrot.slane %v1039, 2
    %1053 = vrot.lane.b32.xlu0 %v1052, 32
    %v1054 = vpop.permute.xlu0 %1053
    %v1056 = vadd.f32 %v1051, %v1054
    %1057 = vst.msk [vmem:[#allocation7] sm:$0x3] %vm394, %v1056
    %v1058 = vld [vmem:[#allocation2] sm:$0x3]
    %v1059 = vld [vmem:[%s4] sm:$0xff]
    %v1060 = vld [vmem:[%s4 + $0x8] sm:$0xff]
    %v1061 = vld [vmem:[%s4 + $0x10] sm:$0xff]
    %v1062 = vld [vmem:[%s4 + $0x18] sm:$0xff]
    %v1064 = vsel %vm286, %v1058, 0
    %1066 = vmatprep.subr.mxu0 0.0
    %1067 = vmatpush1.msra.mxu0 0.0
    %1068 = vmatprep.subr.mxu0 0.0
    %1069 = vmatpush1.msra.mxu0 0.0
    %1070 = vmatprep.subr.mxu0 0.0
    %1071 = vmatpush1.msra.mxu0 0.0
    %1072 = vmatprep.subr.mxu0 0.0
    %1073 = vmatpush1.msra.mxu0 0.0
    %1074 = vmatprep.subr.mxu0 0.0
    %1075 = vmatpush1.msra.mxu0 0.0
    %1076 = vmatprep.subr.mxu0 0.0
    %1077 = vmatpush1.msra.mxu0 0.0
    %1078 = vmatprep.subr.mxu0 0.0
    %1079 = vmatpush1.msra.mxu0 0.0
    %1080 = vmatprep.subr.mxu0 0.0
    %1081 = vmatpush1.msra.mxu0 0.0
    %1082 = vmatprep.subr.mxu0 0.0
    %1083 = vmatpush1.msra.mxu0 0.0
    %1084 = vmatprep.subr.mxu0 0.0
    %1085 = vmatpush1.msra.mxu0 0.0
    %1086 = vmatprep.subr.mxu0 0.0
    %1087 = vmatpush1.msra.mxu0 0.0
    %1088 = vmatprep.subr.mxu0 0.0
    %1089 = vmatpush1.msra.mxu0 0.0
    %1090 = vmatprep.subr.mxu0 0.0
    %1091 = vmatpush1.msra.mxu0 %v1062
    %1092 = vmatprep.subr.mxu0 0.0
    %1093 = vmatpush1.msra.mxu0 %v1061
    %1094 = vmatprep.subr.mxu0 0.0
    %1095 = vmatpush1.msra.mxu0 %v1060
    %1096 = vmatprep.subr.mxu0 0.0
    %1097 = vmatpush1.msra.mxu0 %v1059
    %1098 = vmatprep.subr.mxu0 0.0
    %1099 = vmatpush2.msra.mxu0 0.0
    %1100 = vmatprep.subr.mxu0 0.0
    %1101 = vmatpush2.msra.mxu0 0.0
    %1102 = vmatprep.subr.mxu0 0.0
    %1103 = vmatpush2.msra.mxu0 0.0
    %1104 = vmatprep.subr.mxu0 0.0
    %1105 = vmatpush2.msra.mxu0 0.0
    %1106 = vmatprep.subr.mxu0 0.0
    %1107 = vmatpush2.msra.mxu0 0.0
    %1108 = vmatprep.subr.mxu0 0.0
    %1109 = vmatpush2.msra.mxu0 0.0
    %1110 = vmatprep.subr.mxu0 0.0
    %1111 = vmatpush2.msra.mxu0 0.0
    %1112 = vmatprep.subr.mxu0 0.0
    %1113 = vmatpush2.msra.mxu0 0.0
    %1114 = vmatprep.subr.mxu0 0.0
    %1115 = vmatpush2.msra.mxu0 0.0
    %1116 = vmatprep.subr.mxu0 0.0
    %1117 = vmatpush2.msra.mxu0 0.0
    %1118 = vmatprep.subr.mxu0 0.0
    %1119 = vmatpush2.msra.mxu0 0.0
    %1120 = vmatprep.subr.mxu0 0.0
    %1121 = vmatpush2.msra.mxu0 0.0
    %1122 = vmatprep.subr.mxu0 0.0
    %1123 = vmatpush2.msra.mxu0 0.0
    %1124 = vmatprep.subr.mxu0 0.0
    %1125 = vmatpush2.msra.mxu0 0.0
    %1126 = vmatprep.subr.mxu0 0.0
    %1127 = vmatpush2.msra.mxu0 0.0
    %1128 = vmatprep.subr.mxu0 0.0
    %1129 = vmatpush2.msra.mxu0 0.0
    %1130 = vmatprep.mubr.f32.mxu0 0.0
    %1131 = vmatmul.mubr.f32.gmra.mxu0 %v1064
    %v1132 = vpop.f32.mrf.mxu0
    %v1133 = vadd.f32 0.0, %v1132
    %v1134 = vpop.f32.mrf.mxu0
    %1135 = vdwg.mxu0
    %v1137 = vrot.slane %v1133, 2
    %v1139 = vadd.f32 %v181, %v1137
    %v1140 = vld [vmem:[#allocation3] sm:$0x3]
    %v1141 = vxor.u32 %v1139, 2147483648
    %v1142 = vmul.f32 %v1141, 1.442695
    %v1143 = vpow.pop %v1142
    %v1144 = vadd.f32 %v1143, 1.0
    %v1145 = vrcp.pop %v1144
    %v1146 = vmul.f32 1.0, %v1145
    %v1147 = vtanh.pop %v1139
    %v1149 = vrot.slane %v1140, 2
    %1150 = vrot.lane.b32.xlu0 %v1149, 32
    %v1151 = vpop.permute.xlu0 %1150
    %v1153 = vmul.f32 %v1146, %v1151
    %1155 = vrot.lane.b32.xlu0 %v1147, 64
    %v1156 = vpop.permute.xlu0 %1155
    %v1158 = vmul.f32 %v1146, %v1156
    %1160 = vrot.lane.b32.xlu0 %v1158, 32
    %v1161 = vpop.permute.xlu0 %1160
    %v1163 = vadd.f32 %v1153, %v1161
    %v1164 = vtanh.pop %v1163
    %1166 = vrot.lane.b32.xlu0 %v1164, 64
    %v1167 = vpop.permute.xlu0 %1166
    %v1169 = vmul.f32 %v1146, %v1167
    %1171 = vrot.lane.b32.xlu0 %v1169, 32
    %v1172 = vpop.permute.xlu0 %1171
    %1174 = vst.msk [vmem:[#allocation2 - $0x6] sm:$0xc0] %vm521, %v1172
    %1176 = vrot.lane.b32.xlu0 %v1163, 96
    %v1177 = vpop.permute.xlu0 %1176
    %1179 = vst.msk [vmem:[#allocation3 - $0x6] sm:$0xc0] %vm521, %v1177
    %1180 = vst.msk [vmem:[%s12] sm:$0xc0] %vm521, %v1172
    %v1181 = vld [vmem:[#allocation6] sm:$0x3]
    %v1182 = vrot.slane %v1169, 6
    %1183 = vrot.lane.b32.xlu0 %v1182, 32
    %v1184 = vpop.permute.xlu0 %1183
    %v1186 = vadd.f32 %v1181, %v1184
    %1187 = vst.msk [vmem:[#allocation6] sm:$0x3] %vm394, %v1186
    %v1188 = vld [vmem:[#allocation4] sm:$0x3]
    %v1189 = vld [vmem:[%s5] sm:$0xff]
    %v1190 = vld [vmem:[%s5 + $0x8] sm:$0xff]
    %v1191 = vld [vmem:[%s5 + $0x10] sm:$0xff]
    %v1192 = vld [vmem:[%s5 + $0x18] sm:$0xff]
    %v1194 = vsel %vm286, %v1188, 0
    %1196 = vmatprep.subr.mxu0 0.0
    %1197 = vmatpush1.msra.mxu0 0.0
    %1198 = vmatprep.subr.mxu0 0.0
    %1199 = vmatpush1.msra.mxu0 0.0
    %1200 = vmatprep.subr.mxu0 0.0
    %1201 = vmatpush1.msra.mxu0 0.0
    %1202 = vmatprep.subr.mxu0 0.0
    %1203 = vmatpush1.msra.mxu0 0.0
    %1204 = vmatprep.subr.mxu0 0.0
    %1205 = vmatpush1.msra.mxu0 0.0
    %1206 = vmatprep.subr.mxu0 0.0
    %1207 = vmatpush1.msra.mxu0 0.0
    %1208 = vmatprep.subr.mxu0 0.0
    %1209 = vmatpush1.msra.mxu0 0.0
    %1210 = vmatprep.subr.mxu0 0.0
    %1211 = vmatpush1.msra.mxu0 0.0
    %1212 = vmatprep.subr.mxu0 0.0
    %1213 = vmatpush1.msra.mxu0 0.0
    %1214 = vmatprep.subr.mxu0 0.0
    %1215 = vmatpush1.msra.mxu0 0.0
    %1216 = vmatprep.subr.mxu0 0.0
    %1217 = vmatpush1.msra.mxu0 0.0
    %1218 = vmatprep.subr.mxu0 0.0
    %1219 = vmatpush1.msra.mxu0 0.0
    %1220 = vmatprep.subr.mxu0 0.0
    %1221 = vmatpush1.msra.mxu0 %v1192
    %1222 = vmatprep.subr.mxu0 0.0
    %1223 = vmatpush1.msra.mxu0 %v1191
    %1224 = vmatprep.subr.mxu0 0.0
    %1225 = vmatpush1.msra.mxu0 %v1190
    %1226 = vmatprep.subr.mxu0 0.0
    %1227 = vmatpush1.msra.mxu0 %v1189
    %1228 = vmatprep.subr.mxu0 0.0
    %1229 = vmatpush2.msra.mxu0 0.0
    %1230 = vmatprep.subr.mxu0 0.0
    %1231 = vmatpush2.msra.mxu0 0.0
    %1232 = vmatprep.subr.mxu0 0.0
    %1233 = vmatpush2.msra.mxu0 0.0
    %1234 = vmatprep.subr.mxu0 0.0
    %1235 = vmatpush2.msra.mxu0 0.0
    %1236 = vmatprep.subr.mxu0 0.0
    %1237 = vmatpush2.msra.mxu0 0.0
    %1238 = vmatprep.subr.mxu0 0.0
    %1239 = vmatpush2.msra.mxu0 0.0
    %1240 = vmatprep.subr.mxu0 0.0
    %1241 = vmatpush2.msra.mxu0 0.0
    %1242 = vmatprep.subr.mxu0 0.0
    %1243 = vmatpush2.msra.mxu0 0.0
    %1244 = vmatprep.subr.mxu0 0.0
    %1245 = vmatpush2.msra.mxu0 0.0
    %1246 = vmatprep.subr.mxu0 0.0
    %1247 = vmatpush2.msra.mxu0 0.0
    %1248 = vmatprep.subr.mxu0 0.0
    %1249 = vmatpush2.msra.mxu0 0.0
    %1250 = vmatprep.subr.mxu0 0.0
    %1251 = vmatpush2.msra.mxu0 0.0
    %1252 = vmatprep.subr.mxu0 0.0
    %1253 = vmatpush2.msra.mxu0 0.0
    %1254 = vmatprep.subr.mxu0 0.0
    %1255 = vmatpush2.msra.mxu0 0.0
    %1256 = vmatprep.subr.mxu0 0.0
    %1257 = vmatpush2.msra.mxu0 0.0
    %1258 = vmatprep.subr.mxu0 0.0
    %1259 = vmatpush2.msra.mxu0 0.0
    %1260 = vmatprep.mubr.f32.mxu0 0.0
    %1261 = vmatmul.mubr.f32.gmra.mxu0 %v1194
    %v1262 = vpop.f32.mrf.mxu0
    %v1263 = vadd.f32 0.0, %v1262
    %v1264 = vpop.f32.mrf.mxu0
    %1265 = vdwg.mxu0
    %v1266 = vadd.f32 %v278, %v1263
    %v1267 = vld [vmem:[#allocation5] sm:$0x3]
    %v1268 = vxor.u32 %v1266, 2147483648
    %v1269 = vmul.f32 %v1268, 1.442695
    %v1270 = vpow.pop %v1269
    %v1271 = vadd.f32 %v1270, 1.0
    %v1272 = vrcp.pop %v1271
    %v1273 = vmul.f32 1.0, %v1272
    %v1274 = vtanh.pop %v1266
    %1276 = vrot.lane.b32.xlu0 %v1267, 32
    %v1277 = vpop.permute.xlu0 %1276
    %v1279 = vmul.f32 %v1273, %v1277
    %1281 = vrot.lane.b32.xlu0 %v1274, 64
    %v1282 = vpop.permute.xlu0 %1281
    %v1284 = vmul.f32 %v1273, %v1282
    %1286 = vrot.lane.b32.xlu0 %v1284, 32
    %v1287 = vpop.permute.xlu0 %1286
    %v1289 = vadd.f32 %v1279, %v1287
    %v1290 = vtanh.pop %v1289
    %1292 = vrot.lane.b32.xlu0 %v1290, 64
    %v1293 = vpop.permute.xlu0 %1292
    %v1295 = vmul.f32 %v1273, %v1293
    %1297 = vrot.lane.b32.xlu0 %v1295, 32
    %v1298 = vpop.permute.xlu0 %1297
    %1300 = vst.msk [vmem:[#allocation4] sm:$0x3] %vm394, %v1298
    %1302 = vrot.lane.b32.xlu0 %v1289, 96
    %v1303 = vpop.permute.xlu0 %1302
    %1305 = vst.msk [vmem:[#allocation5] sm:$0x3] %vm394, %v1303
    %1306 = vst.msk [vmem:[%s78 + $0x8] sm:$0x3] %vm394, %v1298
    %v1307 = vld [vmem:[#allocation7] sm:$0x3]
    %v1308 = vadd.f32 %v1307, %v1298
    %1309 = vst.msk [vmem:[#allocation7] sm:$0x3] %vm394, %v1308
    %v1310 = vld [vmem:[#allocation2] sm:$0x3]
    %v1311 = vld [vmem:[%s4] sm:$0xff]
    %v1312 = vld [vmem:[%s4 + $0x8] sm:$0xff]
    %v1313 = vld [vmem:[%s4 + $0x10] sm:$0xff]
    %v1314 = vld [vmem:[%s4 + $0x18] sm:$0xff]
    %v1316 = vsel %vm286, %v1310, 0
    %1318 = vmatprep.subr.mxu0 0.0
    %1319 = vmatpush1.msra.mxu0 0.0
    %1320 = vmatprep.subr.mxu0 0.0
    %1321 = vmatpush1.msra.mxu0 0.0
    %1322 = vmatprep.subr.mxu0 0.0
    %1323 = vmatpush1.msra.mxu0 0.0
    %1324 = vmatprep.subr.mxu0 0.0
    %1325 = vmatpush1.msra.mxu0 0.0
    %1326 = vmatprep.subr.mxu0 0.0
    %1327 = vmatpush1.msra.mxu0 0.0
    %1328 = vmatprep.subr.mxu0 0.0
    %1329 = vmatpush1.msra.mxu0 0.0
    %1330 = vmatprep.subr.mxu0 0.0
    %1331 = vmatpush1.msra.mxu0 0.0
    %1332 = vmatprep.subr.mxu0 0.0
    %1333 = vmatpush1.msra.mxu0 0.0
    %1334 = vmatprep.subr.mxu0 0.0
    %1335 = vmatpush1.msra.mxu0 0.0
    %1336 = vmatprep.subr.mxu0 0.0
    %1337 = vmatpush1.msra.mxu0 0.0
    %1338 = vmatprep.subr.mxu0 0.0
    %1339 = vmatpush1.msra.mxu0 0.0
    %1340 = vmatprep.subr.mxu0 0.0
    %1341 = vmatpush1.msra.mxu0 0.0
    %1342 = vmatprep.subr.mxu0 0.0
    %1343 = vmatpush1.msra.mxu0 %v1314
    %1344 = vmatprep.subr.mxu0 0.0
    %1345 = vmatpush1.msra.mxu0 %v1313
    %1346 = vmatprep.subr.mxu0 0.0
    %1347 = vmatpush1.msra.mxu0 %v1312
    %1348 = vmatprep.subr.mxu0 0.0
    %1349 = vmatpush1.msra.mxu0 %v1311
    %1350 = vmatprep.subr.mxu0 0.0
    %1351 = vmatpush2.msra.mxu0 0.0
    %1352 = vmatprep.subr.mxu0 0.0
    %1353 = vmatpush2.msra.mxu0 0.0
    %1354 = vmatprep.subr.mxu0 0.0
    %1355 = vmatpush2.msra.mxu0 0.0
    %1356 = vmatprep.subr.mxu0 0.0
    %1357 = vmatpush2.msra.mxu0 0.0
    %1358 = vmatprep.subr.mxu0 0.0
    %1359 = vmatpush2.msra.mxu0 0.0
    %1360 = vmatprep.subr.mxu0 0.0
    %1361 = vmatpush2.msra.mxu0 0.0
    %1362 = vmatprep.subr.mxu0 0.0
    %1363 = vmatpush2.msra.mxu0 0.0
    %1364 = vmatprep.subr.mxu0 0.0
    %1365 = vmatpush2.msra.mxu0 0.0
    %1366 = vmatprep.subr.mxu0 0.0
    %1367 = vmatpush2.msra.mxu0 0.0
    %1368 = vmatprep.subr.mxu0 0.0
    %1369 = vmatpush2.msra.mxu0 0.0
    %1370 = vmatprep.subr.mxu0 0.0
    %1371 = vmatpush2.msra.mxu0 0.0
    %1372 = vmatprep.subr.mxu0 0.0
    %1373 = vmatpush2.msra.mxu0 0.0
    %1374 = vmatprep.subr.mxu0 0.0
    %1375 = vmatpush2.msra.mxu0 0.0
    %1376 = vmatprep.subr.mxu0 0.0
    %1377 = vmatpush2.msra.mxu0 0.0
    %1378 = vmatprep.subr.mxu0 0.0
    %1379 = vmatpush2.msra.mxu0 0.0
    %1380 = vmatprep.subr.mxu0 0.0
    %1381 = vmatpush2.msra.mxu0 0.0
    %1382 = vmatprep.mubr.f32.mxu0 0.0
    %1383 = vmatmul.mubr.f32.gmra.mxu0 %v1316
    %v1384 = vpop.f32.mrf.mxu0
    %v1385 = vadd.f32 0.0, %v1384
    %v1386 = vpop.f32.mrf.mxu0
    %1387 = vdwg.mxu0
    %v1388 = vadd.f32 %v186, %v1385
    %v1389 = vld [vmem:[#allocation3] sm:$0x3]
    %v1390 = vxor.u32 %v1388, 2147483648
    %v1391 = vmul.f32 %v1390, 1.442695
    %v1392 = vpow.pop %v1391
    %v1393 = vadd.f32 %v1392, 1.0
    %v1394 = vrcp.pop %v1393
    %v1395 = vmul.f32 1.0, %v1394
    %v1396 = vtanh.pop %v1388
    %1398 = vrot.lane.b32.xlu0 %v1389, 32
    %v1399 = vpop.permute.xlu0 %1398
    %v1401 = vmul.f32 %v1395, %v1399
    %1403 = vrot.lane.b32.xlu0 %v1396, 64
    %v1404 = vpop.permute.xlu0 %1403
    %v1406 = vmul.f32 %v1395, %v1404
    %1408 = vrot.lane.b32.xlu0 %v1406, 32
    %v1409 = vpop.permute.xlu0 %1408
    %v1411 = vadd.f32 %v1401, %v1409
    %v1412 = vtanh.pop %v1411
    %1414 = vrot.lane.b32.xlu0 %v1412, 64
    %v1415 = vpop.permute.xlu0 %1414
    %v1417 = vmul.f32 %v1395, %v1415
    %1419 = vrot.lane.b32.xlu0 %v1417, 32
    %v1420 = vpop.permute.xlu0 %1419
    %1422 = vst.msk [vmem:[#allocation2] sm:$0x3] %vm394, %v1420
    %1424 = vrot.lane.b32.xlu0 %v1411, 96
    %v1425 = vpop.permute.xlu0 %1424
    %1427 = vst.msk [vmem:[#allocation3] sm:$0x3] %vm394, %v1425
    %1428 = vst.msk [vmem:[%s12 + $0x8] sm:$0x3] %vm394, %v1420
    %v1429 = vld [vmem:[#allocation6] sm:$0x3]
    %v1430 = vadd.f32 %v1429, %v1420
    %1431 = vst.msk [vmem:[#allocation6] sm:$0x3] %vm394, %v1430
    %v1432 = vld [vmem:[#allocation4] sm:$0x3]
    %v1433 = vld [vmem:[%s5] sm:$0xff]
    %v1434 = vld [vmem:[%s5 + $0x8] sm:$0xff]
    %v1435 = vld [vmem:[%s5 + $0x10] sm:$0xff]
    %v1436 = vld [vmem:[%s5 + $0x18] sm:$0xff]
    %v1438 = vsel %vm286, %v1432, 0
    %1440 = vmatprep.subr.mxu0 0.0
    %1441 = vmatpush1.msra.mxu0 0.0
    %1442 = vmatprep.subr.mxu0 0.0
    %1443 = vmatpush1.msra.mxu0 0.0
    %1444 = vmatprep.subr.mxu0 0.0
    %1445 = vmatpush1.msra.mxu0 0.0
    %1446 = vmatprep.subr.mxu0 0.0
    %1447 = vmatpush1.msra.mxu0 0.0
    %1448 = vmatprep.subr.mxu0 0.0
    %1449 = vmatpush1.msra.mxu0 0.0
    %1450 = vmatprep.subr.mxu0 0.0
    %1451 = vmatpush1.msra.mxu0 0.0
    %1452 = vmatprep.subr.mxu0 0.0
    %1453 = vmatpush1.msra.mxu0 0.0
    %1454 = vmatprep.subr.mxu0 0.0
    %1455 = vmatpush1.msra.mxu0 0.0
    %1456 = vmatprep.subr.mxu0 0.0
    %1457 = vmatpush1.msra.mxu0 0.0
    %1458 = vmatprep.subr.mxu0 0.0
    %1459 = vmatpush1.msra.mxu0 0.0
    %1460 = vmatprep.subr.mxu0 0.0
    %1461 = vmatpush1.msra.mxu0 0.0
    %1462 = vmatprep.subr.mxu0 0.0
    %1463 = vmatpush1.msra.mxu0 0.0
    %1464 = vmatprep.subr.mxu0 0.0
    %1465 = vmatpush1.msra.mxu0 %v1436
    %1466 = vmatprep.subr.mxu0 0.0
    %1467 = vmatpush1.msra.mxu0 %v1435
    %1468 = vmatprep.subr.mxu0 0.0
    %1469 = vmatpush1.msra.mxu0 %v1434
    %1470 = vmatprep.subr.mxu0 0.0
    %1471 = vmatpush1.msra.mxu0 %v1433
    %1472 = vmatprep.subr.mxu0 0.0
    %1473 = vmatpush2.msra.mxu0 0.0
    %1474 = vmatprep.subr.mxu0 0.0
    %1475 = vmatpush2.msra.mxu0 0.0
    %1476 = vmatprep.subr.mxu0 0.0
    %1477 = vmatpush2.msra.mxu0 0.0
    %1478 = vmatprep.subr.mxu0 0.0
    %1479 = vmatpush2.msra.mxu0 0.0
    %1480 = vmatprep.subr.mxu0 0.0
    %1481 = vmatpush2.msra.mxu0 0.0
    %1482 = vmatprep.subr.mxu0 0.0
    %1483 = vmatpush2.msra.mxu0 0.0
    %1484 = vmatprep.subr.mxu0 0.0
    %1485 = vmatpush2.msra.mxu0 0.0
    %1486 = vmatprep.subr.mxu0 0.0
    %1487 = vmatpush2.msra.mxu0 0.0
    %1488 = vmatprep.subr.mxu0 0.0
    %1489 = vmatpush2.msra.mxu0 0.0
    %1490 = vmatprep.subr.mxu0 0.0
    %1491 = vmatpush2.msra.mxu0 0.0
    %1492 = vmatprep.subr.mxu0 0.0
    %1493 = vmatpush2.msra.mxu0 0.0
    %1494 = vmatprep.subr.mxu0 0.0
    %1495 = vmatpush2.msra.mxu0 0.0
    %1496 = vmatprep.subr.mxu0 0.0
    %1497 = vmatpush2.msra.mxu0 0.0
    %1498 = vmatprep.subr.mxu0 0.0
    %1499 = vmatpush2.msra.mxu0 0.0
    %1500 = vmatprep.subr.mxu0 0.0
    %1501 = vmatpush2.msra.mxu0 0.0
    %1502 = vmatprep.subr.mxu0 0.0
    %1503 = vmatpush2.msra.mxu0 0.0
    %1504 = vmatprep.mubr.f32.mxu0 0.0
    %1505 = vmatmul.mubr.f32.gmra.mxu0 %v1438
    %v1506 = vpop.f32.mrf.mxu0
    %v1507 = vadd.f32 0.0, %v1506
    %v1508 = vpop.f32.mrf.mxu0
    %1509 = vdwg.mxu0
    %v1511 = vrot.slane %v1507, 2
    %v1513 = vadd.f32 %v273, %v1511
    %v1514 = vld [vmem:[#allocation5] sm:$0x3]
    %v1515 = vxor.u32 %v1513, 2147483648
    %v1516 = vmul.f32 %v1515, 1.442695
    %v1517 = vpow.pop %v1516
    %v1518 = vadd.f32 %v1517, 1.0
    %v1519 = vrcp.pop %v1518
    %v1520 = vmul.f32 1.0, %v1519
    %v1521 = vtanh.pop %v1513
    %v1523 = vrot.slane %v1514, 2
    %1524 = vrot.lane.b32.xlu0 %v1523, 32
    %v1525 = vpop.permute.xlu0 %1524
    %v1527 = vmul.f32 %v1520, %v1525
    %1529 = vrot.lane.b32.xlu0 %v1521, 64
    %v1530 = vpop.permute.xlu0 %1529
    %v1532 = vmul.f32 %v1520, %v1530
    %1534 = vrot.lane.b32.xlu0 %v1532, 32
    %v1535 = vpop.permute.xlu0 %1534
    %v1537 = vadd.f32 %v1527, %v1535
    %v1538 = vtanh.pop %v1537
    %1540 = vrot.lane.b32.xlu0 %v1538, 64
    %v1541 = vpop.permute.xlu0 %1540
    %v1543 = vmul.f32 %v1520, %v1541
    %1545 = vrot.lane.b32.xlu0 %v1543, 32
    %v1546 = vpop.permute.xlu0 %1545
    %1548 = vst.msk [vmem:[#allocation4 - $0x6] sm:$0xc0] %vm521, %v1546
    %1550 = vrot.lane.b32.xlu0 %v1537, 96
    %v1551 = vpop.permute.xlu0 %1550
    %1553 = vst.msk [vmem:[#allocation5 - $0x6] sm:$0xc0] %vm521, %v1551
    %1554 = vst.msk [vmem:[%s78] sm:$0xc0] %vm521, %v1546
    %v1555 = vld [vmem:[#allocation7] sm:$0x3]
    %v1556 = vrot.slane %v1543, 6
    %1557 = vrot.lane.b32.xlu0 %v1556, 32
    %v1558 = vpop.permute.xlu0 %1557
    %v1560 = vadd.f32 %v1555, %v1558
    %1561 = vst.msk [vmem:[#allocation7] sm:$0x3] %vm394, %v1560
    %v1562 = vld [vmem:[#allocation2] sm:$0x3]
    %v1563 = vld [vmem:[%s4] sm:$0xff]
    %v1564 = vld [vmem:[%s4 + $0x8] sm:$0xff]
    %v1565 = vld [vmem:[%s4 + $0x10] sm:$0xff]
    %v1566 = vld [vmem:[%s4 + $0x18] sm:$0xff]
    %v1568 = vsel %vm286, %v1562, 0
    %1570 = vmatprep.subr.mxu0 0.0
    %1571 = vmatpush1.msra.mxu0 0.0
    %1572 = vmatprep.subr.mxu0 0.0
    %1573 = vmatpush1.msra.mxu0 0.0
    %1574 = vmatprep.subr.mxu0 0.0
    %1575 = vmatpush1.msra.mxu0 0.0
    %1576 = vmatprep.subr.mxu0 0.0
    %1577 = vmatpush1.msra.mxu0 0.0
    %1578 = vmatprep.subr.mxu0 0.0
    %1579 = vmatpush1.msra.mxu0 0.0
    %1580 = vmatprep.subr.mxu0 0.0
    %1581 = vmatpush1.msra.mxu0 0.0
    %1582 = vmatprep.subr.mxu0 0.0
    %1583 = vmatpush1.msra.mxu0 0.0
    %1584 = vmatprep.subr.mxu0 0.0
    %1585 = vmatpush1.msra.mxu0 0.0
    %1586 = vmatprep.subr.mxu0 0.0
    %1587 = vmatpush1.msra.mxu0 0.0
    %1588 = vmatprep.subr.mxu0 0.0
    %1589 = vmatpush1.msra.mxu0 0.0
    %1590 = vmatprep.subr.mxu0 0.0
    %1591 = vmatpush1.msra.mxu0 0.0
    %1592 = vmatprep.subr.mxu0 0.0
    %1593 = vmatpush1.msra.mxu0 0.0
    %1594 = vmatprep.subr.mxu0 0.0
    %1595 = vmatpush1.msra.mxu0 %v1566
    %1596 = vmatprep.subr.mxu0 0.0
    %1597 = vmatpush1.msra.mxu0 %v1565
    %1598 = vmatprep.subr.mxu0 0.0
    %1599 = vmatpush1.msra.mxu0 %v1564
    %1600 = vmatprep.subr.mxu0 0.0
    %1601 = vmatpush1.msra.mxu0 %v1563
    %1602 = vmatprep.subr.mxu0 0.0
    %1603 = vmatpush2.msra.mxu0 0.0
    %1604 = vmatprep.subr.mxu0 0.0
    %1605 = vmatpush2.msra.mxu0 0.0
    %1606 = vmatprep.subr.mxu0 0.0
    %1607 = vmatpush2.msra.mxu0 0.0
    %1608 = vmatprep.subr.mxu0 0.0
    %1609 = vmatpush2.msra.mxu0 0.0
    %1610 = vmatprep.subr.mxu0 0.0
    %1611 = vmatpush2.msra.mxu0 0.0
    %1612 = vmatprep.subr.mxu0 0.0
    %1613 = vmatpush2.msra.mxu0 0.0
    %1614 = vmatprep.subr.mxu0 0.0
    %1615 = vmatpush2.msra.mxu0 0.0
    %1616 = vmatprep.subr.mxu0 0.0
    %1617 = vmatpush2.msra.mxu0 0.0
    %1618 = vmatprep.subr.mxu0 0.0
    %1619 = vmatpush2.msra.mxu0 0.0
    %1620 = vmatprep.subr.mxu0 0.0
    %1621 = vmatpush2.msra.mxu0 0.0
    %1622 = vmatprep.subr.mxu0 0.0
    %1623 = vmatpush2.msra.mxu0 0.0
    %1624 = vmatprep.subr.mxu0 0.0
    %1625 = vmatpush2.msra.mxu0 0.0
    %1626 = vmatprep.subr.mxu0 0.0
    %1627 = vmatpush2.msra.mxu0 0.0
    %1628 = vmatprep.subr.mxu0 0.0
    %1629 = vmatpush2.msra.mxu0 0.0
    %1630 = vmatprep.subr.mxu0 0.0
    %1631 = vmatpush2.msra.mxu0 0.0
    %1632 = vmatprep.subr.mxu0 0.0
    %1633 = vmatpush2.msra.mxu0 0.0
    %1634 = vmatprep.mubr.f32.mxu0 0.0
    %1635 = vmatmul.mubr.f32.gmra.mxu0 %v1568
    %v1636 = vpop.f32.mrf.mxu0
    %v1637 = vadd.f32 0.0, %v1636
    %v1638 = vpop.f32.mrf.mxu0
    %1639 = vdwg.mxu0
    %v1641 = vrot.slane %v1637, 6
    %v1643 = vadd.f32 %v186, %v1641
    %v1644 = vld [vmem:[#allocation3] sm:$0x3]
    %v1645 = vxor.u32 %v1643, 2147483648
    %v1646 = vmul.f32 %v1645, 1.442695
    %v1647 = vpow.pop %v1646
    %v1648 = vadd.f32 %v1647, 1.0
    %v1649 = vrcp.pop %v1648
    %v1650 = vmul.f32 1.0, %v1649
    %v1651 = vtanh.pop %v1643
    %v1653 = vrot.slane %v1644, 6
    %1654 = vrot.lane.b32.xlu0 %v1653, 32
    %v1655 = vpop.permute.xlu0 %1654
    %v1657 = vmul.f32 %v1650, %v1655
    %1659 = vrot.lane.b32.xlu0 %v1651, 64
    %v1660 = vpop.permute.xlu0 %1659
    %v1662 = vmul.f32 %v1650, %v1660
    %1664 = vrot.lane.b32.xlu0 %v1662, 32
    %v1665 = vpop.permute.xlu0 %1664
    %v1667 = vadd.f32 %v1657, %v1665
    %v1668 = vtanh.pop %v1667
    %1670 = vrot.lane.b32.xlu0 %v1668, 64
    %v1671 = vpop.permute.xlu0 %1670
    %v1673 = vmul.f32 %v1650, %v1671
    %1675 = vrot.lane.b32.xlu0 %v1673, 32
    %v1676 = vpop.permute.xlu0 %1675
    %1678 = vst.msk [vmem:[#allocation2 - $0x2] sm:$0xc] %vm652, %v1676
    %1680 = vrot.lane.b32.xlu0 %v1667, 96
    %v1681 = vpop.permute.xlu0 %1680
    %1683 = vst.msk [vmem:[#allocation3 - $0x2] sm:$0xc] %vm652, %v1681
    %1684 = vst.msk [vmem:[%s12 + $0x8] sm:$0xc] %vm652, %v1676
    %v1685 = vld [vmem:[#allocation6] sm:$0x3]
    %v1686 = vrot.slane %v1673, 2
    %1687 = vrot.lane.b32.xlu0 %v1686, 32
    %v1688 = vpop.permute.xlu0 %1687
    %v1690 = vadd.f32 %v1685, %v1688
    %1691 = vst.msk [vmem:[#allocation6] sm:$0x3] %vm394, %v1690
    %v1692 = vld [vmem:[#allocation4] sm:$0x3]
    %v1693 = vld [vmem:[%s5] sm:$0xff]
    %v1694 = vld [vmem:[%s5 + $0x8] sm:$0xff]
    %v1695 = vld [vmem:[%s5 + $0x10] sm:$0xff]
    %v1696 = vld [vmem:[%s5 + $0x18] sm:$0xff]
    %v1698 = vsel %vm286, %v1692, 0
    %1700 = vmatprep.subr.mxu0 0.0
    %1701 = vmatpush1.msra.mxu0 0.0
    %1702 = vmatprep.subr.mxu0 0.0
    %1703 = vmatpush1.msra.mxu0 0.0
    %1704 = vmatprep.subr.mxu0 0.0
    %1705 = vmatpush1.msra.mxu0 0.0
    %1706 = vmatprep.subr.mxu0 0.0
    %1707 = vmatpush1.msra.mxu0 0.0
    %1708 = vmatprep.subr.mxu0 0.0
    %1709 = vmatpush1.msra.mxu0 0.0
    %1710 = vmatprep.subr.mxu0 0.0
    %1711 = vmatpush1.msra.mxu0 0.0
    %1712 = vmatprep.subr.mxu0 0.0
    %1713 = vmatpush1.msra.mxu0 0.0
    %1714 = vmatprep.subr.mxu0 0.0
    %1715 = vmatpush1.msra.mxu0 0.0
    %1716 = vmatprep.subr.mxu0 0.0
    %1717 = vmatpush1.msra.mxu0 0.0
    %1718 = vmatprep.subr.mxu0 0.0
    %1719 = vmatpush1.msra.mxu0 0.0
    %1720 = vmatprep.subr.mxu0 0.0
    %1721 = vmatpush1.msra.mxu0 0.0
    %1722 = vmatprep.subr.mxu0 0.0
    %1723 = vmatpush1.msra.mxu0 0.0
    %1724 = vmatprep.subr.mxu0 0.0
    %1725 = vmatpush1.msra.mxu0 %v1696
    %1726 = vmatprep.subr.mxu0 0.0
    %1727 = vmatpush1.msra.mxu0 %v1695
    %1728 = vmatprep.subr.mxu0 0.0
    %1729 = vmatpush1.msra.mxu0 %v1694
    %1730 = vmatprep.subr.mxu0 0.0
    %1731 = vmatpush1.msra.mxu0 %v1693
    %1732 = vmatprep.subr.mxu0 0.0
    %1733 = vmatpush2.msra.mxu0 0.0
    %1734 = vmatprep.subr.mxu0 0.0
    %1735 = vmatpush2.msra.mxu0 0.0
    %1736 = vmatprep.subr.mxu0 0.0
    %1737 = vmatpush2.msra.mxu0 0.0
    %1738 = vmatprep.subr.mxu0 0.0
    %1739 = vmatpush2.msra.mxu0 0.0
    %1740 = vmatprep.subr.mxu0 0.0
    %1741 = vmatpush2.msra.mxu0 0.0
    %1742 = vmatprep.subr.mxu0 0.0
    %1743 = vmatpush2.msra.mxu0 0.0
    %1744 = vmatprep.subr.mxu0 0.0
    %1745 = vmatpush2.msra.mxu0 0.0
    %1746 = vmatprep.subr.mxu0 0.0
    %1747 = vmatpush2.msra.mxu0 0.0
    %1748 = vmatprep.subr.mxu0 0.0
    %1749 = vmatpush2.msra.mxu0 0.0
    %1750 = vmatprep.subr.mxu0 0.0
    %1751 = vmatpush2.msra.mxu0 0.0
    %1752 = vmatprep.subr.mxu0 0.0
    %1753 = vmatpush2.msra.mxu0 0.0
    %1754 = vmatprep.subr.mxu0 0.0
    %1755 = vmatpush2.msra.mxu0 0.0
    %1756 = vmatprep.subr.mxu0 0.0
    %1757 = vmatpush2.msra.mxu0 0.0
    %1758 = vmatprep.subr.mxu0 0.0
    %1759 = vmatpush2.msra.mxu0 0.0
    %1760 = vmatprep.subr.mxu0 0.0
    %1761 = vmatpush2.msra.mxu0 0.0
    %1762 = vmatprep.subr.mxu0 0.0
    %1763 = vmatpush2.msra.mxu0 0.0
    %1764 = vmatprep.mubr.f32.mxu0 0.0
    %1765 = vmatmul.mubr.f32.gmra.mxu0 %v1698
    %v1766 = vpop.f32.mrf.mxu0
    %v1767 = vadd.f32 0.0, %v1766
    %v1768 = vpop.f32.mrf.mxu0
    %1769 = vdwg.mxu0
    %v1771 = vrot.slane %v1767, 4
    %v1773 = vadd.f32 %v273, %v1771
    %v1774 = vld [vmem:[#allocation5] sm:$0x3]
    %v1775 = vxor.u32 %v1773, 2147483648
    %v1776 = vmul.f32 %v1775, 1.442695
    %v1777 = vpow.pop %v1776
    %v1778 = vadd.f32 %v1777, 1.0
    %v1779 = vrcp.pop %v1778
    %v1780 = vmul.f32 1.0, %v1779
    %v1781 = vtanh.pop %v1773
    %v1783 = vrot.slane %v1774, 4
    %1784 = vrot.lane.b32.xlu0 %v1783, 32
    %v1785 = vpop.permute.xlu0 %1784
    %v1787 = vmul.f32 %v1780, %v1785
    %1789 = vrot.lane.b32.xlu0 %v1781, 64
    %v1790 = vpop.permute.xlu0 %1789
    %v1792 = vmul.f32 %v1780, %v1790
    %1794 = vrot.lane.b32.xlu0 %v1792, 32
    %v1795 = vpop.permute.xlu0 %1794
    %v1797 = vadd.f32 %v1787, %v1795
    %v1798 = vtanh.pop %v1797
    %1800 = vrot.lane.b32.xlu0 %v1798, 64
    %v1801 = vpop.permute.xlu0 %1800
    %v1803 = vmul.f32 %v1780, %v1801
    %1805 = vrot.lane.b32.xlu0 %v1803, 32
    %v1806 = vpop.permute.xlu0 %1805
    %1808 = vst.msk [vmem:[#allocation4 - $0x4] sm:$0x30] %vm783, %v1806
    %1810 = vrot.lane.b32.xlu0 %v1797, 96
    %v1811 = vpop.permute.xlu0 %1810
    %1813 = vst.msk [vmem:[#allocation5 - $0x4] sm:$0x30] %vm783, %v1811
    %1814 = vst.msk [vmem:[%s78] sm:$0x30] %vm783, %v1806
    %v1815 = vld [vmem:[#allocation7] sm:$0x3]
    %v1816 = vrot.slane %v1803, 4
    %1817 = vrot.lane.b32.xlu0 %v1816, 32
    %v1818 = vpop.permute.xlu0 %1817
    %v1820 = vadd.f32 %v1815, %v1818
    %1821 = vst.msk [vmem:[#allocation7] sm:$0x3] %vm394, %v1820
    %v1822 = vld [vmem:[#allocation2] sm:$0x3]
    %v1823 = vld [vmem:[%s4] sm:$0xff]
    %v1824 = vld [vmem:[%s4 + $0x8] sm:$0xff]
    %v1825 = vld [vmem:[%s4 + $0x10] sm:$0xff]
    %v1826 = vld [vmem:[%s4 + $0x18] sm:$0xff]
    %v1828 = vsel %vm286, %v1822, 0
    %1830 = vmatprep.subr.mxu0 0.0
    %1831 = vmatpush1.msra.mxu0 0.0
    %1832 = vmatprep.subr.mxu0 0.0
    %1833 = vmatpush1.msra.mxu0 0.0
    %1834 = vmatprep.subr.mxu0 0.0
    %1835 = vmatpush1.msra.mxu0 0.0
    %1836 = vmatprep.subr.mxu0 0.0
    %1837 = vmatpush1.msra.mxu0 0.0
    %1838 = vmatprep.subr.mxu0 0.0
    %1839 = vmatpush1.msra.mxu0 0.0
    %1840 = vmatprep.subr.mxu0 0.0
    %1841 = vmatpush1.msra.mxu0 0.0
    %1842 = vmatprep.subr.mxu0 0.0
    %1843 = vmatpush1.msra.mxu0 0.0
    %1844 = vmatprep.subr.mxu0 0.0
    %1845 = vmatpush1.msra.mxu0 0.0
    %1846 = vmatprep.subr.mxu0 0.0
    %1847 = vmatpush1.msra.mxu0 0.0
    %1848 = vmatprep.subr.mxu0 0.0
    %1849 = vmatpush1.msra.mxu0 0.0
    %1850 = vmatprep.subr.mxu0 0.0
    %1851 = vmatpush1.msra.mxu0 0.0
    %1852 = vmatprep.subr.mxu0 0.0
    %1853 = vmatpush1.msra.mxu0 0.0
    %1854 = vmatprep.subr.mxu0 0.0
    %1855 = vmatpush1.msra.mxu0 %v1826
    %1856 = vmatprep.subr.mxu0 0.0
    %1857 = vmatpush1.msra.mxu0 %v1825
    %1858 = vmatprep.subr.mxu0 0.0
    %1859 = vmatpush1.msra.mxu0 %v1824
    %1860 = vmatprep.subr.mxu0 0.0
    %1861 = vmatpush1.msra.mxu0 %v1823
    %1862 = vmatprep.subr.mxu0 0.0
    %1863 = vmatpush2.msra.mxu0 0.0
    %1864 = vmatprep.subr.mxu0 0.0
    %1865 = vmatpush2.msra.mxu0 0.0
    %1866 = vmatprep.subr.mxu0 0.0
    %1867 = vmatpush2.msra.mxu0 0.0
    %1868 = vmatprep.subr.mxu0 0.0
    %1869 = vmatpush2.msra.mxu0 0.0
    %1870 = vmatprep.subr.mxu0 0.0
    %1871 = vmatpush2.msra.mxu0 0.0
    %1872 = vmatprep.subr.mxu0 0.0
    %1873 = vmatpush2.msra.mxu0 0.0
    %1874 = vmatprep.subr.mxu0 0.0
    %1875 = vmatpush2.msra.mxu0 0.0
    %1876 = vmatprep.subr.mxu0 0.0
    %1877 = vmatpush2.msra.mxu0 0.0
    %1878 = vmatprep.subr.mxu0 0.0
    %1879 = vmatpush2.msra.mxu0 0.0
    %1880 = vmatprep.subr.mxu0 0.0
    %1881 = vmatpush2.msra.mxu0 0.0
    %1882 = vmatprep.subr.mxu0 0.0
    %1883 = vmatpush2.msra.mxu0 0.0
    %1884 = vmatprep.subr.mxu0 0.0
    %1885 = vmatpush2.msra.mxu0 0.0
    %1886 = vmatprep.subr.mxu0 0.0
    %1887 = vmatpush2.msra.mxu0 0.0
    %1888 = vmatprep.subr.mxu0 0.0
    %1889 = vmatpush2.msra.mxu0 0.0
    %1890 = vmatprep.subr.mxu0 0.0
    %1891 = vmatpush2.msra.mxu0 0.0
    %1892 = vmatprep.subr.mxu0 0.0
    %1893 = vmatpush2.msra.mxu0 0.0
    %1894 = vmatprep.mubr.f32.mxu0 0.0
    %1895 = vmatmul.mubr.f32.gmra.mxu0 %v1828
    %v1896 = vpop.f32.mrf.mxu0
    %v1897 = vadd.f32 0.0, %v1896
    %v1898 = vpop.f32.mrf.mxu0
    %1899 = vdwg.mxu0
    %v1901 = vrot.slane %v1897, 4
    %v1903 = vadd.f32 %v186, %v1901
    %v1904 = vld [vmem:[#allocation3] sm:$0x3]
    %v1905 = vxor.u32 %v1903, 2147483648
    %v1906 = vmul.f32 %v1905, 1.442695
    %v1907 = vpow.pop %v1906
    %v1908 = vadd.f32 %v1907, 1.0
    %v1909 = vrcp.pop %v1908
    %v1910 = vmul.f32 1.0, %v1909
    %v1911 = vtanh.pop %v1903
    %v1913 = vrot.slane %v1904, 4
    %1914 = vrot.lane.b32.xlu0 %v1913, 32
    %v1915 = vpop.permute.xlu0 %1914
    %v1917 = vmul.f32 %v1910, %v1915
    %1919 = vrot.lane.b32.xlu0 %v1911, 64
    %v1920 = vpop.permute.xlu0 %1919
    %v1922 = vmul.f32 %v1910, %v1920
    %1924 = vrot.lane.b32.xlu0 %v1922, 32
    %v1925 = vpop.permute.xlu0 %1924
    %v1927 = vadd.f32 %v1917, %v1925
    %v1928 = vtanh.pop %v1927
    %1930 = vrot.lane.b32.xlu0 %v1928, 64
    %v1931 = vpop.permute.xlu0 %1930
    %v1933 = vmul.f32 %v1910, %v1931
    %1935 = vrot.lane.b32.xlu0 %v1933, 32
    %v1936 = vpop.permute.xlu0 %1935
    %1938 = vst.msk [vmem:[#allocation2 - $0x4] sm:$0x30] %vm783, %v1936
    %1940 = vrot.lane.b32.xlu0 %v1927, 96
    %v1941 = vpop.permute.xlu0 %1940
    %1943 = vst.msk [vmem:[#allocation3 - $0x4] sm:$0x30] %vm783, %v1941
    %1944 = vst.msk [vmem:[%s12 + $0x8] sm:$0x30] %vm783, %v1936
    %v1945 = vld [vmem:[#allocation6] sm:$0x3]
    %v1946 = vrot.slane %v1933, 4
    %1947 = vrot.lane.b32.xlu0 %v1946, 32
    %v1948 = vpop.permute.xlu0 %1947
    %v1950 = vadd.f32 %v1945, %v1948
    %1951 = vst.msk [vmem:[#allocation6] sm:$0x3] %vm394, %v1950
    %v1952 = vld [vmem:[#allocation4] sm:$0x3]
    %v1953 = vld [vmem:[%s5] sm:$0xff]
    %v1954 = vld [vmem:[%s5 + $0x8] sm:$0xff]
    %v1955 = vld [vmem:[%s5 + $0x10] sm:$0xff]
    %v1956 = vld [vmem:[%s5 + $0x18] sm:$0xff]
    %v1958 = vsel %vm286, %v1952, 0
    %1960 = vmatprep.subr.mxu0 0.0
    %1961 = vmatpush1.msra.mxu0 0.0
    %1962 = vmatprep.subr.mxu0 0.0
    %1963 = vmatpush1.msra.mxu0 0.0
    %1964 = vmatprep.subr.mxu0 0.0
    %1965 = vmatpush1.msra.mxu0 0.0
    %1966 = vmatprep.subr.mxu0 0.0
    %1967 = vmatpush1.msra.mxu0 0.0
    %1968 = vmatprep.subr.mxu0 0.0
    %1969 = vmatpush1.msra.mxu0 0.0
    %1970 = vmatprep.subr.mxu0 0.0
    %1971 = vmatpush1.msra.mxu0 0.0
    %1972 = vmatprep.subr.mxu0 0.0
    %1973 = vmatpush1.msra.mxu0 0.0
    %1974 = vmatprep.subr.mxu0 0.0
    %1975 = vmatpush1.msra.mxu0 0.0
    %1976 = vmatprep.subr.mxu0 0.0
    %1977 = vmatpush1.msra.mxu0 0.0
    %1978 = vmatprep.subr.mxu0 0.0
    %1979 = vmatpush1.msra.mxu0 0.0
    %1980 = vmatprep.subr.mxu0 0.0
    %1981 = vmatpush1.msra.mxu0 0.0
    %1982 = vmatprep.subr.mxu0 0.0
    %1983 = vmatpush1.msra.mxu0 0.0
    %1984 = vmatprep.subr.mxu0 0.0
    %1985 = vmatpush1.msra.mxu0 %v1956
    %1986 = vmatprep.subr.mxu0 0.0
    %1987 = vmatpush1.msra.mxu0 %v1955
    %1988 = vmatprep.subr.mxu0 0.0
    %1989 = vmatpush1.msra.mxu0 %v1954
    %1990 = vmatprep.subr.mxu0 0.0
    %1991 = vmatpush1.msra.mxu0 %v1953
    %1992 = vmatprep.subr.mxu0 0.0
    %1993 = vmatpush2.msra.mxu0 0.0
    %1994 = vmatprep.subr.mxu0 0.0
    %1995 = vmatpush2.msra.mxu0 0.0
    %1996 = vmatprep.subr.mxu0 0.0
    %1997 = vmatpush2.msra.mxu0 0.0
    %1998 = vmatprep.subr.mxu0 0.0
    %1999 = vmatpush2.msra.mxu0 0.0
    %2000 = vmatprep.subr.mxu0 0.0
    %2001 = vmatpush2.msra.mxu0 0.0
    %2002 = vmatprep.subr.mxu0 0.0
    %2003 = vmatpush2.msra.mxu0 0.0
    %2004 = vmatprep.subr.mxu0 0.0
    %2005 = vmatpush2.msra.mxu0 0.0
    %2006 = vmatprep.subr.mxu0 0.0
    %2007 = vmatpush2.msra.mxu0 0.0
    %2008 = vmatprep.subr.mxu0 0.0
    %2009 = vmatpush2.msra.mxu0 0.0
    %2010 = vmatprep.subr.mxu0 0.0
    %2011 = vmatpush2.msra.mxu0 0.0
    %2012 = vmatprep.subr.mxu0 0.0
    %2013 = vmatpush2.msra.mxu0 0.0
    %2014 = vmatprep.subr.mxu0 0.0
    %2015 = vmatpush2.msra.mxu0 0.0
    %2016 = vmatprep.subr.mxu0 0.0
    %2017 = vmatpush2.msra.mxu0 0.0
    %2018 = vmatprep.subr.mxu0 0.0
    %2019 = vmatpush2.msra.mxu0 0.0
    %2020 = vmatprep.subr.mxu0 0.0
    %2021 = vmatpush2.msra.mxu0 0.0
    %2022 = vmatprep.subr.mxu0 0.0
    %2023 = vmatpush2.msra.mxu0 0.0
    %2024 = vmatprep.mubr.f32.mxu0 0.0
    %2025 = vmatmul.mubr.f32.gmra.mxu0 %v1958
    %v2026 = vpop.f32.mrf.mxu0
    %v2027 = vadd.f32 0.0, %v2026
    %v2028 = vpop.f32.mrf.mxu0
    %2029 = vdwg.mxu0
    %v2031 = vrot.slane %v2027, 6
    %v2033 = vadd.f32 %v273, %v2031
    %v2034 = vld [vmem:[#allocation5] sm:$0x3]
    %v2035 = vxor.u32 %v2033, 2147483648
    %v2036 = vmul.f32 %v2035, 1.442695
    %v2037 = vpow.pop %v2036
    %v2038 = vadd.f32 %v2037, 1.0
    %v2039 = vrcp.pop %v2038
    %v2040 = vmul.f32 1.0, %v2039
    %v2041 = vtanh.pop %v2033
    %v2043 = vrot.slane %v2034, 6
    %2044 = vrot.lane.b32.xlu0 %v2043, 32
    %v2045 = vpop.permute.xlu0 %2044
    %v2047 = vmul.f32 %v2040, %v2045
    %2049 = vrot.lane.b32.xlu0 %v2041, 64
    %v2050 = vpop.permute.xlu0 %2049
    %v2052 = vmul.f32 %v2040, %v2050
    %2054 = vrot.lane.b32.xlu0 %v2052, 32
    %v2055 = vpop.permute.xlu0 %2054
    %v2057 = vadd.f32 %v2047, %v2055
    %v2058 = vtanh.pop %v2057
    %2060 = vrot.lane.b32.xlu0 %v2058, 64
    %v2061 = vpop.permute.xlu0 %2060
    %v2063 = vmul.f32 %v2040, %v2061
    %2065 = vrot.lane.b32.xlu0 %v2063, 32
    %v2066 = vpop.permute.xlu0 %2065
    %2068 = vst.msk [vmem:[#allocation4 - $0x2] sm:$0xc] %vm652, %v2066
    %2070 = vrot.lane.b32.xlu0 %v2057, 96
    %v2071 = vpop.permute.xlu0 %2070
    %2073 = vst.msk [vmem:[#allocation5 - $0x2] sm:$0xc] %vm652, %v2071
    %2074 = vst.msk [vmem:[%s78] sm:$0xc] %vm652, %v2066
    %v2075 = vld [vmem:[#allocation7] sm:$0x3]
    %v2076 = vrot.slane %v2063, 2
    %2077 = vrot.lane.b32.xlu0 %v2076, 32
    %v2078 = vpop.permute.xlu0 %2077
    %v2080 = vadd.f32 %v2075, %v2078
    %2081 = vst.msk [vmem:[#allocation7] sm:$0x3] %vm394, %v2080
    %v2082 = vld [vmem:[#allocation2] sm:$0x3]
    %v2083 = vld [vmem:[%s4] sm:$0xff]
    %v2084 = vld [vmem:[%s4 + $0x8] sm:$0xff]
    %v2085 = vld [vmem:[%s4 + $0x10] sm:$0xff]
    %v2086 = vld [vmem:[%s4 + $0x18] sm:$0xff]
    %v2088 = vsel %vm286, %v2082, 0
    %2090 = vmatprep.subr.mxu0 0.0
    %2091 = vmatpush1.msra.mxu0 0.0
    %2092 = vmatprep.subr.mxu0 0.0
    %2093 = vmatpush1.msra.mxu0 0.0
    %2094 = vmatprep.subr.mxu0 0.0
    %2095 = vmatpush1.msra.mxu0 0.0
    %2096 = vmatprep.subr.mxu0 0.0
    %2097 = vmatpush1.msra.mxu0 0.0
    %2098 = vmatprep.subr.mxu0 0.0
    %2099 = vmatpush1.msra.mxu0 0.0
    %2100 = vmatprep.subr.mxu0 0.0
    %2101 = vmatpush1.msra.mxu0 0.0
    %2102 = vmatprep.subr.mxu0 0.0
    %2103 = vmatpush1.msra.mxu0 0.0
    %2104 = vmatprep.subr.mxu0 0.0
    %2105 = vmatpush1.msra.mxu0 0.0
    %2106 = vmatprep.subr.mxu0 0.0
    %2107 = vmatpush1.msra.mxu0 0.0
    %2108 = vmatprep.subr.mxu0 0.0
    %2109 = vmatpush1.msra.mxu0 0.0
    %2110 = vmatprep.subr.mxu0 0.0
    %2111 = vmatpush1.msra.mxu0 0.0
    %2112 = vmatprep.subr.mxu0 0.0
    %2113 = vmatpush1.msra.mxu0 0.0
    %2114 = vmatprep.subr.mxu0 0.0
    %2115 = vmatpush1.msra.mxu0 %v2086
    %2116 = vmatprep.subr.mxu0 0.0
    %2117 = vmatpush1.msra.mxu0 %v2085
    %2118 = vmatprep.subr.mxu0 0.0
    %2119 = vmatpush1.msra.mxu0 %v2084
    %2120 = vmatprep.subr.mxu0 0.0
    %2121 = vmatpush1.msra.mxu0 %v2083
    %2122 = vmatprep.subr.mxu0 0.0
    %2123 = vmatpush2.msra.mxu0 0.0
    %2124 = vmatprep.subr.mxu0 0.0
    %2125 = vmatpush2.msra.mxu0 0.0
    %2126 = vmatprep.subr.mxu0 0.0
    %2127 = vmatpush2.msra.mxu0 0.0
    %2128 = vmatprep.subr.mxu0 0.0
    %2129 = vmatpush2.msra.mxu0 0.0
    %2130 = vmatprep.subr.mxu0 0.0
    %2131 = vmatpush2.msra.mxu0 0.0
    %2132 = vmatprep.subr.mxu0 0.0
    %2133 = vmatpush2.msra.mxu0 0.0
    %2134 = vmatprep.subr.mxu0 0.0
    %2135 = vmatpush2.msra.mxu0 0.0
    %2136 = vmatprep.subr.mxu0 0.0
    %2137 = vmatpush2.msra.mxu0 0.0
    %2138 = vmatprep.subr.mxu0 0.0
    %2139 = vmatpush2.msra.mxu0 0.0
    %2140 = vmatprep.subr.mxu0 0.0
    %2141 = vmatpush2.msra.mxu0 0.0
    %2142 = vmatprep.subr.mxu0 0.0
    %2143 = vmatpush2.msra.mxu0 0.0
    %2144 = vmatprep.subr.mxu0 0.0
    %2145 = vmatpush2.msra.mxu0 0.0
    %2146 = vmatprep.subr.mxu0 0.0
    %2147 = vmatpush2.msra.mxu0 0.0
    %2148 = vmatprep.subr.mxu0 0.0
    %2149 = vmatpush2.msra.mxu0 0.0
    %2150 = vmatprep.subr.mxu0 0.0
    %2151 = vmatpush2.msra.mxu0 0.0
    %2152 = vmatprep.subr.mxu0 0.0
    %2153 = vmatpush2.msra.mxu0 0.0
    %2154 = vmatprep.mubr.f32.mxu0 0.0
    %2155 = vmatmul.mubr.f32.gmra.mxu0 %v2088
    %v2156 = vpop.f32.mrf.mxu0
    %v2157 = vadd.f32 0.0, %v2156
    %v2158 = vpop.f32.mrf.mxu0
    %2159 = vdwg.mxu0
    %v2161 = vrot.slane %v2157, 2
    %v2163 = vadd.f32 %v186, %v2161
    %v2164 = vld [vmem:[#allocation3] sm:$0x3]
    %v2165 = vxor.u32 %v2163, 2147483648
    %v2166 = vmul.f32 %v2165, 1.442695
    %v2167 = vpow.pop %v2166
    %v2168 = vadd.f32 %v2167, 1.0
    %v2169 = vrcp.pop %v2168
    %v2170 = vmul.f32 1.0, %v2169
    %v2171 = vtanh.pop %v2163
    %v2173 = vrot.slane %v2164, 2
    %2174 = vrot.lane.b32.xlu0 %v2173, 32
    %v2175 = vpop.permute.xlu0 %2174
    %v2177 = vmul.f32 %v2170, %v2175
    %2179 = vrot.lane.b32.xlu0 %v2171, 64
    %v2180 = vpop.permute.xlu0 %2179
    %v2182 = vmul.f32 %v2170, %v2180
    %2184 = vrot.lane.b32.xlu0 %v2182, 32
    %v2185 = vpop.permute.xlu0 %2184
    %v2187 = vadd.f32 %v2177, %v2185
    %v2188 = vtanh.pop %v2187
    %2190 = vrot.lane.b32.xlu0 %v2188, 64
    %v2191 = vpop.permute.xlu0 %2190
    %v2193 = vmul.f32 %v2170, %v2191
    %2195 = vrot.lane.b32.xlu0 %v2193, 32
    %v2196 = vpop.permute.xlu0 %2195
    %2198 = vst.msk [vmem:[#allocation2 - $0x6] sm:$0xc0] %vm521, %v2196
    %2200 = vrot.lane.b32.xlu0 %v2187, 96
    %v2201 = vpop.permute.xlu0 %2200
    %2203 = vst.msk [vmem:[#allocation3 - $0x6] sm:$0xc0] %vm521, %v2201
    %2204 = vst.msk [vmem:[%s12 + $0x8] sm:$0xc0] %vm521, %v2196
    %v2205 = vld [vmem:[#allocation6] sm:$0x3]
    %v2206 = vrot.slane %v2193, 6
    %2207 = vrot.lane.b32.xlu0 %v2206, 32
    %v2208 = vpop.permute.xlu0 %2207
    %v2210 = vadd.f32 %v2205, %v2208
    %2211 = vst.msk [vmem:[#allocation6] sm:$0x3] %vm394, %v2210
    %v2212 = vld [vmem:[#allocation4] sm:$0x3]
    %v2213 = vld [vmem:[%s5] sm:$0xff]
    %v2214 = vld [vmem:[%s5 + $0x8] sm:$0xff]
    %v2215 = vld [vmem:[%s5 + $0x10] sm:$0xff]
    %v2216 = vld [vmem:[%s5 + $0x18] sm:$0xff]
    %v2218 = vsel %vm286, %v2212, 0
    %2220 = vmatprep.subr.mxu0 0.0
    %2221 = vmatpush1.msra.mxu0 0.0
    %2222 = vmatprep.subr.mxu0 0.0
    %2223 = vmatpush1.msra.mxu0 0.0
    %2224 = vmatprep.subr.mxu0 0.0
    %2225 = vmatpush1.msra.mxu0 0.0
    %2226 = vmatprep.subr.mxu0 0.0
    %2227 = vmatpush1.msra.mxu0 0.0
    %2228 = vmatprep.subr.mxu0 0.0
    %2229 = vmatpush1.msra.mxu0 0.0
    %2230 = vmatprep.subr.mxu0 0.0
    %2231 = vmatpush1.msra.mxu0 0.0
    %2232 = vmatprep.subr.mxu0 0.0
    %2233 = vmatpush1.msra.mxu0 0.0
    %2234 = vmatprep.subr.mxu0 0.0
    %2235 = vmatpush1.msra.mxu0 0.0
    %2236 = vmatprep.subr.mxu0 0.0
    %2237 = vmatpush1.msra.mxu0 0.0
    %2238 = vmatprep.subr.mxu0 0.0
    %2239 = vmatpush1.msra.mxu0 0.0
    %2240 = vmatprep.subr.mxu0 0.0
    %2241 = vmatpush1.msra.mxu0 0.0
    %2242 = vmatprep.subr.mxu0 0.0
    %2243 = vmatpush1.msra.mxu0 0.0
    %2244 = vmatprep.subr.mxu0 0.0
    %2245 = vmatpush1.msra.mxu0 %v2216
    %2246 = vmatprep.subr.mxu0 0.0
    %2247 = vmatpush1.msra.mxu0 %v2215
    %2248 = vmatprep.subr.mxu0 0.0
    %2249 = vmatpush1.msra.mxu0 %v2214
    %2250 = vmatprep.subr.mxu0 0.0
    %2251 = vmatpush1.msra.mxu0 %v2213
    %2252 = vmatprep.subr.mxu0 0.0
    %2253 = vmatpush2.msra.mxu0 0.0
    %2254 = vmatprep.subr.mxu0 0.0
    %2255 = vmatpush2.msra.mxu0 0.0
    %2256 = vmatprep.subr.mxu0 0.0
    %2257 = vmatpush2.msra.mxu0 0.0
    %2258 = vmatprep.subr.mxu0 0.0
    %2259 = vmatpush2.msra.mxu0 0.0
    %2260 = vmatprep.subr.mxu0 0.0
    %2261 = vmatpush2.msra.mxu0 0.0
    %2262 = vmatprep.subr.mxu0 0.0
    %2263 = vmatpush2.msra.mxu0 0.0
    %2264 = vmatprep.subr.mxu0 0.0
    %2265 = vmatpush2.msra.mxu0 0.0
    %2266 = vmatprep.subr.mxu0 0.0
    %2267 = vmatpush2.msra.mxu0 0.0
    %2268 = vmatprep.subr.mxu0 0.0
    %2269 = vmatpush2.msra.mxu0 0.0
    %2270 = vmatprep.subr.mxu0 0.0
    %2271 = vmatpush2.msra.mxu0 0.0
    %2272 = vmatprep.subr.mxu0 0.0
    %2273 = vmatpush2.msra.mxu0 0.0
    %2274 = vmatprep.subr.mxu0 0.0
    %2275 = vmatpush2.msra.mxu0 0.0
    %2276 = vmatprep.subr.mxu0 0.0
    %2277 = vmatpush2.msra.mxu0 0.0
    %2278 = vmatprep.subr.mxu0 0.0
    %2279 = vmatpush2.msra.mxu0 0.0
    %2280 = vmatprep.subr.mxu0 0.0
    %2281 = vmatpush2.msra.mxu0 0.0
    %2282 = vmatprep.subr.mxu0 0.0
    %2283 = vmatpush2.msra.mxu0 0.0
    %2284 = vmatprep.mubr.f32.mxu0 0.0
    %2285 = vmatmul.mubr.f32.gmra.mxu0 %v2218
    %v2286 = vpop.f32.mrf.mxu0
    %v2287 = vadd.f32 0.0, %v2286
    %v2288 = vpop.f32.mrf.mxu0
    %2289 = vdwg.mxu0
    %v2290 = vadd.f32 %v273, %v2287
    %v2291 = vld [vmem:[#allocation5] sm:$0x3]
    %v2292 = vxor.u32 %v2290, 2147483648
    %v2293 = vmul.f32 %v2292, 1.442695
    %v2294 = vpow.pop %v2293
    %v2295 = vadd.f32 %v2294, 1.0
    %v2296 = vrcp.pop %v2295
    %v2297 = vmul.f32 1.0, %v2296
    %v2298 = vtanh.pop %v2290
    %2300 = vrot.lane.b32.xlu0 %v2291, 32
    %v2301 = vpop.permute.xlu0 %2300
    %v2303 = vmul.f32 %v2297, %v2301
    %2305 = vrot.lane.b32.xlu0 %v2298, 64
    %v2306 = vpop.permute.xlu0 %2305
    %v2308 = vmul.f32 %v2297, %v2306
    %2310 = vrot.lane.b32.xlu0 %v2308, 32
    %v2311 = vpop.permute.xlu0 %2310
    %v2313 = vadd.f32 %v2303, %v2311
    %v2314 = vtanh.pop %v2313
    %2316 = vrot.lane.b32.xlu0 %v2314, 64
    %v2317 = vpop.permute.xlu0 %2316
    %v2319 = vmul.f32 %v2297, %v2317
    %2321 = vrot.lane.b32.xlu0 %v2319, 32
    %v2322 = vpop.permute.xlu0 %2321
    %2324 = vst.msk [vmem:[#allocation4] sm:$0x3] %vm394, %v2322
    %2326 = vrot.lane.b32.xlu0 %v2313, 96
    %v2327 = vpop.permute.xlu0 %2326
    %2329 = vst.msk [vmem:[#allocation5] sm:$0x3] %vm394, %v2327
    %2330 = vst.msk [vmem:[%s78] sm:$0x3] %vm394, %v2322
    %v2331 = vld [vmem:[#allocation7] sm:$0x3]
    %v2332 = vadd.f32 %v2331, %v2322
    %2333 = vst.msk [vmem:[#allocation7] sm:$0x3] %vm394, %v2332
    // Predicated region
    $region54: #{embed_sentence_forward.2} parent=1 // pred_check
      %p2334 = pneg %p81
    $region55: #{embed_sentence_forward.2} parent=1 // pred_check_branch
      %2336 = sbr.rel (%p2334) target = $region57
    $region56: #{embed_sentence_forward.2} parent=1 // pred_region
      %v2337 = vld [vmem:[#allocation6] sm:$0x3]
      %v2338 = vmul.f32 %v2337, 0.125
      %2339 = vst.msk [vmem:[#allocation8] sm:$0x3] %vm394, %v2338
      %v2340 = vld [vmem:[#allocation7] sm:$0x3]
      %v2341 = vmul.f32 %v2340, 0.125
      %2343 = vrot.lane.b32.xlu0 %v2341, 32
      %v2344 = vpop.permute.xlu0 %2343
      %vm2346 = vcmask 517376
      %2347 = vst.msk [vmem:[#allocation8] sm:$0x3] %vm2346, %v2344
    $region57: #{embed_sentence_forward.2} parent=1 // pred_fallthru
      _
    %s2348 = ssub.s32 0, 0
    %s2349 = smul.u32 2, %s2348
    %p2350 = scmp.lt.s32.totalorder %s2349, 1
    %s2351 = scalar_select %p2350, %s2349, 1
    %s2352 = smul.addr %s2351, 8
    %s2353 = scalar_lea.vmem %s13, %s2352
    // Predicated region
    $region58: #{embed_sentence_forward.2} parent=1 // pred_check
      _
    $region59: #{embed_sentence_forward.2} parent=1 // pred_check_branch
      %2355 = sbr.rel (0) target = $region61
    $region60: #{embed_sentence_forward.2} parent=1 // pred_region
      _
    $region61: #{embed_sentence_forward.2} parent=1 // pred_fallthru
      _
    // Predicated region
    $region62: #{embed_sentence_forward.2} parent=1 // pred_check
      _
    $region63: #{embed_sentence_forward.2} parent=1 // pred_check_branch
      %2357 = sbr.rel (0) target = $region65
    $region64: #{embed_sentence_forward.2} parent=1 // pred_region
      %s2358 = ssub.s32 0, 0
      %s2359 = smul.u32 2, %s2358
    $region65: #{embed_sentence_forward.2} parent=1 // pred_fallthru
      _
    // Predicated region
    $region66: #{embed_sentence_forward.2} parent=1 // pred_check
      _
    $region67: #{embed_sentence_forward.2} parent=1 // pred_check_branch
      %2361 = sbr.rel (0) target = $region69
    $region68: #{embed_sentence_forward.2} parent=1 // pred_region
      %s2363 = ssub.s32 32, 32
      %2364 = vsyncadd [#allocation9], %s2363
      %s2366 = sshll.u32 [#allocation8], 4
      %s2367 = int_to_ptr.vmem [resolvable:$true] %s2366
      %2369 = dma.vmem_to_hbm [thread:$0]  %s2367, 32, %s14, [#allocation9]
    $region69: #{embed_sentence_forward.2} parent=1 // pred_fallthru
      _
    // Predicated region
    $region70: #{embed_sentence_forward.2} parent=1 // pred_check
      _
    $region71: #{embed_sentence_forward.2} parent=1 // pred_check_branch
      %2371 = sbr.rel (0) target = $region73
    $region72: #{embed_sentence_forward.2} parent=1 // pred_region
      _
    $region73: #{embed_sentence_forward.2} parent=1 // pred_fallthru
      _
    // Predicated region
    $region74: #{embed_sentence_forward.2} parent=1 // pred_check
      _
    $region75: #{embed_sentence_forward.2} parent=1 // pred_check_branch
      %2373 = sbr.rel (0) target = $region77
    $region76: #{embed_sentence_forward.2} parent=1 // pred_region
      %s2374 = ssub.s32 0, 0
      %s2375 = smul.u32 2, %s2374
      %p2376 = scmp.lt.s32.totalorder %s2375, 1
      %s2377 = scalar_select %p2376, %s2375, 1
      %s2378 = smul.addr %s2377, 8
      %s2379 = scalar_lea.vmem %s13, %s2378
    $region77: #{embed_sentence_forward.2} parent=1 // pred_fallthru
      _
    // Predicated region
    $region78: #{embed_sentence_forward.2} parent=1 // pred_check
      _
    $region79: #{embed_sentence_forward.2} parent=1 // pred_check_branch
      %2381 = sbr.rel (0) target = $region81
    $region80: #{embed_sentence_forward.2} parent=1 // pred_region
      %2382 = dma.done [#allocation9], 32
    $region81: #{embed_sentence_forward.2} parent=1 // pred_fallthru
      _
    %2383 = vsyncpa [#allocation9], 1

</llo_original>
